<compile_context>
chip_gen: v7x
topology: tpu7x:2x2x1
jax: 0.10.0
libtpu: 0.0.40
codegen_flags: <defaults>
</compile_context>

<pallas_src>
import functools

import jax
import jax.numpy as jnp
from jax.experimental import pallas as pl
from jax.experimental.pallas import tpu as pltpu


SE_PAD = 128      # padded SE bottleneck width (lane-dense)
CLS_PAD = 128     # padded classifier output width (lane-dense)
NUM_LAYERS = 3
PER_LAYER_PARAMS = 5   # w_root, w_rel, bias, w_se1(pad), w_se2(pad)
NUM_CLS_PARAMS = 8     # w1,b1,w2,b2,w3,b3,w4(pad),b4(pad)


# ---------------------------------------------------------------------------
# Fused kernel: 3 x (GraphConv + ReLU + GraphSE) + global mean pool + MLP
# ---------------------------------------------------------------------------
def secpro_fused_kernel(*refs):
    x_ref, a_ref, bm_ref, bmt_ref, invc_ref = refs[0:5]
    layer_refs = refs[5:5 + NUM_LAYERS * PER_LAYER_PARAMS]
    (w1_ref, b1_ref, w2_ref, b2_ref,
     w3_ref, b3_ref, w4_ref, b4_ref) = refs[5 + NUM_LAYERS * PER_LAYER_PARAMS:
                                            5 + NUM_LAYERS * PER_LAYER_PARAMS
                                            + NUM_CLS_PARAMS]
    o_ref = refs[-1]

    A = a_ref[...]            # [N, N]  bf16 (exact small-integer edge counts)
    Bm = bm_ref[...]          # [Gp, N] bf16 one-hot (padded rows are zero)
    BmT = bmt_ref[...]        # [N, Gp] bf16 (pre-transposed in the wrapper)
    inv_cnt = invc_ref[...]   # [Gp, 1] f32  (padded rows are zero)

    def mean_pool(h_f32):
        # [N, C] f32 -> [Gp, C] f32  (sum via MXU, then exact f32 1/count scale)
        return jnp.dot(Bm, h_f32.astype(jnp.bfloat16),
                       preferred_element_type=jnp.float32) * inv_cnt

    def sigmoid(z):
        # exp on the EUP; approx reciprocal also on the EUP (free-ish slot).
        return pl.reciprocal(1.0 + jnp.exp(-z), approx=True)

    x = x_ref[...].astype(jnp.float32)            # [N, Fin0]
    for l in range(NUM_LAYERS):
        (wroot_ref, wrel_ref, bias_ref,
         wse1_ref, wse2_ref) = layer_refs[l * PER_LAYER_PARAMS:
                                          (l + 1) * PER_LAYER_PARAMS]
        x_bf = x.astype(jnp.bfloat16)
        # GraphConv: root transform + aggregated-neighbour transform + bias
        agg = jnp.dot(A, x_bf, preferred_element_type=jnp.float32)     # [N, Fin]
        h = (jnp.dot(x_bf, wroot_ref[...],
                     preferred_element_type=jnp.float32)
             + jnp.dot(agg.astype(jnp.bfloat16), wrel_ref[...],
                       preferred_element_type=jnp.float32)
             + bias_ref[...])                                          # [N, C]
        h = jnp.maximum(h, 0.0)                                        # ReLU (f32)

        # GraphSELayer: mean pool -> bottleneck MLP (lane-padded, bias-free)
        pooled = mean_pool(h)                                          # [Gp, C]
        se_hidden = jnp.maximum(
            jnp.dot(pooled.astype(jnp.bfloat16), wse1_ref[...],
                    preferred_element_type=jnp.float32), 0.0)          # [Gp, 128]
        scale = sigmoid(
            jnp.dot(se_hidden.astype(jnp.bfloat16), wse2_ref[...],
                    preferred_element_type=jnp.float32))               # [Gp, C]
        # repeat_interleave(scale, counts) == BmT @ scale (one-hot Bm)
        scale_nodes = jnp.dot(BmT, scale.astype(jnp.bfloat16),
                              preferred_element_type=jnp.float32)      # [N, C]
        x = h * scale_nodes                                            # f32

    # global mean pool + 4-layer classifier (dropout = identity, eval mode)
    pooled = mean_pool(x)                                              # [Gp, 4h]
    h = jnp.maximum(jnp.dot(pooled.astype(jnp.bfloat16), w1_ref[...],
                            preferred_element_type=jnp.float32) + b1_ref[...], 0.0)
    h = jnp.maximum(jnp.dot(h.astype(jnp.bfloat16), w2_ref[...],
                            preferred_element_type=jnp.float32) + b2_ref[...], 0.0)
    h = jnp.maximum(jnp.dot(h.astype(jnp.bfloat16), w3_ref[...],
                            preferred_element_type=jnp.float32) + b3_ref[...], 0.0)
    o_ref[...] = (jnp.dot(h.astype(jnp.bfloat16), w4_ref[...],
                          preferred_element_type=jnp.float32) + b4_ref[...])


# ---------------------------------------------------------------------------
# Wrapper
# ---------------------------------------------------------------------------
_VMEM_SPEC = pl.BlockSpec(memory_space=pltpu.MemorySpace.VMEM)


@functools.partial(jax.jit, static_argnames=("num_graphs", "num_classes"))
def secpro_gnn_forward(x, A, Bm, BmT, inv_cnt, flat_params,
                       num_graphs, num_classes):
    Gp = Bm.shape[0]
    n_inputs = 5 + len(flat_params)
    out_pad = pl.pallas_call(
        secpro_fused_kernel,
        out_shape=jax.ShapeDtypeStruct((Gp, CLS_PAD), jnp.float32),
        in_specs=[_VMEM_SPEC] * n_inputs,
        out_specs=_VMEM_SPEC,
        compiler_params=pltpu.CompilerParams(
            vmem_limit_bytes=48 * 1024 * 1024),
    )(x, A, Bm, BmT, inv_cnt, *flat_params)
    return out_pad[:num_graphs, :num_classes]


# ---------------------------------------------------------------------------
# Parameter / graph preparation (plain JAX glue, done once)
# ---------------------------------------------------------------------------
def make_params(key, input_features, hidden_channels, num_classes, reduction=16):
    def lin(key, fan_in, fan_out):
        # stored as [in, out] so that y = x @ W (equivalent to torch x @ W.T)
        scale = 1.0 / jnp.sqrt(jnp.float32(fan_in))
        return jax.random.uniform(key, (fan_in, fan_out), jnp.float32, -scale, scale)

    keys = iter(jax.random.split(key, 32))
    layers = []
    dims = [(input_features, hidden_channels),
            (hidden_channels, hidden_channels * 2),
            (hidden_channels * 2, hidden_channels * 4)]
    for fin, fout in dims:
        w_root = lin(next(keys), fin, fout)
        w_rel = lin(next(keys), fin, fout)
        bias = jax.random.uniform(next(keys), (1, fout), jnp.float32,
                                  -1.0 / jnp.sqrt(fin), 1.0 / jnp.sqrt(fin))
        w_se1 = lin(next(keys), fout, max(fout // reduction, 1))   # bias=False
        w_se2 = lin(next(keys), max(fout // reduction, 1), fout)   # bias=False
        layers.append((w_root, w_rel, bias, w_se1, w_se2))

    cdims = [(hidden_channels * 4, 1024), (1024, 1024),
             (1024, 256), (256, num_classes)]
    cls = []
    for fin, fout in cdims:
        cls.append(lin(next(keys), fin, fout))
        cls.append(jax.random.uniform(next(keys), (1, fout), jnp.float32,
                                      -1.0 / jnp.sqrt(fin), 1.0 / jnp.sqrt(fin)))
    return {"layers": layers, "classifier": tuple(cls)}


def prepare_params(params):
    """bf16-cast weights, zero-pad SE bottleneck and classifier output lanes."""
    flat = []
    for (w_root, w_rel, bias, w_se1, w_se2) in params["layers"]:
        fout = w_root.shape[1]
        bneck = w_se1.shape[1]
        w_se1_pad = jnp.zeros((fout, SE_PAD), jnp.float32).at[:, :bneck].set(w_se1)
        w_se2_pad = jnp.zeros((SE_PAD, fout), jnp.float32).at[:bneck, :].set(w_se2)
        flat += [w_root.astype(jnp.bfloat16),
                 w_rel.astype(jnp.bfloat16),
                 bias.astype(jnp.float32),
                 w_se1_pad.astype(jnp.bfloat16),
                 w_se2_pad.astype(jnp.bfloat16)]

    w1, b1, w2, b2, w3, b3, w4, b4 = params["classifier"]
    num_classes = w4.shape[1]
    w4_pad = jnp.zeros((w4.shape[0], CLS_PAD), jnp.float32).at[:, :num_classes].set(w4)
    b4_pad = jnp.zeros((1, CLS_PAD), jnp.float32).at[:, :num_classes].set(b4)
    flat += [w1.astype(jnp.bfloat16), b1.astype(jnp.float32),
             w2.astype(jnp.bfloat16), b2.astype(jnp.float32),
             w3.astype(jnp.bfloat16), b3.astype(jnp.float32),
             w4_pad.astype(jnp.bfloat16), b4_pad.astype(jnp.float32)]
    return tuple(flat)


def prepare_graph(edge_index, batch, num_nodes, num_graphs):
    """Densify edge_index / batch into bf16 A, padded Bm/BmT and inv_cnt."""
    A = jnp.zeros((num_nodes, num_nodes), jnp.float32)
    A = A.at[edge_index[1], edge_index[0]].add(1.0)   # A[i, j] = #edges (j -> i)
    # bf16 is exact for integer edge multiplicities < 256
    assert float(jnp.max(A)) < 256.0, "edge multiplicity too large for bf16 adjacency"

    Gp = max(8, -(-num_graphs // 8) * 8)              # pad graph axis to sublane tile
    Bm = (batch[None, :] == jnp.arange(num_graphs, dtype=jnp.int32)[:, None]
          ).astype(jnp.float32)                       # [G, N]
    counts = jnp.sum(Bm, axis=1, keepdims=True)       # [G, 1] == batch.bincount()
    Bm_pad = jnp.zeros((Gp, num_nodes), jnp.float32).at[:num_graphs].set(Bm)
    invc_pad = jnp.zeros((Gp, 1), jnp.float32).at[:num_graphs].set(1.0 / counts)
    return (A,                                       # f32 (for the reference)
            A.astype(jnp.bfloat16),
            Bm_pad.astype(jnp.bfloat16),
            Bm_pad.T.astype(jnp.bfloat16),
            invc_pad)


# ---------------------------------------------------------------------------
# Pure-JAX reference (f32, matches the PyTorch module in eval mode)
# ---------------------------------------------------------------------------
def reference_forward(x, A_f32, batch, params, num_graphs):
    def segment_mean(h):
        sums = jax.ops.segment_sum(h, batch, num_graphs)
        cnts = jax.ops.segment_sum(jnp.ones((h.shape[0], 1), jnp.float32),
                                   batch, num_graphs)
        return sums / cnts

    h = x
    for (w_root, w_rel, bias, w_se1, w_se2) in params["layers"]:
        h = jnp.maximum(h @ w_root + (A_f32 @ h) @ w_rel + bias, 0.0)
        pooled = segment_mean(h)
        s = jax.nn.sigmoid(jnp.maximum(pooled @ w_se1, 0.0) @ w_se2)
        h = h * s[batch]
    pooled = segment_mean(h)
    w1, b1, w2, b2, w3, b3, w4, b4 = params["classifier"]
    h = jnp.maximum(pooled @ w1 + b1, 0.0)
    h = jnp.maximum(h @ w2 + b2, 0.0)
    h = jnp.maximum(h @ w3 + b3, 0.0)
    return h @ w4 + b4


# ---------------------------------------------------------------------------
# Main
# ---------------------------------------------------------------------------
if __name__ == "__main__":
    key = jax.random.PRNGKey(0)
    k_x, k_p = jax.random.split(key)

    # Small problem: 2 graphs of 8 nodes each (N=16), input_features=16,
    # hidden_channels=32, num_classes=4.
    input_features = 16
    hidden_channels = 32
    num_classes = 4
    nodes_per_graph = 8
    num_graphs = 2
    N = num_graphs * nodes_per_graph

    x = jax.random.normal(k_x, (N, input_features), jnp.float32)

    # Bidirectional ring edges inside each graph -> edge_index [2, E]
    src_list, dst_list = [], []
    for g in range(num_graphs):
        base = g * nodes_per_graph
        for i in range(nodes_per_graph):
            a = base + i
            b = base + (i + 1) % nodes_per_graph
            src_list += [a, b]
            dst_list += [b, a]
    edge_index = jnp.array([src_list, dst_list], dtype=jnp.int32)       # [2, E]
    batch = jnp.repeat(jnp.arange(num_graphs, dtype=jnp.int32),
                       nodes_per_graph)                                  # [N]

    A_f32, A, Bm, BmT, inv_cnt = prepare_graph(edge_index, batch, N, num_graphs)
    params = make_params(k_p, input_features, hidden_channels, num_classes)
    flat_params = prepare_params(params)

    out = secpro_gnn_forward(x, A, Bm, BmT, inv_cnt, flat_params,
                             num_graphs=num_graphs, num_classes=num_classes)
    out = jax.block_until_ready(out)
    assert out.shape == (num_graphs, num_classes)
    assert jnp.all(jnp.isfinite(out))

    # Loose correctness check vs. pure-f32 reference (kernel matmuls are bf16).
    ref = reference_forward(x, A_f32, batch, params, num_graphs)
    assert jnp.allclose(out, ref, atol=0.25, rtol=0.05), (out, ref)

    print("KERNEL_OK")
</pallas_src>

<mosaic_0001>
module attributes {stable_mosaic.version = 11 : i64} {
  func.func @secpro_fused_kernel(%arg0: memref<16x16xf32, #tpu.memory_space<vmem>>, %arg1: memref<16x16xbf16, #tpu.memory_space<vmem>>, %arg2: memref<8x16xbf16, #tpu.memory_space<vmem>>, %arg3: memref<16x8xbf16, #tpu.memory_space<vmem>>, %arg4: memref<8x1xf32, #tpu.memory_space<vmem>>, %arg5: memref<16x32xbf16, #tpu.memory_space<vmem>>, %arg6: memref<16x32xbf16, #tpu.memory_space<vmem>>, %arg7: memref<1x32xf32, #tpu.memory_space<vmem>>, %arg8: memref<32x128xbf16, #tpu.memory_space<vmem>>, %arg9: memref<128x32xbf16, #tpu.memory_space<vmem>>, %arg10: memref<32x64xbf16, #tpu.memory_space<vmem>>, %arg11: memref<32x64xbf16, #tpu.memory_space<vmem>>, %arg12: memref<1x64xf32, #tpu.memory_space<vmem>>, %arg13: memref<64x128xbf16, #tpu.memory_space<vmem>>, %arg14: memref<128x64xbf16, #tpu.memory_space<vmem>>, %arg15: memref<64x128xbf16, #tpu.memory_space<vmem>>, %arg16: memref<64x128xbf16, #tpu.memory_space<vmem>>, %arg17: memref<1x128xf32, #tpu.memory_space<vmem>>, %arg18: memref<128x128xbf16, #tpu.memory_space<vmem>>, %arg19: memref<128x128xbf16, #tpu.memory_space<vmem>>, %arg20: memref<128x1024xbf16, #tpu.memory_space<vmem>>, %arg21: memref<1x1024xf32, #tpu.memory_space<vmem>>, %arg22: memref<1024x1024xbf16, #tpu.memory_space<vmem>>, %arg23: memref<1x1024xf32, #tpu.memory_space<vmem>>, %arg24: memref<1024x256xbf16, #tpu.memory_space<vmem>>, %arg25: memref<1x256xf32, #tpu.memory_space<vmem>>, %arg26: memref<256x128xbf16, #tpu.memory_space<vmem>>, %arg27: memref<1x128xf32, #tpu.memory_space<vmem>>, %arg28: memref<8x128xf32, #tpu.memory_space<vmem>>) attributes {dimension_semantics = [], scalar_prefetch = 0 : i64, scratch_operands = 0 : i64, tpu.core_type = #tpu.core_type<tc>} {
    %c0 = arith.constant 0 : index
    %c0_0 = arith.constant 0 : index
    %0 = vector.load %arg1[%c0, %c0_0] : memref<16x16xbf16, #tpu.memory_space<vmem>>, vector<16x16xbf16>
    %c0_1 = arith.constant 0 : index
    %c0_2 = arith.constant 0 : index
    %1 = vector.load %arg2[%c0_1, %c0_2] : memref<8x16xbf16, #tpu.memory_space<vmem>>, vector<8x16xbf16>
    %c0_3 = arith.constant 0 : index
    %c0_4 = arith.constant 0 : index
    %2 = vector.load %arg3[%c0_3, %c0_4] : memref<16x8xbf16, #tpu.memory_space<vmem>>, vector<16x8xbf16>
    %c0_5 = arith.constant 0 : index
    %c0_6 = arith.constant 0 : index
    %3 = vector.load %arg4[%c0_5, %c0_6] : memref<8x1xf32, #tpu.memory_space<vmem>>, vector<8x1xf32>
    %c0_7 = arith.constant 0 : index
    %c0_8 = arith.constant 0 : index
    %4 = vector.load %arg0[%c0_7, %c0_8] : memref<16x16xf32, #tpu.memory_space<vmem>>, vector<16x16xf32>
    %5 = arith.truncf %4 : vector<16x16xf32> to vector<16x16xbf16>
    %cst = arith.constant dense<0.000000e+00> : vector<16x16xf32>
    %6 = tpu.matmul %0, %5, %cst {dimension_numbers = #tpu.dot_dimension_numbers<[1], [0], [0], [1], [0, 0, 1, 1], [], []>} : vector<16x16xbf16>, vector<16x16xbf16>, vector<16x16xf32> -> vector<16x16xf32>
    %c0_9 = arith.constant 0 : index
    %c0_10 = arith.constant 0 : index
    %7 = vector.load %arg5[%c0_9, %c0_10] : memref<16x32xbf16, #tpu.memory_space<vmem>>, vector<16x32xbf16>
    %cst_11 = arith.constant dense<0.000000e+00> : vector<16x32xf32>
    %8 = tpu.matmul %5, %7, %cst_11 {dimension_numbers = #tpu.dot_dimension_numbers<[1], [0], [0], [1], [0, 0, 1, 1], [], []>} : vector<16x16xbf16>, vector<16x32xbf16>, vector<16x32xf32> -> vector<16x32xf32>
    %9 = arith.truncf %6 : vector<16x16xf32> to vector<16x16xbf16>
    %c0_12 = arith.constant 0 : index
    %c0_13 = arith.constant 0 : index
    %10 = vector.load %arg6[%c0_12, %c0_13] : memref<16x32xbf16, #tpu.memory_space<vmem>>, vector<16x32xbf16>
    %cst_14 = arith.constant dense<0.000000e+00> : vector<16x32xf32>
    %11 = tpu.matmul %9, %10, %cst_14 {dimension_numbers = #tpu.dot_dimension_numbers<[1], [0], [0], [1], [0, 0, 1, 1], [], []>} : vector<16x16xbf16>, vector<16x32xbf16>, vector<16x32xf32> -> vector<16x32xf32>
    %12 = arith.addf %8, %11 : vector<16x32xf32>
    %c0_15 = arith.constant 0 : index
    %c0_16 = arith.constant 0 : index
    %13 = vector.load %arg7[%c0_15, %c0_16] : memref<1x32xf32, #tpu.memory_space<vmem>>, vector<1x32xf32>
    %14 = vector.broadcast %13 : vector<1x32xf32> to vector<16x32xf32>
    %15 = arith.addf %12, %14 : vector<16x32xf32>
    %cst_17 = arith.constant 0.000000e+00 : f32
    %16 = vector.broadcast %cst_17 : f32 to vector<16x32xf32>
    %17 = arith.maximumf %15, %16 : vector<16x32xf32>
    %18 = arith.truncf %17 : vector<16x32xf32> to vector<16x32xbf16>
    %cst_18 = arith.constant dense<0.000000e+00> : vector<8x32xf32>
    %19 = tpu.matmul %1, %18, %cst_18 {dimension_numbers = #tpu.dot_dimension_numbers<[1], [0], [0], [1], [0, 0, 1, 1], [], []>} : vector<8x16xbf16>, vector<16x32xbf16>, vector<8x32xf32> -> vector<8x32xf32>
    %20 = vector.broadcast %3 : vector<8x1xf32> to vector<8x32xf32>
    %21 = arith.mulf %19, %20 : vector<8x32xf32>
    %22 = arith.truncf %21 : vector<8x32xf32> to vector<8x32xbf16>
    %c0_19 = arith.constant 0 : index
    %c0_20 = arith.constant 0 : index
    %23 = vector.load %arg8[%c0_19, %c0_20] : memref<32x128xbf16, #tpu.memory_space<vmem>>, vector<32x128xbf16>
    %cst_21 = arith.constant dense<0.000000e+00> : vector<8x128xf32>
    %24 = tpu.matmul %22, %23, %cst_21 {dimension_numbers = #tpu.dot_dimension_numbers<[1], [0], [0], [1], [0, 0, 1, 1], [], []>} : vector<8x32xbf16>, vector<32x128xbf16>, vector<8x128xf32> -> vector<8x128xf32>
    %cst_22 = arith.constant 0.000000e+00 : f32
    %25 = vector.broadcast %cst_22 : f32 to vector<8x128xf32>
    %26 = arith.maximumf %24, %25 : vector<8x128xf32>
    %27 = arith.truncf %26 : vector<8x128xf32> to vector<8x128xbf16>
    %c0_23 = arith.constant 0 : index
    %c0_24 = arith.constant 0 : index
    %28 = vector.load %arg9[%c0_23, %c0_24] : memref<128x32xbf16, #tpu.memory_space<vmem>>, vector<128x32xbf16>
    %cst_25 = arith.constant dense<0.000000e+00> : vector<8x32xf32>
    %29 = tpu.matmul %27, %28, %cst_25 {dimension_numbers = #tpu.dot_dimension_numbers<[1], [0], [0], [1], [0, 0, 1, 1], [], []>} : vector<8x128xbf16>, vector<128x32xbf16>, vector<8x32xf32> -> vector<8x32xf32>
    %cst_26 = arith.constant 0.000000e+00 : f32
    %30 = vector.broadcast %cst_26 : f32 to vector<8x32xf32>
    %31 = arith.subf %30, %29 : vector<8x32xf32>
    %32 = math.exp %31 : vector<8x32xf32>
    %cst_27 = arith.constant 1.000000e+00 : f32
    %33 = vector.broadcast %cst_27 : f32 to vector<8x32xf32>
    %34 = arith.addf %33, %32 : vector<8x32xf32>
    %35 = tpu.reciprocal %34 {approx = true} : vector<8x32xf32> -> vector<8x32xf32>
    %36 = arith.truncf %35 : vector<8x32xf32> to vector<8x32xbf16>
    %cst_28 = arith.constant dense<0.000000e+00> : vector<16x32xf32>
    %37 = tpu.matmul %2, %36, %cst_28 {dimension_numbers = #tpu.dot_dimension_numbers<[1], [0], [0], [1], [0, 0, 1, 1], [], []>} : vector<16x8xbf16>, vector<8x32xbf16>, vector<16x32xf32> -> vector<16x32xf32>
    %38 = arith.mulf %17, %37 : vector<16x32xf32>
    %39 = arith.truncf %38 : vector<16x32xf32> to vector<16x32xbf16>
    %cst_29 = arith.constant dense<0.000000e+00> : vector<16x32xf32>
    %40 = tpu.matmul %0, %39, %cst_29 {dimension_numbers = #tpu.dot_dimension_numbers<[1], [0], [0], [1], [0, 0, 1, 1], [], []>} : vector<16x16xbf16>, vector<16x32xbf16>, vector<16x32xf32> -> vector<16x32xf32>
    %c0_30 = arith.constant 0 : index
    %c0_31 = arith.constant 0 : index
    %41 = vector.load %arg10[%c0_30, %c0_31] : memref<32x64xbf16, #tpu.memory_space<vmem>>, vector<32x64xbf16>
    %cst_32 = arith.constant dense<0.000000e+00> : vector<16x64xf32>
    %42 = tpu.matmul %39, %41, %cst_32 {dimension_numbers = #tpu.dot_dimension_numbers<[1], [0], [0], [1], [0, 0, 1, 1], [], []>} : vector<16x32xbf16>, vector<32x64xbf16>, vector<16x64xf32> -> vector<16x64xf32>
    %43 = arith.truncf %40 : vector<16x32xf32> to vector<16x32xbf16>
    %c0_33 = arith.constant 0 : index
    %c0_34 = arith.constant 0 : index
    %44 = vector.load %arg11[%c0_33, %c0_34] : memref<32x64xbf16, #tpu.memory_space<vmem>>, vector<32x64xbf16>
    %cst_35 = arith.constant dense<0.000000e+00> : vector<16x64xf32>
    %45 = tpu.matmul %43, %44, %cst_35 {dimension_numbers = #tpu.dot_dimension_numbers<[1], [0], [0], [1], [0, 0, 1, 1], [], []>} : vector<16x32xbf16>, vector<32x64xbf16>, vector<16x64xf32> -> vector<16x64xf32>
    %46 = arith.addf %42, %45 : vector<16x64xf32>
    %c0_36 = arith.constant 0 : index
    %c0_37 = arith.constant 0 : index
    %47 = vector.load %arg12[%c0_36, %c0_37] : memref<1x64xf32, #tpu.memory_space<vmem>>, vector<1x64xf32>
    %48 = vector.broadcast %47 : vector<1x64xf32> to vector<16x64xf32>
    %49 = arith.addf %46, %48 : vector<16x64xf32>
    %cst_38 = arith.constant 0.000000e+00 : f32
    %50 = vector.broadcast %cst_38 : f32 to vector<16x64xf32>
    %51 = arith.maximumf %49, %50 : vector<16x64xf32>
    %52 = arith.truncf %51 : vector<16x64xf32> to vector<16x64xbf16>
    %cst_39 = arith.constant dense<0.000000e+00> : vector<8x64xf32>
    %53 = tpu.matmul %1, %52, %cst_39 {dimension_numbers = #tpu.dot_dimension_numbers<[1], [0], [0], [1], [0, 0, 1, 1], [], []>} : vector<8x16xbf16>, vector<16x64xbf16>, vector<8x64xf32> -> vector<8x64xf32>
    %54 = vector.broadcast %3 : vector<8x1xf32> to vector<8x64xf32>
    %55 = arith.mulf %53, %54 : vector<8x64xf32>
    %56 = arith.truncf %55 : vector<8x64xf32> to vector<8x64xbf16>
    %c0_40 = arith.constant 0 : index
    %c0_41 = arith.constant 0 : index
    %57 = vector.load %arg13[%c0_40, %c0_41] : memref<64x128xbf16, #tpu.memory_space<vmem>>, vector<64x128xbf16>
    %cst_42 = arith.constant dense<0.000000e+00> : vector<8x128xf32>
    %58 = tpu.matmul %56, %57, %cst_42 {dimension_numbers = #tpu.dot_dimension_numbers<[1], [0], [0], [1], [0, 0, 1, 1], [], []>} : vector<8x64xbf16>, vector<64x128xbf16>, vector<8x128xf32> -> vector<8x128xf32>
    %cst_43 = arith.constant 0.000000e+00 : f32
    %59 = vector.broadcast %cst_43 : f32 to vector<8x128xf32>
    %60 = arith.maximumf %58, %59 : vector<8x128xf32>
    %61 = arith.truncf %60 : vector<8x128xf32> to vector<8x128xbf16>
    %c0_44 = arith.constant 0 : index
    %c0_45 = arith.constant 0 : index
    %62 = vector.load %arg14[%c0_44, %c0_45] : memref<128x64xbf16, #tpu.memory_space<vmem>>, vector<128x64xbf16>
    %cst_46 = arith.constant dense<0.000000e+00> : vector<8x64xf32>
    %63 = tpu.matmul %61, %62, %cst_46 {dimension_numbers = #tpu.dot_dimension_numbers<[1], [0], [0], [1], [0, 0, 1, 1], [], []>} : vector<8x128xbf16>, vector<128x64xbf16>, vector<8x64xf32> -> vector<8x64xf32>
    %cst_47 = arith.constant 0.000000e+00 : f32
    %64 = vector.broadcast %cst_47 : f32 to vector<8x64xf32>
    %65 = arith.subf %64, %63 : vector<8x64xf32>
    %66 = math.exp %65 : vector<8x64xf32>
    %cst_48 = arith.constant 1.000000e+00 : f32
    %67 = vector.broadcast %cst_48 : f32 to vector<8x64xf32>
    %68 = arith.addf %67, %66 : vector<8x64xf32>
    %69 = tpu.reciprocal %68 {approx = true} : vector<8x64xf32> -> vector<8x64xf32>
    %70 = arith.truncf %69 : vector<8x64xf32> to vector<8x64xbf16>
    %cst_49 = arith.constant dense<0.000000e+00> : vector<16x64xf32>
    %71 = tpu.matmul %2, %70, %cst_49 {dimension_numbers = #tpu.dot_dimension_numbers<[1], [0], [0], [1], [0, 0, 1, 1], [], []>} : vector<16x8xbf16>, vector<8x64xbf16>, vector<16x64xf32> -> vector<16x64xf32>
    %72 = arith.mulf %51, %71 : vector<16x64xf32>
    %73 = arith.truncf %72 : vector<16x64xf32> to vector<16x64xbf16>
    %cst_50 = arith.constant dense<0.000000e+00> : vector<16x64xf32>
    %74 = tpu.matmul %0, %73, %cst_50 {dimension_numbers = #tpu.dot_dimension_numbers<[1], [0], [0], [1], [0, 0, 1, 1], [], []>} : vector<16x16xbf16>, vector<16x64xbf16>, vector<16x64xf32> -> vector<16x64xf32>
    %c0_51 = arith.constant 0 : index
    %c0_52 = arith.constant 0 : index
    %75 = vector.load %arg15[%c0_51, %c0_52] : memref<64x128xbf16, #tpu.memory_space<vmem>>, vector<64x128xbf16>
    %cst_53 = arith.constant dense<0.000000e+00> : vector<16x128xf32>
    %76 = tpu.matmul %73, %75, %cst_53 {dimension_numbers = #tpu.dot_dimension_numbers<[1], [0], [0], [1], [0, 0, 1, 1], [], []>} : vector<16x64xbf16>, vector<64x128xbf16>, vector<16x128xf32> -> vector<16x128xf32>
    %77 = arith.truncf %74 : vector<16x64xf32> to vector<16x64xbf16>
    %c0_54 = arith.constant 0 : index
    %c0_55 = arith.constant 0 : index
    %78 = vector.load %arg16[%c0_54, %c0_55] : memref<64x128xbf16, #tpu.memory_space<vmem>>, vector<64x128xbf16>
    %cst_56 = arith.constant dense<0.000000e+00> : vector<16x128xf32>
    %79 = tpu.matmul %77, %78, %cst_56 {dimension_numbers = #tpu.dot_dimension_numbers<[1], [0], [0], [1], [0, 0, 1, 1], [], []>} : vector<16x64xbf16>, vector<64x128xbf16>, vector<16x128xf32> -> vector<16x128xf32>
    %80 = arith.addf %76, %79 : vector<16x128xf32>
    %c0_57 = arith.constant 0 : index
    %c0_58 = arith.constant 0 : index
    %81 = vector.load %arg17[%c0_57, %c0_58] : memref<1x128xf32, #tpu.memory_space<vmem>>, vector<1x128xf32>
    %82 = vector.broadcast %81 : vector<1x128xf32> to vector<16x128xf32>
    %83 = arith.addf %80, %82 : vector<16x128xf32>
    %cst_59 = arith.constant 0.000000e+00 : f32
    %84 = vector.broadcast %cst_59 : f32 to vector<16x128xf32>
    %85 = arith.maximumf %83, %84 : vector<16x128xf32>
    %86 = arith.truncf %85 : vector<16x128xf32> to vector<16x128xbf16>
    %cst_60 = arith.constant dense<0.000000e+00> : vector<8x128xf32>
    %87 = tpu.matmul %1, %86, %cst_60 {dimension_numbers = #tpu.dot_dimension_numbers<[1], [0], [0], [1], [0, 0, 1, 1], [], []>} : vector<8x16xbf16>, vector<16x128xbf16>, vector<8x128xf32> -> vector<8x128xf32>
    %88 = vector.broadcast %3 : vector<8x1xf32> to vector<8x128xf32>
    %89 = arith.mulf %87, %88 : vector<8x128xf32>
    %90 = arith.truncf %89 : vector<8x128xf32> to vector<8x128xbf16>
    %c0_61 = arith.constant 0 : index
    %c0_62 = arith.constant 0 : index
    %91 = vector.load %arg18[%c0_61, %c0_62] : memref<128x128xbf16, #tpu.memory_space<vmem>>, vector<128x128xbf16>
    %cst_63 = arith.constant dense<0.000000e+00> : vector<8x128xf32>
    %92 = tpu.matmul %90, %91, %cst_63 {dimension_numbers = #tpu.dot_dimension_numbers<[1], [0], [0], [1], [0, 0, 1, 1], [], []>} : vector<8x128xbf16>, vector<128x128xbf16>, vector<8x128xf32> -> vector<8x128xf32>
    %cst_64 = arith.constant 0.000000e+00 : f32
    %93 = vector.broadcast %cst_64 : f32 to vector<8x128xf32>
    %94 = arith.maximumf %92, %93 : vector<8x128xf32>
    %95 = arith.truncf %94 : vector<8x128xf32> to vector<8x128xbf16>
    %c0_65 = arith.constant 0 : index
    %c0_66 = arith.constant 0 : index
    %96 = vector.load %arg19[%c0_65, %c0_66] : memref<128x128xbf16, #tpu.memory_space<vmem>>, vector<128x128xbf16>
    %cst_67 = arith.constant dense<0.000000e+00> : vector<8x128xf32>
    %97 = tpu.matmul %95, %96, %cst_67 {dimension_numbers = #tpu.dot_dimension_numbers<[1], [0], [0], [1], [0, 0, 1, 1], [], []>} : vector<8x128xbf16>, vector<128x128xbf16>, vector<8x128xf32> -> vector<8x128xf32>
    %cst_68 = arith.constant 0.000000e+00 : f32
    %98 = vector.broadcast %cst_68 : f32 to vector<8x128xf32>
    %99 = arith.subf %98, %97 : vector<8x128xf32>
    %100 = math.exp %99 : vector<8x128xf32>
    %cst_69 = arith.constant 1.000000e+00 : f32
    %101 = vector.broadcast %cst_69 : f32 to vector<8x128xf32>
    %102 = arith.addf %101, %100 : vector<8x128xf32>
    %103 = tpu.reciprocal %102 {approx = true} : vector<8x128xf32> -> vector<8x128xf32>
    %104 = arith.truncf %103 : vector<8x128xf32> to vector<8x128xbf16>
    %cst_70 = arith.constant dense<0.000000e+00> : vector<16x128xf32>
    %105 = tpu.matmul %2, %104, %cst_70 {dimension_numbers = #tpu.dot_dimension_numbers<[1], [0], [0], [1], [0, 0, 1, 1], [], []>} : vector<16x8xbf16>, vector<8x128xbf16>, vector<16x128xf32> -> vector<16x128xf32>
    %106 = arith.mulf %85, %105 : vector<16x128xf32>
    %107 = arith.truncf %106 : vector<16x128xf32> to vector<16x128xbf16>
    %cst_71 = arith.constant dense<0.000000e+00> : vector<8x128xf32>
    %108 = tpu.matmul %1, %107, %cst_71 {dimension_numbers = #tpu.dot_dimension_numbers<[1], [0], [0], [1], [0, 0, 1, 1], [], []>} : vector<8x16xbf16>, vector<16x128xbf16>, vector<8x128xf32> -> vector<8x128xf32>
    %109 = vector.broadcast %3 : vector<8x1xf32> to vector<8x128xf32>
    %110 = arith.mulf %108, %109 : vector<8x128xf32>
    %111 = arith.truncf %110 : vector<8x128xf32> to vector<8x128xbf16>
    %c0_72 = arith.constant 0 : index
    %c0_73 = arith.constant 0 : index
    %112 = vector.load %arg20[%c0_72, %c0_73] : memref<128x1024xbf16, #tpu.memory_space<vmem>>, vector<128x1024xbf16>
    %cst_74 = arith.constant dense<0.000000e+00> : vector<8x1024xf32>
    %113 = tpu.matmul %111, %112, %cst_74 {dimension_numbers = #tpu.dot_dimension_numbers<[1], [0], [0], [1], [0, 0, 1, 1], [], []>} : vector<8x128xbf16>, vector<128x1024xbf16>, vector<8x1024xf32> -> vector<8x1024xf32>
    %c0_75 = arith.constant 0 : index
    %c0_76 = arith.constant 0 : index
    %114 = vector.load %arg21[%c0_75, %c0_76] : memref<1x1024xf32, #tpu.memory_space<vmem>>, vector<1x1024xf32>
    %115 = vector.broadcast %114 : vector<1x1024xf32> to vector<8x1024xf32>
    %116 = arith.addf %113, %115 : vector<8x1024xf32>
    %cst_77 = arith.constant 0.000000e+00 : f32
    %117 = vector.broadcast %cst_77 : f32 to vector<8x1024xf32>
    %118 = arith.maximumf %116, %117 : vector<8x1024xf32>
    %119 = arith.truncf %118 : vector<8x1024xf32> to vector<8x1024xbf16>
    %c0_78 = arith.constant 0 : index
    %c0_79 = arith.constant 0 : index
    %120 = vector.load %arg22[%c0_78, %c0_79] : memref<1024x1024xbf16, #tpu.memory_space<vmem>>, vector<1024x1024xbf16>
    %cst_80 = arith.constant dense<0.000000e+00> : vector<8x1024xf32>
    %121 = tpu.matmul %119, %120, %cst_80 {dimension_numbers = #tpu.dot_dimension_numbers<[1], [0], [0], [1], [0, 0, 1, 1], [], []>} : vector<8x1024xbf16>, vector<1024x1024xbf16>, vector<8x1024xf32> -> vector<8x1024xf32>
    %c0_81 = arith.constant 0 : index
    %c0_82 = arith.constant 0 : index
    %122 = vector.load %arg23[%c0_81, %c0_82] : memref<1x1024xf32, #tpu.memory_space<vmem>>, vector<1x1024xf32>
    %123 = vector.broadcast %122 : vector<1x1024xf32> to vector<8x1024xf32>
    %124 = arith.addf %121, %123 : vector<8x1024xf32>
    %cst_83 = arith.constant 0.000000e+00 : f32
    %125 = vector.broadcast %cst_83 : f32 to vector<8x1024xf32>
    %126 = arith.maximumf %124, %125 : vector<8x1024xf32>
    %127 = arith.truncf %126 : vector<8x1024xf32> to vector<8x1024xbf16>
    %c0_84 = arith.constant 0 : index
    %c0_85 = arith.constant 0 : index
    %128 = vector.load %arg24[%c0_84, %c0_85] : memref<1024x256xbf16, #tpu.memory_space<vmem>>, vector<1024x256xbf16>
    %cst_86 = arith.constant dense<0.000000e+00> : vector<8x256xf32>
    %129 = tpu.matmul %127, %128, %cst_86 {dimension_numbers = #tpu.dot_dimension_numbers<[1], [0], [0], [1], [0, 0, 1, 1], [], []>} : vector<8x1024xbf16>, vector<1024x256xbf16>, vector<8x256xf32> -> vector<8x256xf32>
    %c0_87 = arith.constant 0 : index
    %c0_88 = arith.constant 0 : index
    %130 = vector.load %arg25[%c0_87, %c0_88] : memref<1x256xf32, #tpu.memory_space<vmem>>, vector<1x256xf32>
    %131 = vector.broadcast %130 : vector<1x256xf32> to vector<8x256xf32>
    %132 = arith.addf %129, %131 : vector<8x256xf32>
    %cst_89 = arith.constant 0.000000e+00 : f32
    %133 = vector.broadcast %cst_89 : f32 to vector<8x256xf32>
    %134 = arith.maximumf %132, %133 : vector<8x256xf32>
    %135 = arith.truncf %134 : vector<8x256xf32> to vector<8x256xbf16>
    %c0_90 = arith.constant 0 : index
    %c0_91 = arith.constant 0 : index
    %136 = vector.load %arg26[%c0_90, %c0_91] : memref<256x128xbf16, #tpu.memory_space<vmem>>, vector<256x128xbf16>
    %cst_92 = arith.constant dense<0.000000e+00> : vector<8x128xf32>
    %137 = tpu.matmul %135, %136, %cst_92 {dimension_numbers = #tpu.dot_dimension_numbers<[1], [0], [0], [1], [0, 0, 1, 1], [], []>} : vector<8x256xbf16>, vector<256x128xbf16>, vector<8x128xf32> -> vector<8x128xf32>
    %c0_93 = arith.constant 0 : index
    %c0_94 = arith.constant 0 : index
    %138 = vector.load %arg27[%c0_93, %c0_94] : memref<1x128xf32, #tpu.memory_space<vmem>>, vector<1x128xf32>
    %139 = vector.broadcast %138 : vector<1x128xf32> to vector<8x128xf32>
    %140 = arith.addf %137, %139 : vector<8x128xf32>
    %c0_95 = arith.constant 0 : index
    %c0_96 = arith.constant 0 : index
    %141 = vector.load %arg28[%c0_95, %c0_96] : memref<8x128xf32, #tpu.memory_space<vmem>>, vector<8x128xf32>
    tpu.vector_store %arg28[%c0_95, %c0_96], %140 {strides = array<i32>} : memref<8x128xf32, #tpu.memory_space<vmem>>, vector<8x128xf32>,
    return
  }
}

</mosaic_0001>

<llo_original>
// kernel: secpro_gnn_forward.1
$region0: #{secpro_gnn_forward.1}
  #allocation0 [shape = 'u32[]', space=smem, size = 0x4, offset = 0x4, fixed_abs, tag = 'smem constant byte address 0x4 - core index']
  #allocation1 [shape = 'u32[144,128]{1,0:T(1,128)}', space=vmem, size = 0x12000, scoped, tag = 'internal scratch']
  %s0 = inlined_call_operand.hbm [shape: f32[16,16], index: 0, kind: input, shape index: {}]
  %s1 = inlined_call_operand.hbm [shape: bf16[16,16], index: 1, kind: input, shape index: {}]
  %s2 = inlined_call_operand.hbm [shape: bf16[8,16], index: 2, kind: input, shape index: {}]
  %s3 = inlined_call_operand.vmem [shape: bf16[16,8], index: 3, kind: input, shape index: {}]
  %s4 = inlined_call_operand.vmem [shape: f32[8,1], index: 4, kind: input, shape index: {}]
  %s5 = inlined_call_operand.hbm [shape: bf16[16,32], index: 5, kind: input, shape index: {}]
  %s6 = inlined_call_operand.hbm [shape: bf16[16,32], index: 6, kind: input, shape index: {}]
  %s7 = inlined_call_operand.hbm [shape: f32[1,32], index: 7, kind: input, shape index: {}]
  %s8 = inlined_call_operand.hbm [shape: bf16[32,128], index: 8, kind: input, shape index: {}]
  %s9 = inlined_call_operand.vmem [shape: bf16[128,32], index: 9, kind: input, shape index: {}]
  %s10 = inlined_call_operand.hbm [shape: bf16[32,64], index: 10, kind: input, shape index: {}]
  %s11 = inlined_call_operand.hbm [shape: bf16[32,64], index: 11, kind: input, shape index: {}]
  %s12 = inlined_call_operand.hbm [shape: f32[1,64], index: 12, kind: input, shape index: {}]
  %s13 = inlined_call_operand.hbm [shape: bf16[64,128], index: 13, kind: input, shape index: {}]
  %s14 = inlined_call_operand.vmem [shape: bf16[128,64], index: 14, kind: input, shape index: {}]
  %s15 = inlined_call_operand.hbm [shape: bf16[64,128], index: 15, kind: input, shape index: {}]
  %s16 = inlined_call_operand.hbm [shape: bf16[64,128], index: 16, kind: input, shape index: {}]
  %s17 = inlined_call_operand.hbm [shape: f32[1,128], index: 17, kind: input, shape index: {}]
  %s18 = inlined_call_operand.hbm [shape: bf16[128,128], index: 18, kind: input, shape index: {}]
  %s19 = inlined_call_operand.hbm [shape: bf16[128,128], index: 19, kind: input, shape index: {}]
  %s20 = inlined_call_operand.hbm [shape: bf16[128,1024], index: 20, kind: input, shape index: {}]
  %s21 = inlined_call_operand.hbm [shape: f32[1,1024], index: 21, kind: input, shape index: {}]
  %s22 = inlined_call_operand.hbm [shape: bf16[1024,1024], index: 22, kind: input, shape index: {}]
  %s23 = inlined_call_operand.hbm [shape: f32[1,1024], index: 23, kind: input, shape index: {}]
  %s24 = inlined_call_operand.hbm [shape: bf16[1024,256], index: 24, kind: input, shape index: {}]
  %s25 = inlined_call_operand.hbm [shape: f32[1,256], index: 25, kind: input, shape index: {}]
  %s26 = inlined_call_operand.hbm [shape: bf16[256,128], index: 26, kind: input, shape index: {}]
  %s27 = inlined_call_operand.hbm [shape: f32[1,128], index: 27, kind: input, shape index: {}]
  %s28 = inlined_call_operand.vmem [shape: f32[8,128], index: 28, kind: output, shape index: {}]
  %s29 = sld [smem:[#allocation0]]
  $region218: #{secpro_gnn_forward.1} parent=0
    _
  %s31 = ssub.s32 1, %s29
  %s32 = scalar_select 0, %s31, %s29
  $region1: #{secpro_gnn_forward.1} parent=0
    #allocation2 [shape = 'u8[8192]{0}', space=vmem, size = 0x2000, scoped, tag = 'input window, operand 0, single buffered']
    #allocation3 [shape = 's32[1]{0}', space=sflag, size = 0x4, scoped, tag = 'scoped memory for secpro_gnn_forward.1']
    #allocation4 [shape = 'u8[4096]{0}', space=vmem, size = 0x1000, scoped, tag = 'input window, operand 1, single buffered']
    #allocation5 [shape = 's32[1]{0}', space=sflag, size = 0x4, scoped, tag = 'scoped memory for secpro_gnn_forward.1']
    #allocation6 [shape = 'u8[2048]{0}', space=vmem, size = 0x800, scoped, tag = 'input window, operand 2, single buffered']
    #allocation7 [shape = 'u8[4096]{0}', space=vmem, size = 0x1000, scoped, tag = 'input window, operand 5, single buffered']
    #allocation8 [shape = 's32[1]{0}', space=sflag, size = 0x4, scoped, tag = 'scoped memory for secpro_gnn_forward.1']
    #allocation9 [shape = 'u8[4096]{0}', space=vmem, size = 0x1000, scoped, tag = 'input window, operand 6, single buffered']
    #allocation10 [shape = 'u8[512]{0}', space=vmem, size = 0x400, scoped, tag = 'input window, operand 7, single buffered']
    #allocation11 [shape = 's32[1]{0}', space=sflag, size = 0x4, scoped, tag = 'scoped memory for secpro_gnn_forward.1']
    #allocation12 [shape = 'u8[8192]{0}', space=vmem, size = 0x2000, scoped, tag = 'input window, operand 8, single buffered']
    #allocation13 [shape = 'u8[8192]{0}', space=vmem, size = 0x2000, scoped, tag = 'input window, operand 10, single buffered']
    #allocation14 [shape = 's32[1]{0}', space=sflag, size = 0x4, scoped, tag = 'scoped memory for secpro_gnn_forward.1']
    #allocation15 [shape = 'u8[8192]{0}', space=vmem, size = 0x2000, scoped, tag = 'input window, operand 11, single buffered']
    #allocation16 [shape = 'u8[512]{0}', space=vmem, size = 0x400, scoped, tag = 'input window, operand 12, single buffered']
    #allocation17 [shape = 's32[1]{0}', space=sflag, size = 0x4, scoped, tag = 'scoped memory for secpro_gnn_forward.1']
    #allocation18 [shape = 'u8[16384]{0}', space=vmem, size = 0x4000, scoped, tag = 'input window, operand 13, single buffered']
    #allocation19 [shape = 'u8[16384]{0}', space=vmem, size = 0x4000, scoped, tag = 'input window, operand 15, single buffered']
    #allocation20 [shape = 's32[1]{0}', space=sflag, size = 0x4, scoped, tag = 'scoped memory for secpro_gnn_forward.1']
    #allocation21 [shape = 'u8[16384]{0}', space=vmem, size = 0x4000, scoped, tag = 'input window, operand 16, single buffered']
    #allocation22 [shape = 'u8[512]{0}', space=vmem, size = 0x400, scoped, tag = 'input window, operand 17, single buffered']
    #allocation23 [shape = 's32[1]{0}', space=sflag, size = 0x4, scoped, tag = 'scoped memory for secpro_gnn_forward.1']
    #allocation24 [shape = 'u8[32768]{0}', space=vmem, size = 0x8000, scoped, tag = 'input window, operand 18, single buffered']
    #allocation25 [shape = 'u8[32768]{0}', space=vmem, size = 0x8000, scoped, tag = 'input window, operand 19, single buffered']
    #allocation26 [shape = 's32[1]{0}', space=sflag, size = 0x4, scoped, tag = 'scoped memory for secpro_gnn_forward.1']
    #allocation27 [shape = 'u8[262144]{0}', space=vmem, size = 0x40000, scoped, tag = 'input window, operand 20, single buffered']
    #allocation28 [shape = 'u8[4096]{0}', space=vmem, size = 0x1000, scoped, tag = 'input window, operand 21, single buffered']
    #allocation29 [shape = 's32[1]{0}', space=sflag, size = 0x4, scoped, tag = 'scoped memory for secpro_gnn_forward.1']
    #allocation30 [shape = 'u8[2097152]{0}', space=vmem, size = 0x200000, scoped, tag = 'input window, operand 22, single buffered']
    #allocation31 [shape = 'u8[4096]{0}', space=vmem, size = 0x1000, scoped, tag = 'input window, operand 23, single buffered']
    #allocation32 [shape = 's32[1]{0}', space=sflag, size = 0x4, scoped, tag = 'scoped memory for secpro_gnn_forward.1']
    #allocation33 [shape = 'u8[524288]{0}', space=vmem, size = 0x80000, scoped, tag = 'input window, operand 24, single buffered']
    #allocation34 [shape = 'u8[1024]{0}', space=vmem, size = 0x400, scoped, tag = 'input window, operand 25, single buffered']
    #allocation35 [shape = 's32[1]{0}', space=sflag, size = 0x4, scoped, tag = 'scoped memory for secpro_gnn_forward.1']
    #allocation36 [shape = 'u8[65536]{0}', space=vmem, size = 0x10000, scoped, tag = 'input window, operand 26, single buffered']
    #allocation37 [shape = 'u8[512]{0}', space=vmem, size = 0x400, scoped, tag = 'input window, operand 27, single buffered']
    #allocation38 [shape = 's32[1]{0}', space=sflag, size = 0x4, scoped, tag = 'scoped memory for secpro_gnn_forward.1']
    %33 = vsyncpa [#allocation3], 0
    %34 = vsyncpa [#allocation5], 0
    %35 = vsyncpa [#allocation8], 0
    %36 = vsyncpa [#allocation11], 0
    %37 = vsyncpa [#allocation14], 0
    %38 = vsyncpa [#allocation17], 0
    %39 = vsyncpa [#allocation20], 0
    %40 = vsyncpa [#allocation23], 0
    %41 = vsyncpa [#allocation26], 0
    %42 = vsyncpa [#allocation29], 0
    %43 = vsyncpa [#allocation32], 0
    %44 = vsyncpa [#allocation35], 0
    %45 = vsyncpa [#allocation38], 0
    // Predicated region
    $region2: #{secpro_gnn_forward.1} parent=1 // pred_check
      _
    $region3: #{secpro_gnn_forward.1} parent=1 // pred_check_branch
      %47 = sbr.rel (0) target = $region5
    $region4: #{secpro_gnn_forward.1} parent=1 // pred_region
      %s49 = ssub.s32 256, 256
      %50 = vsyncadd [#allocation3], %s49
      %s51 = sshll.u32 [#allocation2], 4
      %s52 = int_to_ptr.vmem [resolvable:$true] %s51
      %57 = dma.hbm_to_vmem [thread:$0]  %s0, 256, %s52, [#allocation3], 128, 128, 8
    $region5: #{secpro_gnn_forward.1} parent=1 // pred_fallthru
      _
    // Predicated region
    $region6: #{secpro_gnn_forward.1} parent=1 // pred_check
      _
    $region7: #{secpro_gnn_forward.1} parent=1 // pred_check_branch
      %59 = sbr.rel (0) target = $region9
    $region8: #{secpro_gnn_forward.1} parent=1 // pred_region
      %s61 = ssub.s32 128, 128
      %62 = vsyncadd [#allocation5], %s61
      %s63 = sshll.u32 [#allocation4], 4
      %s64 = int_to_ptr.vmem [resolvable:$true] %s63
      %69 = dma.hbm_to_vmem [thread:$0]  %s1, 128, %s64, [#allocation5], 64, 64, 4
    $region9: #{secpro_gnn_forward.1} parent=1 // pred_fallthru
      _
    // Predicated region
    $region10: #{secpro_gnn_forward.1} parent=1 // pred_check
      _
    $region11: #{secpro_gnn_forward.1} parent=1 // pred_check_branch
      %71 = sbr.rel (0) target = $region13
    $region12: #{secpro_gnn_forward.1} parent=1 // pred_region
      %s73 = ssub.s32 64, 64
      %74 = vsyncadd [#allocation5], %s73
      %s76 = sshll.u32 [#allocation6], 4
      %s77 = int_to_ptr.vmem [resolvable:$true] %s76
      %79 = dma.hbm_to_vmem [thread:$0]  %s2, 64, %s77, [#allocation5]
    $region13: #{secpro_gnn_forward.1} parent=1 // pred_fallthru
      _
    // Predicated region
    $region14: #{secpro_gnn_forward.1} parent=1 // pred_check
      _
    $region15: #{secpro_gnn_forward.1} parent=1 // pred_check_branch
      %81 = sbr.rel (0) target = $region17
    $region16: #{secpro_gnn_forward.1} parent=1 // pred_region
      _
    $region17: #{secpro_gnn_forward.1} parent=1 // pred_fallthru
      _
    // Predicated region
    $region18: #{secpro_gnn_forward.1} parent=1 // pred_check
      _
    $region19: #{secpro_gnn_forward.1} parent=1 // pred_check_branch
      %83 = sbr.rel (0) target = $region21
    $region20: #{secpro_gnn_forward.1} parent=1 // pred_region
      _
    $region21: #{secpro_gnn_forward.1} parent=1 // pred_fallthru
      _
    // Predicated region
    $region22: #{secpro_gnn_forward.1} parent=1 // pred_check
      _
    $region23: #{secpro_gnn_forward.1} parent=1 // pred_check_branch
      %85 = sbr.rel (0) target = $region25
    $region24: #{secpro_gnn_forward.1} parent=1 // pred_region
      %s87 = ssub.s32 128, 128
      %88 = vsyncadd [#allocation8], %s87
      %s89 = sshll.u32 [#allocation7], 4
      %s90 = int_to_ptr.vmem [resolvable:$true] %s89
      %95 = dma.hbm_to_vmem [thread:$0]  %s5, 128, %s90, [#allocation8], 64, 64, 4
    $region25: #{secpro_gnn_forward.1} parent=1 // pred_fallthru
      _
    // Predicated region
    $region26: #{secpro_gnn_forward.1} parent=1 // pred_check
      _
    $region27: #{secpro_gnn_forward.1} parent=1 // pred_check_branch
      %97 = sbr.rel (0) target = $region29
    $region28: #{secpro_gnn_forward.1} parent=1 // pred_region
      %s99 = ssub.s32 128, 128
      %100 = vsyncadd [#allocation8], %s99
      %s101 = sshll.u32 [#allocation9], 4
      %s102 = int_to_ptr.vmem [resolvable:$true] %s101
      %107 = dma.hbm_to_vmem [thread:$0]  %s6, 128, %s102, [#allocation8], 64, 64, 4
    $region29: #{secpro_gnn_forward.1} parent=1 // pred_fallthru
      _
    // Predicated region
    $region30: #{secpro_gnn_forward.1} parent=1 // pred_check
      _
    $region31: #{secpro_gnn_forward.1} parent=1 // pred_check_branch
      %109 = sbr.rel (0) target = $region33
    $region32: #{secpro_gnn_forward.1} parent=1 // pred_region
      %s111 = ssub.s32 16, 16
      %112 = vsyncadd [#allocation11], %s111
      %s114 = sshll.u32 [#allocation10], 4
      %s115 = int_to_ptr.vmem [resolvable:$true] %s114
      %117 = dma.hbm_to_vmem [thread:$0]  %s7, 16, %s115, [#allocation11]
    $region33: #{secpro_gnn_forward.1} parent=1 // pred_fallthru
      _
    // Predicated region
    $region34: #{secpro_gnn_forward.1} parent=1 // pred_check
      _
    $region35: #{secpro_gnn_forward.1} parent=1 // pred_check_branch
      %119 = sbr.rel (0) target = $region37
    $region36: #{secpro_gnn_forward.1} parent=1 // pred_region
      %s121 = ssub.s32 256, 256
      %122 = vsyncadd [#allocation11], %s121
      %s123 = sshll.u32 [#allocation12], 4
      %s124 = int_to_ptr.vmem [resolvable:$true] %s123
      %129 = dma.hbm_to_vmem [thread:$0]  %s8, 256, %s124, [#allocation11], 64, 64, 4
    $region37: #{secpro_gnn_forward.1} parent=1 // pred_fallthru
      _
    // Predicated region
    $region38: #{secpro_gnn_forward.1} parent=1 // pred_check
      _
    $region39: #{secpro_gnn_forward.1} parent=1 // pred_check_branch
      %131 = sbr.rel (0) target = $region41
    $region40: #{secpro_gnn_forward.1} parent=1 // pred_region
      _
    $region41: #{secpro_gnn_forward.1} parent=1 // pred_fallthru
      _
    // Predicated region
    $region42: #{secpro_gnn_forward.1} parent=1 // pred_check
      _
    $region43: #{secpro_gnn_forward.1} parent=1 // pred_check_branch
      %133 = sbr.rel (0) target = $region45
    $region44: #{secpro_gnn_forward.1} parent=1 // pred_region
      %s135 = ssub.s32 256, 256
      %136 = vsyncadd [#allocation14], %s135
      %s137 = sshll.u32 [#allocation13], 4
      %s138 = int_to_ptr.vmem [resolvable:$true] %s137
      %143 = dma.hbm_to_vmem [thread:$0]  %s10, 256, %s138, [#allocation14], 64, 64, 4
    $region45: #{secpro_gnn_forward.1} parent=1 // pred_fallthru
      _
    // Predicated region
    $region46: #{secpro_gnn_forward.1} parent=1 // pred_check
      _
    $region47: #{secpro_gnn_forward.1} parent=1 // pred_check_branch
      %145 = sbr.rel (0) target = $region49
    $region48: #{secpro_gnn_forward.1} parent=1 // pred_region
      %s147 = ssub.s32 256, 256
      %148 = vsyncadd [#allocation14], %s147
      %s149 = sshll.u32 [#allocation15], 4
      %s150 = int_to_ptr.vmem [resolvable:$true] %s149
      %155 = dma.hbm_to_vmem [thread:$0]  %s11, 256, %s150, [#allocation14], 64, 64, 4
    $region49: #{secpro_gnn_forward.1} parent=1 // pred_fallthru
      _
    // Predicated region
    $region50: #{secpro_gnn_forward.1} parent=1 // pred_check
      _
    $region51: #{secpro_gnn_forward.1} parent=1 // pred_check_branch
      %157 = sbr.rel (0) target = $region53
    $region52: #{secpro_gnn_forward.1} parent=1 // pred_region
      %s159 = ssub.s32 16, 16
      %160 = vsyncadd [#allocation17], %s159
      %s162 = sshll.u32 [#allocation16], 4
      %s163 = int_to_ptr.vmem [resolvable:$true] %s162
      %165 = dma.hbm_to_vmem [thread:$0]  %s12, 16, %s163, [#allocation17]
    $region53: #{secpro_gnn_forward.1} parent=1 // pred_fallthru
      _
    // Predicated region
    $region54: #{secpro_gnn_forward.1} parent=1 // pred_check
      _
    $region55: #{secpro_gnn_forward.1} parent=1 // pred_check_branch
      %167 = sbr.rel (0) target = $region57
    $region56: #{secpro_gnn_forward.1} parent=1 // pred_region
      %s169 = ssub.s32 512, 512
      %170 = vsyncadd [#allocation17], %s169
      %s171 = sshll.u32 [#allocation18], 4
      %s172 = int_to_ptr.vmem [resolvable:$true] %s171
      %177 = dma.hbm_to_vmem [thread:$0]  %s13, 512, %s172, [#allocation17], 64, 64, 4
    $region57: #{secpro_gnn_forward.1} parent=1 // pred_fallthru
      _
    // Predicated region
    $region58: #{secpro_gnn_forward.1} parent=1 // pred_check
      _
    $region59: #{secpro_gnn_forward.1} parent=1 // pred_check_branch
      %179 = sbr.rel (0) target = $region61
    $region60: #{secpro_gnn_forward.1} parent=1 // pred_region
      _
    $region61: #{secpro_gnn_forward.1} parent=1 // pred_fallthru
      _
    // Predicated region
    $region62: #{secpro_gnn_forward.1} parent=1 // pred_check
      _
    $region63: #{secpro_gnn_forward.1} parent=1 // pred_check_branch
      %181 = sbr.rel (0) target = $region65
    $region64: #{secpro_gnn_forward.1} parent=1 // pred_region
      %s183 = ssub.s32 512, 512
      %184 = vsyncadd [#allocation20], %s183
      %s185 = sshll.u32 [#allocation19], 4
      %s186 = int_to_ptr.vmem [resolvable:$true] %s185
      %191 = dma.hbm_to_vmem [thread:$0]  %s15, 512, %s186, [#allocation20], 64, 64, 4
    $region65: #{secpro_gnn_forward.1} parent=1 // pred_fallthru
      _
    // Predicated region
    $region66: #{secpro_gnn_forward.1} parent=1 // pred_check
      _
    $region67: #{secpro_gnn_forward.1} parent=1 // pred_check_branch
      %193 = sbr.rel (0) target = $region69
    $region68: #{secpro_gnn_forward.1} parent=1 // pred_region
      %s195 = ssub.s32 512, 512
      %196 = vsyncadd [#allocation20], %s195
      %s197 = sshll.u32 [#allocation21], 4
      %s198 = int_to_ptr.vmem [resolvable:$true] %s197
      %203 = dma.hbm_to_vmem [thread:$0]  %s16, 512, %s198, [#allocation20], 64, 64, 4
    $region69: #{secpro_gnn_forward.1} parent=1 // pred_fallthru
      _
    // Predicated region
    $region70: #{secpro_gnn_forward.1} parent=1 // pred_check
      _
    $region71: #{secpro_gnn_forward.1} parent=1 // pred_check_branch
      %205 = sbr.rel (0) target = $region73
    $region72: #{secpro_gnn_forward.1} parent=1 // pred_region
      %s207 = ssub.s32 16, 16
      %208 = vsyncadd [#allocation23], %s207
      %s210 = sshll.u32 [#allocation22], 4
      %s211 = int_to_ptr.vmem [resolvable:$true] %s210
      %213 = dma.hbm_to_vmem [thread:$0]  %s17, 16, %s211, [#allocation23]
    $region73: #{secpro_gnn_forward.1} parent=1 // pred_fallthru
      _
    // Predicated region
    $region74: #{secpro_gnn_forward.1} parent=1 // pred_check
      _
    $region75: #{secpro_gnn_forward.1} parent=1 // pred_check_branch
      %215 = sbr.rel (0) target = $region77
    $region76: #{secpro_gnn_forward.1} parent=1 // pred_region
      %s217 = ssub.s32 1024, 1024
      %218 = vsyncadd [#allocation23], %s217
      %s219 = sshll.u32 [#allocation24], 4
      %s220 = int_to_ptr.vmem [resolvable:$true] %s219
      %225 = dma.hbm_to_vmem [thread:$0]  %s18, 1024, %s220, [#allocation23], 64, 64, 4
    $region77: #{secpro_gnn_forward.1} parent=1 // pred_fallthru
      _
    // Predicated region
    $region78: #{secpro_gnn_forward.1} parent=1 // pred_check
      _
    $region79: #{secpro_gnn_forward.1} parent=1 // pred_check_branch
      %227 = sbr.rel (0) target = $region81
    $region80: #{secpro_gnn_forward.1} parent=1 // pred_region
      %s229 = ssub.s32 1024, 1024
      %230 = vsyncadd [#allocation26], %s229
      %s231 = sshll.u32 [#allocation25], 4
      %s232 = int_to_ptr.vmem [resolvable:$true] %s231
      %237 = dma.hbm_to_vmem [thread:$0]  %s19, 1024, %s232, [#allocation26], 64, 64, 4
    $region81: #{secpro_gnn_forward.1} parent=1 // pred_fallthru
      _
    // Predicated region
    $region82: #{secpro_gnn_forward.1} parent=1 // pred_check
      _
    $region83: #{secpro_gnn_forward.1} parent=1 // pred_check_branch
      %239 = sbr.rel (0) target = $region85
    $region84: #{secpro_gnn_forward.1} parent=1 // pred_region
      %s241 = ssub.s32 8192, 8192
      %242 = vsyncadd [#allocation26], %s241
      %s243 = sshll.u32 [#allocation27], 4
      %s244 = int_to_ptr.vmem [resolvable:$true] %s243
      %249 = dma.hbm_to_vmem [thread:$0]  %s20, 8192, %s244, [#allocation26], 512, 512, 32
    $region85: #{secpro_gnn_forward.1} parent=1 // pred_fallthru
      _
    // Predicated region
    $region86: #{secpro_gnn_forward.1} parent=1 // pred_check
      _
    $region87: #{secpro_gnn_forward.1} parent=1 // pred_check_branch
      %251 = sbr.rel (0) target = $region89
    $region88: #{secpro_gnn_forward.1} parent=1 // pred_region
      %s253 = ssub.s32 128, 128
      %254 = vsyncadd [#allocation29], %s253
      %s256 = sshll.u32 [#allocation28], 4
      %s257 = int_to_ptr.vmem [resolvable:$true] %s256
      %259 = dma.hbm_to_vmem [thread:$0]  %s21, 128, %s257, [#allocation29]
    $region89: #{secpro_gnn_forward.1} parent=1 // pred_fallthru
      _
    // Predicated region
    $region90: #{secpro_gnn_forward.1} parent=1 // pred_check
      _
    $region91: #{secpro_gnn_forward.1} parent=1 // pred_check_branch
      %261 = sbr.rel (0) target = $region93
    $region92: #{secpro_gnn_forward.1} parent=1 // pred_region
      %s263 = ssub.s32 65536, 65536
      %264 = vsyncadd [#allocation29], %s263
      %s265 = sshll.u32 [#allocation30], 4
      %s266 = int_to_ptr.vmem [resolvable:$true] %s265
      %271 = dma.hbm_to_vmem [thread:$0]  %s22, 65536, %s266, [#allocation29], 512, 512, 32
    $region93: #{secpro_gnn_forward.1} parent=1 // pred_fallthru
      _
    // Predicated region
    $region94: #{secpro_gnn_forward.1} parent=1 // pred_check
      _
    $region95: #{secpro_gnn_forward.1} parent=1 // pred_check_branch
      %273 = sbr.rel (0) target = $region97
    $region96: #{secpro_gnn_forward.1} parent=1 // pred_region
      %s275 = ssub.s32 128, 128
      %276 = vsyncadd [#allocation32], %s275
      %s278 = sshll.u32 [#allocation31], 4
      %s279 = int_to_ptr.vmem [resolvable:$true] %s278
      %281 = dma.hbm_to_vmem [thread:$0]  %s23, 128, %s279, [#allocation32]
    $region97: #{secpro_gnn_forward.1} parent=1 // pred_fallthru
      _
    // Predicated region
    $region98: #{secpro_gnn_forward.1} parent=1 // pred_check
      _
    $region99: #{secpro_gnn_forward.1} parent=1 // pred_check_branch
      %283 = sbr.rel (0) target = $region101
    $region100: #{secpro_gnn_forward.1} parent=1 // pred_region
      %s285 = ssub.s32 16384, 16384
      %286 = vsyncadd [#allocation32], %s285
      %s287 = sshll.u32 [#allocation33], 4
      %s288 = int_to_ptr.vmem [resolvable:$true] %s287
      %293 = dma.hbm_to_vmem [thread:$0]  %s24, 16384, %s288, [#allocation32], 128, 128, 8
    $region101: #{secpro_gnn_forward.1} parent=1 // pred_fallthru
      _
    // Predicated region
    $region102: #{secpro_gnn_forward.1} parent=1 // pred_check
      _
    $region103: #{secpro_gnn_forward.1} parent=1 // pred_check_branch
      %295 = sbr.rel (0) target = $region105
    $region104: #{secpro_gnn_forward.1} parent=1 // pred_region
      %s297 = ssub.s32 32, 32
      %298 = vsyncadd [#allocation35], %s297
      %s300 = sshll.u32 [#allocation34], 4
      %s301 = int_to_ptr.vmem [resolvable:$true] %s300
      %303 = dma.hbm_to_vmem [thread:$0]  %s25, 32, %s301, [#allocation35]
    $region105: #{secpro_gnn_forward.1} parent=1 // pred_fallthru
      _
    // Predicated region
    $region106: #{secpro_gnn_forward.1} parent=1 // pred_check
      _
    $region107: #{secpro_gnn_forward.1} parent=1 // pred_check_branch
      %305 = sbr.rel (0) target = $region109
    $region108: #{secpro_gnn_forward.1} parent=1 // pred_region
      %s307 = ssub.s32 2048, 2048
      %308 = vsyncadd [#allocation35], %s307
      %s309 = sshll.u32 [#allocation36], 4
      %s310 = int_to_ptr.vmem [resolvable:$true] %s309
      %315 = dma.hbm_to_vmem [thread:$0]  %s26, 2048, %s310, [#allocation35], 64, 64, 4
    $region109: #{secpro_gnn_forward.1} parent=1 // pred_fallthru
      _
    // Predicated region
    $region110: #{secpro_gnn_forward.1} parent=1 // pred_check
      _
    $region111: #{secpro_gnn_forward.1} parent=1 // pred_check_branch
      %317 = sbr.rel (0) target = $region113
    $region112: #{secpro_gnn_forward.1} parent=1 // pred_region
      %s319 = ssub.s32 16, 16
      %320 = vsyncadd [#allocation38], %s319
      %s322 = sshll.u32 [#allocation37], 4
      %s323 = int_to_ptr.vmem [resolvable:$true] %s322
      %325 = dma.hbm_to_vmem [thread:$0]  %s27, 16, %s323, [#allocation38]
    $region113: #{secpro_gnn_forward.1} parent=1 // pred_fallthru
      _
    // Predicated region
    $region114: #{secpro_gnn_forward.1} parent=1 // pred_check
      _
    $region115: #{secpro_gnn_forward.1} parent=1 // pred_check_branch
      %327 = sbr.rel (0) target = $region117
    $region116: #{secpro_gnn_forward.1} parent=1 // pred_region
      %328 = dma.done [#allocation3], 256
    $region117: #{secpro_gnn_forward.1} parent=1 // pred_fallthru
      _
    // Predicated region
    $region118: #{secpro_gnn_forward.1} parent=1 // pred_check
      _
    $region119: #{secpro_gnn_forward.1} parent=1 // pred_check_branch
      %330 = sbr.rel (0) target = $region121
    $region120: #{secpro_gnn_forward.1} parent=1 // pred_region
      %331 = dma.done [#allocation5], 128
    $region121: #{secpro_gnn_forward.1} parent=1 // pred_fallthru
      _
    // Predicated region
    $region122: #{secpro_gnn_forward.1} parent=1 // pred_check
      _
    $region123: #{secpro_gnn_forward.1} parent=1 // pred_check_branch
      %333 = sbr.rel (0) target = $region125
    $region124: #{secpro_gnn_forward.1} parent=1 // pred_region
      %334 = dma.done [#allocation5], 64
    $region125: #{secpro_gnn_forward.1} parent=1 // pred_fallthru
      _
    // Predicated region
    $region126: #{secpro_gnn_forward.1} parent=1 // pred_check
      _
    $region127: #{secpro_gnn_forward.1} parent=1 // pred_check_branch
      %336 = sbr.rel (0) target = $region129
    $region128: #{secpro_gnn_forward.1} parent=1 // pred_region
      %337 = dma.done [#allocation8], 128
    $region129: #{secpro_gnn_forward.1} parent=1 // pred_fallthru
      _
    // Predicated region
    $region130: #{secpro_gnn_forward.1} parent=1 // pred_check
      _
    $region131: #{secpro_gnn_forward.1} parent=1 // pred_check_branch
      %339 = sbr.rel (0) target = $region133
    $region132: #{secpro_gnn_forward.1} parent=1 // pred_region
      %340 = dma.done [#allocation8], 128
    $region133: #{secpro_gnn_forward.1} parent=1 // pred_fallthru
      _
    // Predicated region
    $region134: #{secpro_gnn_forward.1} parent=1 // pred_check
      _
    $region135: #{secpro_gnn_forward.1} parent=1 // pred_check_branch
      %342 = sbr.rel (0) target = $region137
    $region136: #{secpro_gnn_forward.1} parent=1 // pred_region
      %343 = dma.done [#allocation11], 16
    $region137: #{secpro_gnn_forward.1} parent=1 // pred_fallthru
      _
    // Predicated region
    $region138: #{secpro_gnn_forward.1} parent=1 // pred_check
      _
    $region139: #{secpro_gnn_forward.1} parent=1 // pred_check_branch
      %345 = sbr.rel (0) target = $region141
    $region140: #{secpro_gnn_forward.1} parent=1 // pred_region
      %346 = dma.done [#allocation11], 256
    $region141: #{secpro_gnn_forward.1} parent=1 // pred_fallthru
      _
    // Predicated region
    $region142: #{secpro_gnn_forward.1} parent=1 // pred_check
      _
    $region143: #{secpro_gnn_forward.1} parent=1 // pred_check_branch
      %348 = sbr.rel (0) target = $region145
    $region144: #{secpro_gnn_forward.1} parent=1 // pred_region
      %349 = dma.done [#allocation14], 256
    $region145: #{secpro_gnn_forward.1} parent=1 // pred_fallthru
      _
    // Predicated region
    $region146: #{secpro_gnn_forward.1} parent=1 // pred_check
      _
    $region147: #{secpro_gnn_forward.1} parent=1 // pred_check_branch
      %351 = sbr.rel (0) target = $region149
    $region148: #{secpro_gnn_forward.1} parent=1 // pred_region
      %352 = dma.done [#allocation14], 256
    $region149: #{secpro_gnn_forward.1} parent=1 // pred_fallthru
      _
    // Predicated region
    $region150: #{secpro_gnn_forward.1} parent=1 // pred_check
      _
    $region151: #{secpro_gnn_forward.1} parent=1 // pred_check_branch
      %354 = sbr.rel (0) target = $region153
    $region152: #{secpro_gnn_forward.1} parent=1 // pred_region
      %355 = dma.done [#allocation17], 16
    $region153: #{secpro_gnn_forward.1} parent=1 // pred_fallthru
      _
    // Predicated region
    $region154: #{secpro_gnn_forward.1} parent=1 // pred_check
      _
    $region155: #{secpro_gnn_forward.1} parent=1 // pred_check_branch
      %357 = sbr.rel (0) target = $region157
    $region156: #{secpro_gnn_forward.1} parent=1 // pred_region
      %358 = dma.done [#allocation17], 512
    $region157: #{secpro_gnn_forward.1} parent=1 // pred_fallthru
      _
    // Predicated region
    $region158: #{secpro_gnn_forward.1} parent=1 // pred_check
      _
    $region159: #{secpro_gnn_forward.1} parent=1 // pred_check_branch
      %360 = sbr.rel (0) target = $region161
    $region160: #{secpro_gnn_forward.1} parent=1 // pred_region
      %361 = dma.done [#allocation20], 512
    $region161: #{secpro_gnn_forward.1} parent=1 // pred_fallthru
      _
    // Predicated region
    $region162: #{secpro_gnn_forward.1} parent=1 // pred_check
      _
    $region163: #{secpro_gnn_forward.1} parent=1 // pred_check_branch
      %363 = sbr.rel (0) target = $region165
    $region164: #{secpro_gnn_forward.1} parent=1 // pred_region
      %364 = dma.done [#allocation20], 512
    $region165: #{secpro_gnn_forward.1} parent=1 // pred_fallthru
      _
    // Predicated region
    $region166: #{secpro_gnn_forward.1} parent=1 // pred_check
      _
    $region167: #{secpro_gnn_forward.1} parent=1 // pred_check_branch
      %366 = sbr.rel (0) target = $region169
    $region168: #{secpro_gnn_forward.1} parent=1 // pred_region
      %367 = dma.done [#allocation23], 16
    $region169: #{secpro_gnn_forward.1} parent=1 // pred_fallthru
      _
    // Predicated region
    $region170: #{secpro_gnn_forward.1} parent=1 // pred_check
      _
    $region171: #{secpro_gnn_forward.1} parent=1 // pred_check_branch
      %369 = sbr.rel (0) target = $region173
    $region172: #{secpro_gnn_forward.1} parent=1 // pred_region
      %370 = dma.done [#allocation23], 1024
    $region173: #{secpro_gnn_forward.1} parent=1 // pred_fallthru
      _
    // Predicated region
    $region174: #{secpro_gnn_forward.1} parent=1 // pred_check
      _
    $region175: #{secpro_gnn_forward.1} parent=1 // pred_check_branch
      %372 = sbr.rel (0) target = $region177
    $region176: #{secpro_gnn_forward.1} parent=1 // pred_region
      %373 = dma.done [#allocation26], 1024
    $region177: #{secpro_gnn_forward.1} parent=1 // pred_fallthru
      _
    // Predicated region
    $region178: #{secpro_gnn_forward.1} parent=1 // pred_check
      _
    $region179: #{secpro_gnn_forward.1} parent=1 // pred_check_branch
      %375 = sbr.rel (0) target = $region181
    $region180: #{secpro_gnn_forward.1} parent=1 // pred_region
      %376 = dma.done [#allocation26], 8192
    $region181: #{secpro_gnn_forward.1} parent=1 // pred_fallthru
      _
    // Predicated region
    $region182: #{secpro_gnn_forward.1} parent=1 // pred_check
      _
    $region183: #{secpro_gnn_forward.1} parent=1 // pred_check_branch
      %378 = sbr.rel (0) target = $region185
    $region184: #{secpro_gnn_forward.1} parent=1 // pred_region
      %379 = dma.done [#allocation29], 128
    $region185: #{secpro_gnn_forward.1} parent=1 // pred_fallthru
      _
    // Predicated region
    $region186: #{secpro_gnn_forward.1} parent=1 // pred_check
      _
    $region187: #{secpro_gnn_forward.1} parent=1 // pred_check_branch
      %381 = sbr.rel (0) target = $region189
    $region188: #{secpro_gnn_forward.1} parent=1 // pred_region
      %382 = dma.done [#allocation29], 65536
    $region189: #{secpro_gnn_forward.1} parent=1 // pred_fallthru
      _
    // Predicated region
    $region190: #{secpro_gnn_forward.1} parent=1 // pred_check
      _
    $region191: #{secpro_gnn_forward.1} parent=1 // pred_check_branch
      %384 = sbr.rel (0) target = $region193
    $region192: #{secpro_gnn_forward.1} parent=1 // pred_region
      %385 = dma.done [#allocation32], 128
    $region193: #{secpro_gnn_forward.1} parent=1 // pred_fallthru
      _
    // Predicated region
    $region194: #{secpro_gnn_forward.1} parent=1 // pred_check
      _
    $region195: #{secpro_gnn_forward.1} parent=1 // pred_check_branch
      %387 = sbr.rel (0) target = $region197
    $region196: #{secpro_gnn_forward.1} parent=1 // pred_region
      %388 = dma.done [#allocation32], 16384
    $region197: #{secpro_gnn_forward.1} parent=1 // pred_fallthru
      _
    // Predicated region
    $region198: #{secpro_gnn_forward.1} parent=1 // pred_check
      _
    $region199: #{secpro_gnn_forward.1} parent=1 // pred_check_branch
      %390 = sbr.rel (0) target = $region201
    $region200: #{secpro_gnn_forward.1} parent=1 // pred_region
      %391 = dma.done [#allocation35], 32
    $region201: #{secpro_gnn_forward.1} parent=1 // pred_fallthru
      _
    // Predicated region
    $region202: #{secpro_gnn_forward.1} parent=1 // pred_check
      _
    $region203: #{secpro_gnn_forward.1} parent=1 // pred_check_branch
      %393 = sbr.rel (0) target = $region205
    $region204: #{secpro_gnn_forward.1} parent=1 // pred_region
      %394 = dma.done [#allocation35], 2048
    $region205: #{secpro_gnn_forward.1} parent=1 // pred_fallthru
      _
    // Predicated region
    $region206: #{secpro_gnn_forward.1} parent=1 // pred_check
      _
    $region207: #{secpro_gnn_forward.1} parent=1 // pred_check_branch
      %396 = sbr.rel (0) target = $region209
    $region208: #{secpro_gnn_forward.1} parent=1 // pred_region
      %397 = dma.done [#allocation38], 16
    $region209: #{secpro_gnn_forward.1} parent=1 // pred_fallthru
      _
    %v399 = vld [vmem:[#allocation4] sm:$0xf]
    %v400 = vld [vmem:[#allocation4 + $0x4] sm:$0xf]
    %v401 = vld [vmem:[#allocation6] sm:$0xf]
    %v402 = vld [vmem:[%s3] sm:$0xf]
    %v403 = vld [vmem:[%s3 + $0x4] sm:$0xf]
    %v404 = vld [vmem:[%s4] sm:$0xff]
    %v405 = vld [vmem:[#allocation2] sm:$0xff]
    %v406 = vld [vmem:[#allocation2 + $0x8] sm:$0xff]
    %v407 = vpack.c.bf16 %v406, %v405
    %v410 = vunpack.c.l.b16 %v399
    %v411 = vunpack.c.l.b16 %v400
    %v412 = vpack.c.b16 %v411, %v410
    %vm413 = vcmask 130048
    %v415 = vsel %vm413, %v412, 0
    %417 = vmatprep.subr.bf16.mxu0 0
    %418 = vmatpush1.bf16.msra.mxu0 %v407
    %419 = vmatprep.subr.bf16.mxu0 0
    %420 = vmatpush1.bf16.msra.mxu0 0
    %421 = vmatprep.subr.bf16.mxu0 0
    %422 = vmatpush1.bf16.msra.mxu0 0
    %423 = vmatprep.subr.bf16.mxu0 0
    %424 = vmatpush1.bf16.msra.mxu0 0
    %425 = vmatprep.subr.bf16.mxu0 0
    %426 = vmatpush1.bf16.msra.mxu0 0
    %427 = vmatprep.subr.bf16.mxu0 0
    %428 = vmatpush1.bf16.msra.mxu0 0
    %429 = vmatprep.subr.bf16.mxu0 0
    %430 = vmatpush1.bf16.msra.mxu0 0
    %431 = vmatprep.subr.bf16.mxu0 0
    %432 = vmatpush1.bf16.msra.mxu0 0
    %433 = vmatprep.subr.bf16.mxu0 0
    %434 = vmatpush1.bf16.msra.mxu0 0
    %435 = vmatprep.subr.bf16.mxu0 0
    %436 = vmatpush1.bf16.msra.mxu0 0
    %437 = vmatprep.subr.bf16.mxu0 0
    %438 = vmatpush1.bf16.msra.mxu0 0
    %439 = vmatprep.subr.bf16.mxu0 0
    %440 = vmatpush1.bf16.msra.mxu0 0
    %441 = vmatprep.subr.bf16.mxu0 0
    %442 = vmatpush1.bf16.msra.mxu0 0
    %443 = vmatprep.subr.bf16.mxu0 0
    %444 = vmatpush1.bf16.msra.mxu0 0
    %445 = vmatprep.subr.bf16.mxu0 0
    %446 = vmatpush1.bf16.msra.mxu0 0
    %447 = vmatprep.subr.bf16.mxu0 0
    %448 = vmatpush1.bf16.msra.mxu0 0
    %449 = vmatprep.mubr.bf16.mxu0 0
    %450 = vmatmul.mubr.bf16.gmra.mrb[0].mxu0 %v415
    %v451 = vpop.f32.mrb[0].mxu0
    %v452 = vadd.f32 0.0, %v451
    %v453 = vpop.f32.mrb[0].mxu0
    %v454 = vpop.f32.mrb[0].mxu0
    %v455 = vadd.f32 0.0, %v454
    %v456 = vpop.f32.mrb[0].mxu0
    %457 = vdwg.mxu0
    %v458 = vld [vmem:[#allocation7] sm:$0xf]
    %v459 = vld [vmem:[#allocation7 + $0x4] sm:$0xf]
    %v460 = vpack.c.bf16 %v455, %v452
    %v461 = vld [vmem:[#allocation9] sm:$0xf]
    %v462 = vld [vmem:[#allocation9 + $0x4] sm:$0xf]
    %v465 = vunpack.c.l.b16 %v461
    %v466 = vunpack.c.l.b16 %v462
    %v467 = vpack.c.b16 %v466, %v465
    %v470 = vsel %vm413, %v460, 0
    %472 = vmatprep.subr.bf16.mxu0 0
    %473 = vmatpush1.bf16.msra.mxu0 %v467
    %474 = vmatprep.subr.bf16.mxu0 0
    %475 = vmatpush1.bf16.msra.mxu0 0
    %476 = vmatprep.subr.bf16.mxu0 0
    %477 = vmatpush1.bf16.msra.mxu0 0
    %478 = vmatprep.subr.bf16.mxu0 0
    %479 = vmatpush1.bf16.msra.mxu0 0
    %480 = vmatprep.subr.bf16.mxu0 0
    %481 = vmatpush1.bf16.msra.mxu0 0
    %482 = vmatprep.subr.bf16.mxu0 0
    %483 = vmatpush1.bf16.msra.mxu0 0
    %484 = vmatprep.subr.bf16.mxu0 0
    %485 = vmatpush1.bf16.msra.mxu0 0
    %486 = vmatprep.subr.bf16.mxu0 0
    %487 = vmatpush1.bf16.msra.mxu0 0
    %488 = vmatprep.subr.bf16.mxu0 0
    %489 = vmatpush1.bf16.msra.mxu0 0
    %490 = vmatprep.subr.bf16.mxu0 0
    %491 = vmatpush1.bf16.msra.mxu0 0
    %492 = vmatprep.subr.bf16.mxu0 0
    %493 = vmatpush1.bf16.msra.mxu0 0
    %494 = vmatprep.subr.bf16.mxu0 0
    %495 = vmatpush1.bf16.msra.mxu0 0
    %496 = vmatprep.subr.bf16.mxu0 0
    %497 = vmatpush1.bf16.msra.mxu0 0
    %498 = vmatprep.subr.bf16.mxu0 0
    %499 = vmatpush1.bf16.msra.mxu0 0
    %500 = vmatprep.subr.bf16.mxu0 0
    %501 = vmatpush1.bf16.msra.mxu0 0
    %502 = vmatprep.subr.bf16.mxu0 0
    %503 = vmatpush1.bf16.msra.mxu0 0
    %504 = vmatprep.mubr.bf16.mxu0 0
    %505 = vmatmul.mubr.bf16.gmra.mrb[0].mxu0 %v470
    %v506 = vpop.f32.mrb[0].mxu0
    %v507 = vadd.f32 0.0, %v506
    %v508 = vpop.f32.mrb[0].mxu0
    %v509 = vpop.f32.mrb[0].mxu0
    %v510 = vadd.f32 0.0, %v509
    %v511 = vpop.f32.mrb[0].mxu0
    %512 = vdwg.mxu0
    %v515 = vunpack.c.l.b16 %v458
    %v516 = vunpack.c.l.b16 %v459
    %v517 = vpack.c.b16 %v516, %v515
    %v520 = vsel %vm413, %v407, 0
    %522 = vmatprep.subr.bf16.mxu0 0
    %523 = vmatpush1.bf16.msra.mxu0 %v517
    %524 = vmatprep.subr.bf16.mxu0 0
    %525 = vmatpush1.bf16.msra.mxu0 0
    %526 = vmatprep.subr.bf16.mxu0 0
    %527 = vmatpush1.bf16.msra.mxu0 0
    %528 = vmatprep.subr.bf16.mxu0 0
    %529 = vmatpush1.bf16.msra.mxu0 0
    %530 = vmatprep.subr.bf16.mxu0 0
    %531 = vmatpush1.bf16.msra.mxu0 0
    %532 = vmatprep.subr.bf16.mxu0 0
    %533 = vmatpush1.bf16.msra.mxu0 0
    %534 = vmatprep.subr.bf16.mxu0 0
    %535 = vmatpush1.bf16.msra.mxu0 0
    %536 = vmatprep.subr.bf16.mxu0 0
    %537 = vmatpush1.bf16.msra.mxu0 0
    %538 = vmatprep.subr.bf16.mxu0 0
    %539 = vmatpush1.bf16.msra.mxu0 0
    %540 = vmatprep.subr.bf16.mxu0 0
    %541 = vmatpush1.bf16.msra.mxu0 0
    %542 = vmatprep.subr.bf16.mxu0 0
    %543 = vmatpush1.bf16.msra.mxu0 0
    %544 = vmatprep.subr.bf16.mxu0 0
    %545 = vmatpush1.bf16.msra.mxu0 0
    %546 = vmatprep.subr.bf16.mxu0 0
    %547 = vmatpush1.bf16.msra.mxu0 0
    %548 = vmatprep.subr.bf16.mxu0 0
    %549 = vmatpush1.bf16.msra.mxu0 0
    %550 = vmatprep.subr.bf16.mxu0 0
    %551 = vmatpush1.bf16.msra.mxu0 0
    %552 = vmatprep.subr.bf16.mxu0 0
    %553 = vmatpush1.bf16.msra.mxu0 0
    %554 = vmatprep.mubr.bf16.mxu0 0
    %555 = vmatmul.mubr.bf16.gmra.mrb[0].mxu0 %v520
    %v556 = vpop.f32.mrb[0].mxu0
    %v557 = vadd.f32 %v507, %v556
    %v558 = vpop.f32.mrb[0].mxu0
    %v559 = vpop.f32.mrb[0].mxu0
    %v560 = vadd.f32 %v510, %v559
    %v561 = vpop.f32.mrb[0].mxu0
    %562 = vdwg.mxu0
    %v563 = vld [vmem:[#allocation10] sm:$0x1]
    %v565 = vlaneseq
    %v566 = vshrl.u32 %v565, 7
    %v567 = vsub.s32 0, %v566
    %v568 = vrot.slane %v563, %v567
    %v570 = vadd.f32 %v557, %v568
    %v571 = vadd.f32 %v560, %v568
    %v572 = vmax.f32 %v570, 0.0
    %v573 = vmax.f32 %v571, 0.0
    %v574 = vpack.c.bf16 %v573, %v572
    %v576 = vsel %vm413, %v401, 0
    %578 = vmatprep.subr.bf16.mxu0 0
    %579 = vmatpush1.bf16.msra.mxu0 %v574
    %580 = vmatprep.subr.bf16.mxu0 0
    %581 = vmatpush1.bf16.msra.mxu0 0
    %582 = vmatprep.subr.bf16.mxu0 0
    %583 = vmatpush1.bf16.msra.mxu0 0
    %584 = vmatprep.subr.bf16.mxu0 0
    %585 = vmatpush1.bf16.msra.mxu0 0
    %586 = vmatprep.subr.bf16.mxu0 0
    %587 = vmatpush1.bf16.msra.mxu0 0
    %588 = vmatprep.subr.bf16.mxu0 0
    %589 = vmatpush1.bf16.msra.mxu0 0
    %590 = vmatprep.subr.bf16.mxu0 0
    %591 = vmatpush1.bf16.msra.mxu0 0
    %592 = vmatprep.subr.bf16.mxu0 0
    %593 = vmatpush1.bf16.msra.mxu0 0
    %594 = vmatprep.subr.bf16.mxu0 0
    %595 = vmatpush1.bf16.msra.mxu0 0
    %596 = vmatprep.subr.bf16.mxu0 0
    %597 = vmatpush1.bf16.msra.mxu0 0
    %598 = vmatprep.subr.bf16.mxu0 0
    %599 = vmatpush1.bf16.msra.mxu0 0
    %600 = vmatprep.subr.bf16.mxu0 0
    %601 = vmatpush1.bf16.msra.mxu0 0
    %602 = vmatprep.subr.bf16.mxu0 0
    %603 = vmatpush1.bf16.msra.mxu0 0
    %604 = vmatprep.subr.bf16.mxu0 0
    %605 = vmatpush1.bf16.msra.mxu0 0
    %606 = vmatprep.subr.bf16.mxu0 0
    %607 = vmatpush1.bf16.msra.mxu0 0
    %608 = vmatprep.subr.bf16.mxu0 0
    %609 = vmatpush1.bf16.msra.mxu0 0
    %610 = vmatprep.mubr.bf16.mxu0 0
    %611 = vmatmul.mubr.bf16.gmra.mrb[0].mxu0 %v576
    %v612 = vpop.f32.mrb[0].mxu0
    %v613 = vadd.f32 0.0, %v612
    %v614 = vpop.f32.mrb[0].mxu0
    %v615 = vpop.f32.mrb[0].mxu0
    %v616 = vpop.f32.mrb[0].mxu0
    %617 = vdwg.mxu0
    %619 = vset.pattern.permute.xlu0 0
    %620 = vperm.xlu0 %619, %v404
    %v621 = vpop.permute.xlu0 %620
    %v623 = vmul.f32 %v613, %v621
    %v624 = vpack.c.bf16 %v623, %v623
    %v625 = vld [vmem:[#allocation12] sm:$0xf]
    %v626 = vld [vmem:[#allocation12 + $0x4] sm:$0xf]
    %v627 = vld [vmem:[#allocation12 + $0x8] sm:$0xf]
    %v628 = vld [vmem:[#allocation12 + $0xc] sm:$0xf]
    %v633 = vunpack.c.l.b16 %v625
    %v634 = vunpack.c.l.b16 %v626
    %v635 = vunpack.c.l.b16 %v627
    %v636 = vunpack.c.l.b16 %v628
    %v637 = vpack.c.b16 %v634, %v633
    %v638 = vpack.c.b16 %v636, %v635
    %vm641 = vcmask 261120
    %v643 = vsel %vm641, %v624, 0
    %645 = vmatprep.subr.bf16.mxu0 0
    %646 = vmatpush1.bf16.msra.mxu0 %v637
    %647 = vmatprep.subr.bf16.mxu0 0
    %648 = vmatpush1.bf16.msra.mxu0 %v638
    %649 = vmatprep.subr.bf16.mxu0 0
    %650 = vmatpush1.bf16.msra.mxu0 0
    %651 = vmatprep.subr.bf16.mxu0 0
    %652 = vmatpush1.bf16.msra.mxu0 0
    %653 = vmatprep.subr.bf16.mxu0 0
    %654 = vmatpush1.bf16.msra.mxu0 0
    %655 = vmatprep.subr.bf16.mxu0 0
    %656 = vmatpush1.bf16.msra.mxu0 0
    %657 = vmatprep.subr.bf16.mxu0 0
    %658 = vmatpush1.bf16.msra.mxu0 0
    %659 = vmatprep.subr.bf16.mxu0 0
    %660 = vmatpush1.bf16.msra.mxu0 0
    %661 = vmatprep.subr.bf16.mxu0 0
    %662 = vmatpush1.bf16.msra.mxu0 0
    %663 = vmatprep.subr.bf16.mxu0 0
    %664 = vmatpush1.bf16.msra.mxu0 0
    %665 = vmatprep.subr.bf16.mxu0 0
    %666 = vmatpush1.bf16.msra.mxu0 0
    %667 = vmatprep.subr.bf16.mxu0 0
    %668 = vmatpush1.bf16.msra.mxu0 0
    %669 = vmatprep.subr.bf16.mxu0 0
    %670 = vmatpush1.bf16.msra.mxu0 0
    %671 = vmatprep.subr.bf16.mxu0 0
    %672 = vmatpush1.bf16.msra.mxu0 0
    %673 = vmatprep.subr.bf16.mxu0 0
    %674 = vmatpush1.bf16.msra.mxu0 0
    %675 = vmatprep.subr.bf16.mxu0 0
    %676 = vmatpush1.bf16.msra.mxu0 0
    %677 = vmatprep.mubr.bf16.mxu0 0
    %678 = vmatmul.mubr.bf16.gmra.mrb[0].mxu0 %v643
    %v679 = vpop.f32.mrb[0].mxu0
    %v680 = vadd.f32 0.0, %v679
    %v681 = vpop.f32.mrb[0].mxu0
    %v682 = vpop.f32.mrb[0].mxu0
    %v683 = vpop.f32.mrb[0].mxu0
    %684 = vdwg.mxu0
    %v685 = vmax.f32 %v680, 0.0
    %v686 = vpack.c.bf16 %v685, %v685
    %v687 = vld [vmem:[%s9] sm:$0xf]
    %v688 = vld [vmem:[%s9 + $0x4] sm:$0xf]
    %v689 = vld [vmem:[%s9 + $0x8] sm:$0xf]
    %v690 = vld [vmem:[%s9 + $0xc] sm:$0xf]
    %v691 = vld [vmem:[%s9 + $0x10] sm:$0xf]
    %v692 = vld [vmem:[%s9 + $0x14] sm:$0xf]
    %v693 = vld [vmem:[%s9 + $0x18] sm:$0xf]
    %v694 = vld [vmem:[%s9 + $0x1c] sm:$0xf]
    %v695 = vld [vmem:[%s9 + $0x20] sm:$0xf]
    %v696 = vld [vmem:[%s9 + $0x24] sm:$0xf]
    %v697 = vld [vmem:[%s9 + $0x28] sm:$0xf]
    %v698 = vld [vmem:[%s9 + $0x2c] sm:$0xf]
    %v699 = vld [vmem:[%s9 + $0x30] sm:$0xf]
    %v700 = vld [vmem:[%s9 + $0x34] sm:$0xf]
    %v701 = vld [vmem:[%s9 + $0x38] sm:$0xf]
    %v702 = vld [vmem:[%s9 + $0x3c] sm:$0xf]
    %v719 = vunpack.c.l.b16 %v687
    %v720 = vunpack.c.l.b16 %v688
    %v721 = vunpack.c.l.b16 %v689
    %v722 = vunpack.c.l.b16 %v690
    %v723 = vunpack.c.l.b16 %v691
    %v724 = vunpack.c.l.b16 %v692
    %v725 = vunpack.c.l.b16 %v693
    %v726 = vunpack.c.l.b16 %v694
    %v727 = vunpack.c.l.b16 %v695
    %v728 = vunpack.c.l.b16 %v696
    %v729 = vunpack.c.l.b16 %v697
    %v730 = vunpack.c.l.b16 %v698
    %v731 = vunpack.c.l.b16 %v699
    %v732 = vunpack.c.l.b16 %v700
    %v733 = vunpack.c.l.b16 %v701
    %v734 = vunpack.c.l.b16 %v702
    %v735 = vpack.c.b16 %v720, %v719
    %v736 = vpack.c.b16 %v722, %v721
    %v737 = vpack.c.b16 %v724, %v723
    %v738 = vpack.c.b16 %v726, %v725
    %v739 = vpack.c.b16 %v728, %v727
    %v740 = vpack.c.b16 %v730, %v729
    %v741 = vpack.c.b16 %v732, %v731
    %v742 = vpack.c.b16 %v734, %v733
    %751 = vmatprep.subr.bf16.mxu0 0
    %752 = vmatpush1.bf16.msra.mxu0 %v735
    %753 = vmatprep.subr.bf16.mxu0 0
    %754 = vmatpush1.bf16.msra.mxu0 %v736
    %755 = vmatprep.subr.bf16.mxu0 0
    %756 = vmatpush1.bf16.msra.mxu0 %v737
    %757 = vmatprep.subr.bf16.mxu0 0
    %758 = vmatpush1.bf16.msra.mxu0 %v738
    %759 = vmatprep.subr.bf16.mxu0 0
    %760 = vmatpush1.bf16.msra.mxu0 %v739
    %761 = vmatprep.subr.bf16.mxu0 0
    %762 = vmatpush1.bf16.msra.mxu0 %v740
    %763 = vmatprep.subr.bf16.mxu0 0
    %764 = vmatpush1.bf16.msra.mxu0 %v741
    %765 = vmatprep.subr.bf16.mxu0 0
    %766 = vmatpush1.bf16.msra.mxu0 %v742
    %767 = vmatprep.subr.bf16.mxu0 0
    %768 = vmatpush1.bf16.msra.mxu0 0
    %769 = vmatprep.subr.bf16.mxu0 0
    %770 = vmatpush1.bf16.msra.mxu0 0
    %771 = vmatprep.subr.bf16.mxu0 0
    %772 = vmatpush1.bf16.msra.mxu0 0
    %773 = vmatprep.subr.bf16.mxu0 0
    %774 = vmatpush1.bf16.msra.mxu0 0
    %775 = vmatprep.subr.bf16.mxu0 0
    %776 = vmatpush1.bf16.msra.mxu0 0
    %777 = vmatprep.subr.bf16.mxu0 0
    %778 = vmatpush1.bf16.msra.mxu0 0
    %779 = vmatprep.subr.bf16.mxu0 0
    %780 = vmatpush1.bf16.msra.mxu0 0
    %781 = vmatprep.subr.bf16.mxu0 0
    %782 = vmatpush1.bf16.msra.mxu0 0
    %783 = vmatprep.mubr.bf16.mxu0 0
    %784 = vmatmul.mubr.bf16.gmra.mrb[0].mxu0 %v686
    %v785 = vpop.f32.mrb[0].mxu0
    %v786 = vadd.f32 0.0, %v785
    %v787 = vpop.f32.mrb[0].mxu0
    %v788 = vpop.f32.mrb[0].mxu0
    %v789 = vpop.f32.mrb[0].mxu0
    %790 = vdwg.mxu0
    %v791 = vsub.f32 0.0, %v786
    %v792 = vmul.f32 %v791, 1.442695
    %v793 = vpow.pop %v792
    %v794 = vadd.f32 %v793, 1.0
    %v795 = vrcp.pop %v794
    %v796 = vpack.c.bf16 %v795, %v795
    %v799 = vunpack.c.l.b16 %v402
    %v800 = vunpack.c.l.b16 %v403
    %v801 = vpack.c.b16 %v800, %v799
    %vm802 = vcmask 64512
    %v804 = vsel %vm802, %v801, 0
    %vm806 = vcmask 1043456
    %v808 = vsel %vm806, %v796, 0
    %810 = vmatprep.subr.bf16.mxu0 0
    %811 = vmatpush1.bf16.msra.mxu0 %v808
    %812 = vmatprep.subr.bf16.mxu0 0
    %813 = vmatpush1.bf16.msra.mxu0 0
    %814 = vmatprep.subr.bf16.mxu0 0
    %815 = vmatpush1.bf16.msra.mxu0 0
    %816 = vmatprep.subr.bf16.mxu0 0
    %817 = vmatpush1.bf16.msra.mxu0 0
    %818 = vmatprep.subr.bf16.mxu0 0
    %819 = vmatpush1.bf16.msra.mxu0 0
    %820 = vmatprep.subr.bf16.mxu0 0
    %821 = vmatpush1.bf16.msra.mxu0 0
    %822 = vmatprep.subr.bf16.mxu0 0
    %823 = vmatpush1.bf16.msra.mxu0 0
    %824 = vmatprep.subr.bf16.mxu0 0
    %825 = vmatpush1.bf16.msra.mxu0 0
    %826 = vmatprep.subr.bf16.mxu0 0
    %827 = vmatpush1.bf16.msra.mxu0 0
    %828 = vmatprep.subr.bf16.mxu0 0
    %829 = vmatpush1.bf16.msra.mxu0 0
    %830 = vmatprep.subr.bf16.mxu0 0
    %831 = vmatpush1.bf16.msra.mxu0 0
    %832 = vmatprep.subr.bf16.mxu0 0
    %833 = vmatpush1.bf16.msra.mxu0 0
    %834 = vmatprep.subr.bf16.mxu0 0
    %835 = vmatpush1.bf16.msra.mxu0 0
    %836 = vmatprep.subr.bf16.mxu0 0
    %837 = vmatpush1.bf16.msra.mxu0 0
    %838 = vmatprep.subr.bf16.mxu0 0
    %839 = vmatpush1.bf16.msra.mxu0 0
    %840 = vmatprep.subr.bf16.mxu0 0
    %841 = vmatpush1.bf16.msra.mxu0 0
    %842 = vmatprep.mubr.bf16.mxu0 0
    %843 = vmatmul.mubr.bf16.gmra.mrb[0].mxu0 %v804
    %v844 = vpop.f32.mrb[0].mxu0
    %v845 = vadd.f32 0.0, %v844
    %v846 = vpop.f32.mrb[0].mxu0
    %v847 = vpop.f32.mrb[0].mxu0
    %v848 = vadd.f32 0.0, %v847
    %v849 = vpop.f32.mrb[0].mxu0
    %850 = vdwg.mxu0
    %v851 = vmul.f32 %v572, %v845
    %v852 = vmul.f32 %v573, %v848
    %v853 = vpack.c.bf16 %v852, %v851
    %854 = vmatprep.subr.bf16.mxu0 0
    %855 = vmatpush1.bf16.msra.mxu0 %v853
    %856 = vmatprep.subr.bf16.mxu0 0
    %857 = vmatpush1.bf16.msra.mxu0 0
    %858 = vmatprep.subr.bf16.mxu0 0
    %859 = vmatpush1.bf16.msra.mxu0 0
    %860 = vmatprep.subr.bf16.mxu0 0
    %861 = vmatpush1.bf16.msra.mxu0 0
    %862 = vmatprep.subr.bf16.mxu0 0
    %863 = vmatpush1.bf16.msra.mxu0 0
    %864 = vmatprep.subr.bf16.mxu0 0
    %865 = vmatpush1.bf16.msra.mxu0 0
    %866 = vmatprep.subr.bf16.mxu0 0
    %867 = vmatpush1.bf16.msra.mxu0 0
    %868 = vmatprep.subr.bf16.mxu0 0
    %869 = vmatpush1.bf16.msra.mxu0 0
    %870 = vmatprep.subr.bf16.mxu0 0
    %871 = vmatpush1.bf16.msra.mxu0 0
    %872 = vmatprep.subr.bf16.mxu0 0
    %873 = vmatpush1.bf16.msra.mxu0 0
    %874 = vmatprep.subr.bf16.mxu0 0
    %875 = vmatpush1.bf16.msra.mxu0 0
    %876 = vmatprep.subr.bf16.mxu0 0
    %877 = vmatpush1.bf16.msra.mxu0 0
    %878 = vmatprep.subr.bf16.mxu0 0
    %879 = vmatpush1.bf16.msra.mxu0 0
    %880 = vmatprep.subr.bf16.mxu0 0
    %881 = vmatpush1.bf16.msra.mxu0 0
    %882 = vmatprep.subr.bf16.mxu0 0
    %883 = vmatpush1.bf16.msra.mxu0 0
    %884 = vmatprep.subr.bf16.mxu0 0
    %885 = vmatpush1.bf16.msra.mxu0 0
    %886 = vmatprep.mubr.bf16.mxu0 0
    %887 = vmatmul.mubr.bf16.gmra.mrb[0].mxu0 %v415
    %v888 = vpop.f32.mrb[0].mxu0
    %v889 = vadd.f32 0.0, %v888
    %v890 = vpop.f32.mrb[0].mxu0
    %v891 = vpop.f32.mrb[0].mxu0
    %v892 = vadd.f32 0.0, %v891
    %v893 = vpop.f32.mrb[0].mxu0
    %894 = vdwg.mxu0
    %v895 = vld [vmem:[#allocation13] sm:$0xf]
    %v896 = vld [vmem:[#allocation13 + $0x4] sm:$0xf]
    %v897 = vld [vmem:[#allocation13 + $0x8] sm:$0xf]
    %v898 = vld [vmem:[#allocation13 + $0xc] sm:$0xf]
    %v899 = vpack.c.bf16 %v892, %v889
    %v900 = vld [vmem:[#allocation15] sm:$0xf]
    %v901 = vld [vmem:[#allocation15 + $0x4] sm:$0xf]
    %v902 = vld [vmem:[#allocation15 + $0x8] sm:$0xf]
    %v903 = vld [vmem:[#allocation15 + $0xc] sm:$0xf]
    %v908 = vunpack.c.l.b16 %v900
    %v909 = vunpack.c.l.b16 %v901
    %v910 = vunpack.c.l.b16 %v902
    %v911 = vunpack.c.l.b16 %v903
    %v912 = vpack.c.b16 %v909, %v908
    %v913 = vpack.c.b16 %v911, %v910
    %v917 = vsel %vm641, %v899, 0
    %919 = vmatprep.subr.bf16.mxu0 0
    %920 = vmatpush1.bf16.msra.mxu0 %v912
    %921 = vmatprep.subr.bf16.mxu0 0
    %922 = vmatpush1.bf16.msra.mxu0 %v913
    %923 = vmatprep.subr.bf16.mxu0 0
    %924 = vmatpush1.bf16.msra.mxu0 0
    %925 = vmatprep.subr.bf16.mxu0 0
    %926 = vmatpush1.bf16.msra.mxu0 0
    %927 = vmatprep.subr.bf16.mxu0 0
    %928 = vmatpush1.bf16.msra.mxu0 0
    %929 = vmatprep.subr.bf16.mxu0 0
    %930 = vmatpush1.bf16.msra.mxu0 0
    %931 = vmatprep.subr.bf16.mxu0 0
    %932 = vmatpush1.bf16.msra.mxu0 0
    %933 = vmatprep.subr.bf16.mxu0 0
    %934 = vmatpush1.bf16.msra.mxu0 0
    %935 = vmatprep.subr.bf16.mxu0 0
    %936 = vmatpush1.bf16.msra.mxu0 0
    %937 = vmatprep.subr.bf16.mxu0 0
    %938 = vmatpush1.bf16.msra.mxu0 0
    %939 = vmatprep.subr.bf16.mxu0 0
    %940 = vmatpush1.bf16.msra.mxu0 0
    %941 = vmatprep.subr.bf16.mxu0 0
    %942 = vmatpush1.bf16.msra.mxu0 0
    %943 = vmatprep.subr.bf16.mxu0 0
    %944 = vmatpush1.bf16.msra.mxu0 0
    %945 = vmatprep.subr.bf16.mxu0 0
    %946 = vmatpush1.bf16.msra.mxu0 0
    %947 = vmatprep.subr.bf16.mxu0 0
    %948 = vmatpush1.bf16.msra.mxu0 0
    %949 = vmatprep.subr.bf16.mxu0 0
    %950 = vmatpush1.bf16.msra.mxu0 0
    %951 = vmatprep.mubr.bf16.mxu0 0
    %952 = vmatmul.mubr.bf16.gmra.mrb[0].mxu0 %v917
    %v953 = vpop.f32.mrb[0].mxu0
    %v954 = vadd.f32 0.0, %v953
    %v955 = vpop.f32.mrb[0].mxu0
    %v956 = vpop.f32.mrb[0].mxu0
    %v957 = vadd.f32 0.0, %v956
    %v958 = vpop.f32.mrb[0].mxu0
    %959 = vdwg.mxu0
    %v964 = vunpack.c.l.b16 %v895
    %v965 = vunpack.c.l.b16 %v896
    %v966 = vunpack.c.l.b16 %v897
    %v967 = vunpack.c.l.b16 %v898
    %v968 = vpack.c.b16 %v965, %v964
    %v969 = vpack.c.b16 %v967, %v966
    %v973 = vsel %vm641, %v853, 0
    %975 = vmatprep.subr.bf16.mxu0 0
    %976 = vmatpush1.bf16.msra.mxu0 %v968
    %977 = vmatprep.subr.bf16.mxu0 0
    %978 = vmatpush1.bf16.msra.mxu0 %v969
    %979 = vmatprep.subr.bf16.mxu0 0
    %980 = vmatpush1.bf16.msra.mxu0 0
    %981 = vmatprep.subr.bf16.mxu0 0
    %982 = vmatpush1.bf16.msra.mxu0 0
    %983 = vmatprep.subr.bf16.mxu0 0
    %984 = vmatpush1.bf16.msra.mxu0 0
    %985 = vmatprep.subr.bf16.mxu0 0
    %986 = vmatpush1.bf16.msra.mxu0 0
    %987 = vmatprep.subr.bf16.mxu0 0
    %988 = vmatpush1.bf16.msra.mxu0 0
    %989 = vmatprep.subr.bf16.mxu0 0
    %990 = vmatpush1.bf16.msra.mxu0 0
    %991 = vmatprep.subr.bf16.mxu0 0
    %992 = vmatpush1.bf16.msra.mxu0 0
    %993 = vmatprep.subr.bf16.mxu0 0
    %994 = vmatpush1.bf16.msra.mxu0 0
    %995 = vmatprep.subr.bf16.mxu0 0
    %996 = vmatpush1.bf16.msra.mxu0 0
    %997 = vmatprep.subr.bf16.mxu0 0
    %998 = vmatpush1.bf16.msra.mxu0 0
    %999 = vmatprep.subr.bf16.mxu0 0
    %1000 = vmatpush1.bf16.msra.mxu0 0
    %1001 = vmatprep.subr.bf16.mxu0 0
    %1002 = vmatpush1.bf16.msra.mxu0 0
    %1003 = vmatprep.subr.bf16.mxu0 0
    %1004 = vmatpush1.bf16.msra.mxu0 0
    %1005 = vmatprep.subr.bf16.mxu0 0
    %1006 = vmatpush1.bf16.msra.mxu0 0
    %1007 = vmatprep.mubr.bf16.mxu0 0
    %1008 = vmatmul.mubr.bf16.gmra.mrb[0].mxu0 %v973
    %v1009 = vpop.f32.mrb[0].mxu0
    %v1010 = vadd.f32 %v954, %v1009
    %v1011 = vpop.f32.mrb[0].mxu0
    %v1012 = vpop.f32.mrb[0].mxu0
    %v1013 = vadd.f32 %v957, %v1012
    %v1014 = vpop.f32.mrb[0].mxu0
    %1015 = vdwg.mxu0
    %v1016 = vld [vmem:[#allocation16] sm:$0x1]
    %v1018 = vlaneseq
    %v1019 = vshrl.u32 %v1018, 7
    %v1020 = vsub.s32 0, %v1019
    %v1021 = vrot.slane %v1016, %v1020
    %v1023 = vadd.f32 %v1010, %v1021
    %v1024 = vadd.f32 %v1013, %v1021
    %v1025 = vmax.f32 %v1023, 0.0
    %v1026 = vmax.f32 %v1024, 0.0
    %v1027 = vpack.c.bf16 %v1026, %v1025
    %1028 = vmatprep.subr.bf16.mxu0 0
    %1029 = vmatpush1.bf16.msra.mxu0 %v1027
    %1030 = vmatprep.subr.bf16.mxu0 0
    %1031 = vmatpush1.bf16.msra.mxu0 0
    %1032 = vmatprep.subr.bf16.mxu0 0
    %1033 = vmatpush1.bf16.msra.mxu0 0
    %1034 = vmatprep.subr.bf16.mxu0 0
    %1035 = vmatpush1.bf16.msra.mxu0 0
    %1036 = vmatprep.subr.bf16.mxu0 0
    %1037 = vmatpush1.bf16.msra.mxu0 0
    %1038 = vmatprep.subr.bf16.mxu0 0
    %1039 = vmatpush1.bf16.msra.mxu0 0
    %1040 = vmatprep.subr.bf16.mxu0 0
    %1041 = vmatpush1.bf16.msra.mxu0 0
    %1042 = vmatprep.subr.bf16.mxu0 0
    %1043 = vmatpush1.bf16.msra.mxu0 0
    %1044 = vmatprep.subr.bf16.mxu0 0
    %1045 = vmatpush1.bf16.msra.mxu0 0
    %1046 = vmatprep.subr.bf16.mxu0 0
    %1047 = vmatpush1.bf16.msra.mxu0 0
    %1048 = vmatprep.subr.bf16.mxu0 0
    %1049 = vmatpush1.bf16.msra.mxu0 0
    %1050 = vmatprep.subr.bf16.mxu0 0
    %1051 = vmatpush1.bf16.msra.mxu0 0
    %1052 = vmatprep.subr.bf16.mxu0 0
    %1053 = vmatpush1.bf16.msra.mxu0 0
    %1054 = vmatprep.subr.bf16.mxu0 0
    %1055 = vmatpush1.bf16.msra.mxu0 0
    %1056 = vmatprep.subr.bf16.mxu0 0
    %1057 = vmatpush1.bf16.msra.mxu0 0
    %1058 = vmatprep.subr.bf16.mxu0 0
    %1059 = vmatpush1.bf16.msra.mxu0 0
    %1060 = vmatprep.mubr.bf16.mxu0 0
    %1061 = vmatmul.mubr.bf16.gmra.mrb[0].mxu0 %v576
    %v1062 = vpop.f32.mrb[0].mxu0
    %v1063 = vadd.f32 0.0, %v1062
    %v1064 = vpop.f32.mrb[0].mxu0
    %v1065 = vpop.f32.mrb[0].mxu0
    %v1066 = vpop.f32.mrb[0].mxu0
    %1067 = vdwg.mxu0
    %v1068 = vmul.f32 %v1063, %v621
    %v1069 = vpack.c.bf16 %v1068, %v1068
    %v1070 = vld [vmem:[#allocation18] sm:$0xf]
    %v1071 = vld [vmem:[#allocation18 + $0x4] sm:$0xf]
    %v1072 = vld [vmem:[#allocation18 + $0x8] sm:$0xf]
    %v1073 = vld [vmem:[#allocation18 + $0xc] sm:$0xf]
    %v1074 = vld [vmem:[#allocation18 + $0x10] sm:$0xf]
    %v1075 = vld [vmem:[#allocation18 + $0x14] sm:$0xf]
    %v1076 = vld [vmem:[#allocation18 + $0x18] sm:$0xf]
    %v1077 = vld [vmem:[#allocation18 + $0x1c] sm:$0xf]
    %v1086 = vunpack.c.l.b16 %v1070
    %v1087 = vunpack.c.l.b16 %v1071
    %v1088 = vunpack.c.l.b16 %v1072
    %v1089 = vunpack.c.l.b16 %v1073
    %v1090 = vunpack.c.l.b16 %v1074
    %v1091 = vunpack.c.l.b16 %v1075
    %v1092 = vunpack.c.l.b16 %v1076
    %v1093 = vunpack.c.l.b16 %v1077
    %v1094 = vpack.c.b16 %v1087, %v1086
    %v1095 = vpack.c.b16 %v1089, %v1088
    %v1096 = vpack.c.b16 %v1091, %v1090
    %v1097 = vpack.c.b16 %v1093, %v1092
    %vm1102 = vcmask 523264
    %v1104 = vsel %vm1102, %v1069, 0
    %1106 = vmatprep.subr.bf16.mxu0 0
    %1107 = vmatpush1.bf16.msra.mxu0 %v1094
    %1108 = vmatprep.subr.bf16.mxu0 0
    %1109 = vmatpush1.bf16.msra.mxu0 %v1095
    %1110 = vmatprep.subr.bf16.mxu0 0
    %1111 = vmatpush1.bf16.msra.mxu0 %v1096
    %1112 = vmatprep.subr.bf16.mxu0 0
    %1113 = vmatpush1.bf16.msra.mxu0 %v1097
    %1114 = vmatprep.subr.bf16.mxu0 0
    %1115 = vmatpush1.bf16.msra.mxu0 0
    %1116 = vmatprep.subr.bf16.mxu0 0
    %1117 = vmatpush1.bf16.msra.mxu0 0
    %1118 = vmatprep.subr.bf16.mxu0 0
    %1119 = vmatpush1.bf16.msra.mxu0 0
    %1120 = vmatprep.subr.bf16.mxu0 0
    %1121 = vmatpush1.bf16.msra.mxu0 0
    %1122 = vmatprep.subr.bf16.mxu0 0
    %1123 = vmatpush1.bf16.msra.mxu0 0
    %1124 = vmatprep.subr.bf16.mxu0 0
    %1125 = vmatpush1.bf16.msra.mxu0 0
    %1126 = vmatprep.subr.bf16.mxu0 0
    %1127 = vmatpush1.bf16.msra.mxu0 0
    %1128 = vmatprep.subr.bf16.mxu0 0
    %1129 = vmatpush1.bf16.msra.mxu0 0
    %1130 = vmatprep.subr.bf16.mxu0 0
    %1131 = vmatpush1.bf16.msra.mxu0 0
    %1132 = vmatprep.subr.bf16.mxu0 0
    %1133 = vmatpush1.bf16.msra.mxu0 0
    %1134 = vmatprep.subr.bf16.mxu0 0
    %1135 = vmatpush1.bf16.msra.mxu0 0
    %1136 = vmatprep.subr.bf16.mxu0 0
    %1137 = vmatpush1.bf16.msra.mxu0 0
    %1138 = vmatprep.mubr.bf16.mxu0 0
    %1139 = vmatmul.mubr.bf16.gmra.mrb[0].mxu0 %v1104
    %v1140 = vpop.f32.mrb[0].mxu0
    %v1141 = vadd.f32 0.0, %v1140
    %v1142 = vpop.f32.mrb[0].mxu0
    %v1143 = vpop.f32.mrb[0].mxu0
    %v1144 = vpop.f32.mrb[0].mxu0
    %1145 = vdwg.mxu0
    %v1146 = vmax.f32 %v1141, 0.0
    %v1147 = vpack.c.bf16 %v1146, %v1146
    %v1148 = vld [vmem:[%s14] sm:$0xf]
    %v1149 = vld [vmem:[%s14 + $0x4] sm:$0xf]
    %v1150 = vld [vmem:[%s14 + $0x8] sm:$0xf]
    %v1151 = vld [vmem:[%s14 + $0xc] sm:$0xf]
    %v1152 = vld [vmem:[%s14 + $0x10] sm:$0xf]
    %v1153 = vld [vmem:[%s14 + $0x14] sm:$0xf]
    %v1154 = vld [vmem:[%s14 + $0x18] sm:$0xf]
    %v1155 = vld [vmem:[%s14 + $0x1c] sm:$0xf]
    %v1156 = vld [vmem:[%s14 + $0x20] sm:$0xf]
    %v1157 = vld [vmem:[%s14 + $0x24] sm:$0xf]
    %v1158 = vld [vmem:[%s14 + $0x28] sm:$0xf]
    %v1159 = vld [vmem:[%s14 + $0x2c] sm:$0xf]
    %v1160 = vld [vmem:[%s14 + $0x30] sm:$0xf]
    %v1161 = vld [vmem:[%s14 + $0x34] sm:$0xf]
    %v1162 = vld [vmem:[%s14 + $0x38] sm:$0xf]
    %v1163 = vld [vmem:[%s14 + $0x3c] sm:$0xf]
    %v1180 = vunpack.c.l.b16 %v1148
    %v1181 = vunpack.c.l.b16 %v1149
    %v1182 = vunpack.c.l.b16 %v1150
    %v1183 = vunpack.c.l.b16 %v1151
    %v1184 = vunpack.c.l.b16 %v1152
    %v1185 = vunpack.c.l.b16 %v1153
    %v1186 = vunpack.c.l.b16 %v1154
    %v1187 = vunpack.c.l.b16 %v1155
    %v1188 = vunpack.c.l.b16 %v1156
    %v1189 = vunpack.c.l.b16 %v1157
    %v1190 = vunpack.c.l.b16 %v1158
    %v1191 = vunpack.c.l.b16 %v1159
    %v1192 = vunpack.c.l.b16 %v1160
    %v1193 = vunpack.c.l.b16 %v1161
    %v1194 = vunpack.c.l.b16 %v1162
    %v1195 = vunpack.c.l.b16 %v1163
    %v1196 = vpack.c.b16 %v1181, %v1180
    %v1197 = vpack.c.b16 %v1183, %v1182
    %v1198 = vpack.c.b16 %v1185, %v1184
    %v1199 = vpack.c.b16 %v1187, %v1186
    %v1200 = vpack.c.b16 %v1189, %v1188
    %v1201 = vpack.c.b16 %v1191, %v1190
    %v1202 = vpack.c.b16 %v1193, %v1192
    %v1203 = vpack.c.b16 %v1195, %v1194
    %1212 = vmatprep.subr.bf16.mxu0 0
    %1213 = vmatpush1.bf16.msra.mxu0 %v1196
    %1214 = vmatprep.subr.bf16.mxu0 0
    %1215 = vmatpush1.bf16.msra.mxu0 %v1197
    %1216 = vmatprep.subr.bf16.mxu0 0
    %1217 = vmatpush1.bf16.msra.mxu0 %v1198
    %1218 = vmatprep.subr.bf16.mxu0 0
    %1219 = vmatpush1.bf16.msra.mxu0 %v1199
    %1220 = vmatprep.subr.bf16.mxu0 0
    %1221 = vmatpush1.bf16.msra.mxu0 %v1200
    %1222 = vmatprep.subr.bf16.mxu0 0
    %1223 = vmatpush1.bf16.msra.mxu0 %v1201
    %1224 = vmatprep.subr.bf16.mxu0 0
    %1225 = vmatpush1.bf16.msra.mxu0 %v1202
    %1226 = vmatprep.subr.bf16.mxu0 0
    %1227 = vmatpush1.bf16.msra.mxu0 %v1203
    %1228 = vmatprep.subr.bf16.mxu0 0
    %1229 = vmatpush1.bf16.msra.mxu0 0
    %1230 = vmatprep.subr.bf16.mxu0 0
    %1231 = vmatpush1.bf16.msra.mxu0 0
    %1232 = vmatprep.subr.bf16.mxu0 0
    %1233 = vmatpush1.bf16.msra.mxu0 0
    %1234 = vmatprep.subr.bf16.mxu0 0
    %1235 = vmatpush1.bf16.msra.mxu0 0
    %1236 = vmatprep.subr.bf16.mxu0 0
    %1237 = vmatpush1.bf16.msra.mxu0 0
    %1238 = vmatprep.subr.bf16.mxu0 0
    %1239 = vmatpush1.bf16.msra.mxu0 0
    %1240 = vmatprep.subr.bf16.mxu0 0
    %1241 = vmatpush1.bf16.msra.mxu0 0
    %1242 = vmatprep.subr.bf16.mxu0 0
    %1243 = vmatpush1.bf16.msra.mxu0 0
    %1244 = vmatprep.mubr.bf16.mxu0 0
    %1245 = vmatmul.mubr.bf16.gmra.mrb[0].mxu0 %v1147
    %v1246 = vpop.f32.mrb[0].mxu0
    %v1247 = vadd.f32 0.0, %v1246
    %v1248 = vpop.f32.mrb[0].mxu0
    %v1249 = vpop.f32.mrb[0].mxu0
    %v1250 = vpop.f32.mrb[0].mxu0
    %1251 = vdwg.mxu0
    %v1252 = vsub.f32 0.0, %v1247
    %v1253 = vmul.f32 %v1252, 1.442695
    %v1254 = vpow.pop %v1253
    %v1255 = vadd.f32 %v1254, 1.0
    %v1256 = vrcp.pop %v1255
    %v1257 = vpack.c.bf16 %v1256, %v1256
    %v1259 = vsel %vm806, %v1257, 0
    %1261 = vmatprep.subr.bf16.mxu0 0
    %1262 = vmatpush1.bf16.msra.mxu0 %v1259
    %1263 = vmatprep.subr.bf16.mxu0 0
    %1264 = vmatpush1.bf16.msra.mxu0 0
    %1265 = vmatprep.subr.bf16.mxu0 0
    %1266 = vmatpush1.bf16.msra.mxu0 0
    %1267 = vmatprep.subr.bf16.mxu0 0
    %1268 = vmatpush1.bf16.msra.mxu0 0
    %1269 = vmatprep.subr.bf16.mxu0 0
    %1270 = vmatpush1.bf16.msra.mxu0 0
    %1271 = vmatprep.subr.bf16.mxu0 0
    %1272 = vmatpush1.bf16.msra.mxu0 0
    %1273 = vmatprep.subr.bf16.mxu0 0
    %1274 = vmatpush1.bf16.msra.mxu0 0
    %1275 = vmatprep.subr.bf16.mxu0 0
    %1276 = vmatpush1.bf16.msra.mxu0 0
    %1277 = vmatprep.subr.bf16.mxu0 0
    %1278 = vmatpush1.bf16.msra.mxu0 0
    %1279 = vmatprep.subr.bf16.mxu0 0
    %1280 = vmatpush1.bf16.msra.mxu0 0
    %1281 = vmatprep.subr.bf16.mxu0 0
    %1282 = vmatpush1.bf16.msra.mxu0 0
    %1283 = vmatprep.subr.bf16.mxu0 0
    %1284 = vmatpush1.bf16.msra.mxu0 0
    %1285 = vmatprep.subr.bf16.mxu0 0
    %1286 = vmatpush1.bf16.msra.mxu0 0
    %1287 = vmatprep.subr.bf16.mxu0 0
    %1288 = vmatpush1.bf16.msra.mxu0 0
    %1289 = vmatprep.subr.bf16.mxu0 0
    %1290 = vmatpush1.bf16.msra.mxu0 0
    %1291 = vmatprep.subr.bf16.mxu0 0
    %1292 = vmatpush1.bf16.msra.mxu0 0
    %1293 = vmatprep.mubr.bf16.mxu0 0
    %1294 = vmatmul.mubr.bf16.gmra.mrb[0].mxu0 %v804
    %v1295 = vpop.f32.mrb[0].mxu0
    %v1296 = vadd.f32 0.0, %v1295
    %v1297 = vpop.f32.mrb[0].mxu0
    %v1298 = vpop.f32.mrb[0].mxu0
    %v1299 = vadd.f32 0.0, %v1298
    %v1300 = vpop.f32.mrb[0].mxu0
    %1301 = vdwg.mxu0
    %v1302 = vmul.f32 %v1025, %v1296
    %v1303 = vmul.f32 %v1026, %v1299
    %v1304 = vpack.c.bf16 %v1303, %v1302
    %1305 = vmatprep.subr.bf16.mxu0 0
    %1306 = vmatpush1.bf16.msra.mxu0 %v1304
    %1307 = vmatprep.subr.bf16.mxu0 0
    %1308 = vmatpush1.bf16.msra.mxu0 0
    %1309 = vmatprep.subr.bf16.mxu0 0
    %1310 = vmatpush1.bf16.msra.mxu0 0
    %1311 = vmatprep.subr.bf16.mxu0 0
    %1312 = vmatpush1.bf16.msra.mxu0 0
    %1313 = vmatprep.subr.bf16.mxu0 0
    %1314 = vmatpush1.bf16.msra.mxu0 0
    %1315 = vmatprep.subr.bf16.mxu0 0
    %1316 = vmatpush1.bf16.msra.mxu0 0
    %1317 = vmatprep.subr.bf16.mxu0 0
    %1318 = vmatpush1.bf16.msra.mxu0 0
    %1319 = vmatprep.subr.bf16.mxu0 0
    %1320 = vmatpush1.bf16.msra.mxu0 0
    %1321 = vmatprep.subr.bf16.mxu0 0
    %1322 = vmatpush1.bf16.msra.mxu0 0
    %1323 = vmatprep.subr.bf16.mxu0 0
    %1324 = vmatpush1.bf16.msra.mxu0 0
    %1325 = vmatprep.subr.bf16.mxu0 0
    %1326 = vmatpush1.bf16.msra.mxu0 0
    %1327 = vmatprep.subr.bf16.mxu0 0
    %1328 = vmatpush1.bf16.msra.mxu0 0
    %1329 = vmatprep.subr.bf16.mxu0 0
    %1330 = vmatpush1.bf16.msra.mxu0 0
    %1331 = vmatprep.subr.bf16.mxu0 0
    %1332 = vmatpush1.bf16.msra.mxu0 0
    %1333 = vmatprep.subr.bf16.mxu0 0
    %1334 = vmatpush1.bf16.msra.mxu0 0
    %1335 = vmatprep.subr.bf16.mxu0 0
    %1336 = vmatpush1.bf16.msra.mxu0 0
    %1337 = vmatprep.mubr.bf16.mxu0 0
    %1338 = vmatmul.mubr.bf16.gmra.mrb[0].mxu0 %v415
    %v1339 = vpop.f32.mrb[0].mxu0
    %v1340 = vadd.f32 0.0, %v1339
    %v1341 = vpop.f32.mrb[0].mxu0
    %v1342 = vpop.f32.mrb[0].mxu0
    %v1343 = vadd.f32 0.0, %v1342
    %v1344 = vpop.f32.mrb[0].mxu0
    %1345 = vdwg.mxu0
    %v1346 = vld [vmem:[#allocation19] sm:$0xf]
    %v1347 = vld [vmem:[#allocation19 + $0x4] sm:$0xf]
    %v1348 = vld [vmem:[#allocation19 + $0x8] sm:$0xf]
    %v1349 = vld [vmem:[#allocation19 + $0xc] sm:$0xf]
    %v1350 = vld [vmem:[#allocation19 + $0x10] sm:$0xf]
    %v1351 = vld [vmem:[#allocation19 + $0x14] sm:$0xf]
    %v1352 = vld [vmem:[#allocation19 + $0x18] sm:$0xf]
    %v1353 = vld [vmem:[#allocation19 + $0x1c] sm:$0xf]
    %v1354 = vpack.c.bf16 %v1343, %v1340
    %v1355 = vld [vmem:[#allocation21] sm:$0xf]
    %v1356 = vld [vmem:[#allocation21 + $0x4] sm:$0xf]
    %v1357 = vld [vmem:[#allocation21 + $0x8] sm:$0xf]
    %v1358 = vld [vmem:[#allocation21 + $0xc] sm:$0xf]
    %v1359 = vld [vmem:[#allocation21 + $0x10] sm:$0xf]
    %v1360 = vld [vmem:[#allocation21 + $0x14] sm:$0xf]
    %v1361 = vld [vmem:[#allocation21 + $0x18] sm:$0xf]
    %v1362 = vld [vmem:[#allocation21 + $0x1c] sm:$0xf]
    %v1371 = vunpack.c.l.b16 %v1355
    %v1372 = vunpack.c.l.b16 %v1356
    %v1373 = vunpack.c.l.b16 %v1357
    %v1374 = vunpack.c.l.b16 %v1358
    %v1375 = vunpack.c.l.b16 %v1359
    %v1376 = vunpack.c.l.b16 %v1360
    %v1377 = vunpack.c.l.b16 %v1361
    %v1378 = vunpack.c.l.b16 %v1362
    %v1379 = vpack.c.b16 %v1372, %v1371
    %v1380 = vpack.c.b16 %v1374, %v1373
    %v1381 = vpack.c.b16 %v1376, %v1375
    %v1382 = vpack.c.b16 %v1378, %v1377
    %v1388 = vsel %vm1102, %v1354, 0
    %1390 = vmatprep.subr.bf16.mxu0 0
    %1391 = vmatpush1.bf16.msra.mxu0 %v1379
    %1392 = vmatprep.subr.bf16.mxu0 0
    %1393 = vmatpush1.bf16.msra.mxu0 %v1380
    %1394 = vmatprep.subr.bf16.mxu0 0
    %1395 = vmatpush1.bf16.msra.mxu0 %v1381
    %1396 = vmatprep.subr.bf16.mxu0 0
    %1397 = vmatpush1.bf16.msra.mxu0 %v1382
    %1398 = vmatprep.subr.bf16.mxu0 0
    %1399 = vmatpush1.bf16.msra.mxu0 0
    %1400 = vmatprep.subr.bf16.mxu0 0
    %1401 = vmatpush1.bf16.msra.mxu0 0
    %1402 = vmatprep.subr.bf16.mxu0 0
    %1403 = vmatpush1.bf16.msra.mxu0 0
    %1404 = vmatprep.subr.bf16.mxu0 0
    %1405 = vmatpush1.bf16.msra.mxu0 0
    %1406 = vmatprep.subr.bf16.mxu0 0
    %1407 = vmatpush1.bf16.msra.mxu0 0
    %1408 = vmatprep.subr.bf16.mxu0 0
    %1409 = vmatpush1.bf16.msra.mxu0 0
    %1410 = vmatprep.subr.bf16.mxu0 0
    %1411 = vmatpush1.bf16.msra.mxu0 0
    %1412 = vmatprep.subr.bf16.mxu0 0
    %1413 = vmatpush1.bf16.msra.mxu0 0
    %1414 = vmatprep.subr.bf16.mxu0 0
    %1415 = vmatpush1.bf16.msra.mxu0 0
    %1416 = vmatprep.subr.bf16.mxu0 0
    %1417 = vmatpush1.bf16.msra.mxu0 0
    %1418 = vmatprep.subr.bf16.mxu0 0
    %1419 = vmatpush1.bf16.msra.mxu0 0
    %1420 = vmatprep.subr.bf16.mxu0 0
    %1421 = vmatpush1.bf16.msra.mxu0 0
    %1422 = vmatprep.mubr.bf16.mxu0 0
    %1423 = vmatmul.mubr.bf16.gmra.mrb[0].mxu0 %v1388
    %v1424 = vpop.f32.mrb[0].mxu0
    %v1425 = vadd.f32 0.0, %v1424
    %v1426 = vpop.f32.mrb[0].mxu0
    %v1427 = vpop.f32.mrb[0].mxu0
    %v1428 = vadd.f32 0.0, %v1427
    %v1429 = vpop.f32.mrb[0].mxu0
    %1430 = vdwg.mxu0
    %v1439 = vunpack.c.l.b16 %v1346
    %v1440 = vunpack.c.l.b16 %v1347
    %v1441 = vunpack.c.l.b16 %v1348
    %v1442 = vunpack.c.l.b16 %v1349
    %v1443 = vunpack.c.l.b16 %v1350
    %v1444 = vunpack.c.l.b16 %v1351
    %v1445 = vunpack.c.l.b16 %v1352
    %v1446 = vunpack.c.l.b16 %v1353
    %v1447 = vpack.c.b16 %v1440, %v1439
    %v1448 = vpack.c.b16 %v1442, %v1441
    %v1449 = vpack.c.b16 %v1444, %v1443
    %v1450 = vpack.c.b16 %v1446, %v1445
    %v1456 = vsel %vm1102, %v1304, 0
    %1458 = vmatprep.subr.bf16.mxu0 0
    %1459 = vmatpush1.bf16.msra.mxu0 %v1447
    %1460 = vmatprep.subr.bf16.mxu0 0
    %1461 = vmatpush1.bf16.msra.mxu0 %v1448
    %1462 = vmatprep.subr.bf16.mxu0 0
    %1463 = vmatpush1.bf16.msra.mxu0 %v1449
    %1464 = vmatprep.subr.bf16.mxu0 0
    %1465 = vmatpush1.bf16.msra.mxu0 %v1450
    %1466 = vmatprep.subr.bf16.mxu0 0
    %1467 = vmatpush1.bf16.msra.mxu0 0
    %1468 = vmatprep.subr.bf16.mxu0 0
    %1469 = vmatpush1.bf16.msra.mxu0 0
    %1470 = vmatprep.subr.bf16.mxu0 0
    %1471 = vmatpush1.bf16.msra.mxu0 0
    %1472 = vmatprep.subr.bf16.mxu0 0
    %1473 = vmatpush1.bf16.msra.mxu0 0
    %1474 = vmatprep.subr.bf16.mxu0 0
    %1475 = vmatpush1.bf16.msra.mxu0 0
    %1476 = vmatprep.subr.bf16.mxu0 0
    %1477 = vmatpush1.bf16.msra.mxu0 0
    %1478 = vmatprep.subr.bf16.mxu0 0
    %1479 = vmatpush1.bf16.msra.mxu0 0
    %1480 = vmatprep.subr.bf16.mxu0 0
    %1481 = vmatpush1.bf16.msra.mxu0 0
    %1482 = vmatprep.subr.bf16.mxu0 0
    %1483 = vmatpush1.bf16.msra.mxu0 0
    %1484 = vmatprep.subr.bf16.mxu0 0
    %1485 = vmatpush1.bf16.msra.mxu0 0
    %1486 = vmatprep.subr.bf16.mxu0 0
    %1487 = vmatpush1.bf16.msra.mxu0 0
    %1488 = vmatprep.subr.bf16.mxu0 0
    %1489 = vmatpush1.bf16.msra.mxu0 0
    %1490 = vmatprep.mubr.bf16.mxu0 0
    %1491 = vmatmul.mubr.bf16.gmra.mrb[0].mxu0 %v1456
    %v1492 = vpop.f32.mrb[0].mxu0
    %v1493 = vadd.f32 %v1425, %v1492
    %v1494 = vpop.f32.mrb[0].mxu0
    %v1495 = vpop.f32.mrb[0].mxu0
    %v1496 = vadd.f32 %v1428, %v1495
    %v1497 = vpop.f32.mrb[0].mxu0
    %1498 = vdwg.mxu0
    %v1499 = vld [vmem:[#allocation22] sm:$0x1]
    %v1501 = vlaneseq
    %v1502 = vshrl.u32 %v1501, 7
    %v1503 = vsub.s32 0, %v1502
    %v1504 = vrot.slane %v1499, %v1503
    %v1506 = vadd.f32 %v1493, %v1504
    %v1507 = vadd.f32 %v1496, %v1504
    %v1508 = vmax.f32 %v1506, 0.0
    %v1509 = vmax.f32 %v1507, 0.0
    %v1510 = vpack.c.bf16 %v1509, %v1508
    %1511 = vmatprep.subr.bf16.mxu0 0
    %1512 = vmatpush1.bf16.msra.mxu0 %v1510
    %1513 = vmatprep.subr.bf16.mxu0 0
    %1514 = vmatpush1.bf16.msra.mxu0 0
    %1515 = vmatprep.subr.bf16.mxu0 0
    %1516 = vmatpush1.bf16.msra.mxu0 0
    %1517 = vmatprep.subr.bf16.mxu0 0
    %1518 = vmatpush1.bf16.msra.mxu0 0
    %1519 = vmatprep.subr.bf16.mxu0 0
    %1520 = vmatpush1.bf16.msra.mxu0 0
    %1521 = vmatprep.subr.bf16.mxu0 0
    %1522 = vmatpush1.bf16.msra.mxu0 0
    %1523 = vmatprep.subr.bf16.mxu0 0
    %1524 = vmatpush1.bf16.msra.mxu0 0
    %1525 = vmatprep.subr.bf16.mxu0 0
    %1526 = vmatpush1.bf16.msra.mxu0 0
    %1527 = vmatprep.subr.bf16.mxu0 0
    %1528 = vmatpush1.bf16.msra.mxu0 0
    %1529 = vmatprep.subr.bf16.mxu0 0
    %1530 = vmatpush1.bf16.msra.mxu0 0
    %1531 = vmatprep.subr.bf16.mxu0 0
    %1532 = vmatpush1.bf16.msra.mxu0 0
    %1533 = vmatprep.subr.bf16.mxu0 0
    %1534 = vmatpush1.bf16.msra.mxu0 0
    %1535 = vmatprep.subr.bf16.mxu0 0
    %1536 = vmatpush1.bf16.msra.mxu0 0
    %1537 = vmatprep.subr.bf16.mxu0 0
    %1538 = vmatpush1.bf16.msra.mxu0 0
    %1539 = vmatprep.subr.bf16.mxu0 0
    %1540 = vmatpush1.bf16.msra.mxu0 0
    %1541 = vmatprep.subr.bf16.mxu0 0
    %1542 = vmatpush1.bf16.msra.mxu0 0
    %1543 = vmatprep.mubr.bf16.mxu0 0
    %1544 = vmatmul.mubr.bf16.gmra.mrb[0].mxu0 %v576
    %v1545 = vpop.f32.mrb[0].mxu0
    %v1546 = vadd.f32 0.0, %v1545
    %v1547 = vpop.f32.mrb[0].mxu0
    %v1548 = vpop.f32.mrb[0].mxu0
    %v1549 = vpop.f32.mrb[0].mxu0
    %1550 = vdwg.mxu0
    %v1551 = vmul.f32 %v1546, %v621
    %v1552 = vpack.c.bf16 %v1551, %v1551
    %v1553 = vld [vmem:[#allocation24] sm:$0xf]
    %v1554 = vld [vmem:[#allocation24 + $0x4] sm:$0xf]
    %v1555 = vld [vmem:[#allocation24 + $0x8] sm:$0xf]
    %v1556 = vld [vmem:[#allocation24 + $0xc] sm:$0xf]
    %v1557 = vld [vmem:[#allocation24 + $0x10] sm:$0xf]
    %v1558 = vld [vmem:[#allocation24 + $0x14] sm:$0xf]
    %v1559 = vld [vmem:[#allocation24 + $0x18] sm:$0xf]
    %v1560 = vld [vmem:[#allocation24 + $0x1c] sm:$0xf]
    %v1561 = vld [vmem:[#allocation24 + $0x20] sm:$0xf]
    %v1562 = vld [vmem:[#allocation24 + $0x24] sm:$0xf]
    %v1563 = vld [vmem:[#allocation24 + $0x28] sm:$0xf]
    %v1564 = vld [vmem:[#allocation24 + $0x2c] sm:$0xf]
    %v1565 = vld [vmem:[#allocation24 + $0x30] sm:$0xf]
    %v1566 = vld [vmem:[#allocation24 + $0x34] sm:$0xf]
    %v1567 = vld [vmem:[#allocation24 + $0x38] sm:$0xf]
    %v1568 = vld [vmem:[#allocation24 + $0x3c] sm:$0xf]
    %v1585 = vunpack.c.l.b16 %v1553
    %v1586 = vunpack.c.l.b16 %v1554
    %v1587 = vunpack.c.l.b16 %v1555
    %v1588 = vunpack.c.l.b16 %v1556
    %v1589 = vunpack.c.l.b16 %v1557
    %v1590 = vunpack.c.l.b16 %v1558
    %v1591 = vunpack.c.l.b16 %v1559
    %v1592 = vunpack.c.l.b16 %v1560
    %v1593 = vunpack.c.l.b16 %v1561
    %v1594 = vunpack.c.l.b16 %v1562
    %v1595 = vunpack.c.l.b16 %v1563
    %v1596 = vunpack.c.l.b16 %v1564
    %v1597 = vunpack.c.l.b16 %v1565
    %v1598 = vunpack.c.l.b16 %v1566
    %v1599 = vunpack.c.l.b16 %v1567
    %v1600 = vunpack.c.l.b16 %v1568
    %v1601 = vpack.c.b16 %v1586, %v1585
    %v1602 = vpack.c.b16 %v1588, %v1587
    %v1603 = vpack.c.b16 %v1590, %v1589
    %v1604 = vpack.c.b16 %v1592, %v1591
    %v1605 = vpack.c.b16 %v1594, %v1593
    %v1606 = vpack.c.b16 %v1596, %v1595
    %v1607 = vpack.c.b16 %v1598, %v1597
    %v1608 = vpack.c.b16 %v1600, %v1599
    %1617 = vmatprep.subr.bf16.mxu0 0
    %1618 = vmatpush1.bf16.msra.mxu0 %v1601
    %1619 = vmatprep.subr.bf16.mxu0 0
    %1620 = vmatpush1.bf16.msra.mxu0 %v1602
    %1621 = vmatprep.subr.bf16.mxu0 0
    %1622 = vmatpush1.bf16.msra.mxu0 %v1603
    %1623 = vmatprep.subr.bf16.mxu0 0
    %1624 = vmatpush1.bf16.msra.mxu0 %v1604
    %1625 = vmatprep.subr.bf16.mxu0 0
    %1626 = vmatpush1.bf16.msra.mxu0 %v1605
    %1627 = vmatprep.subr.bf16.mxu0 0
    %1628 = vmatpush1.bf16.msra.mxu0 %v1606
    %1629 = vmatprep.subr.bf16.mxu0 0
    %1630 = vmatpush1.bf16.msra.mxu0 %v1607
    %1631 = vmatprep.subr.bf16.mxu0 0
    %1632 = vmatpush1.bf16.msra.mxu0 %v1608
    %1633 = vmatprep.subr.bf16.mxu0 0
    %1634 = vmatpush1.bf16.msra.mxu0 0
    %1635 = vmatprep.subr.bf16.mxu0 0
    %1636 = vmatpush1.bf16.msra.mxu0 0
    %1637 = vmatprep.subr.bf16.mxu0 0
    %1638 = vmatpush1.bf16.msra.mxu0 0
    %1639 = vmatprep.subr.bf16.mxu0 0
    %1640 = vmatpush1.bf16.msra.mxu0 0
    %1641 = vmatprep.subr.bf16.mxu0 0
    %1642 = vmatpush1.bf16.msra.mxu0 0
    %1643 = vmatprep.subr.bf16.mxu0 0
    %1644 = vmatpush1.bf16.msra.mxu0 0
    %1645 = vmatprep.subr.bf16.mxu0 0
    %1646 = vmatpush1.bf16.msra.mxu0 0
    %1647 = vmatprep.subr.bf16.mxu0 0
    %1648 = vmatpush1.bf16.msra.mxu0 0
    %1649 = vmatprep.mubr.bf16.mxu0 0
    %1650 = vmatmul.mubr.bf16.gmra.mrb[0].mxu0 %v1552
    %v1651 = vpop.f32.mrb[0].mxu0
    %v1652 = vadd.f32 0.0, %v1651
    %v1653 = vpop.f32.mrb[0].mxu0
    %v1654 = vpop.f32.mrb[0].mxu0
    %v1655 = vpop.f32.mrb[0].mxu0
    %1656 = vdwg.mxu0
    %v1657 = vmax.f32 %v1652, 0.0
    %v1658 = vpack.c.bf16 %v1657, %v1657
    %v1659 = vld [vmem:[#allocation25] sm:$0xf]
    %v1660 = vld [vmem:[#allocation25 + $0x4] sm:$0xf]
    %v1661 = vld [vmem:[#allocation25 + $0x8] sm:$0xf]
    %v1662 = vld [vmem:[#allocation25 + $0xc] sm:$0xf]
    %v1663 = vld [vmem:[#allocation25 + $0x10] sm:$0xf]
    %v1664 = vld [vmem:[#allocation25 + $0x14] sm:$0xf]
    %v1665 = vld [vmem:[#allocation25 + $0x18] sm:$0xf]
    %v1666 = vld [vmem:[#allocation25 + $0x1c] sm:$0xf]
    %v1667 = vld [vmem:[#allocation25 + $0x20] sm:$0xf]
    %v1668 = vld [vmem:[#allocation25 + $0x24] sm:$0xf]
    %v1669 = vld [vmem:[#allocation25 + $0x28] sm:$0xf]
    %v1670 = vld [vmem:[#allocation25 + $0x2c] sm:$0xf]
    %v1671 = vld [vmem:[#allocation25 + $0x30] sm:$0xf]
    %v1672 = vld [vmem:[#allocation25 + $0x34] sm:$0xf]
    %v1673 = vld [vmem:[#allocation25 + $0x38] sm:$0xf]
    %v1674 = vld [vmem:[#allocation25 + $0x3c] sm:$0xf]
    %v1691 = vunpack.c.l.b16 %v1659
    %v1692 = vunpack.c.l.b16 %v1660
    %v1693 = vunpack.c.l.b16 %v1661
    %v1694 = vunpack.c.l.b16 %v1662
    %v1695 = vunpack.c.l.b16 %v1663
    %v1696 = vunpack.c.l.b16 %v1664
    %v1697 = vunpack.c.l.b16 %v1665
    %v1698 = vunpack.c.l.b16 %v1666
    %v1699 = vunpack.c.l.b16 %v1667
    %v1700 = vunpack.c.l.b16 %v1668
    %v1701 = vunpack.c.l.b16 %v1669
    %v1702 = vunpack.c.l.b16 %v1670
    %v1703 = vunpack.c.l.b16 %v1671
    %v1704 = vunpack.c.l.b16 %v1672
    %v1705 = vunpack.c.l.b16 %v1673
    %v1706 = vunpack.c.l.b16 %v1674
    %v1707 = vpack.c.b16 %v1692, %v1691
    %v1708 = vpack.c.b16 %v1694, %v1693
    %v1709 = vpack.c.b16 %v1696, %v1695
    %v1710 = vpack.c.b16 %v1698, %v1697
    %v1711 = vpack.c.b16 %v1700, %v1699
    %v1712 = vpack.c.b16 %v1702, %v1701
    %v1713 = vpack.c.b16 %v1704, %v1703
    %v1714 = vpack.c.b16 %v1706, %v1705
    %1723 = vmatprep.subr.bf16.mxu0 0
    %1724 = vmatpush1.bf16.msra.mxu0 %v1707
    %1725 = vmatprep.subr.bf16.mxu0 0
    %1726 = vmatpush1.bf16.msra.mxu0 %v1708
    %1727 = vmatprep.subr.bf16.mxu0 0
    %1728 = vmatpush1.bf16.msra.mxu0 %v1709
    %1729 = vmatprep.subr.bf16.mxu0 0
    %1730 = vmatpush1.bf16.msra.mxu0 %v1710
    %1731 = vmatprep.subr.bf16.mxu0 0
    %1732 = vmatpush1.bf16.msra.mxu0 %v1711
    %1733 = vmatprep.subr.bf16.mxu0 0
    %1734 = vmatpush1.bf16.msra.mxu0 %v1712
    %1735 = vmatprep.subr.bf16.mxu0 0
    %1736 = vmatpush1.bf16.msra.mxu0 %v1713
    %1737 = vmatprep.subr.bf16.mxu0 0
    %1738 = vmatpush1.bf16.msra.mxu0 %v1714
    %1739 = vmatprep.subr.bf16.mxu0 0
    %1740 = vmatpush1.bf16.msra.mxu0 0
    %1741 = vmatprep.subr.bf16.mxu0 0
    %1742 = vmatpush1.bf16.msra.mxu0 0
    %1743 = vmatprep.subr.bf16.mxu0 0
    %1744 = vmatpush1.bf16.msra.mxu0 0
    %1745 = vmatprep.subr.bf16.mxu0 0
    %1746 = vmatpush1.bf16.msra.mxu0 0
    %1747 = vmatprep.subr.bf16.mxu0 0
    %1748 = vmatpush1.bf16.msra.mxu0 0
    %1749 = vmatprep.subr.bf16.mxu0 0
    %1750 = vmatpush1.bf16.msra.mxu0 0
    %1751 = vmatprep.subr.bf16.mxu0 0
    %1752 = vmatpush1.bf16.msra.mxu0 0
    %1753 = vmatprep.subr.bf16.mxu0 0
    %1754 = vmatpush1.bf16.msra.mxu0 0
    %1755 = vmatprep.mubr.bf16.mxu0 0
    %1756 = vmatmul.mubr.bf16.gmra.mrb[0].mxu0 %v1658
    %v1757 = vpop.f32.mrb[0].mxu0
    %v1758 = vadd.f32 0.0, %v1757
    %v1759 = vpop.f32.mrb[0].mxu0
    %v1760 = vpop.f32.mrb[0].mxu0
    %v1761 = vpop.f32.mrb[0].mxu0
    %1762 = vdwg.mxu0
    %v1763 = vsub.f32 0.0, %v1758
    %v1764 = vmul.f32 %v1763, 1.442695
    %v1765 = vpow.pop %v1764
    %v1766 = vadd.f32 %v1765, 1.0
    %v1767 = vrcp.pop %v1766
    %v1768 = vpack.c.bf16 %v1767, %v1767
    %v1770 = vsel %vm806, %v1768, 0
    %1772 = vmatprep.subr.bf16.mxu0 0
    %1773 = vmatpush1.bf16.msra.mxu0 %v1770
    %1774 = vmatprep.subr.bf16.mxu0 0
    %1775 = vmatpush1.bf16.msra.mxu0 0
    %1776 = vmatprep.subr.bf16.mxu0 0
    %1777 = vmatpush1.bf16.msra.mxu0 0
    %1778 = vmatprep.subr.bf16.mxu0 0
    %1779 = vmatpush1.bf16.msra.mxu0 0
    %1780 = vmatprep.subr.bf16.mxu0 0
    %1781 = vmatpush1.bf16.msra.mxu0 0
    %1782 = vmatprep.subr.bf16.mxu0 0
    %1783 = vmatpush1.bf16.msra.mxu0 0
    %1784 = vmatprep.subr.bf16.mxu0 0
    %1785 = vmatpush1.bf16.msra.mxu0 0
    %1786 = vmatprep.subr.bf16.mxu0 0
    %1787 = vmatpush1.bf16.msra.mxu0 0
    %1788 = vmatprep.subr.bf16.mxu0 0
    %1789 = vmatpush1.bf16.msra.mxu0 0
    %1790 = vmatprep.subr.bf16.mxu0 0
    %1791 = vmatpush1.bf16.msra.mxu0 0
    %1792 = vmatprep.subr.bf16.mxu0 0
    %1793 = vmatpush1.bf16.msra.mxu0 0
    %1794 = vmatprep.subr.bf16.mxu0 0
    %1795 = vmatpush1.bf16.msra.mxu0 0
    %1796 = vmatprep.subr.bf16.mxu0 0
    %1797 = vmatpush1.bf16.msra.mxu0 0
    %1798 = vmatprep.subr.bf16.mxu0 0
    %1799 = vmatpush1.bf16.msra.mxu0 0
    %1800 = vmatprep.subr.bf16.mxu0 0
    %1801 = vmatpush1.bf16.msra.mxu0 0
    %1802 = vmatprep.subr.bf16.mxu0 0
    %1803 = vmatpush1.bf16.msra.mxu0 0
    %1804 = vmatprep.mubr.bf16.mxu0 0
    %1805 = vmatmul.mubr.bf16.gmra.mrb[0].mxu0 %v804
    %v1806 = vpop.f32.mrb[0].mxu0
    %v1807 = vadd.f32 0.0, %v1806
    %v1808 = vpop.f32.mrb[0].mxu0
    %v1809 = vpop.f32.mrb[0].mxu0
    %v1810 = vadd.f32 0.0, %v1809
    %v1811 = vpop.f32.mrb[0].mxu0
    %1812 = vdwg.mxu0
    %v1813 = vmul.f32 %v1508, %v1807
    %v1814 = vmul.f32 %v1509, %v1810
    %v1815 = vpack.c.bf16 %v1814, %v1813
    %1816 = vmatprep.subr.bf16.mxu0 0
    %1817 = vmatpush1.bf16.msra.mxu0 %v1815
    %1818 = vmatprep.subr.bf16.mxu0 0
    %1819 = vmatpush1.bf16.msra.mxu0 0
    %1820 = vmatprep.subr.bf16.mxu0 0
    %1821 = vmatpush1.bf16.msra.mxu0 0
    %1822 = vmatprep.subr.bf16.mxu0 0
    %1823 = vmatpush1.bf16.msra.mxu0 0
    %1824 = vmatprep.subr.bf16.mxu0 0
    %1825 = vmatpush1.bf16.msra.mxu0 0
    %1826 = vmatprep.subr.bf16.mxu0 0
    %1827 = vmatpush1.bf16.msra.mxu0 0
    %1828 = vmatprep.subr.bf16.mxu0 0
    %1829 = vmatpush1.bf16.msra.mxu0 0
    %1830 = vmatprep.subr.bf16.mxu0 0
    %1831 = vmatpush1.bf16.msra.mxu0 0
    %1832 = vmatprep.subr.bf16.mxu0 0
    %1833 = vmatpush1.bf16.msra.mxu0 0
    %1834 = vmatprep.subr.bf16.mxu0 0
    %1835 = vmatpush1.bf16.msra.mxu0 0
    %1836 = vmatprep.subr.bf16.mxu0 0
    %1837 = vmatpush1.bf16.msra.mxu0 0
    %1838 = vmatprep.subr.bf16.mxu0 0
    %1839 = vmatpush1.bf16.msra.mxu0 0
    %1840 = vmatprep.subr.bf16.mxu0 0
    %1841 = vmatpush1.bf16.msra.mxu0 0
    %1842 = vmatprep.subr.bf16.mxu0 0
    %1843 = vmatpush1.bf16.msra.mxu0 0
    %1844 = vmatprep.subr.bf16.mxu0 0
    %1845 = vmatpush1.bf16.msra.mxu0 0
    %1846 = vmatprep.subr.bf16.mxu0 0
    %1847 = vmatpush1.bf16.msra.mxu0 0
    %1848 = vmatprep.mubr.bf16.mxu0 0
    %1849 = vmatmul.mubr.bf16.gmra.mrb[0].mxu0 %v576
    %v1850 = vpop.f32.mrb[0].mxu0
    %v1851 = vadd.f32 0.0, %v1850
    %v1852 = vpop.f32.mrb[0].mxu0
    %v1853 = vpop.f32.mrb[0].mxu0
    %v1854 = vpop.f32.mrb[0].mxu0
    %1855 = vdwg.mxu0
    %v1856 = vmul.f32 %v1851, %v621
    %v1857 = vpack.c.bf16 %v1856, %v1856
    %v1858 = vld [vmem:[#allocation27] sm:$0xff]
    %v1859 = vld [vmem:[#allocation27 + $0x8] sm:$0xff]
    %v1860 = vld [vmem:[#allocation27 + $0x10] sm:$0xff]
    %v1861 = vld [vmem:[#allocation27 + $0x18] sm:$0xff]
    %v1862 = vld [vmem:[#allocation27 + $0x20] sm:$0xff]
    %v1863 = vld [vmem:[#allocation27 + $0x28] sm:$0xff]
    %v1864 = vld [vmem:[#allocation27 + $0x30] sm:$0xff]
    %v1865 = vld [vmem:[#allocation27 + $0x38] sm:$0xff]
    %v1866 = vld [vmem:[#allocation27 + $0x40] sm:$0xff]
    %v1867 = vld [vmem:[#allocation27 + $0x48] sm:$0xff]
    %v1868 = vld [vmem:[#allocation27 + $0x50] sm:$0xff]
    %v1869 = vld [vmem:[#allocation27 + $0x58] sm:$0xff]
    %v1870 = vld [vmem:[#allocation27 + $0x60] sm:$0xff]
    %v1871 = vld [vmem:[#allocation27 + $0x68] sm:$0xff]
    %v1872 = vld [vmem:[#allocation27 + $0x70] sm:$0xff]
    %v1873 = vld [vmem:[#allocation27 + $0x78] sm:$0xff]
    %v1874 = vld [vmem:[#allocation27 + $0x80] sm:$0xff]
    %v1875 = vld [vmem:[#allocation27 + $0x88] sm:$0xff]
    %v1876 = vld [vmem:[#allocation27 + $0x90] sm:$0xff]
    %v1877 = vld [vmem:[#allocation27 + $0x98] sm:$0xff]
    %v1878 = vld [vmem:[#allocation27 + $0xa0] sm:$0xff]
    %v1879 = vld [vmem:[#allocation27 + $0xa8] sm:$0xff]
    %v1880 = vld [vmem:[#allocation27 + $0xb0] sm:$0xff]
    %v1881 = vld [vmem:[#allocation27 + $0xb8] sm:$0xff]
    %v1882 = vld [vmem:[#allocation27 + $0xc0] sm:$0xff]
    %v1883 = vld [vmem:[#allocation27 + $0xc8] sm:$0xff]
    %v1884 = vld [vmem:[#allocation27 + $0xd0] sm:$0xff]
    %v1885 = vld [vmem:[#allocation27 + $0xd8] sm:$0xff]
    %v1886 = vld [vmem:[#allocation27 + $0xe0] sm:$0xff]
    %v1887 = vld [vmem:[#allocation27 + $0xe8] sm:$0xff]
    %v1888 = vld [vmem:[#allocation27 + $0xf0] sm:$0xff]
    %v1889 = vld [vmem:[#allocation27 + $0xf8] sm:$0xff]
    %v1890 = vld [vmem:[#allocation27 + $0x100] sm:$0xff]
    %v1891 = vld [vmem:[#allocation27 + $0x108] sm:$0xff]
    %v1892 = vld [vmem:[#allocation27 + $0x110] sm:$0xff]
    %v1893 = vld [vmem:[#allocation27 + $0x118] sm:$0xff]
    %v1894 = vld [vmem:[#allocation27 + $0x120] sm:$0xff]
    %v1895 = vld [vmem:[#allocation27 + $0x128] sm:$0xff]
    %v1896 = vld [vmem:[#allocation27 + $0x130] sm:$0xff]
    %v1897 = vld [vmem:[#allocation27 + $0x138] sm:$0xff]
    %v1898 = vld [vmem:[#allocation27 + $0x140] sm:$0xff]
    %v1899 = vld [vmem:[#allocation27 + $0x148] sm:$0xff]
    %v1900 = vld [vmem:[#allocation27 + $0x150] sm:$0xff]
    %v1901 = vld [vmem:[#allocation27 + $0x158] sm:$0xff]
    %v1902 = vld [vmem:[#allocation27 + $0x160] sm:$0xff]
    %v1903 = vld [vmem:[#allocation27 + $0x168] sm:$0xff]
    %v1904 = vld [vmem:[#allocation27 + $0x170] sm:$0xff]
    %v1905 = vld [vmem:[#allocation27 + $0x178] sm:$0xff]
    %v1906 = vld [vmem:[#allocation27 + $0x180] sm:$0xff]
    %v1907 = vld [vmem:[#allocation27 + $0x188] sm:$0xff]
    %v1908 = vld [vmem:[#allocation27 + $0x190] sm:$0xff]
    %v1909 = vld [vmem:[#allocation27 + $0x198] sm:$0xff]
    %v1910 = vld [vmem:[#allocation27 + $0x1a0] sm:$0xff]
    %v1911 = vld [vmem:[#allocation27 + $0x1a8] sm:$0xff]
    %v1912 = vld [vmem:[#allocation27 + $0x1b0] sm:$0xff]
    %v1913 = vld [vmem:[#allocation27 + $0x1b8] sm:$0xff]
    %v1914 = vld [vmem:[#allocation27 + $0x1c0] sm:$0xff]
    %v1915 = vld [vmem:[#allocation27 + $0x1c8] sm:$0xff]
    %v1916 = vld [vmem:[#allocation27 + $0x1d0] sm:$0xff]
    %v1917 = vld [vmem:[#allocation27 + $0x1d8] sm:$0xff]
    %v1918 = vld [vmem:[#allocation27 + $0x1e0] sm:$0xff]
    %v1919 = vld [vmem:[#allocation27 + $0x1e8] sm:$0xff]
    %v1920 = vld [vmem:[#allocation27 + $0x1f0] sm:$0xff]
    %v1921 = vld [vmem:[#allocation27 + $0x1f8] sm:$0xff]
    %v1922 = vld [vmem:[#allocation28] sm:$0xff]
    %v1924 = vlaneseq
    %v1925 = vshrl.u32 %v1924, 7
    %v1926 = vsub.s32 0, %v1925
    %v1927 = vrot.slane %v1922, %v1926
    %v1928 = vlaneseq
    %v1929 = vshrl.u32 %v1928, 7
    %v1930 = vsub.s32 1, %v1929
    %v1931 = vrot.slane %v1922, %v1930
    %v1932 = vlaneseq
    %v1933 = vshrl.u32 %v1932, 7
    %v1934 = vsub.s32 2, %v1933
    %v1935 = vrot.slane %v1922, %v1934
    %v1936 = vlaneseq
    %v1937 = vshrl.u32 %v1936, 7
    %v1938 = vsub.s32 3, %v1937
    %v1939 = vrot.slane %v1922, %v1938
    %v1940 = vlaneseq
    %v1941 = vshrl.u32 %v1940, 7
    %v1942 = vsub.s32 4, %v1941
    %v1943 = vrot.slane %v1922, %v1942
    %v1944 = vlaneseq
    %v1945 = vshrl.u32 %v1944, 7
    %v1946 = vsub.s32 5, %v1945
    %v1947 = vrot.slane %v1922, %v1946
    %v1948 = vlaneseq
    %v1949 = vshrl.u32 %v1948, 7
    %v1950 = vsub.s32 6, %v1949
    %v1951 = vrot.slane %v1922, %v1950
    %v1952 = vlaneseq
    %v1953 = vshrl.u32 %v1952, 7
    %v1954 = vsub.s32 7, %v1953
    %v1955 = vrot.slane %v1922, %v1954
    %v2028 = vunpack.c.l.b16 %v1858
    %v2029 = vunpack.c.h.b16 %v1858
    %v2030 = vunpack.c.l.b16 %v1859
    %v2031 = vunpack.c.h.b16 %v1859
    %v2032 = vunpack.c.l.b16 %v1860
    %v2033 = vunpack.c.h.b16 %v1860
    %v2034 = vunpack.c.l.b16 %v1861
    %v2035 = vunpack.c.h.b16 %v1861
    %v2036 = vunpack.c.l.b16 %v1862
    %v2037 = vunpack.c.h.b16 %v1862
    %v2038 = vunpack.c.l.b16 %v1863
    %v2039 = vunpack.c.h.b16 %v1863
    %v2040 = vunpack.c.l.b16 %v1864
    %v2041 = vunpack.c.h.b16 %v1864
    %v2042 = vunpack.c.l.b16 %v1865
    %v2043 = vunpack.c.h.b16 %v1865
    %v2044 = vunpack.c.l.b16 %v1866
    %v2045 = vunpack.c.h.b16 %v1866
    %v2046 = vunpack.c.l.b16 %v1867
    %v2047 = vunpack.c.h.b16 %v1867
    %v2048 = vunpack.c.l.b16 %v1868
    %v2049 = vunpack.c.h.b16 %v1868
    %v2050 = vunpack.c.l.b16 %v1869
    %v2051 = vunpack.c.h.b16 %v1869
    %v2052 = vunpack.c.l.b16 %v1870
    %v2053 = vunpack.c.h.b16 %v1870
    %v2054 = vunpack.c.l.b16 %v1871
    %v2055 = vunpack.c.h.b16 %v1871
    %v2056 = vunpack.c.l.b16 %v1872
    %v2057 = vunpack.c.h.b16 %v1872
    %v2058 = vunpack.c.l.b16 %v1873
    %v2059 = vunpack.c.h.b16 %v1873
    %v2060 = vunpack.c.l.b16 %v1874
    %v2061 = vunpack.c.h.b16 %v1874
    %v2062 = vunpack.c.l.b16 %v1875
    %v2063 = vunpack.c.h.b16 %v1875
    %v2064 = vunpack.c.l.b16 %v1876
    %v2065 = vunpack.c.h.b16 %v1876
    %v2066 = vunpack.c.l.b16 %v1877
    %v2067 = vunpack.c.h.b16 %v1877
    %v2068 = vunpack.c.l.b16 %v1878
    %v2069 = vunpack.c.h.b16 %v1878
    %v2070 = vunpack.c.l.b16 %v1879
    %v2071 = vunpack.c.h.b16 %v1879
    %v2072 = vunpack.c.l.b16 %v1880
    %v2073 = vunpack.c.h.b16 %v1880
    %v2074 = vunpack.c.l.b16 %v1881
    %v2075 = vunpack.c.h.b16 %v1881
    %v2076 = vunpack.c.l.b16 %v1882
    %v2077 = vunpack.c.h.b16 %v1882
    %v2078 = vunpack.c.l.b16 %v1883
    %v2079 = vunpack.c.h.b16 %v1883
    %v2080 = vunpack.c.l.b16 %v1884
    %v2081 = vunpack.c.h.b16 %v1884
    %v2082 = vunpack.c.l.b16 %v1885
    %v2083 = vunpack.c.h.b16 %v1885
    %v2084 = vunpack.c.l.b16 %v1886
    %v2085 = vunpack.c.h.b16 %v1886
    %v2086 = vunpack.c.l.b16 %v1887
    %v2087 = vunpack.c.h.b16 %v1887
    %v2088 = vunpack.c.l.b16 %v1888
    %v2089 = vunpack.c.h.b16 %v1888
    %v2090 = vunpack.c.l.b16 %v1889
    %v2091 = vunpack.c.h.b16 %v1889
    %v2092 = vunpack.c.l.b16 %v1890
    %v2093 = vunpack.c.h.b16 %v1890
    %v2094 = vunpack.c.l.b16 %v1891
    %v2095 = vunpack.c.h.b16 %v1891
    %v2096 = vunpack.c.l.b16 %v1892
    %v2097 = vunpack.c.h.b16 %v1892
    %v2098 = vunpack.c.l.b16 %v1893
    %v2099 = vunpack.c.h.b16 %v1893
    %v2100 = vunpack.c.l.b16 %v1894
    %v2101 = vunpack.c.h.b16 %v1894
    %v2102 = vunpack.c.l.b16 %v1895
    %v2103 = vunpack.c.h.b16 %v1895
    %v2104 = vunpack.c.l.b16 %v1896
    %v2105 = vunpack.c.h.b16 %v1896
    %v2106 = vunpack.c.l.b16 %v1897
    %v2107 = vunpack.c.h.b16 %v1897
    %v2108 = vunpack.c.l.b16 %v1898
    %v2109 = vunpack.c.h.b16 %v1898
    %v2110 = vunpack.c.l.b16 %v1899
    %v2111 = vunpack.c.h.b16 %v1899
    %v2112 = vunpack.c.l.b16 %v1900
    %v2113 = vunpack.c.h.b16 %v1900
    %v2114 = vunpack.c.l.b16 %v1901
    %v2115 = vunpack.c.h.b16 %v1901
    %v2116 = vunpack.c.l.b16 %v1902
    %v2117 = vunpack.c.h.b16 %v1902
    %v2118 = vunpack.c.l.b16 %v1903
    %v2119 = vunpack.c.h.b16 %v1903
    %v2120 = vunpack.c.l.b16 %v1904
    %v2121 = vunpack.c.h.b16 %v1904
    %v2122 = vunpack.c.l.b16 %v1905
    %v2123 = vunpack.c.h.b16 %v1905
    %v2124 = vunpack.c.l.b16 %v1906
    %v2125 = vunpack.c.h.b16 %v1906
    %v2126 = vunpack.c.l.b16 %v1907
    %v2127 = vunpack.c.h.b16 %v1907
    %v2128 = vunpack.c.l.b16 %v1908
    %v2129 = vunpack.c.h.b16 %v1908
    %v2130 = vunpack.c.l.b16 %v1909
    %v2131 = vunpack.c.h.b16 %v1909
    %v2132 = vunpack.c.l.b16 %v1910
    %v2133 = vunpack.c.h.b16 %v1910
    %v2134 = vunpack.c.l.b16 %v1911
    %v2135 = vunpack.c.h.b16 %v1911
    %v2136 = vunpack.c.l.b16 %v1912
    %v2137 = vunpack.c.h.b16 %v1912
    %v2138 = vunpack.c.l.b16 %v1913
    %v2139 = vunpack.c.h.b16 %v1913
    %v2140 = vunpack.c.l.b16 %v1914
    %v2141 = vunpack.c.h.b16 %v1914
    %v2142 = vunpack.c.l.b16 %v1915
    %v2143 = vunpack.c.h.b16 %v1915
    %v2144 = vunpack.c.l.b16 %v1916
    %v2145 = vunpack.c.h.b16 %v1916
    %v2146 = vunpack.c.l.b16 %v1917
    %v2147 = vunpack.c.h.b16 %v1917
    %v2148 = vunpack.c.l.b16 %v1918
    %v2149 = vunpack.c.h.b16 %v1918
    %v2150 = vunpack.c.l.b16 %v1919
    %v2151 = vunpack.c.h.b16 %v1919
    %v2152 = vunpack.c.l.b16 %v1920
    %v2153 = vunpack.c.h.b16 %v1920
    %v2154 = vunpack.c.l.b16 %v1921
    %v2155 = vunpack.c.h.b16 %v1921
    %v2156 = vpack.c.b16 %v2036, %v2028
    %v2157 = vpack.c.b16 %v2037, %v2029
    %v2158 = vpack.c.b16 %v2038, %v2030
    %v2159 = vpack.c.b16 %v2039, %v2031
    %v2160 = vpack.c.b16 %v2040, %v2032
    %v2161 = vpack.c.b16 %v2041, %v2033
    %v2162 = vpack.c.b16 %v2042, %v2034
    %v2163 = vpack.c.b16 %v2043, %v2035
    %v2164 = vpack.c.b16 %v2052, %v2044
    %v2165 = vpack.c.b16 %v2053, %v2045
    %v2166 = vpack.c.b16 %v2054, %v2046
    %v2167 = vpack.c.b16 %v2055, %v2047
    %v2168 = vpack.c.b16 %v2056, %v2048
    %v2169 = vpack.c.b16 %v2057, %v2049
    %v2170 = vpack.c.b16 %v2058, %v2050
    %v2171 = vpack.c.b16 %v2059, %v2051
    %v2172 = vpack.c.b16 %v2068, %v2060
    %v2173 = vpack.c.b16 %v2069, %v2061
    %v2174 = vpack.c.b16 %v2070, %v2062
    %v2175 = vpack.c.b16 %v2071, %v2063
    %v2176 = vpack.c.b16 %v2072, %v2064
    %v2177 = vpack.c.b16 %v2073, %v2065
    %v2178 = vpack.c.b16 %v2074, %v2066
    %v2179 = vpack.c.b16 %v2075, %v2067
    %v2180 = vpack.c.b16 %v2084, %v2076
    %v2181 = vpack.c.b16 %v2085, %v2077
    %v2182 = vpack.c.b16 %v2086, %v2078
    %v2183 = vpack.c.b16 %v2087, %v2079
    %v2184 = vpack.c.b16 %v2088, %v2080
    %v2185 = vpack.c.b16 %v2089, %v2081
    %v2186 = vpack.c.b16 %v2090, %v2082
    %v2187 = vpack.c.b16 %v2091, %v2083
    %v2188 = vpack.c.b16 %v2100, %v2092
    %v2189 = vpack.c.b16 %v2101, %v2093
    %v2190 = vpack.c.b16 %v2102, %v2094
    %v2191 = vpack.c.b16 %v2103, %v2095
    %v2192 = vpack.c.b16 %v2104, %v2096
    %v2193 = vpack.c.b16 %v2105, %v2097
    %v2194 = vpack.c.b16 %v2106, %v2098
    %v2195 = vpack.c.b16 %v2107, %v2099
    %v2196 = vpack.c.b16 %v2116, %v2108
    %v2197 = vpack.c.b16 %v2117, %v2109
    %v2198 = vpack.c.b16 %v2118, %v2110
    %v2199 = vpack.c.b16 %v2119, %v2111
    %v2200 = vpack.c.b16 %v2120, %v2112
    %v2201 = vpack.c.b16 %v2121, %v2113
    %v2202 = vpack.c.b16 %v2122, %v2114
    %v2203 = vpack.c.b16 %v2123, %v2115
    %v2204 = vpack.c.b16 %v2132, %v2124
    %v2205 = vpack.c.b16 %v2133, %v2125
    %v2206 = vpack.c.b16 %v2134, %v2126
    %v2207 = vpack.c.b16 %v2135, %v2127
    %v2208 = vpack.c.b16 %v2136, %v2128
    %v2209 = vpack.c.b16 %v2137, %v2129
    %v2210 = vpack.c.b16 %v2138, %v2130
    %v2211 = vpack.c.b16 %v2139, %v2131
    %v2212 = vpack.c.b16 %v2148, %v2140
    %v2213 = vpack.c.b16 %v2149, %v2141
    %v2214 = vpack.c.b16 %v2150, %v2142
    %v2215 = vpack.c.b16 %v2151, %v2143
    %v2216 = vpack.c.b16 %v2152, %v2144
    %v2217 = vpack.c.b16 %v2153, %v2145
    %v2218 = vpack.c.b16 %v2154, %v2146
    %v2219 = vpack.c.b16 %v2155, %v2147
    %2284 = vmatprep.subr.bf16.mxu0 %v2157
    %2285 = vmatpush1.bf16.msra.mxu0 %v2156
    %2286 = vmatprep.subr.bf16.mxu0 %v2165
    %2287 = vmatpush1.bf16.msra.mxu0 %v2164
    %2288 = vmatprep.subr.bf16.mxu0 %v2173
    %2289 = vmatpush1.bf16.msra.mxu0 %v2172
    %2290 = vmatprep.subr.bf16.mxu0 %v2181
    %2291 = vmatpush1.bf16.msra.mxu0 %v2180
    %2292 = vmatprep.subr.bf16.mxu0 %v2189
    %2293 = vmatpush1.bf16.msra.mxu0 %v2188
    %2294 = vmatprep.subr.bf16.mxu0 %v2197
    %2295 = vmatpush1.bf16.msra.mxu0 %v2196
    %2296 = vmatprep.subr.bf16.mxu0 %v2205
    %2297 = vmatpush1.bf16.msra.mxu0 %v2204
    %2298 = vmatprep.subr.bf16.mxu0 %v2213
    %2299 = vmatpush1.bf16.msra.mxu0 %v2212
    %2300 = vmatprep.subr.bf16.mxu0 0
    %2301 = vmatpush1.bf16.msra.mxu0 0
    %2302 = vmatprep.subr.bf16.mxu0 0
    %2303 = vmatpush1.bf16.msra.mxu0 0
    %2304 = vmatprep.subr.bf16.mxu0 0
    %2305 = vmatpush1.bf16.msra.mxu0 0
    %2306 = vmatprep.subr.bf16.mxu0 0
    %2307 = vmatpush1.bf16.msra.mxu0 0
    %2308 = vmatprep.subr.bf16.mxu0 0
    %2309 = vmatpush1.bf16.msra.mxu0 0
    %2310 = vmatprep.subr.bf16.mxu0 0
    %2311 = vmatpush1.bf16.msra.mxu0 0
    %2312 = vmatprep.subr.bf16.mxu0 0
    %2313 = vmatpush1.bf16.msra.mxu0 0
    %2314 = vmatprep.subr.bf16.mxu0 0
    %2315 = vmatpush1.bf16.msra.mxu0 0
    %2316 = vmatprep.mubr.bf16.mxu0 0
    %2317 = vmatmul.mubr.bf16.gmra.mrb[0].mxu0 %v1857
    %v2318 = vpop.f32.mrb[0].mxu0
    %v2319 = vadd.f32 %v1927, %v2318
    %v2320 = vpop.f32.mrb[0].mxu0
    %v2321 = vadd.f32 %v1931, %v2320
    %v2322 = vpop.f32.mrb[0].mxu0
    %v2323 = vpop.f32.mrb[0].mxu0
    %2324 = vdwg.mxu0
    %2325 = vmatprep.subr.bf16.mxu0 %v2159
    %2326 = vmatpush1.bf16.msra.mxu0 %v2158
    %2327 = vmatprep.subr.bf16.mxu0 %v2167
    %2328 = vmatpush1.bf16.msra.mxu0 %v2166
    %2329 = vmatprep.subr.bf16.mxu0 %v2175
    %2330 = vmatpush1.bf16.msra.mxu0 %v2174
    %2331 = vmatprep.subr.bf16.mxu0 %v2183
    %2332 = vmatpush1.bf16.msra.mxu0 %v2182
    %2333 = vmatprep.subr.bf16.mxu0 %v2191
    %2334 = vmatpush1.bf16.msra.mxu0 %v2190
    %2335 = vmatprep.subr.bf16.mxu0 %v2199
    %2336 = vmatpush1.bf16.msra.mxu0 %v2198
    %2337 = vmatprep.subr.bf16.mxu0 %v2207
    %2338 = vmatpush1.bf16.msra.mxu0 %v2206
    %2339 = vmatprep.subr.bf16.mxu0 %v2215
    %2340 = vmatpush1.bf16.msra.mxu0 %v2214
    %2341 = vmatprep.subr.bf16.mxu0 0
    %2342 = vmatpush1.bf16.msra.mxu0 0
    %2343 = vmatprep.subr.bf16.mxu0 0
    %2344 = vmatpush1.bf16.msra.mxu0 0
    %2345 = vmatprep.subr.bf16.mxu0 0
    %2346 = vmatpush1.bf16.msra.mxu0 0
    %2347 = vmatprep.subr.bf16.mxu0 0
    %2348 = vmatpush1.bf16.msra.mxu0 0
    %2349 = vmatprep.subr.bf16.mxu0 0
    %2350 = vmatpush1.bf16.msra.mxu0 0
    %2351 = vmatprep.subr.bf16.mxu0 0
    %2352 = vmatpush1.bf16.msra.mxu0 0
    %2353 = vmatprep.subr.bf16.mxu0 0
    %2354 = vmatpush1.bf16.msra.mxu0 0
    %2355 = vmatprep.subr.bf16.mxu0 0
    %2356 = vmatpush1.bf16.msra.mxu0 0
    %2357 = vmatprep.mubr.bf16.mxu0 0
    %2358 = vmatmul.mubr.bf16.gmra.mrb[0].mxu0 %v1857
    %v2359 = vpop.f32.mrb[0].mxu0
    %v2360 = vadd.f32 %v1935, %v2359
    %v2361 = vpop.f32.mrb[0].mxu0
    %v2362 = vadd.f32 %v1939, %v2361
    %v2363 = vpop.f32.mrb[0].mxu0
    %v2364 = vpop.f32.mrb[0].mxu0
    %2365 = vdwg.mxu0
    %2366 = vmatprep.subr.bf16.mxu0 %v2161
    %2367 = vmatpush1.bf16.msra.mxu0 %v2160
    %2368 = vmatprep.subr.bf16.mxu0 %v2169
    %2369 = vmatpush1.bf16.msra.mxu0 %v2168
    %2370 = vmatprep.subr.bf16.mxu0 %v2177
    %2371 = vmatpush1.bf16.msra.mxu0 %v2176
    %2372 = vmatprep.subr.bf16.mxu0 %v2185
    %2373 = vmatpush1.bf16.msra.mxu0 %v2184
    %2374 = vmatprep.subr.bf16.mxu0 %v2193
    %2375 = vmatpush1.bf16.msra.mxu0 %v2192
    %2376 = vmatprep.subr.bf16.mxu0 %v2201
    %2377 = vmatpush1.bf16.msra.mxu0 %v2200
    %2378 = vmatprep.subr.bf16.mxu0 %v2209
    %2379 = vmatpush1.bf16.msra.mxu0 %v2208
    %2380 = vmatprep.subr.bf16.mxu0 %v2217
    %2381 = vmatpush1.bf16.msra.mxu0 %v2216
    %2382 = vmatprep.subr.bf16.mxu0 0
    %2383 = vmatpush1.bf16.msra.mxu0 0
    %2384 = vmatprep.subr.bf16.mxu0 0
    %2385 = vmatpush1.bf16.msra.mxu0 0
    %2386 = vmatprep.subr.bf16.mxu0 0
    %2387 = vmatpush1.bf16.msra.mxu0 0
    %2388 = vmatprep.subr.bf16.mxu0 0
    %2389 = vmatpush1.bf16.msra.mxu0 0
    %2390 = vmatprep.subr.bf16.mxu0 0
    %2391 = vmatpush1.bf16.msra.mxu0 0
    %2392 = vmatprep.subr.bf16.mxu0 0
    %2393 = vmatpush1.bf16.msra.mxu0 0
    %2394 = vmatprep.subr.bf16.mxu0 0
    %2395 = vmatpush1.bf16.msra.mxu0 0
    %2396 = vmatprep.subr.bf16.mxu0 0
    %2397 = vmatpush1.bf16.msra.mxu0 0
    %2398 = vmatprep.mubr.bf16.mxu0 0
    %2399 = vmatmul.mubr.bf16.gmra.mrb[0].mxu0 %v1857
    %v2400 = vpop.f32.mrb[0].mxu0
    %v2401 = vadd.f32 %v1943, %v2400
    %v2402 = vpop.f32.mrb[0].mxu0
    %v2403 = vadd.f32 %v1947, %v2402
    %v2404 = vpop.f32.mrb[0].mxu0
    %v2405 = vpop.f32.mrb[0].mxu0
    %2406 = vdwg.mxu0
    %2407 = vmatprep.subr.bf16.mxu0 %v2163
    %2408 = vmatpush1.bf16.msra.mxu0 %v2162
    %2409 = vmatprep.subr.bf16.mxu0 %v2171
    %2410 = vmatpush1.bf16.msra.mxu0 %v2170
    %2411 = vmatprep.subr.bf16.mxu0 %v2179
    %2412 = vmatpush1.bf16.msra.mxu0 %v2178
    %2413 = vmatprep.subr.bf16.mxu0 %v2187
    %2414 = vmatpush1.bf16.msra.mxu0 %v2186
    %2415 = vmatprep.subr.bf16.mxu0 %v2195
    %2416 = vmatpush1.bf16.msra.mxu0 %v2194
    %2417 = vmatprep.subr.bf16.mxu0 %v2203
    %2418 = vmatpush1.bf16.msra.mxu0 %v2202
    %2419 = vmatprep.subr.bf16.mxu0 %v2211
    %2420 = vmatpush1.bf16.msra.mxu0 %v2210
    %2421 = vmatprep.subr.bf16.mxu0 %v2219
    %2422 = vmatpush1.bf16.msra.mxu0 %v2218
    %2423 = vmatprep.subr.bf16.mxu0 0
    %2424 = vmatpush1.bf16.msra.mxu0 0
    %2425 = vmatprep.subr.bf16.mxu0 0
    %2426 = vmatpush1.bf16.msra.mxu0 0
    %2427 = vmatprep.subr.bf16.mxu0 0
    %2428 = vmatpush1.bf16.msra.mxu0 0
    %2429 = vmatprep.subr.bf16.mxu0 0
    %2430 = vmatpush1.bf16.msra.mxu0 0
    %2431 = vmatprep.subr.bf16.mxu0 0
    %2432 = vmatpush1.bf16.msra.mxu0 0
    %2433 = vmatprep.subr.bf16.mxu0 0
    %2434 = vmatpush1.bf16.msra.mxu0 0
    %2435 = vmatprep.subr.bf16.mxu0 0
    %2436 = vmatpush1.bf16.msra.mxu0 0
    %2437 = vmatprep.subr.bf16.mxu0 0
    %2438 = vmatpush1.bf16.msra.mxu0 0
    %2439 = vmatprep.mubr.bf16.mxu0 0
    %2440 = vmatmul.mubr.bf16.gmra.mrb[0].mxu0 %v1857
    %v2441 = vpop.f32.mrb[0].mxu0
    %v2442 = vadd.f32 %v1951, %v2441
    %v2443 = vpop.f32.mrb[0].mxu0
    %v2444 = vadd.f32 %v1955, %v2443
    %v2445 = vpop.f32.mrb[0].mxu0
    %v2446 = vpop.f32.mrb[0].mxu0
    %2447 = vdwg.mxu0
    %v2448 = vmax.f32 %v2319, 0.0
    %v2449 = vmax.f32 %v2321, 0.0
    %v2450 = vmax.f32 %v2360, 0.0
    %v2451 = vmax.f32 %v2362, 0.0
    %v2452 = vmax.f32 %v2401, 0.0
    %v2453 = vmax.f32 %v2403, 0.0
    %v2454 = vmax.f32 %v2442, 0.0
    %v2455 = vmax.f32 %v2444, 0.0
    %v2456 = vpack.c.bf16 %v2448, %v2448
    %v2457 = vpack.c.bf16 %v2449, %v2449
    %v2458 = vpack.c.bf16 %v2450, %v2450
    %v2459 = vpack.c.bf16 %v2451, %v2451
    %v2460 = vpack.c.bf16 %v2452, %v2452
    %v2461 = vpack.c.bf16 %v2453, %v2453
    %v2462 = vpack.c.bf16 %v2454, %v2454
    %v2463 = vpack.c.bf16 %v2455, %v2455
    %v2464 = vld [vmem:[#allocation30] sm:$0xff]
    %v2465 = vld [vmem:[#allocation30 + $0x8] sm:$0xff]
    %v2466 = vld [vmem:[#allocation30 + $0x10] sm:$0xff]
    %v2467 = vld [vmem:[#allocation30 + $0x18] sm:$0xff]
    %v2468 = vld [vmem:[#allocation30 + $0x20] sm:$0xff]
    %v2469 = vld [vmem:[#allocation30 + $0x28] sm:$0xff]
    %v2470 = vld [vmem:[#allocation30 + $0x30] sm:$0xff]
    %v2471 = vld [vmem:[#allocation30 + $0x38] sm:$0xff]
    %v2472 = vld [vmem:[#allocation30 + $0x40] sm:$0xff]
    %v2473 = vld [vmem:[#allocation30 + $0x48] sm:$0xff]
    %v2474 = vld [vmem:[#allocation30 + $0x50] sm:$0xff]
    %v2475 = vld [vmem:[#allocation30 + $0x58] sm:$0xff]
    %v2476 = vld [vmem:[#allocation30 + $0x60] sm:$0xff]
    %v2477 = vld [vmem:[#allocation30 + $0x68] sm:$0xff]
    %v2478 = vld [vmem:[#allocation30 + $0x70] sm:$0xff]
    %v2479 = vld [vmem:[#allocation30 + $0x78] sm:$0xff]
    %v2480 = vld [vmem:[#allocation30 + $0x80] sm:$0xff]
    %v2481 = vld [vmem:[#allocation30 + $0x88] sm:$0xff]
    %v2482 = vld [vmem:[#allocation30 + $0x90] sm:$0xff]
    %v2483 = vld [vmem:[#allocation30 + $0x98] sm:$0xff]
    %v2484 = vld [vmem:[#allocation30 + $0xa0] sm:$0xff]
    %v2485 = vld [vmem:[#allocation30 + $0xa8] sm:$0xff]
    %v2486 = vld [vmem:[#allocation30 + $0xb0] sm:$0xff]
    %v2487 = vld [vmem:[#allocation30 + $0xb8] sm:$0xff]
    %v2488 = vld [vmem:[#allocation30 + $0xc0] sm:$0xff]
    %v2489 = vld [vmem:[#allocation30 + $0xc8] sm:$0xff]
    %v2490 = vld [vmem:[#allocation30 + $0xd0] sm:$0xff]
    %v2491 = vld [vmem:[#allocation30 + $0xd8] sm:$0xff]
    %v2492 = vld [vmem:[#allocation30 + $0xe0] sm:$0xff]
    %v2493 = vld [vmem:[#allocation30 + $0xe8] sm:$0xff]
    %v2494 = vld [vmem:[#allocation30 + $0xf0] sm:$0xff]
    %v2495 = vld [vmem:[#allocation30 + $0xf8] sm:$0xff]
    %v2496 = vld [vmem:[#allocation30 + $0x100] sm:$0xff]
    %v2497 = vld [vmem:[#allocation30 + $0x108] sm:$0xff]
    %v2498 = vld [vmem:[#allocation30 + $0x110] sm:$0xff]
    %v2499 = vld [vmem:[#allocation30 + $0x118] sm:$0xff]
    %v2500 = vld [vmem:[#allocation30 + $0x120] sm:$0xff]
    %v2501 = vld [vmem:[#allocation30 + $0x128] sm:$0xff]
    %v2502 = vld [vmem:[#allocation30 + $0x130] sm:$0xff]
    %v2503 = vld [vmem:[#allocation30 + $0x138] sm:$0xff]
    %v2504 = vld [vmem:[#allocation30 + $0x140] sm:$0xff]
    %v2505 = vld [vmem:[#allocation30 + $0x148] sm:$0xff]
    %v2506 = vld [vmem:[#allocation30 + $0x150] sm:$0xff]
    %v2507 = vld [vmem:[#allocation30 + $0x158] sm:$0xff]
    %v2508 = vld [vmem:[#allocation30 + $0x160] sm:$0xff]
    %v2509 = vld [vmem:[#allocation30 + $0x168] sm:$0xff]
    %v2510 = vld [vmem:[#allocation30 + $0x170] sm:$0xff]
    %v2511 = vld [vmem:[#allocation30 + $0x178] sm:$0xff]
    %v2512 = vld [vmem:[#allocation30 + $0x180] sm:$0xff]
    %v2513 = vld [vmem:[#allocation30 + $0x188] sm:$0xff]
    %v2514 = vld [vmem:[#allocation30 + $0x190] sm:$0xff]
    %v2515 = vld [vmem:[#allocation30 + $0x198] sm:$0xff]
    %v2516 = vld [vmem:[#allocation30 + $0x1a0] sm:$0xff]
    %v2517 = vld [vmem:[#allocation30 + $0x1a8] sm:$0xff]
    %v2518 = vld [vmem:[#allocation30 + $0x1b0] sm:$0xff]
    %v2519 = vld [vmem:[#allocation30 + $0x1b8] sm:$0xff]
    %v2520 = vld [vmem:[#allocation30 + $0x1c0] sm:$0xff]
    %v2521 = vld [vmem:[#allocation30 + $0x1c8] sm:$0xff]
    %v2522 = vld [vmem:[#allocation30 + $0x1d0] sm:$0xff]
    %v2523 = vld [vmem:[#allocation30 + $0x1d8] sm:$0xff]
    %v2524 = vld [vmem:[#allocation30 + $0x1e0] sm:$0xff]
    %v2525 = vld [vmem:[#allocation30 + $0x1e8] sm:$0xff]
    %v2526 = vld [vmem:[#allocation30 + $0x1f0] sm:$0xff]
    %v2527 = vld [vmem:[#allocation30 + $0x1f8] sm:$0xff]
    %v2528 = vld [vmem:[#allocation30 + $0x200] sm:$0xff]
    %v2529 = vld [vmem:[#allocation30 + $0x208] sm:$0xff]
    %v2530 = vld [vmem:[#allocation30 + $0x210] sm:$0xff]
    %v2531 = vld [vmem:[#allocation30 + $0x218] sm:$0xff]
    %v2532 = vld [vmem:[#allocation30 + $0x220] sm:$0xff]
    %v2533 = vld [vmem:[#allocation30 + $0x228] sm:$0xff]
    %v2534 = vld [vmem:[#allocation30 + $0x230] sm:$0xff]
    %v2535 = vld [vmem:[#allocation30 + $0x238] sm:$0xff]
    %v2536 = vld [vmem:[#allocation30 + $0x240] sm:$0xff]
    %v2537 = vld [vmem:[#allocation30 + $0x248] sm:$0xff]
    %v2538 = vld [vmem:[#allocation30 + $0x250] sm:$0xff]
    %v2539 = vld [vmem:[#allocation30 + $0x258] sm:$0xff]
    %v2540 = vld [vmem:[#allocation30 + $0x260] sm:$0xff]
    %v2541 = vld [vmem:[#allocation30 + $0x268] sm:$0xff]
    %v2542 = vld [vmem:[#allocation30 + $0x270] sm:$0xff]
    %v2543 = vld [vmem:[#allocation30 + $0x278] sm:$0xff]
    %v2544 = vld [vmem:[#allocation30 + $0x280] sm:$0xff]
    %v2545 = vld [vmem:[#allocation30 + $0x288] sm:$0xff]
    %v2546 = vld [vmem:[#allocation30 + $0x290] sm:$0xff]
    %v2547 = vld [vmem:[#allocation30 + $0x298] sm:$0xff]
    %v2548 = vld [vmem:[#allocation30 + $0x2a0] sm:$0xff]
    %v2549 = vld [vmem:[#allocation30 + $0x2a8] sm:$0xff]
    %v2550 = vld [vmem:[#allocation30 + $0x2b0] sm:$0xff]
    %v2551 = vld [vmem:[#allocation30 + $0x2b8] sm:$0xff]
    %v2552 = vld [vmem:[#allocation30 + $0x2c0] sm:$0xff]
    %v2553 = vld [vmem:[#allocation30 + $0x2c8] sm:$0xff]
    %v2554 = vld [vmem:[#allocation30 + $0x2d0] sm:$0xff]
    %v2555 = vld [vmem:[#allocation30 + $0x2d8] sm:$0xff]
    %v2556 = vld [vmem:[#allocation30 + $0x2e0] sm:$0xff]
    %v2557 = vld [vmem:[#allocation30 + $0x2e8] sm:$0xff]
    %v2558 = vld [vmem:[#allocation30 + $0x2f0] sm:$0xff]
    %v2559 = vld [vmem:[#allocation30 + $0x2f8] sm:$0xff]
    %v2560 = vld [vmem:[#allocation30 + $0x300] sm:$0xff]
    %v2561 = vld [vmem:[#allocation30 + $0x308] sm:$0xff]
    %v2562 = vld [vmem:[#allocation30 + $0x310] sm:$0xff]
    %v2563 = vld [vmem:[#allocation30 + $0x318] sm:$0xff]
    %v2564 = vld [vmem:[#allocation30 + $0x320] sm:$0xff]
    %v2565 = vld [vmem:[#allocation30 + $0x328] sm:$0xff]
    %v2566 = vld [vmem:[#allocation30 + $0x330] sm:$0xff]
    %v2567 = vld [vmem:[#allocation30 + $0x338] sm:$0xff]
    %v2568 = vld [vmem:[#allocation30 + $0x340] sm:$0xff]
    %v2569 = vld [vmem:[#allocation30 + $0x348] sm:$0xff]
    %v2570 = vld [vmem:[#allocation30 + $0x350] sm:$0xff]
    %v2571 = vld [vmem:[#allocation30 + $0x358] sm:$0xff]
    %v2572 = vld [vmem:[#allocation30 + $0x360] sm:$0xff]
    %v2573 = vld [vmem:[#allocation30 + $0x368] sm:$0xff]
    %v2574 = vld [vmem:[#allocation30 + $0x370] sm:$0xff]
    %v2575 = vld [vmem:[#allocation30 + $0x378] sm:$0xff]
    %v2576 = vld [vmem:[#allocation30 + $0x380] sm:$0xff]
    %v2577 = vld [vmem:[#allocation30 + $0x388] sm:$0xff]
    %v2578 = vld [vmem:[#allocation30 + $0x390] sm:$0xff]
    %v2579 = vld [vmem:[#allocation30 + $0x398] sm:$0xff]
    %v2580 = vld [vmem:[#allocation30 + $0x3a0] sm:$0xff]
    %v2581 = vld [vmem:[#allocation30 + $0x3a8] sm:$0xff]
    %v2582 = vld [vmem:[#allocation30 + $0x3b0] sm:$0xff]
    %v2583 = vld [vmem:[#allocation30 + $0x3b8] sm:$0xff]
    %v2584 = vld [vmem:[#allocation30 + $0x3c0] sm:$0xff]
    %v2585 = vld [vmem:[#allocation30 + $0x3c8] sm:$0xff]
    %v2586 = vld [vmem:[#allocation30 + $0x3d0] sm:$0xff]
    %v2587 = vld [vmem:[#allocation30 + $0x3d8] sm:$0xff]
    %v2588 = vld [vmem:[#allocation30 + $0x3e0] sm:$0xff]
    %v2589 = vld [vmem:[#allocation30 + $0x3e8] sm:$0xff]
    %v2590 = vld [vmem:[#allocation30 + $0x3f0] sm:$0xff]
    %v2591 = vld [vmem:[#allocation30 + $0x3f8] sm:$0xff]
    %v2592 = vld [vmem:[#allocation30 + $0x400] sm:$0xff]
    %v2593 = vld [vmem:[#allocation30 + $0x408] sm:$0xff]
    %v2594 = vld [vmem:[#allocation30 + $0x410] sm:$0xff]
    %v2595 = vld [vmem:[#allocation30 + $0x418] sm:$0xff]
    %v2596 = vld [vmem:[#allocation30 + $0x420] sm:$0xff]
    %v2597 = vld [vmem:[#allocation30 + $0x428] sm:$0xff]
    %v2598 = vld [vmem:[#allocation30 + $0x430] sm:$0xff]
    %v2599 = vld [vmem:[#allocation30 + $0x438] sm:$0xff]
    %v2600 = vld [vmem:[#allocation30 + $0x440] sm:$0xff]
    %v2601 = vld [vmem:[#allocation30 + $0x448] sm:$0xff]
    %v2602 = vld [vmem:[#allocation30 + $0x450] sm:$0xff]
    %v2603 = vld [vmem:[#allocation30 + $0x458] sm:$0xff]
    %v2604 = vld [vmem:[#allocation30 + $0x460] sm:$0xff]
    %v2605 = vld [vmem:[#allocation30 + $0x468] sm:$0xff]
    %v2606 = vld [vmem:[#allocation30 + $0x470] sm:$0xff]
    %v2607 = vld [vmem:[#allocation30 + $0x478] sm:$0xff]
    %v2608 = vld [vmem:[#allocation30 + $0x480] sm:$0xff]
    %v2609 = vld [vmem:[#allocation30 + $0x488] sm:$0xff]
    %v2610 = vld [vmem:[#allocation30 + $0x490] sm:$0xff]
    %v2611 = vld [vmem:[#allocation30 + $0x498] sm:$0xff]
    %v2612 = vld [vmem:[#allocation30 + $0x4a0] sm:$0xff]
    %v2613 = vld [vmem:[#allocation30 + $0x4a8] sm:$0xff]
    %v2614 = vld [vmem:[#allocation30 + $0x4b0] sm:$0xff]
    %v2615 = vld [vmem:[#allocation30 + $0x4b8] sm:$0xff]
    %v2616 = vld [vmem:[#allocation30 + $0x4c0] sm:$0xff]
    %v2617 = vld [vmem:[#allocation30 + $0x4c8] sm:$0xff]
    %v2618 = vld [vmem:[#allocation30 + $0x4d0] sm:$0xff]
    %v2619 = vld [vmem:[#allocation30 + $0x4d8] sm:$0xff]
    %v2620 = vld [vmem:[#allocation30 + $0x4e0] sm:$0xff]
    %v2621 = vld [vmem:[#allocation30 + $0x4e8] sm:$0xff]
    %v2622 = vld [vmem:[#allocation30 + $0x4f0] sm:$0xff]
    %v2623 = vld [vmem:[#allocation30 + $0x4f8] sm:$0xff]
    %v2624 = vld [vmem:[#allocation30 + $0x500] sm:$0xff]
    %v2625 = vld [vmem:[#allocation30 + $0x508] sm:$0xff]
    %v2626 = vld [vmem:[#allocation30 + $0x510] sm:$0xff]
    %v2627 = vld [vmem:[#allocation30 + $0x518] sm:$0xff]
    %v2628 = vld [vmem:[#allocation30 + $0x520] sm:$0xff]
    %v2629 = vld [vmem:[#allocation30 + $0x528] sm:$0xff]
    %v2630 = vld [vmem:[#allocation30 + $0x530] sm:$0xff]
    %v2631 = vld [vmem:[#allocation30 + $0x538] sm:$0xff]
    %v2632 = vld [vmem:[#allocation30 + $0x540] sm:$0xff]
    %v2633 = vld [vmem:[#allocation30 + $0x548] sm:$0xff]
    %v2634 = vld [vmem:[#allocation30 + $0x550] sm:$0xff]
    %v2635 = vld [vmem:[#allocation30 + $0x558] sm:$0xff]
    %v2636 = vld [vmem:[#allocation30 + $0x560] sm:$0xff]
    %v2637 = vld [vmem:[#allocation30 + $0x568] sm:$0xff]
    %v2638 = vld [vmem:[#allocation30 + $0x570] sm:$0xff]
    %v2639 = vld [vmem:[#allocation30 + $0x578] sm:$0xff]
    %v2640 = vld [vmem:[#allocation30 + $0x580] sm:$0xff]
    %v2641 = vld [vmem:[#allocation30 + $0x588] sm:$0xff]
    %v2642 = vld [vmem:[#allocation30 + $0x590] sm:$0xff]
    %v2643 = vld [vmem:[#allocation30 + $0x598] sm:$0xff]
    %v2644 = vld [vmem:[#allocation30 + $0x5a0] sm:$0xff]
    %v2645 = vld [vmem:[#allocation30 + $0x5a8] sm:$0xff]
    %v2646 = vld [vmem:[#allocation30 + $0x5b0] sm:$0xff]
    %v2647 = vld [vmem:[#allocation30 + $0x5b8] sm:$0xff]
    %v2648 = vld [vmem:[#allocation30 + $0x5c0] sm:$0xff]
    %v2649 = vld [vmem:[#allocation30 + $0x5c8] sm:$0xff]
    %v2650 = vld [vmem:[#allocation30 + $0x5d0] sm:$0xff]
    %v2651 = vld [vmem:[#allocation30 + $0x5d8] sm:$0xff]
    %v2652 = vld [vmem:[#allocation30 + $0x5e0] sm:$0xff]
    %v2653 = vld [vmem:[#allocation30 + $0x5e8] sm:$0xff]
    %v2654 = vld [vmem:[#allocation30 + $0x5f0] sm:$0xff]
    %v2655 = vld [vmem:[#allocation30 + $0x5f8] sm:$0xff]
    %v2656 = vld [vmem:[#allocation30 + $0x600] sm:$0xff]
    %v2657 = vld [vmem:[#allocation30 + $0x608] sm:$0xff]
    %v2658 = vld [vmem:[#allocation30 + $0x610] sm:$0xff]
    %v2659 = vld [vmem:[#allocation30 + $0x618] sm:$0xff]
    %v2660 = vld [vmem:[#allocation30 + $0x620] sm:$0xff]
    %v2661 = vld [vmem:[#allocation30 + $0x628] sm:$0xff]
    %v2662 = vld [vmem:[#allocation30 + $0x630] sm:$0xff]
    %v2663 = vld [vmem:[#allocation30 + $0x638] sm:$0xff]
    %v2664 = vld [vmem:[#allocation30 + $0x640] sm:$0xff]
    %v2665 = vld [vmem:[#allocation30 + $0x648] sm:$0xff]
    %v2666 = vld [vmem:[#allocation30 + $0x650] sm:$0xff]
    %v2667 = vld [vmem:[#allocation30 + $0x658] sm:$0xff]
    %v2668 = vld [vmem:[#allocation30 + $0x660] sm:$0xff]
    %v2669 = vld [vmem:[#allocation30 + $0x668] sm:$0xff]
    %v2670 = vld [vmem:[#allocation30 + $0x670] sm:$0xff]
    %v2671 = vld [vmem:[#allocation30 + $0x678] sm:$0xff]
    %v2672 = vld [vmem:[#allocation30 + $0x680] sm:$0xff]
    %v2673 = vld [vmem:[#allocation30 + $0x688] sm:$0xff]
    %v2674 = vld [vmem:[#allocation30 + $0x690] sm:$0xff]
    %v2675 = vld [vmem:[#allocation30 + $0x698] sm:$0xff]
    %v2676 = vld [vmem:[#allocation30 + $0x6a0] sm:$0xff]
    %v2677 = vld [vmem:[#allocation30 + $0x6a8] sm:$0xff]
    %v2678 = vld [vmem:[#allocation30 + $0x6b0] sm:$0xff]
    %v2679 = vld [vmem:[#allocation30 + $0x6b8] sm:$0xff]
    %v2680 = vld [vmem:[#allocation30 + $0x6c0] sm:$0xff]
    %v2681 = vld [vmem:[#allocation30 + $0x6c8] sm:$0xff]
    %v2682 = vld [vmem:[#allocation30 + $0x6d0] sm:$0xff]
    %v2683 = vld [vmem:[#allocation30 + $0x6d8] sm:$0xff]
    %v2684 = vld [vmem:[#allocation30 + $0x6e0] sm:$0xff]
    %v2685 = vld [vmem:[#allocation30 + $0x6e8] sm:$0xff]
    %v2686 = vld [vmem:[#allocation30 + $0x6f0] sm:$0xff]
    %v2687 = vld [vmem:[#allocation30 + $0x6f8] sm:$0xff]
    %v2688 = vld [vmem:[#allocation30 + $0x700] sm:$0xff]
    %v2689 = vld [vmem:[#allocation30 + $0x708] sm:$0xff]
    %v2690 = vld [vmem:[#allocation30 + $0x710] sm:$0xff]
    %v2691 = vld [vmem:[#allocation30 + $0x718] sm:$0xff]
    %v2692 = vld [vmem:[#allocation30 + $0x720] sm:$0xff]
    %v2693 = vld [vmem:[#allocation30 + $0x728] sm:$0xff]
    %v2694 = vld [vmem:[#allocation30 + $0x730] sm:$0xff]
    %v2695 = vld [vmem:[#allocation30 + $0x738] sm:$0xff]
    %v2696 = vld [vmem:[#allocation30 + $0x740] sm:$0xff]
    %v2697 = vld [vmem:[#allocation30 + $0x748] sm:$0xff]
    %v2698 = vld [vmem:[#allocation30 + $0x750] sm:$0xff]
    %v2699 = vld [vmem:[#allocation30 + $0x758] sm:$0xff]
    %v2700 = vld [vmem:[#allocation30 + $0x760] sm:$0xff]
    %v2701 = vld [vmem:[#allocation30 + $0x768] sm:$0xff]
    %v2702 = vld [vmem:[#allocation30 + $0x770] sm:$0xff]
    %v2703 = vld [vmem:[#allocation30 + $0x778] sm:$0xff]
    %v2704 = vld [vmem:[#allocation30 + $0x780] sm:$0xff]
    %v2705 = vld [vmem:[#allocation30 + $0x788] sm:$0xff]
    %v2706 = vld [vmem:[#allocation30 + $0x790] sm:$0xff]
    %v2707 = vld [vmem:[#allocation30 + $0x798] sm:$0xff]
    %v2708 = vld [vmem:[#allocation30 + $0x7a0] sm:$0xff]
    %v2709 = vld [vmem:[#allocation30 + $0x7a8] sm:$0xff]
    %v2710 = vld [vmem:[#allocation30 + $0x7b0] sm:$0xff]
    %v2711 = vld [vmem:[#allocation30 + $0x7b8] sm:$0xff]
    %v2712 = vld [vmem:[#allocation30 + $0x7c0] sm:$0xff]
    %v2713 = vld [vmem:[#allocation30 + $0x7c8] sm:$0xff]
    %v2714 = vld [vmem:[#allocation30 + $0x7d0] sm:$0xff]
    %v2715 = vld [vmem:[#allocation30 + $0x7d8] sm:$0xff]
    %v2716 = vld [vmem:[#allocation30 + $0x7e0] sm:$0xff]
    %v2717 = vld [vmem:[#allocation30 + $0x7e8] sm:$0xff]
    %v2718 = vld [vmem:[#allocation30 + $0x7f0] sm:$0xff]
    %v2719 = vld [vmem:[#allocation30 + $0x7f8] sm:$0xff]
    %v2720 = vld [vmem:[#allocation30 + $0x800] sm:$0xff]
    %v2721 = vld [vmem:[#allocation30 + $0x808] sm:$0xff]
    %v2722 = vld [vmem:[#allocation30 + $0x810] sm:$0xff]
    %v2723 = vld [vmem:[#allocation30 + $0x818] sm:$0xff]
    %v2724 = vld [vmem:[#allocation30 + $0x820] sm:$0xff]
    %v2725 = vld [vmem:[#allocation30 + $0x828] sm:$0xff]
    %v2726 = vld [vmem:[#allocation30 + $0x830] sm:$0xff]
    %v2727 = vld [vmem:[#allocation30 + $0x838] sm:$0xff]
    %v2728 = vld [vmem:[#allocation30 + $0x840] sm:$0xff]
    %v2729 = vld [vmem:[#allocation30 + $0x848] sm:$0xff]
    %v2730 = vld [vmem:[#allocation30 + $0x850] sm:$0xff]
    %v2731 = vld [vmem:[#allocation30 + $0x858] sm:$0xff]
    %v2732 = vld [vmem:[#allocation30 + $0x860] sm:$0xff]
    %v2733 = vld [vmem:[#allocation30 + $0x868] sm:$0xff]
    %v2734 = vld [vmem:[#allocation30 + $0x870] sm:$0xff]
    %v2735 = vld [vmem:[#allocation30 + $0x878] sm:$0xff]
    %v2736 = vld [vmem:[#allocation30 + $0x880] sm:$0xff]
    %v2737 = vld [vmem:[#allocation30 + $0x888] sm:$0xff]
    %v2738 = vld [vmem:[#allocation30 + $0x890] sm:$0xff]
    %v2739 = vld [vmem:[#allocation30 + $0x898] sm:$0xff]
    %v2740 = vld [vmem:[#allocation30 + $0x8a0] sm:$0xff]
    %v2741 = vld [vmem:[#allocation30 + $0x8a8] sm:$0xff]
    %v2742 = vld [vmem:[#allocation30 + $0x8b0] sm:$0xff]
    %v2743 = vld [vmem:[#allocation30 + $0x8b8] sm:$0xff]
    %v2744 = vld [vmem:[#allocation30 + $0x8c0] sm:$0xff]
    %v2745 = vld [vmem:[#allocation30 + $0x8c8] sm:$0xff]
    %v2746 = vld [vmem:[#allocation30 + $0x8d0] sm:$0xff]
    %v2747 = vld [vmem:[#allocation30 + $0x8d8] sm:$0xff]
    %v2748 = vld [vmem:[#allocation30 + $0x8e0] sm:$0xff]
    %v2749 = vld [vmem:[#allocation30 + $0x8e8] sm:$0xff]
    %v2750 = vld [vmem:[#allocation30 + $0x8f0] sm:$0xff]
    %v2751 = vld [vmem:[#allocation30 + $0x8f8] sm:$0xff]
    %v2752 = vld [vmem:[#allocation30 + $0x900] sm:$0xff]
    %v2753 = vld [vmem:[#allocation30 + $0x908] sm:$0xff]
    %v2754 = vld [vmem:[#allocation30 + $0x910] sm:$0xff]
    %v2755 = vld [vmem:[#allocation30 + $0x918] sm:$0xff]
    %v2756 = vld [vmem:[#allocation30 + $0x920] sm:$0xff]
    %v2757 = vld [vmem:[#allocation30 + $0x928] sm:$0xff]
    %v2758 = vld [vmem:[#allocation30 + $0x930] sm:$0xff]
    %v2759 = vld [vmem:[#allocation30 + $0x938] sm:$0xff]
    %v2760 = vld [vmem:[#allocation30 + $0x940] sm:$0xff]
    %v2761 = vld [vmem:[#allocation30 + $0x948] sm:$0xff]
    %v2762 = vld [vmem:[#allocation30 + $0x950] sm:$0xff]
    %v2763 = vld [vmem:[#allocation30 + $0x958] sm:$0xff]
    %v2764 = vld [vmem:[#allocation30 + $0x960] sm:$0xff]
    %v2765 = vld [vmem:[#allocation30 + $0x968] sm:$0xff]
    %v2766 = vld [vmem:[#allocation30 + $0x970] sm:$0xff]
    %v2767 = vld [vmem:[#allocation30 + $0x978] sm:$0xff]
    %v2768 = vld [vmem:[#allocation30 + $0x980] sm:$0xff]
    %v2769 = vld [vmem:[#allocation30 + $0x988] sm:$0xff]
    %v2770 = vld [vmem:[#allocation30 + $0x990] sm:$0xff]
    %v2771 = vld [vmem:[#allocation30 + $0x998] sm:$0xff]
    %v2772 = vld [vmem:[#allocation30 + $0x9a0] sm:$0xff]
    %v2773 = vld [vmem:[#allocation30 + $0x9a8] sm:$0xff]
    %v2774 = vld [vmem:[#allocation30 + $0x9b0] sm:$0xff]
    %v2775 = vld [vmem:[#allocation30 + $0x9b8] sm:$0xff]
    %v2776 = vld [vmem:[#allocation30 + $0x9c0] sm:$0xff]
    %v2777 = vld [vmem:[#allocation30 + $0x9c8] sm:$0xff]
    %v2778 = vld [vmem:[#allocation30 + $0x9d0] sm:$0xff]
    %v2779 = vld [vmem:[#allocation30 + $0x9d8] sm:$0xff]
    %v2780 = vld [vmem:[#allocation30 + $0x9e0] sm:$0xff]
    %v2781 = vld [vmem:[#allocation30 + $0x9e8] sm:$0xff]
    %v2782 = vld [vmem:[#allocation30 + $0x9f0] sm:$0xff]
    %v2783 = vld [vmem:[#allocation30 + $0x9f8] sm:$0xff]
    %v2784 = vld [vmem:[#allocation30 + $0xa00] sm:$0xff]
    %v2785 = vld [vmem:[#allocation30 + $0xa08] sm:$0xff]
    %v2786 = vld [vmem:[#allocation30 + $0xa10] sm:$0xff]
    %v2787 = vld [vmem:[#allocation30 + $0xa18] sm:$0xff]
    %v2788 = vld [vmem:[#allocation30 + $0xa20] sm:$0xff]
    %v2789 = vld [vmem:[#allocation30 + $0xa28] sm:$0xff]
    %v2790 = vld [vmem:[#allocation30 + $0xa30] sm:$0xff]
    %v2791 = vld [vmem:[#allocation30 + $0xa38] sm:$0xff]
    %v2792 = vld [vmem:[#allocation30 + $0xa40] sm:$0xff]
    %v2793 = vld [vmem:[#allocation30 + $0xa48] sm:$0xff]
    %v2794 = vld [vmem:[#allocation30 + $0xa50] sm:$0xff]
    %v2795 = vld [vmem:[#allocation30 + $0xa58] sm:$0xff]
    %v2796 = vld [vmem:[#allocation30 + $0xa60] sm:$0xff]
    %v2797 = vld [vmem:[#allocation30 + $0xa68] sm:$0xff]
    %v2798 = vld [vmem:[#allocation30 + $0xa70] sm:$0xff]
    %v2799 = vld [vmem:[#allocation30 + $0xa78] sm:$0xff]
    %v2800 = vld [vmem:[#allocation30 + $0xa80] sm:$0xff]
    %v2801 = vld [vmem:[#allocation30 + $0xa88] sm:$0xff]
    %v2802 = vld [vmem:[#allocation30 + $0xa90] sm:$0xff]
    %v2803 = vld [vmem:[#allocation30 + $0xa98] sm:$0xff]
    %v2804 = vld [vmem:[#allocation30 + $0xaa0] sm:$0xff]
    %v2805 = vld [vmem:[#allocation30 + $0xaa8] sm:$0xff]
    %v2806 = vld [vmem:[#allocation30 + $0xab0] sm:$0xff]
    %v2807 = vld [vmem:[#allocation30 + $0xab8] sm:$0xff]
    %v2808 = vld [vmem:[#allocation30 + $0xac0] sm:$0xff]
    %v2809 = vld [vmem:[#allocation30 + $0xac8] sm:$0xff]
    %v2810 = vld [vmem:[#allocation30 + $0xad0] sm:$0xff]
    %v2811 = vld [vmem:[#allocation30 + $0xad8] sm:$0xff]
    %v2812 = vld [vmem:[#allocation30 + $0xae0] sm:$0xff]
    %v2813 = vld [vmem:[#allocation30 + $0xae8] sm:$0xff]
    %v2814 = vld [vmem:[#allocation30 + $0xaf0] sm:$0xff]
    %v2815 = vld [vmem:[#allocation30 + $0xaf8] sm:$0xff]
    %v2816 = vld [vmem:[#allocation30 + $0xb00] sm:$0xff]
    %v2817 = vld [vmem:[#allocation30 + $0xb08] sm:$0xff]
    %v2818 = vld [vmem:[#allocation30 + $0xb10] sm:$0xff]
    %v2819 = vld [vmem:[#allocation30 + $0xb18] sm:$0xff]
    %v2820 = vld [vmem:[#allocation30 + $0xb20] sm:$0xff]
    %v2821 = vld [vmem:[#allocation30 + $0xb28] sm:$0xff]
    %v2822 = vld [vmem:[#allocation30 + $0xb30] sm:$0xff]
    %v2823 = vld [vmem:[#allocation30 + $0xb38] sm:$0xff]
    %v2824 = vld [vmem:[#allocation30 + $0xb40] sm:$0xff]
    %v2825 = vld [vmem:[#allocation30 + $0xb48] sm:$0xff]
    %v2826 = vld [vmem:[#allocation30 + $0xb50] sm:$0xff]
    %v2827 = vld [vmem:[#allocation30 + $0xb58] sm:$0xff]
    %v2828 = vld [vmem:[#allocation30 + $0xb60] sm:$0xff]
    %v2829 = vld [vmem:[#allocation30 + $0xb68] sm:$0xff]
    %v2830 = vld [vmem:[#allocation30 + $0xb70] sm:$0xff]
    %v2831 = vld [vmem:[#allocation30 + $0xb78] sm:$0xff]
    %v2832 = vld [vmem:[#allocation30 + $0xb80] sm:$0xff]
    %v2833 = vld [vmem:[#allocation30 + $0xb88] sm:$0xff]
    %v2834 = vld [vmem:[#allocation30 + $0xb90] sm:$0xff]
    %v2835 = vld [vmem:[#allocation30 + $0xb98] sm:$0xff]
    %v2836 = vld [vmem:[#allocation30 + $0xba0] sm:$0xff]
    %v2837 = vld [vmem:[#allocation30 + $0xba8] sm:$0xff]
    %v2838 = vld [vmem:[#allocation30 + $0xbb0] sm:$0xff]
    %v2839 = vld [vmem:[#allocation30 + $0xbb8] sm:$0xff]
    %v2840 = vld [vmem:[#allocation30 + $0xbc0] sm:$0xff]
    %v2841 = vld [vmem:[#allocation30 + $0xbc8] sm:$0xff]
    %v2842 = vld [vmem:[#allocation30 + $0xbd0] sm:$0xff]
    %v2843 = vld [vmem:[#allocation30 + $0xbd8] sm:$0xff]
    %v2844 = vld [vmem:[#allocation30 + $0xbe0] sm:$0xff]
    %v2845 = vld [vmem:[#allocation30 + $0xbe8] sm:$0xff]
    %v2846 = vld [vmem:[#allocation30 + $0xbf0] sm:$0xff]
    %v2847 = vld [vmem:[#allocation30 + $0xbf8] sm:$0xff]
    %v2848 = vld [vmem:[#allocation30 + $0xc00] sm:$0xff]
    %v2849 = vld [vmem:[#allocation30 + $0xc08] sm:$0xff]
    %v2850 = vld [vmem:[#allocation30 + $0xc10] sm:$0xff]
    %v2851 = vld [vmem:[#allocation30 + $0xc18] sm:$0xff]
    %v2852 = vld [vmem:[#allocation30 + $0xc20] sm:$0xff]
    %v2853 = vld [vmem:[#allocation30 + $0xc28] sm:$0xff]
    %v2854 = vld [vmem:[#allocation30 + $0xc30] sm:$0xff]
    %v2855 = vld [vmem:[#allocation30 + $0xc38] sm:$0xff]
    %v2856 = vld [vmem:[#allocation30 + $0xc40] sm:$0xff]
    %v2857 = vld [vmem:[#allocation30 + $0xc48] sm:$0xff]
    %v2858 = vld [vmem:[#allocation30 + $0xc50] sm:$0xff]
    %v2859 = vld [vmem:[#allocation30 + $0xc58] sm:$0xff]
    %v2860 = vld [vmem:[#allocation30 + $0xc60] sm:$0xff]
    %v2861 = vld [vmem:[#allocation30 + $0xc68] sm:$0xff]
    %v2862 = vld [vmem:[#allocation30 + $0xc70] sm:$0xff]
    %v2863 = vld [vmem:[#allocation30 + $0xc78] sm:$0xff]
    %v2864 = vld [vmem:[#allocation30 + $0xc80] sm:$0xff]
    %v2865 = vld [vmem:[#allocation30 + $0xc88] sm:$0xff]
    %v2866 = vld [vmem:[#allocation30 + $0xc90] sm:$0xff]
    %v2867 = vld [vmem:[#allocation30 + $0xc98] sm:$0xff]
    %v2868 = vld [vmem:[#allocation30 + $0xca0] sm:$0xff]
    %v2869 = vld [vmem:[#allocation30 + $0xca8] sm:$0xff]
    %v2870 = vld [vmem:[#allocation30 + $0xcb0] sm:$0xff]
    %v2871 = vld [vmem:[#allocation30 + $0xcb8] sm:$0xff]
    %v2872 = vld [vmem:[#allocation30 + $0xcc0] sm:$0xff]
    %v2873 = vld [vmem:[#allocation30 + $0xcc8] sm:$0xff]
    %v2874 = vld [vmem:[#allocation30 + $0xcd0] sm:$0xff]
    %v2875 = vld [vmem:[#allocation30 + $0xcd8] sm:$0xff]
    %v2876 = vld [vmem:[#allocation30 + $0xce0] sm:$0xff]
    %v2877 = vld [vmem:[#allocation30 + $0xce8] sm:$0xff]
    %v2878 = vld [vmem:[#allocation30 + $0xcf0] sm:$0xff]
    %v2879 = vld [vmem:[#allocation30 + $0xcf8] sm:$0xff]
    %v2880 = vld [vmem:[#allocation30 + $0xd00] sm:$0xff]
    %v2881 = vld [vmem:[#allocation30 + $0xd08] sm:$0xff]
    %v2882 = vld [vmem:[#allocation30 + $0xd10] sm:$0xff]
    %v2883 = vld [vmem:[#allocation30 + $0xd18] sm:$0xff]
    %v2884 = vld [vmem:[#allocation30 + $0xd20] sm:$0xff]
    %v2885 = vld [vmem:[#allocation30 + $0xd28] sm:$0xff]
    %v2886 = vld [vmem:[#allocation30 + $0xd30] sm:$0xff]
    %v2887 = vld [vmem:[#allocation30 + $0xd38] sm:$0xff]
    %v2888 = vld [vmem:[#allocation30 + $0xd40] sm:$0xff]
    %v2889 = vld [vmem:[#allocation30 + $0xd48] sm:$0xff]
    %v2890 = vld [vmem:[#allocation30 + $0xd50] sm:$0xff]
    %v2891 = vld [vmem:[#allocation30 + $0xd58] sm:$0xff]
    %v2892 = vld [vmem:[#allocation30 + $0xd60] sm:$0xff]
    %v2893 = vld [vmem:[#allocation30 + $0xd68] sm:$0xff]
    %v2894 = vld [vmem:[#allocation30 + $0xd70] sm:$0xff]
    %v2895 = vld [vmem:[#allocation30 + $0xd78] sm:$0xff]
    %v2896 = vld [vmem:[#allocation30 + $0xd80] sm:$0xff]
    %v2897 = vld [vmem:[#allocation30 + $0xd88] sm:$0xff]
    %v2898 = vld [vmem:[#allocation30 + $0xd90] sm:$0xff]
    %v2899 = vld [vmem:[#allocation30 + $0xd98] sm:$0xff]
    %v2900 = vld [vmem:[#allocation30 + $0xda0] sm:$0xff]
    %v2901 = vld [vmem:[#allocation30 + $0xda8] sm:$0xff]
    %v2902 = vld [vmem:[#allocation30 + $0xdb0] sm:$0xff]
    %v2903 = vld [vmem:[#allocation30 + $0xdb8] sm:$0xff]
    %v2904 = vld [vmem:[#allocation30 + $0xdc0] sm:$0xff]
    %v2905 = vld [vmem:[#allocation30 + $0xdc8] sm:$0xff]
    %v2906 = vld [vmem:[#allocation30 + $0xdd0] sm:$0xff]
    %v2907 = vld [vmem:[#allocation30 + $0xdd8] sm:$0xff]
    %v2908 = vld [vmem:[#allocation30 + $0xde0] sm:$0xff]
    %v2909 = vld [vmem:[#allocation30 + $0xde8] sm:$0xff]
    %v2910 = vld [vmem:[#allocation30 + $0xdf0] sm:$0xff]
    %v2911 = vld [vmem:[#allocation30 + $0xdf8] sm:$0xff]
    %v2912 = vld [vmem:[#allocation30 + $0xe00] sm:$0xff]
    %v2913 = vld [vmem:[#allocation30 + $0xe08] sm:$0xff]
    %v2914 = vld [vmem:[#allocation30 + $0xe10] sm:$0xff]
    %v2915 = vld [vmem:[#allocation30 + $0xe18] sm:$0xff]
    %v2916 = vld [vmem:[#allocation30 + $0xe20] sm:$0xff]
    %v2917 = vld [vmem:[#allocation30 + $0xe28] sm:$0xff]
    %v2918 = vld [vmem:[#allocation30 + $0xe30] sm:$0xff]
    %v2919 = vld [vmem:[#allocation30 + $0xe38] sm:$0xff]
    %v2920 = vld [vmem:[#allocation30 + $0xe40] sm:$0xff]
    %v2921 = vld [vmem:[#allocation30 + $0xe48] sm:$0xff]
    %v2922 = vld [vmem:[#allocation30 + $0xe50] sm:$0xff]
    %v2923 = vld [vmem:[#allocation30 + $0xe58] sm:$0xff]
    %v2924 = vld [vmem:[#allocation30 + $0xe60] sm:$0xff]
    %v2925 = vld [vmem:[#allocation30 + $0xe68] sm:$0xff]
    %v2926 = vld [vmem:[#allocation30 + $0xe70] sm:$0xff]
    %v2927 = vld [vmem:[#allocation30 + $0xe78] sm:$0xff]
    %v2928 = vld [vmem:[#allocation30 + $0xe80] sm:$0xff]
    %v2929 = vld [vmem:[#allocation30 + $0xe88] sm:$0xff]
    %v2930 = vld [vmem:[#allocation30 + $0xe90] sm:$0xff]
    %v2931 = vld [vmem:[#allocation30 + $0xe98] sm:$0xff]
    %v2932 = vld [vmem:[#allocation30 + $0xea0] sm:$0xff]
    %v2933 = vld [vmem:[#allocation30 + $0xea8] sm:$0xff]
    %v2934 = vld [vmem:[#allocation30 + $0xeb0] sm:$0xff]
    %v2935 = vld [vmem:[#allocation30 + $0xeb8] sm:$0xff]
    %v2936 = vld [vmem:[#allocation30 + $0xec0] sm:$0xff]
    %v2937 = vld [vmem:[#allocation30 + $0xec8] sm:$0xff]
    %v2938 = vld [vmem:[#allocation30 + $0xed0] sm:$0xff]
    %v2939 = vld [vmem:[#allocation30 + $0xed8] sm:$0xff]
    %v2940 = vld [vmem:[#allocation30 + $0xee0] sm:$0xff]
    %v2941 = vld [vmem:[#allocation30 + $0xee8] sm:$0xff]
    %v2942 = vld [vmem:[#allocation30 + $0xef0] sm:$0xff]
    %v2943 = vld [vmem:[#allocation30 + $0xef8] sm:$0xff]
    %v2944 = vld [vmem:[#allocation30 + $0xf00] sm:$0xff]
    %v2945 = vld [vmem:[#allocation30 + $0xf08] sm:$0xff]
    %v2946 = vld [vmem:[#allocation30 + $0xf10] sm:$0xff]
    %v2947 = vld [vmem:[#allocation30 + $0xf18] sm:$0xff]
    %v2948 = vld [vmem:[#allocation30 + $0xf20] sm:$0xff]
    %v2949 = vld [vmem:[#allocation30 + $0xf28] sm:$0xff]
    %v2950 = vld [vmem:[#allocation30 + $0xf30] sm:$0xff]
    %v2951 = vld [vmem:[#allocation30 + $0xf38] sm:$0xff]
    %v2952 = vld [vmem:[#allocation30 + $0xf40] sm:$0xff]
    %v2953 = vld [vmem:[#allocation30 + $0xf48] sm:$0xff]
    %v2954 = vld [vmem:[#allocation30 + $0xf50] sm:$0xff]
    %v2955 = vld [vmem:[#allocation30 + $0xf58] sm:$0xff]
    %v2956 = vld [vmem:[#allocation30 + $0xf60] sm:$0xff]
    %v2957 = vld [vmem:[#allocation30 + $0xf68] sm:$0xff]
    %v2958 = vld [vmem:[#allocation30 + $0xf70] sm:$0xff]
    %v2959 = vld [vmem:[#allocation30 + $0xf78] sm:$0xff]
    %v2960 = vld [vmem:[#allocation30 + $0xf80] sm:$0xff]
    %v2961 = vld [vmem:[#allocation30 + $0xf88] sm:$0xff]
    %v2962 = vld [vmem:[#allocation30 + $0xf90] sm:$0xff]
    %v2963 = vld [vmem:[#allocation30 + $0xf98] sm:$0xff]
    %v2964 = vld [vmem:[#allocation30 + $0xfa0] sm:$0xff]
    %v2965 = vld [vmem:[#allocation30 + $0xfa8] sm:$0xff]
    %v2966 = vld [vmem:[#allocation30 + $0xfb0] sm:$0xff]
    %v2967 = vld [vmem:[#allocation30 + $0xfb8] sm:$0xff]
    %v2968 = vld [vmem:[#allocation30 + $0xfc0] sm:$0xff]
    %v2969 = vld [vmem:[#allocation30 + $0xfc8] sm:$0xff]
    %v2970 = vld [vmem:[#allocation30 + $0xfd0] sm:$0xff]
    %v2971 = vld [vmem:[#allocation30 + $0xfd8] sm:$0xff]
    %v2972 = vld [vmem:[#allocation30 + $0xfe0] sm:$0xff]
    %v2973 = vld [vmem:[#allocation30 + $0xfe8] sm:$0xff]
    %v2974 = vld [vmem:[#allocation30 + $0xff0] sm:$0xff]
    %v2975 = vld [vmem:[#allocation30 + $0xff8] sm:$0xff]
    %v2976 = vld [vmem:[#allocation31] sm:$0xff]
    %v2978 = vlaneseq
    %v2979 = vshrl.u32 %v2978, 7
    %v2980 = vsub.s32 0, %v2979
    %v2981 = vrot.slane %v2976, %v2980
    %v2982 = vlaneseq
    %v2983 = vshrl.u32 %v2982, 7
    %v2984 = vsub.s32 1, %v2983
    %v2985 = vrot.slane %v2976, %v2984
    %v2986 = vlaneseq
    %v2987 = vshrl.u32 %v2986, 7
    %v2988 = vsub.s32 2, %v2987
    %v2989 = vrot.slane %v2976, %v2988
    %v2990 = vlaneseq
    %v2991 = vshrl.u32 %v2990, 7
    %v2992 = vsub.s32 3, %v2991
    %v2993 = vrot.slane %v2976, %v2992
    %v2994 = vlaneseq
    %v2995 = vshrl.u32 %v2994, 7
    %v2996 = vsub.s32 4, %v2995
    %v2997 = vrot.slane %v2976, %v2996
    %v2998 = vlaneseq
    %v2999 = vshrl.u32 %v2998, 7
    %v3000 = vsub.s32 5, %v2999
    %v3001 = vrot.slane %v2976, %v3000
    %v3002 = vlaneseq
    %v3003 = vshrl.u32 %v3002, 7
    %v3004 = vsub.s32 6, %v3003
    %v3005 = vrot.slane %v2976, %v3004
    %v3006 = vlaneseq
    %v3007 = vshrl.u32 %v3006, 7
    %v3008 = vsub.s32 7, %v3007
    %v3009 = vrot.slane %v2976, %v3008
    %v3530 = vunpack.c.l.b16 %v2464
    %v3531 = vunpack.c.h.b16 %v2464
    %v3532 = vunpack.c.l.b16 %v2465
    %v3533 = vunpack.c.h.b16 %v2465
    %v3534 = vunpack.c.l.b16 %v2466
    %v3535 = vunpack.c.h.b16 %v2466
    %v3536 = vunpack.c.l.b16 %v2467
    %v3537 = vunpack.c.h.b16 %v2467
    %v3538 = vunpack.c.l.b16 %v2468
    %v3539 = vunpack.c.h.b16 %v2468
    %v3540 = vunpack.c.l.b16 %v2469
    %v3541 = vunpack.c.h.b16 %v2469
    %v3542 = vunpack.c.l.b16 %v2470
    %v3543 = vunpack.c.h.b16 %v2470
    %v3544 = vunpack.c.l.b16 %v2471
    %v3545 = vunpack.c.h.b16 %v2471
    %v3546 = vunpack.c.l.b16 %v2472
    %v3547 = vunpack.c.h.b16 %v2472
    %v3548 = vunpack.c.l.b16 %v2473
    %v3549 = vunpack.c.h.b16 %v2473
    %v3550 = vunpack.c.l.b16 %v2474
    %v3551 = vunpack.c.h.b16 %v2474
    %v3552 = vunpack.c.l.b16 %v2475
    %v3553 = vunpack.c.h.b16 %v2475
    %v3554 = vunpack.c.l.b16 %v2476
    %v3555 = vunpack.c.h.b16 %v2476
    %v3556 = vunpack.c.l.b16 %v2477
    %v3557 = vunpack.c.h.b16 %v2477
    %v3558 = vunpack.c.l.b16 %v2478
    %v3559 = vunpack.c.h.b16 %v2478
    %v3560 = vunpack.c.l.b16 %v2479
    %v3561 = vunpack.c.h.b16 %v2479
    %v3562 = vunpack.c.l.b16 %v2480
    %v3563 = vunpack.c.h.b16 %v2480
    %v3564 = vunpack.c.l.b16 %v2481
    %v3565 = vunpack.c.h.b16 %v2481
    %v3566 = vunpack.c.l.b16 %v2482
    %v3567 = vunpack.c.h.b16 %v2482
    %v3568 = vunpack.c.l.b16 %v2483
    %v3569 = vunpack.c.h.b16 %v2483
    %v3570 = vunpack.c.l.b16 %v2484
    %v3571 = vunpack.c.h.b16 %v2484
    %v3572 = vunpack.c.l.b16 %v2485
    %v3573 = vunpack.c.h.b16 %v2485
    %v3574 = vunpack.c.l.b16 %v2486
    %v3575 = vunpack.c.h.b16 %v2486
    %v3576 = vunpack.c.l.b16 %v2487
    %v3577 = vunpack.c.h.b16 %v2487
    %v3578 = vunpack.c.l.b16 %v2488
    %v3579 = vunpack.c.h.b16 %v2488
    %v3580 = vunpack.c.l.b16 %v2489
    %v3581 = vunpack.c.h.b16 %v2489
    %v3582 = vunpack.c.l.b16 %v2490
    %v3583 = vunpack.c.h.b16 %v2490
    %v3584 = vunpack.c.l.b16 %v2491
    %v3585 = vunpack.c.h.b16 %v2491
    %v3586 = vunpack.c.l.b16 %v2492
    %v3587 = vunpack.c.h.b16 %v2492
    %v3588 = vunpack.c.l.b16 %v2493
    %v3589 = vunpack.c.h.b16 %v2493
    %v3590 = vunpack.c.l.b16 %v2494
    %v3591 = vunpack.c.h.b16 %v2494
    %v3592 = vunpack.c.l.b16 %v2495
    %v3593 = vunpack.c.h.b16 %v2495
    %v3594 = vunpack.c.l.b16 %v2496
    %v3595 = vunpack.c.h.b16 %v2496
    %v3596 = vunpack.c.l.b16 %v2497
    %v3597 = vunpack.c.h.b16 %v2497
    %v3598 = vunpack.c.l.b16 %v2498
    %v3599 = vunpack.c.h.b16 %v2498
    %v3600 = vunpack.c.l.b16 %v2499
    %v3601 = vunpack.c.h.b16 %v2499
    %v3602 = vunpack.c.l.b16 %v2500
    %v3603 = vunpack.c.h.b16 %v2500
    %v3604 = vunpack.c.l.b16 %v2501
    %v3605 = vunpack.c.h.b16 %v2501
    %v3606 = vunpack.c.l.b16 %v2502
    %v3607 = vunpack.c.h.b16 %v2502
    %v3608 = vunpack.c.l.b16 %v2503
    %v3609 = vunpack.c.h.b16 %v2503
    %v3610 = vunpack.c.l.b16 %v2504
    %v3611 = vunpack.c.h.b16 %v2504
    %v3612 = vunpack.c.l.b16 %v2505
    %v3613 = vunpack.c.h.b16 %v2505
    %v3614 = vunpack.c.l.b16 %v2506
    %v3615 = vunpack.c.h.b16 %v2506
    %v3616 = vunpack.c.l.b16 %v2507
    %v3617 = vunpack.c.h.b16 %v2507
    %v3618 = vunpack.c.l.b16 %v2508
    %v3619 = vunpack.c.h.b16 %v2508
    %v3620 = vunpack.c.l.b16 %v2509
    %v3621 = vunpack.c.h.b16 %v2509
    %v3622 = vunpack.c.l.b16 %v2510
    %v3623 = vunpack.c.h.b16 %v2510
    %v3624 = vunpack.c.l.b16 %v2511
    %v3625 = vunpack.c.h.b16 %v2511
    %v3626 = vunpack.c.l.b16 %v2512
    %v3627 = vunpack.c.h.b16 %v2512
    %v3628 = vunpack.c.l.b16 %v2513
    %v3629 = vunpack.c.h.b16 %v2513
    %v3630 = vunpack.c.l.b16 %v2514
    %v3631 = vunpack.c.h.b16 %v2514
    %v3632 = vunpack.c.l.b16 %v2515
    %v3633 = vunpack.c.h.b16 %v2515
    %v3634 = vunpack.c.l.b16 %v2516
    %v3635 = vunpack.c.h.b16 %v2516
    %v3636 = vunpack.c.l.b16 %v2517
    %v3637 = vunpack.c.h.b16 %v2517
    %v3638 = vunpack.c.l.b16 %v2518
    %v3639 = vunpack.c.h.b16 %v2518
    %v3640 = vunpack.c.l.b16 %v2519
    %v3641 = vunpack.c.h.b16 %v2519
    %v3642 = vunpack.c.l.b16 %v2520
    %v3643 = vunpack.c.h.b16 %v2520
    %v3644 = vunpack.c.l.b16 %v2521
    %v3645 = vunpack.c.h.b16 %v2521
    %v3646 = vunpack.c.l.b16 %v2522
    %v3647 = vunpack.c.h.b16 %v2522
    %v3648 = vunpack.c.l.b16 %v2523
    %v3649 = vunpack.c.h.b16 %v2523
    %v3650 = vunpack.c.l.b16 %v2524
    %v3651 = vunpack.c.h.b16 %v2524
    %v3652 = vunpack.c.l.b16 %v2525
    %v3653 = vunpack.c.h.b16 %v2525
    %v3654 = vunpack.c.l.b16 %v2526
    %v3655 = vunpack.c.h.b16 %v2526
    %v3656 = vunpack.c.l.b16 %v2527
    %v3657 = vunpack.c.h.b16 %v2527
    %v3658 = vunpack.c.l.b16 %v2528
    %v3659 = vunpack.c.h.b16 %v2528
    %v3660 = vunpack.c.l.b16 %v2529
    %v3661 = vunpack.c.h.b16 %v2529
    %v3662 = vunpack.c.l.b16 %v2530
    %v3663 = vunpack.c.h.b16 %v2530
    %v3664 = vunpack.c.l.b16 %v2531
    %v3665 = vunpack.c.h.b16 %v2531
    %v3666 = vunpack.c.l.b16 %v2532
    %v3667 = vunpack.c.h.b16 %v2532
    %v3668 = vunpack.c.l.b16 %v2533
    %v3669 = vunpack.c.h.b16 %v2533
    %v3670 = vunpack.c.l.b16 %v2534
    %v3671 = vunpack.c.h.b16 %v2534
    %v3672 = vunpack.c.l.b16 %v2535
    %v3673 = vunpack.c.h.b16 %v2535
    %v3674 = vunpack.c.l.b16 %v2536
    %v3675 = vunpack.c.h.b16 %v2536
    %v3676 = vunpack.c.l.b16 %v2537
    %v3677 = vunpack.c.h.b16 %v2537
    %v3678 = vunpack.c.l.b16 %v2538
    %v3679 = vunpack.c.h.b16 %v2538
    %v3680 = vunpack.c.l.b16 %v2539
    %v3681 = vunpack.c.h.b16 %v2539
    %v3682 = vunpack.c.l.b16 %v2540
    %v3683 = vunpack.c.h.b16 %v2540
    %v3684 = vunpack.c.l.b16 %v2541
    %v3685 = vunpack.c.h.b16 %v2541
    %v3686 = vunpack.c.l.b16 %v2542
    %v3687 = vunpack.c.h.b16 %v2542
    %v3688 = vunpack.c.l.b16 %v2543
    %v3689 = vunpack.c.h.b16 %v2543
    %v3690 = vunpack.c.l.b16 %v2544
    %v3691 = vunpack.c.h.b16 %v2544
    %v3692 = vunpack.c.l.b16 %v2545
    %v3693 = vunpack.c.h.b16 %v2545
    %v3694 = vunpack.c.l.b16 %v2546
    %v3695 = vunpack.c.h.b16 %v2546
    %v3696 = vunpack.c.l.b16 %v2547
    %v3697 = vunpack.c.h.b16 %v2547
    %v3698 = vunpack.c.l.b16 %v2548
    %v3699 = vunpack.c.h.b16 %v2548
    %v3700 = vunpack.c.l.b16 %v2549
    %v3701 = vunpack.c.h.b16 %v2549
    %v3702 = vunpack.c.l.b16 %v2550
    %v3703 = vunpack.c.h.b16 %v2550
    %v3704 = vunpack.c.l.b16 %v2551
    %v3705 = vunpack.c.h.b16 %v2551
    %v3706 = vunpack.c.l.b16 %v2552
    %v3707 = vunpack.c.h.b16 %v2552
    %v3708 = vunpack.c.l.b16 %v2553
    %v3709 = vunpack.c.h.b16 %v2553
    %v3710 = vunpack.c.l.b16 %v2554
    %v3711 = vunpack.c.h.b16 %v2554
    %v3712 = vunpack.c.l.b16 %v2555
    %v3713 = vunpack.c.h.b16 %v2555
    %v3714 = vunpack.c.l.b16 %v2556
    %v3715 = vunpack.c.h.b16 %v2556
    %v3716 = vunpack.c.l.b16 %v2557
    %v3717 = vunpack.c.h.b16 %v2557
    %v3718 = vunpack.c.l.b16 %v2558
    %v3719 = vunpack.c.h.b16 %v2558
    %v3720 = vunpack.c.l.b16 %v2559
    %v3721 = vunpack.c.h.b16 %v2559
    %v3722 = vunpack.c.l.b16 %v2560
    %v3723 = vunpack.c.h.b16 %v2560
    %v3724 = vunpack.c.l.b16 %v2561
    %v3725 = vunpack.c.h.b16 %v2561
    %v3726 = vunpack.c.l.b16 %v2562
    %v3727 = vunpack.c.h.b16 %v2562
    %v3728 = vunpack.c.l.b16 %v2563
    %v3729 = vunpack.c.h.b16 %v2563
    %v3730 = vunpack.c.l.b16 %v2564
    %v3731 = vunpack.c.h.b16 %v2564
    %v3732 = vunpack.c.l.b16 %v2565
    %v3733 = vunpack.c.h.b16 %v2565
    %v3734 = vunpack.c.l.b16 %v2566
    %v3735 = vunpack.c.h.b16 %v2566
    %v3736 = vunpack.c.l.b16 %v2567
    %v3737 = vunpack.c.h.b16 %v2567
    %v3738 = vunpack.c.l.b16 %v2568
    %v3739 = vunpack.c.h.b16 %v2568
    %v3740 = vunpack.c.l.b16 %v2569
    %v3741 = vunpack.c.h.b16 %v2569
    %v3742 = vunpack.c.l.b16 %v2570
    %v3743 = vunpack.c.h.b16 %v2570
    %v3744 = vunpack.c.l.b16 %v2571
    %v3745 = vunpack.c.h.b16 %v2571
    %v3746 = vunpack.c.l.b16 %v2572
    %v3747 = vunpack.c.h.b16 %v2572
    %v3748 = vunpack.c.l.b16 %v2573
    %v3749 = vunpack.c.h.b16 %v2573
    %v3750 = vunpack.c.l.b16 %v2574
    %v3751 = vunpack.c.h.b16 %v2574
    %v3752 = vunpack.c.l.b16 %v2575
    %v3753 = vunpack.c.h.b16 %v2575
    %v3754 = vunpack.c.l.b16 %v2576
    %v3755 = vunpack.c.h.b16 %v2576
    %v3756 = vunpack.c.l.b16 %v2577
    %v3757 = vunpack.c.h.b16 %v2577
    %v3758 = vunpack.c.l.b16 %v2578
    %v3759 = vunpack.c.h.b16 %v2578
    %v3760 = vunpack.c.l.b16 %v2579
    %v3761 = vunpack.c.h.b16 %v2579
    %v3762 = vunpack.c.l.b16 %v2580
    %v3763 = vunpack.c.h.b16 %v2580
    %v3764 = vunpack.c.l.b16 %v2581
    %v3765 = vunpack.c.h.b16 %v2581
    %v3766 = vunpack.c.l.b16 %v2582
    %v3767 = vunpack.c.h.b16 %v2582
    %v3768 = vunpack.c.l.b16 %v2583
    %v3769 = vunpack.c.h.b16 %v2583
    %v3770 = vunpack.c.l.b16 %v2584
    %v3771 = vunpack.c.h.b16 %v2584
    %v3772 = vunpack.c.l.b16 %v2585
    %v3773 = vunpack.c.h.b16 %v2585
    %v3774 = vunpack.c.l.b16 %v2586
    %v3775 = vunpack.c.h.b16 %v2586
    %v3776 = vunpack.c.l.b16 %v2587
    %v3777 = vunpack.c.h.b16 %v2587
    %v3778 = vunpack.c.l.b16 %v2588
    %v3779 = vunpack.c.h.b16 %v2588
    %v3780 = vunpack.c.l.b16 %v2589
    %v3781 = vunpack.c.h.b16 %v2589
    %v3782 = vunpack.c.l.b16 %v2590
    %v3783 = vunpack.c.h.b16 %v2590
    %v3784 = vunpack.c.l.b16 %v2591
    %v3785 = vunpack.c.h.b16 %v2591
    %v3786 = vunpack.c.l.b16 %v2592
    %v3787 = vunpack.c.h.b16 %v2592
    %v3788 = vunpack.c.l.b16 %v2593
    %v3789 = vunpack.c.h.b16 %v2593
    %v3790 = vunpack.c.l.b16 %v2594
    %v3791 = vunpack.c.h.b16 %v2594
    %v3792 = vunpack.c.l.b16 %v2595
    %v3793 = vunpack.c.h.b16 %v2595
    %v3794 = vunpack.c.l.b16 %v2596
    %v3795 = vunpack.c.h.b16 %v2596
    %v3796 = vunpack.c.l.b16 %v2597
    %v3797 = vunpack.c.h.b16 %v2597
    %v3798 = vunpack.c.l.b16 %v2598
    %v3799 = vunpack.c.h.b16 %v2598
    %v3800 = vunpack.c.l.b16 %v2599
    %v3801 = vunpack.c.h.b16 %v2599
    %v3802 = vunpack.c.l.b16 %v2600
    %v3803 = vunpack.c.h.b16 %v2600
    %v3804 = vunpack.c.l.b16 %v2601
    %v3805 = vunpack.c.h.b16 %v2601
    %v3806 = vunpack.c.l.b16 %v2602
    %v3807 = vunpack.c.h.b16 %v2602
    %v3808 = vunpack.c.l.b16 %v2603
    %v3809 = vunpack.c.h.b16 %v2603
    %v3810 = vunpack.c.l.b16 %v2604
    %v3811 = vunpack.c.h.b16 %v2604
    %v3812 = vunpack.c.l.b16 %v2605
    %v3813 = vunpack.c.h.b16 %v2605
    %v3814 = vunpack.c.l.b16 %v2606
    %v3815 = vunpack.c.h.b16 %v2606
    %v3816 = vunpack.c.l.b16 %v2607
    %v3817 = vunpack.c.h.b16 %v2607
    %v3818 = vunpack.c.l.b16 %v2608
    %v3819 = vunpack.c.h.b16 %v2608
    %v3820 = vunpack.c.l.b16 %v2609
    %v3821 = vunpack.c.h.b16 %v2609
    %v3822 = vunpack.c.l.b16 %v2610
    %v3823 = vunpack.c.h.b16 %v2610
    %v3824 = vunpack.c.l.b16 %v2611
    %v3825 = vunpack.c.h.b16 %v2611
    %v3826 = vunpack.c.l.b16 %v2612
    %v3827 = vunpack.c.h.b16 %v2612
    %v3828 = vunpack.c.l.b16 %v2613
    %v3829 = vunpack.c.h.b16 %v2613
    %v3830 = vunpack.c.l.b16 %v2614
    %v3831 = vunpack.c.h.b16 %v2614
    %v3832 = vunpack.c.l.b16 %v2615
    %v3833 = vunpack.c.h.b16 %v2615
    %v3834 = vunpack.c.l.b16 %v2616
    %v3835 = vunpack.c.h.b16 %v2616
    %v3836 = vunpack.c.l.b16 %v2617
    %v3837 = vunpack.c.h.b16 %v2617
    %v3838 = vunpack.c.l.b16 %v2618
    %v3839 = vunpack.c.h.b16 %v2618
    %v3840 = vunpack.c.l.b16 %v2619
    %v3841 = vunpack.c.h.b16 %v2619
    %v3842 = vunpack.c.l.b16 %v2620
    %v3843 = vunpack.c.h.b16 %v2620
    %v3844 = vunpack.c.l.b16 %v2621
    %v3845 = vunpack.c.h.b16 %v2621
    %v3846 = vunpack.c.l.b16 %v2622
    %v3847 = vunpack.c.h.b16 %v2622
    %v3848 = vunpack.c.l.b16 %v2623
    %v3849 = vunpack.c.h.b16 %v2623
    %v3850 = vunpack.c.l.b16 %v2624
    %v3851 = vunpack.c.h.b16 %v2624
    %v3852 = vunpack.c.l.b16 %v2625
    %v3853 = vunpack.c.h.b16 %v2625
    %v3854 = vunpack.c.l.b16 %v2626
    %v3855 = vunpack.c.h.b16 %v2626
    %v3856 = vunpack.c.l.b16 %v2627
    %v3857 = vunpack.c.h.b16 %v2627
    %v3858 = vunpack.c.l.b16 %v2628
    %v3859 = vunpack.c.h.b16 %v2628
    %v3860 = vunpack.c.l.b16 %v2629
    %v3861 = vunpack.c.h.b16 %v2629
    %v3862 = vunpack.c.l.b16 %v2630
    %v3863 = vunpack.c.h.b16 %v2630
    %v3864 = vunpack.c.l.b16 %v2631
    %v3865 = vunpack.c.h.b16 %v2631
    %v3866 = vunpack.c.l.b16 %v2632
    %v3867 = vunpack.c.h.b16 %v2632
    %v3868 = vunpack.c.l.b16 %v2633
    %v3869 = vunpack.c.h.b16 %v2633
    %v3870 = vunpack.c.l.b16 %v2634
    %v3871 = vunpack.c.h.b16 %v2634
    %v3872 = vunpack.c.l.b16 %v2635
    %v3873 = vunpack.c.h.b16 %v2635
    %v3874 = vunpack.c.l.b16 %v2636
    %v3875 = vunpack.c.h.b16 %v2636
    %v3876 = vunpack.c.l.b16 %v2637
    %v3877 = vunpack.c.h.b16 %v2637
    %v3878 = vunpack.c.l.b16 %v2638
    %v3879 = vunpack.c.h.b16 %v2638
    %v3880 = vunpack.c.l.b16 %v2639
    %v3881 = vunpack.c.h.b16 %v2639
    %v3882 = vunpack.c.l.b16 %v2640
    %v3883 = vunpack.c.h.b16 %v2640
    %v3884 = vunpack.c.l.b16 %v2641
    %v3885 = vunpack.c.h.b16 %v2641
    %v3886 = vunpack.c.l.b16 %v2642
    %v3887 = vunpack.c.h.b16 %v2642
    %v3888 = vunpack.c.l.b16 %v2643
    %v3889 = vunpack.c.h.b16 %v2643
    %v3890 = vunpack.c.l.b16 %v2644
    %v3891 = vunpack.c.h.b16 %v2644
    %v3892 = vunpack.c.l.b16 %v2645
    %v3893 = vunpack.c.h.b16 %v2645
    %v3894 = vunpack.c.l.b16 %v2646
    %v3895 = vunpack.c.h.b16 %v2646
    %v3896 = vunpack.c.l.b16 %v2647
    %v3897 = vunpack.c.h.b16 %v2647
    %v3898 = vunpack.c.l.b16 %v2648
    %v3899 = vunpack.c.h.b16 %v2648
    %v3900 = vunpack.c.l.b16 %v2649
    %v3901 = vunpack.c.h.b16 %v2649
    %v3902 = vunpack.c.l.b16 %v2650
    %v3903 = vunpack.c.h.b16 %v2650
    %v3904 = vunpack.c.l.b16 %v2651
    %v3905 = vunpack.c.h.b16 %v2651
    %v3906 = vunpack.c.l.b16 %v2652
    %v3907 = vunpack.c.h.b16 %v2652
    %v3908 = vunpack.c.l.b16 %v2653
    %v3909 = vunpack.c.h.b16 %v2653
    %v3910 = vunpack.c.l.b16 %v2654
    %v3911 = vunpack.c.h.b16 %v2654
    %v3912 = vunpack.c.l.b16 %v2655
    %v3913 = vunpack.c.h.b16 %v2655
    %v3914 = vunpack.c.l.b16 %v2656
    %v3915 = vunpack.c.h.b16 %v2656
    %v3916 = vunpack.c.l.b16 %v2657
    %v3917 = vunpack.c.h.b16 %v2657
    %v3918 = vunpack.c.l.b16 %v2658
    %v3919 = vunpack.c.h.b16 %v2658
    %v3920 = vunpack.c.l.b16 %v2659
    %v3921 = vunpack.c.h.b16 %v2659
    %v3922 = vunpack.c.l.b16 %v2660
    %v3923 = vunpack.c.h.b16 %v2660
    %v3924 = vunpack.c.l.b16 %v2661
    %v3925 = vunpack.c.h.b16 %v2661
    %v3926 = vunpack.c.l.b16 %v2662
    %v3927 = vunpack.c.h.b16 %v2662
    %v3928 = vunpack.c.l.b16 %v2663
    %v3929 = vunpack.c.h.b16 %v2663
    %v3930 = vunpack.c.l.b16 %v2664
    %v3931 = vunpack.c.h.b16 %v2664
    %v3932 = vunpack.c.l.b16 %v2665
    %v3933 = vunpack.c.h.b16 %v2665
    %v3934 = vunpack.c.l.b16 %v2666
    %v3935 = vunpack.c.h.b16 %v2666
    %v3936 = vunpack.c.l.b16 %v2667
    %v3937 = vunpack.c.h.b16 %v2667
    %v3938 = vunpack.c.l.b16 %v2668
    %v3939 = vunpack.c.h.b16 %v2668
    %v3940 = vunpack.c.l.b16 %v2669
    %v3941 = vunpack.c.h.b16 %v2669
    %v3942 = vunpack.c.l.b16 %v2670
    %v3943 = vunpack.c.h.b16 %v2670
    %v3944 = vunpack.c.l.b16 %v2671
    %v3945 = vunpack.c.h.b16 %v2671
    %v3946 = vunpack.c.l.b16 %v2672
    %v3947 = vunpack.c.h.b16 %v2672
    %v3948 = vunpack.c.l.b16 %v2673
    %v3949 = vunpack.c.h.b16 %v2673
    %v3950 = vunpack.c.l.b16 %v2674
    %v3951 = vunpack.c.h.b16 %v2674
    %v3952 = vunpack.c.l.b16 %v2675
    %v3953 = vunpack.c.h.b16 %v2675
    %v3954 = vunpack.c.l.b16 %v2676
    %v3955 = vunpack.c.h.b16 %v2676
    %v3956 = vunpack.c.l.b16 %v2677
    %v3957 = vunpack.c.h.b16 %v2677
    %v3958 = vunpack.c.l.b16 %v2678
    %v3959 = vunpack.c.h.b16 %v2678
    %v3960 = vunpack.c.l.b16 %v2679
    %v3961 = vunpack.c.h.b16 %v2679
    %v3962 = vunpack.c.l.b16 %v2680
    %v3963 = vunpack.c.h.b16 %v2680
    %v3964 = vunpack.c.l.b16 %v2681
    %v3965 = vunpack.c.h.b16 %v2681
    %v3966 = vunpack.c.l.b16 %v2682
    %v3967 = vunpack.c.h.b16 %v2682
    %v3968 = vunpack.c.l.b16 %v2683
    %v3969 = vunpack.c.h.b16 %v2683
    %v3970 = vunpack.c.l.b16 %v2684
    %v3971 = vunpack.c.h.b16 %v2684
    %v3972 = vunpack.c.l.b16 %v2685
    %v3973 = vunpack.c.h.b16 %v2685
    %v3974 = vunpack.c.l.b16 %v2686
    %v3975 = vunpack.c.h.b16 %v2686
    %v3976 = vunpack.c.l.b16 %v2687
    %v3977 = vunpack.c.h.b16 %v2687
    %v3978 = vunpack.c.l.b16 %v2688
    %v3979 = vunpack.c.h.b16 %v2688
    %v3980 = vunpack.c.l.b16 %v2689
    %v3981 = vunpack.c.h.b16 %v2689
    %v3982 = vunpack.c.l.b16 %v2690
    %v3983 = vunpack.c.h.b16 %v2690
    %v3984 = vunpack.c.l.b16 %v2691
    %v3985 = vunpack.c.h.b16 %v2691
    %v3986 = vunpack.c.l.b16 %v2692
    %v3987 = vunpack.c.h.b16 %v2692
    %v3988 = vunpack.c.l.b16 %v2693
    %v3989 = vunpack.c.h.b16 %v2693
    %v3990 = vunpack.c.l.b16 %v2694
    %v3991 = vunpack.c.h.b16 %v2694
    %v3992 = vunpack.c.l.b16 %v2695
    %v3993 = vunpack.c.h.b16 %v2695
    %v3994 = vunpack.c.l.b16 %v2696
    %v3995 = vunpack.c.h.b16 %v2696
    %v3996 = vunpack.c.l.b16 %v2697
    %v3997 = vunpack.c.h.b16 %v2697
    %v3998 = vunpack.c.l.b16 %v2698
    %v3999 = vunpack.c.h.b16 %v2698
    %v4000 = vunpack.c.l.b16 %v2699
    %v4001 = vunpack.c.h.b16 %v2699
    %v4002 = vunpack.c.l.b16 %v2700
    %v4003 = vunpack.c.h.b16 %v2700
    %v4004 = vunpack.c.l.b16 %v2701
    %v4005 = vunpack.c.h.b16 %v2701
    %v4006 = vunpack.c.l.b16 %v2702
    %v4007 = vunpack.c.h.b16 %v2702
    %v4008 = vunpack.c.l.b16 %v2703
    %v4009 = vunpack.c.h.b16 %v2703
    %v4010 = vunpack.c.l.b16 %v2704
    %v4011 = vunpack.c.h.b16 %v2704
    %v4012 = vunpack.c.l.b16 %v2705
    %v4013 = vunpack.c.h.b16 %v2705
    %v4014 = vunpack.c.l.b16 %v2706
    %v4015 = vunpack.c.h.b16 %v2706
    %v4016 = vunpack.c.l.b16 %v2707
    %v4017 = vunpack.c.h.b16 %v2707
    %v4018 = vunpack.c.l.b16 %v2708
    %v4019 = vunpack.c.h.b16 %v2708
    %v4020 = vunpack.c.l.b16 %v2709
    %v4021 = vunpack.c.h.b16 %v2709
    %v4022 = vunpack.c.l.b16 %v2710
    %v4023 = vunpack.c.h.b16 %v2710
    %v4024 = vunpack.c.l.b16 %v2711
    %v4025 = vunpack.c.h.b16 %v2711
    %v4026 = vunpack.c.l.b16 %v2712
    %v4027 = vunpack.c.h.b16 %v2712
    %v4028 = vunpack.c.l.b16 %v2713
    %v4029 = vunpack.c.h.b16 %v2713
    %v4030 = vunpack.c.l.b16 %v2714
    %v4031 = vunpack.c.h.b16 %v2714
    %v4032 = vunpack.c.l.b16 %v2715
    %v4033 = vunpack.c.h.b16 %v2715
    %v4034 = vunpack.c.l.b16 %v2716
    %v4035 = vunpack.c.h.b16 %v2716
    %v4036 = vunpack.c.l.b16 %v2717
    %v4037 = vunpack.c.h.b16 %v2717
    %v4038 = vunpack.c.l.b16 %v2718
    %v4039 = vunpack.c.h.b16 %v2718
    %v4040 = vunpack.c.l.b16 %v2719
    %v4041 = vunpack.c.h.b16 %v2719
    %v4042 = vunpack.c.l.b16 %v2720
    %v4043 = vunpack.c.h.b16 %v2720
    %v4044 = vunpack.c.l.b16 %v2721
    %v4045 = vunpack.c.h.b16 %v2721
    %v4046 = vunpack.c.l.b16 %v2722
    %v4047 = vunpack.c.h.b16 %v2722
    %v4048 = vunpack.c.l.b16 %v2723
    %v4049 = vunpack.c.h.b16 %v2723
    %v4050 = vunpack.c.l.b16 %v2724
    %v4051 = vunpack.c.h.b16 %v2724
    %v4052 = vunpack.c.l.b16 %v2725
    %v4053 = vunpack.c.h.b16 %v2725
    %v4054 = vunpack.c.l.b16 %v2726
    %v4055 = vunpack.c.h.b16 %v2726
    %v4056 = vunpack.c.l.b16 %v2727
    %v4057 = vunpack.c.h.b16 %v2727
    %v4058 = vunpack.c.l.b16 %v2728
    %v4059 = vunpack.c.h.b16 %v2728
    %v4060 = vunpack.c.l.b16 %v2729
    %v4061 = vunpack.c.h.b16 %v2729
    %v4062 = vunpack.c.l.b16 %v2730
    %v4063 = vunpack.c.h.b16 %v2730
    %v4064 = vunpack.c.l.b16 %v2731
    %v4065 = vunpack.c.h.b16 %v2731
    %v4066 = vunpack.c.l.b16 %v2732
    %v4067 = vunpack.c.h.b16 %v2732
    %v4068 = vunpack.c.l.b16 %v2733
    %v4069 = vunpack.c.h.b16 %v2733
    %v4070 = vunpack.c.l.b16 %v2734
    %v4071 = vunpack.c.h.b16 %v2734
    %v4072 = vunpack.c.l.b16 %v2735
    %v4073 = vunpack.c.h.b16 %v2735
    %v4074 = vunpack.c.l.b16 %v2736
    %v4075 = vunpack.c.h.b16 %v2736
    %v4076 = vunpack.c.l.b16 %v2737
    %v4077 = vunpack.c.h.b16 %v2737
    %v4078 = vunpack.c.l.b16 %v2738
    %v4079 = vunpack.c.h.b16 %v2738
    %v4080 = vunpack.c.l.b16 %v2739
    %v4081 = vunpack.c.h.b16 %v2739
    %v4082 = vunpack.c.l.b16 %v2740
    %v4083 = vunpack.c.h.b16 %v2740
    %v4084 = vunpack.c.l.b16 %v2741
    %v4085 = vunpack.c.h.b16 %v2741
    %v4086 = vunpack.c.l.b16 %v2742
    %v4087 = vunpack.c.h.b16 %v2742
    %v4088 = vunpack.c.l.b16 %v2743
    %v4089 = vunpack.c.h.b16 %v2743
    %v4090 = vunpack.c.l.b16 %v2744
    %v4091 = vunpack.c.h.b16 %v2744
    %v4092 = vunpack.c.l.b16 %v2745
    %v4093 = vunpack.c.h.b16 %v2745
    %v4094 = vunpack.c.l.b16 %v2746
    %v4095 = vunpack.c.h.b16 %v2746
    %v4096 = vunpack.c.l.b16 %v2747
    %v4097 = vunpack.c.h.b16 %v2747
    %v4098 = vunpack.c.l.b16 %v2748
    %v4099 = vunpack.c.h.b16 %v2748
    %v4100 = vunpack.c.l.b16 %v2749
    %v4101 = vunpack.c.h.b16 %v2749
    %v4102 = vunpack.c.l.b16 %v2750
    %v4103 = vunpack.c.h.b16 %v2750
    %v4104 = vunpack.c.l.b16 %v2751
    %v4105 = vunpack.c.h.b16 %v2751
    %v4106 = vunpack.c.l.b16 %v2752
    %v4107 = vunpack.c.h.b16 %v2752
    %v4108 = vunpack.c.l.b16 %v2753
    %v4109 = vunpack.c.h.b16 %v2753
    %v4110 = vunpack.c.l.b16 %v2754
    %v4111 = vunpack.c.h.b16 %v2754
    %v4112 = vunpack.c.l.b16 %v2755
    %v4113 = vunpack.c.h.b16 %v2755
    %v4114 = vunpack.c.l.b16 %v2756
    %v4115 = vunpack.c.h.b16 %v2756
    %v4116 = vunpack.c.l.b16 %v2757
    %v4117 = vunpack.c.h.b16 %v2757
    %v4118 = vunpack.c.l.b16 %v2758
    %v4119 = vunpack.c.h.b16 %v2758
    %v4120 = vunpack.c.l.b16 %v2759
    %v4121 = vunpack.c.h.b16 %v2759
    %v4122 = vunpack.c.l.b16 %v2760
    %v4123 = vunpack.c.h.b16 %v2760
    %v4124 = vunpack.c.l.b16 %v2761
    %v4125 = vunpack.c.h.b16 %v2761
    %v4126 = vunpack.c.l.b16 %v2762
    %v4127 = vunpack.c.h.b16 %v2762
    %v4128 = vunpack.c.l.b16 %v2763
    %v4129 = vunpack.c.h.b16 %v2763
    %v4130 = vunpack.c.l.b16 %v2764
    %v4131 = vunpack.c.h.b16 %v2764
    %v4132 = vunpack.c.l.b16 %v2765
    %v4133 = vunpack.c.h.b16 %v2765
    %v4134 = vunpack.c.l.b16 %v2766
    %v4135 = vunpack.c.h.b16 %v2766
    %v4136 = vunpack.c.l.b16 %v2767
    %v4137 = vunpack.c.h.b16 %v2767
    %v4138 = vunpack.c.l.b16 %v2768
    %v4139 = vunpack.c.h.b16 %v2768
    %v4140 = vunpack.c.l.b16 %v2769
    %v4141 = vunpack.c.h.b16 %v2769
    %v4142 = vunpack.c.l.b16 %v2770
    %v4143 = vunpack.c.h.b16 %v2770
    %v4144 = vunpack.c.l.b16 %v2771
    %v4145 = vunpack.c.h.b16 %v2771
    %v4146 = vunpack.c.l.b16 %v2772
    %v4147 = vunpack.c.h.b16 %v2772
    %v4148 = vunpack.c.l.b16 %v2773
    %v4149 = vunpack.c.h.b16 %v2773
    %v4150 = vunpack.c.l.b16 %v2774
    %v4151 = vunpack.c.h.b16 %v2774
    %v4152 = vunpack.c.l.b16 %v2775
    %v4153 = vunpack.c.h.b16 %v2775
    %v4154 = vunpack.c.l.b16 %v2776
    %v4155 = vunpack.c.h.b16 %v2776
    %v4156 = vunpack.c.l.b16 %v2777
    %v4157 = vunpack.c.h.b16 %v2777
    %v4158 = vunpack.c.l.b16 %v2778
    %v4159 = vunpack.c.h.b16 %v2778
    %v4160 = vunpack.c.l.b16 %v2779
    %v4161 = vunpack.c.h.b16 %v2779
    %v4162 = vunpack.c.l.b16 %v2780
    %v4163 = vunpack.c.h.b16 %v2780
    %v4164 = vunpack.c.l.b16 %v2781
    %v4165 = vunpack.c.h.b16 %v2781
    %v4166 = vunpack.c.l.b16 %v2782
    %v4167 = vunpack.c.h.b16 %v2782
    %v4168 = vunpack.c.l.b16 %v2783
    %v4169 = vunpack.c.h.b16 %v2783
    %v4170 = vunpack.c.l.b16 %v2784
    %v4171 = vunpack.c.h.b16 %v2784
    %v4172 = vunpack.c.l.b16 %v2785
    %v4173 = vunpack.c.h.b16 %v2785
    %v4174 = vunpack.c.l.b16 %v2786
    %v4175 = vunpack.c.h.b16 %v2786
    %v4176 = vunpack.c.l.b16 %v2787
    %v4177 = vunpack.c.h.b16 %v2787
    %v4178 = vunpack.c.l.b16 %v2788
    %v4179 = vunpack.c.h.b16 %v2788
    %v4180 = vunpack.c.l.b16 %v2789
    %v4181 = vunpack.c.h.b16 %v2789
    %v4182 = vunpack.c.l.b16 %v2790
    %v4183 = vunpack.c.h.b16 %v2790
    %v4184 = vunpack.c.l.b16 %v2791
    %v4185 = vunpack.c.h.b16 %v2791
    %v4186 = vunpack.c.l.b16 %v2792
    %v4187 = vunpack.c.h.b16 %v2792
    %v4188 = vunpack.c.l.b16 %v2793
    %v4189 = vunpack.c.h.b16 %v2793
    %v4190 = vunpack.c.l.b16 %v2794
    %v4191 = vunpack.c.h.b16 %v2794
    %v4192 = vunpack.c.l.b16 %v2795
    %v4193 = vunpack.c.h.b16 %v2795
    %v4194 = vunpack.c.l.b16 %v2796
    %v4195 = vunpack.c.h.b16 %v2796
    %v4196 = vunpack.c.l.b16 %v2797
    %v4197 = vunpack.c.h.b16 %v2797
    %v4198 = vunpack.c.l.b16 %v2798
    %v4199 = vunpack.c.h.b16 %v2798
    %v4200 = vunpack.c.l.b16 %v2799
    %v4201 = vunpack.c.h.b16 %v2799
    %v4202 = vunpack.c.l.b16 %v2800
    %v4203 = vunpack.c.h.b16 %v2800
    %v4204 = vunpack.c.l.b16 %v2801
    %v4205 = vunpack.c.h.b16 %v2801
    %v4206 = vunpack.c.l.b16 %v2802
    %v4207 = vunpack.c.h.b16 %v2802
    %v4208 = vunpack.c.l.b16 %v2803
    %v4209 = vunpack.c.h.b16 %v2803
    %v4210 = vunpack.c.l.b16 %v2804
    %v4211 = vunpack.c.h.b16 %v2804
    %v4212 = vunpack.c.l.b16 %v2805
    %v4213 = vunpack.c.h.b16 %v2805
    %v4214 = vunpack.c.l.b16 %v2806
    %v4215 = vunpack.c.h.b16 %v2806
    %v4216 = vunpack.c.l.b16 %v2807
    %v4217 = vunpack.c.h.b16 %v2807
    %v4218 = vunpack.c.l.b16 %v2808
    %v4219 = vunpack.c.h.b16 %v2808
    %v4220 = vunpack.c.l.b16 %v2809
    %v4221 = vunpack.c.h.b16 %v2809
    %v4222 = vunpack.c.l.b16 %v2810
    %v4223 = vunpack.c.h.b16 %v2810
    %v4224 = vunpack.c.l.b16 %v2811
    %v4225 = vunpack.c.h.b16 %v2811
    %v4226 = vunpack.c.l.b16 %v2812
    %v4227 = vunpack.c.h.b16 %v2812
    %v4228 = vunpack.c.l.b16 %v2813
    %v4229 = vunpack.c.h.b16 %v2813
    %v4230 = vunpack.c.l.b16 %v2814
    %v4231 = vunpack.c.h.b16 %v2814
    %v4232 = vunpack.c.l.b16 %v2815
    %v4233 = vunpack.c.h.b16 %v2815
    %v4234 = vunpack.c.l.b16 %v2816
    %v4235 = vunpack.c.h.b16 %v2816
    %v4236 = vunpack.c.l.b16 %v2817
    %v4237 = vunpack.c.h.b16 %v2817
    %v4238 = vunpack.c.l.b16 %v2818
    %v4239 = vunpack.c.h.b16 %v2818
    %v4240 = vunpack.c.l.b16 %v2819
    %v4241 = vunpack.c.h.b16 %v2819
    %v4242 = vunpack.c.l.b16 %v2820
    %v4243 = vunpack.c.h.b16 %v2820
    %v4244 = vunpack.c.l.b16 %v2821
    %v4245 = vunpack.c.h.b16 %v2821
    %v4246 = vunpack.c.l.b16 %v2822
    %v4247 = vunpack.c.h.b16 %v2822
    %v4248 = vunpack.c.l.b16 %v2823
    %v4249 = vunpack.c.h.b16 %v2823
    %v4250 = vunpack.c.l.b16 %v2824
    %v4251 = vunpack.c.h.b16 %v2824
    %v4252 = vunpack.c.l.b16 %v2825
    %v4253 = vunpack.c.h.b16 %v2825
    %v4254 = vunpack.c.l.b16 %v2826
    %v4255 = vunpack.c.h.b16 %v2826
    %v4256 = vunpack.c.l.b16 %v2827
    %v4257 = vunpack.c.h.b16 %v2827
    %v4258 = vunpack.c.l.b16 %v2828
    %v4259 = vunpack.c.h.b16 %v2828
    %v4260 = vunpack.c.l.b16 %v2829
    %v4261 = vunpack.c.h.b16 %v2829
    %v4262 = vunpack.c.l.b16 %v2830
    %v4263 = vunpack.c.h.b16 %v2830
    %v4264 = vunpack.c.l.b16 %v2831
    %v4265 = vunpack.c.h.b16 %v2831
    %v4266 = vunpack.c.l.b16 %v2832
    %v4267 = vunpack.c.h.b16 %v2832
    %v4268 = vunpack.c.l.b16 %v2833
    %v4269 = vunpack.c.h.b16 %v2833
    %v4270 = vunpack.c.l.b16 %v2834
    %v4271 = vunpack.c.h.b16 %v2834
    %v4272 = vunpack.c.l.b16 %v2835
    %v4273 = vunpack.c.h.b16 %v2835
    %v4274 = vunpack.c.l.b16 %v2836
    %v4275 = vunpack.c.h.b16 %v2836
    %v4276 = vunpack.c.l.b16 %v2837
    %v4277 = vunpack.c.h.b16 %v2837
    %v4278 = vunpack.c.l.b16 %v2838
    %v4279 = vunpack.c.h.b16 %v2838
    %v4280 = vunpack.c.l.b16 %v2839
    %v4281 = vunpack.c.h.b16 %v2839
    %v4282 = vunpack.c.l.b16 %v2840
    %v4283 = vunpack.c.h.b16 %v2840
    %v4284 = vunpack.c.l.b16 %v2841
    %v4285 = vunpack.c.h.b16 %v2841
    %v4286 = vunpack.c.l.b16 %v2842
    %v4287 = vunpack.c.h.b16 %v2842
    %v4288 = vunpack.c.l.b16 %v2843
    %v4289 = vunpack.c.h.b16 %v2843
    %v4290 = vunpack.c.l.b16 %v2844
    %v4291 = vunpack.c.h.b16 %v2844
    %v4292 = vunpack.c.l.b16 %v2845
    %v4293 = vunpack.c.h.b16 %v2845
    %v4294 = vunpack.c.l.b16 %v2846
    %v4295 = vunpack.c.h.b16 %v2846
    %v4296 = vunpack.c.l.b16 %v2847
    %v4297 = vunpack.c.h.b16 %v2847
    %v4298 = vunpack.c.l.b16 %v2848
    %v4299 = vunpack.c.h.b16 %v2848
    %v4300 = vunpack.c.l.b16 %v2849
    %v4301 = vunpack.c.h.b16 %v2849
    %v4302 = vunpack.c.l.b16 %v2850
    %v4303 = vunpack.c.h.b16 %v2850
    %v4304 = vunpack.c.l.b16 %v2851
    %v4305 = vunpack.c.h.b16 %v2851
    %v4306 = vunpack.c.l.b16 %v2852
    %v4307 = vunpack.c.h.b16 %v2852
    %v4308 = vunpack.c.l.b16 %v2853
    %v4309 = vunpack.c.h.b16 %v2853
    %v4310 = vunpack.c.l.b16 %v2854
    %v4311 = vunpack.c.h.b16 %v2854
    %v4312 = vunpack.c.l.b16 %v2855
    %v4313 = vunpack.c.h.b16 %v2855
    %v4314 = vunpack.c.l.b16 %v2856
    %v4315 = vunpack.c.h.b16 %v2856
    %v4316 = vunpack.c.l.b16 %v2857
    %v4317 = vunpack.c.h.b16 %v2857
    %v4318 = vunpack.c.l.b16 %v2858
    %v4319 = vunpack.c.h.b16 %v2858
    %v4320 = vunpack.c.l.b16 %v2859
    %v4321 = vunpack.c.h.b16 %v2859
    %v4322 = vunpack.c.l.b16 %v2860
    %v4323 = vunpack.c.h.b16 %v2860
    %v4324 = vunpack.c.l.b16 %v2861
    %v4325 = vunpack.c.h.b16 %v2861
    %v4326 = vunpack.c.l.b16 %v2862
    %v4327 = vunpack.c.h.b16 %v2862
    %v4328 = vunpack.c.l.b16 %v2863
    %v4329 = vunpack.c.h.b16 %v2863
    %v4330 = vunpack.c.l.b16 %v2864
    %v4331 = vunpack.c.h.b16 %v2864
    %v4332 = vunpack.c.l.b16 %v2865
    %v4333 = vunpack.c.h.b16 %v2865
    %v4334 = vunpack.c.l.b16 %v2866
    %v4335 = vunpack.c.h.b16 %v2866
    %v4336 = vunpack.c.l.b16 %v2867
    %v4337 = vunpack.c.h.b16 %v2867
    %v4338 = vunpack.c.l.b16 %v2868
    %v4339 = vunpack.c.h.b16 %v2868
    %v4340 = vunpack.c.l.b16 %v2869
    %v4341 = vunpack.c.h.b16 %v2869
    %v4342 = vunpack.c.l.b16 %v2870
    %v4343 = vunpack.c.h.b16 %v2870
    %v4344 = vunpack.c.l.b16 %v2871
    %v4345 = vunpack.c.h.b16 %v2871
    %v4346 = vunpack.c.l.b16 %v2872
    %v4347 = vunpack.c.h.b16 %v2872
    %v4348 = vunpack.c.l.b16 %v2873
    %v4349 = vunpack.c.h.b16 %v2873
    %v4350 = vunpack.c.l.b16 %v2874
    %v4351 = vunpack.c.h.b16 %v2874
    %v4352 = vunpack.c.l.b16 %v2875
    %v4353 = vunpack.c.h.b16 %v2875
    %v4354 = vunpack.c.l.b16 %v2876
    %v4355 = vunpack.c.h.b16 %v2876
    %v4356 = vunpack.c.l.b16 %v2877
    %v4357 = vunpack.c.h.b16 %v2877
    %v4358 = vunpack.c.l.b16 %v2878
    %v4359 = vunpack.c.h.b16 %v2878
    %v4360 = vunpack.c.l.b16 %v2879
    %v4361 = vunpack.c.h.b16 %v2879
    %v4362 = vunpack.c.l.b16 %v2880
    %v4363 = vunpack.c.h.b16 %v2880
    %v4364 = vunpack.c.l.b16 %v2881
    %v4365 = vunpack.c.h.b16 %v2881
    %v4366 = vunpack.c.l.b16 %v2882
    %v4367 = vunpack.c.h.b16 %v2882
    %v4368 = vunpack.c.l.b16 %v2883
    %v4369 = vunpack.c.h.b16 %v2883
    %v4370 = vunpack.c.l.b16 %v2884
    %v4371 = vunpack.c.h.b16 %v2884
    %v4372 = vunpack.c.l.b16 %v2885
    %v4373 = vunpack.c.h.b16 %v2885
    %v4374 = vunpack.c.l.b16 %v2886
    %v4375 = vunpack.c.h.b16 %v2886
    %v4376 = vunpack.c.l.b16 %v2887
    %v4377 = vunpack.c.h.b16 %v2887
    %v4378 = vunpack.c.l.b16 %v2888
    %v4379 = vunpack.c.h.b16 %v2888
    %v4380 = vunpack.c.l.b16 %v2889
    %v4381 = vunpack.c.h.b16 %v2889
    %v4382 = vunpack.c.l.b16 %v2890
    %v4383 = vunpack.c.h.b16 %v2890
    %v4384 = vunpack.c.l.b16 %v2891
    %v4385 = vunpack.c.h.b16 %v2891
    %v4386 = vunpack.c.l.b16 %v2892
    %v4387 = vunpack.c.h.b16 %v2892
    %v4388 = vunpack.c.l.b16 %v2893
    %v4389 = vunpack.c.h.b16 %v2893
    %v4390 = vunpack.c.l.b16 %v2894
    %v4391 = vunpack.c.h.b16 %v2894
    %v4392 = vunpack.c.l.b16 %v2895
    %v4393 = vunpack.c.h.b16 %v2895
    %v4394 = vunpack.c.l.b16 %v2896
    %v4395 = vunpack.c.h.b16 %v2896
    %v4396 = vunpack.c.l.b16 %v2897
    %v4397 = vunpack.c.h.b16 %v2897
    %v4398 = vunpack.c.l.b16 %v2898
    %v4399 = vunpack.c.h.b16 %v2898
    %v4400 = vunpack.c.l.b16 %v2899
    %v4401 = vunpack.c.h.b16 %v2899
    %v4402 = vunpack.c.l.b16 %v2900
    %v4403 = vunpack.c.h.b16 %v2900
    %v4404 = vunpack.c.l.b16 %v2901
    %v4405 = vunpack.c.h.b16 %v2901
    %v4406 = vunpack.c.l.b16 %v2902
    %v4407 = vunpack.c.h.b16 %v2902
    %v4408 = vunpack.c.l.b16 %v2903
    %v4409 = vunpack.c.h.b16 %v2903
    %v4410 = vunpack.c.l.b16 %v2904
    %v4411 = vunpack.c.h.b16 %v2904
    %v4412 = vunpack.c.l.b16 %v2905
    %v4413 = vunpack.c.h.b16 %v2905
    %v4414 = vunpack.c.l.b16 %v2906
    %v4415 = vunpack.c.h.b16 %v2906
    %v4416 = vunpack.c.l.b16 %v2907
    %v4417 = vunpack.c.h.b16 %v2907
    %v4418 = vunpack.c.l.b16 %v2908
    %v4419 = vunpack.c.h.b16 %v2908
    %v4420 = vunpack.c.l.b16 %v2909
    %v4421 = vunpack.c.h.b16 %v2909
    %v4422 = vunpack.c.l.b16 %v2910
    %v4423 = vunpack.c.h.b16 %v2910
    %v4424 = vunpack.c.l.b16 %v2911
    %v4425 = vunpack.c.h.b16 %v2911
    %v4426 = vunpack.c.l.b16 %v2912
    %v4427 = vunpack.c.h.b16 %v2912
    %v4428 = vunpack.c.l.b16 %v2913
    %v4429 = vunpack.c.h.b16 %v2913
    %v4430 = vunpack.c.l.b16 %v2914
    %v4431 = vunpack.c.h.b16 %v2914
    %v4432 = vunpack.c.l.b16 %v2915
    %v4433 = vunpack.c.h.b16 %v2915
    %v4434 = vunpack.c.l.b16 %v2916
    %v4435 = vunpack.c.h.b16 %v2916
    %v4436 = vunpack.c.l.b16 %v2917
    %v4437 = vunpack.c.h.b16 %v2917
    %v4438 = vunpack.c.l.b16 %v2918
    %v4439 = vunpack.c.h.b16 %v2918
    %v4440 = vunpack.c.l.b16 %v2919
    %v4441 = vunpack.c.h.b16 %v2919
    %v4442 = vunpack.c.l.b16 %v2920
    %v4443 = vunpack.c.h.b16 %v2920
    %v4444 = vunpack.c.l.b16 %v2921
    %v4445 = vunpack.c.h.b16 %v2921
    %v4446 = vunpack.c.l.b16 %v2922
    %v4447 = vunpack.c.h.b16 %v2922
    %v4448 = vunpack.c.l.b16 %v2923
    %v4449 = vunpack.c.h.b16 %v2923
    %v4450 = vunpack.c.l.b16 %v2924
    %v4451 = vunpack.c.h.b16 %v2924
    %v4452 = vunpack.c.l.b16 %v2925
    %v4453 = vunpack.c.h.b16 %v2925
    %v4454 = vunpack.c.l.b16 %v2926
    %v4455 = vunpack.c.h.b16 %v2926
    %v4456 = vunpack.c.l.b16 %v2927
    %v4457 = vunpack.c.h.b16 %v2927
    %v4458 = vunpack.c.l.b16 %v2928
    %v4459 = vunpack.c.h.b16 %v2928
    %v4460 = vunpack.c.l.b16 %v2929
    %v4461 = vunpack.c.h.b16 %v2929
    %v4462 = vunpack.c.l.b16 %v2930
    %v4463 = vunpack.c.h.b16 %v2930
    %v4464 = vunpack.c.l.b16 %v2931
    %v4465 = vunpack.c.h.b16 %v2931
    %v4466 = vunpack.c.l.b16 %v2932
    %v4467 = vunpack.c.h.b16 %v2932
    %v4468 = vunpack.c.l.b16 %v2933
    %v4469 = vunpack.c.h.b16 %v2933
    %v4470 = vunpack.c.l.b16 %v2934
    %v4471 = vunpack.c.h.b16 %v2934
    %v4472 = vunpack.c.l.b16 %v2935
    %v4473 = vunpack.c.h.b16 %v2935
    %v4474 = vunpack.c.l.b16 %v2936
    %v4475 = vunpack.c.h.b16 %v2936
    %v4476 = vunpack.c.l.b16 %v2937
    %v4477 = vunpack.c.h.b16 %v2937
    %v4478 = vunpack.c.l.b16 %v2938
    %v4479 = vunpack.c.h.b16 %v2938
    %v4480 = vunpack.c.l.b16 %v2939
    %v4481 = vunpack.c.h.b16 %v2939
    %v4482 = vunpack.c.l.b16 %v2940
    %v4483 = vunpack.c.h.b16 %v2940
    %v4484 = vunpack.c.l.b16 %v2941
    %v4485 = vunpack.c.h.b16 %v2941
    %v4486 = vunpack.c.l.b16 %v2942
    %v4487 = vunpack.c.h.b16 %v2942
    %v4488 = vunpack.c.l.b16 %v2943
    %v4489 = vunpack.c.h.b16 %v2943
    %v4490 = vunpack.c.l.b16 %v2944
    %v4491 = vunpack.c.h.b16 %v2944
    %v4492 = vunpack.c.l.b16 %v2945
    %v4493 = vunpack.c.h.b16 %v2945
    %v4494 = vunpack.c.l.b16 %v2946
    %v4495 = vunpack.c.h.b16 %v2946
    %v4496 = vunpack.c.l.b16 %v2947
    %v4497 = vunpack.c.h.b16 %v2947
    %v4498 = vunpack.c.l.b16 %v2948
    %v4499 = vunpack.c.h.b16 %v2948
    %v4500 = vunpack.c.l.b16 %v2949
    %v4501 = vunpack.c.h.b16 %v2949
    %v4502 = vunpack.c.l.b16 %v2950
    %v4503 = vunpack.c.h.b16 %v2950
    %v4504 = vunpack.c.l.b16 %v2951
    %v4505 = vunpack.c.h.b16 %v2951
    %v4506 = vunpack.c.l.b16 %v2952
    %v4507 = vunpack.c.h.b16 %v2952
    %v4508 = vunpack.c.l.b16 %v2953
    %v4509 = vunpack.c.h.b16 %v2953
    %v4510 = vunpack.c.l.b16 %v2954
    %v4511 = vunpack.c.h.b16 %v2954
    %v4512 = vunpack.c.l.b16 %v2955
    %v4513 = vunpack.c.h.b16 %v2955
    %v4514 = vunpack.c.l.b16 %v2956
    %v4515 = vunpack.c.h.b16 %v2956
    %v4516 = vunpack.c.l.b16 %v2957
    %v4517 = vunpack.c.h.b16 %v2957
    %v4518 = vunpack.c.l.b16 %v2958
    %v4519 = vunpack.c.h.b16 %v2958
    %v4520 = vunpack.c.l.b16 %v2959
    %v4521 = vunpack.c.h.b16 %v2959
    %v4522 = vunpack.c.l.b16 %v2960
    %v4523 = vunpack.c.h.b16 %v2960
    %v4524 = vunpack.c.l.b16 %v2961
    %v4525 = vunpack.c.h.b16 %v2961
    %v4526 = vunpack.c.l.b16 %v2962
    %v4527 = vunpack.c.h.b16 %v2962
    %v4528 = vunpack.c.l.b16 %v2963
    %v4529 = vunpack.c.h.b16 %v2963
    %v4530 = vunpack.c.l.b16 %v2964
    %v4531 = vunpack.c.h.b16 %v2964
    %v4532 = vunpack.c.l.b16 %v2965
    %v4533 = vunpack.c.h.b16 %v2965
    %v4534 = vunpack.c.l.b16 %v2966
    %v4535 = vunpack.c.h.b16 %v2966
    %v4536 = vunpack.c.l.b16 %v2967
    %v4537 = vunpack.c.h.b16 %v2967
    %v4538 = vunpack.c.l.b16 %v2968
    %v4539 = vunpack.c.h.b16 %v2968
    %v4540 = vunpack.c.l.b16 %v2969
    %v4541 = vunpack.c.h.b16 %v2969
    %v4542 = vunpack.c.l.b16 %v2970
    %v4543 = vunpack.c.h.b16 %v2970
    %v4544 = vunpack.c.l.b16 %v2971
    %v4545 = vunpack.c.h.b16 %v2971
    %v4546 = vunpack.c.l.b16 %v2972
    %v4547 = vunpack.c.h.b16 %v2972
    %v4548 = vunpack.c.l.b16 %v2973
    %v4549 = vunpack.c.h.b16 %v2973
    %v4550 = vunpack.c.l.b16 %v2974
    %v4551 = vunpack.c.h.b16 %v2974
    %v4552 = vunpack.c.l.b16 %v2975
    %v4553 = vunpack.c.h.b16 %v2975
    %v4554 = vpack.c.b16 %v3538, %v3530
    %v4555 = vpack.c.b16 %v3539, %v3531
    %v4556 = vpack.c.b16 %v3540, %v3532
    %v4557 = vpack.c.b16 %v3541, %v3533
    %v4558 = vpack.c.b16 %v3542, %v3534
    %v4559 = vpack.c.b16 %v3543, %v3535
    %v4560 = vpack.c.b16 %v3544, %v3536
    %v4561 = vpack.c.b16 %v3545, %v3537
    %v4562 = vpack.c.b16 %v3554, %v3546
    %v4563 = vpack.c.b16 %v3555, %v3547
    %v4564 = vpack.c.b16 %v3556, %v3548
    %v4565 = vpack.c.b16 %v3557, %v3549
    %v4566 = vpack.c.b16 %v3558, %v3550
    %v4567 = vpack.c.b16 %v3559, %v3551
    %v4568 = vpack.c.b16 %v3560, %v3552
    %v4569 = vpack.c.b16 %v3561, %v3553
    %v4570 = vpack.c.b16 %v3570, %v3562
    %v4571 = vpack.c.b16 %v3571, %v3563
    %v4572 = vpack.c.b16 %v3572, %v3564
    %v4573 = vpack.c.b16 %v3573, %v3565
    %v4574 = vpack.c.b16 %v3574, %v3566
    %v4575 = vpack.c.b16 %v3575, %v3567
    %v4576 = vpack.c.b16 %v3576, %v3568
    %v4577 = vpack.c.b16 %v3577, %v3569
    %v4578 = vpack.c.b16 %v3586, %v3578
    %v4579 = vpack.c.b16 %v3587, %v3579
    %v4580 = vpack.c.b16 %v3588, %v3580
    %v4581 = vpack.c.b16 %v3589, %v3581
    %v4582 = vpack.c.b16 %v3590, %v3582
    %v4583 = vpack.c.b16 %v3591, %v3583
    %v4584 = vpack.c.b16 %v3592, %v3584
    %v4585 = vpack.c.b16 %v3593, %v3585
    %v4586 = vpack.c.b16 %v3602, %v3594
    %v4587 = vpack.c.b16 %v3603, %v3595
    %v4588 = vpack.c.b16 %v3604, %v3596
    %v4589 = vpack.c.b16 %v3605, %v3597
    %v4590 = vpack.c.b16 %v3606, %v3598
    %v4591 = vpack.c.b16 %v3607, %v3599
    %v4592 = vpack.c.b16 %v3608, %v3600
    %v4593 = vpack.c.b16 %v3609, %v3601
    %v4594 = vpack.c.b16 %v3618, %v3610
    %v4595 = vpack.c.b16 %v3619, %v3611
    %v4596 = vpack.c.b16 %v3620, %v3612
    %v4597 = vpack.c.b16 %v3621, %v3613
    %v4598 = vpack.c.b16 %v3622, %v3614
    %v4599 = vpack.c.b16 %v3623, %v3615
    %v4600 = vpack.c.b16 %v3624, %v3616
    %v4601 = vpack.c.b16 %v3625, %v3617
    %v4602 = vpack.c.b16 %v3634, %v3626
    %v4603 = vpack.c.b16 %v3635, %v3627
    %v4604 = vpack.c.b16 %v3636, %v3628
    %v4605 = vpack.c.b16 %v3637, %v3629
    %v4606 = vpack.c.b16 %v3638, %v3630
    %v4607 = vpack.c.b16 %v3639, %v3631
    %v4608 = vpack.c.b16 %v3640, %v3632
    %v4609 = vpack.c.b16 %v3641, %v3633
    %v4610 = vpack.c.b16 %v3650, %v3642
    %v4611 = vpack.c.b16 %v3651, %v3643
    %v4612 = vpack.c.b16 %v3652, %v3644
    %v4613 = vpack.c.b16 %v3653, %v3645
    %v4614 = vpack.c.b16 %v3654, %v3646
    %v4615 = vpack.c.b16 %v3655, %v3647
    %v4616 = vpack.c.b16 %v3656, %v3648
    %v4617 = vpack.c.b16 %v3657, %v3649
    %v4618 = vpack.c.b16 %v3666, %v3658
    %v4619 = vpack.c.b16 %v3667, %v3659
    %v4620 = vpack.c.b16 %v3668, %v3660
    %v4621 = vpack.c.b16 %v3669, %v3661
    %v4622 = vpack.c.b16 %v3670, %v3662
    %v4623 = vpack.c.b16 %v3671, %v3663
    %v4624 = vpack.c.b16 %v3672, %v3664
    %v4625 = vpack.c.b16 %v3673, %v3665
    %v4626 = vpack.c.b16 %v3682, %v3674
    %v4627 = vpack.c.b16 %v3683, %v3675
    %v4628 = vpack.c.b16 %v3684, %v3676
    %v4629 = vpack.c.b16 %v3685, %v3677
    %v4630 = vpack.c.b16 %v3686, %v3678
    %v4631 = vpack.c.b16 %v3687, %v3679
    %v4632 = vpack.c.b16 %v3688, %v3680
    %v4633 = vpack.c.b16 %v3689, %v3681
    %v4634 = vpack.c.b16 %v3698, %v3690
    %v4635 = vpack.c.b16 %v3699, %v3691
    %v4636 = vpack.c.b16 %v3700, %v3692
    %v4637 = vpack.c.b16 %v3701, %v3693
    %v4638 = vpack.c.b16 %v3702, %v3694
    %v4639 = vpack.c.b16 %v3703, %v3695
    %v4640 = vpack.c.b16 %v3704, %v3696
    %v4641 = vpack.c.b16 %v3705, %v3697
    %v4642 = vpack.c.b16 %v3714, %v3706
    %v4643 = vpack.c.b16 %v3715, %v3707
    %v4644 = vpack.c.b16 %v3716, %v3708
    %v4645 = vpack.c.b16 %v3717, %v3709
    %v4646 = vpack.c.b16 %v3718, %v3710
    %v4647 = vpack.c.b16 %v3719, %v3711
    %v4648 = vpack.c.b16 %v3720, %v3712
    %v4649 = vpack.c.b16 %v3721, %v3713
    %v4650 = vpack.c.b16 %v3730, %v3722
    %v4651 = vpack.c.b16 %v3731, %v3723
    %v4652 = vpack.c.b16 %v3732, %v3724
    %v4653 = vpack.c.b16 %v3733, %v3725
    %v4654 = vpack.c.b16 %v3734, %v3726
    %v4655 = vpack.c.b16 %v3735, %v3727
    %v4656 = vpack.c.b16 %v3736, %v3728
    %v4657 = vpack.c.b16 %v3737, %v3729
    %v4658 = vpack.c.b16 %v3746, %v3738
    %v4659 = vpack.c.b16 %v3747, %v3739
    %v4660 = vpack.c.b16 %v3748, %v3740
    %v4661 = vpack.c.b16 %v3749, %v3741
    %v4662 = vpack.c.b16 %v3750, %v3742
    %v4663 = vpack.c.b16 %v3751, %v3743
    %v4664 = vpack.c.b16 %v3752, %v3744
    %v4665 = vpack.c.b16 %v3753, %v3745
    %v4666 = vpack.c.b16 %v3762, %v3754
    %v4667 = vpack.c.b16 %v3763, %v3755
    %v4668 = vpack.c.b16 %v3764, %v3756
    %v4669 = vpack.c.b16 %v3765, %v3757
    %v4670 = vpack.c.b16 %v3766, %v3758
    %v4671 = vpack.c.b16 %v3767, %v3759
    %v4672 = vpack.c.b16 %v3768, %v3760
    %v4673 = vpack.c.b16 %v3769, %v3761
    %v4674 = vpack.c.b16 %v3778, %v3770
    %v4675 = vpack.c.b16 %v3779, %v3771
    %v4676 = vpack.c.b16 %v3780, %v3772
    %v4677 = vpack.c.b16 %v3781, %v3773
    %v4678 = vpack.c.b16 %v3782, %v3774
    %v4679 = vpack.c.b16 %v3783, %v3775
    %v4680 = vpack.c.b16 %v3784, %v3776
    %v4681 = vpack.c.b16 %v3785, %v3777
    %v4682 = vpack.c.b16 %v3794, %v3786
    %v4683 = vpack.c.b16 %v3795, %v3787
    %v4684 = vpack.c.b16 %v3796, %v3788
    %v4685 = vpack.c.b16 %v3797, %v3789
    %v4686 = vpack.c.b16 %v3798, %v3790
    %v4687 = vpack.c.b16 %v3799, %v3791
    %v4688 = vpack.c.b16 %v3800, %v3792
    %v4689 = vpack.c.b16 %v3801, %v3793
    %v4690 = vpack.c.b16 %v3810, %v3802
    %v4691 = vpack.c.b16 %v3811, %v3803
    %v4692 = vpack.c.b16 %v3812, %v3804
    %v4693 = vpack.c.b16 %v3813, %v3805
    %v4694 = vpack.c.b16 %v3814, %v3806
    %v4695 = vpack.c.b16 %v3815, %v3807
    %v4696 = vpack.c.b16 %v3816, %v3808
    %v4697 = vpack.c.b16 %v3817, %v3809
    %v4698 = vpack.c.b16 %v3826, %v3818
    %v4699 = vpack.c.b16 %v3827, %v3819
    %v4700 = vpack.c.b16 %v3828, %v3820
    %v4701 = vpack.c.b16 %v3829, %v3821
    %v4702 = vpack.c.b16 %v3830, %v3822
    %v4703 = vpack.c.b16 %v3831, %v3823
    %v4704 = vpack.c.b16 %v3832, %v3824
    %v4705 = vpack.c.b16 %v3833, %v3825
    %v4706 = vpack.c.b16 %v3842, %v3834
    %v4707 = vpack.c.b16 %v3843, %v3835
    %v4708 = vpack.c.b16 %v3844, %v3836
    %v4709 = vpack.c.b16 %v3845, %v3837
    %v4710 = vpack.c.b16 %v3846, %v3838
    %v4711 = vpack.c.b16 %v3847, %v3839
    %v4712 = vpack.c.b16 %v3848, %v3840
    %v4713 = vpack.c.b16 %v3849, %v3841
    %v4714 = vpack.c.b16 %v3858, %v3850
    %v4715 = vpack.c.b16 %v3859, %v3851
    %v4716 = vpack.c.b16 %v3860, %v3852
    %v4717 = vpack.c.b16 %v3861, %v3853
    %v4718 = vpack.c.b16 %v3862, %v3854
    %v4719 = vpack.c.b16 %v3863, %v3855
    %v4720 = vpack.c.b16 %v3864, %v3856
    %v4721 = vpack.c.b16 %v3865, %v3857
    %v4722 = vpack.c.b16 %v3874, %v3866
    %v4723 = vpack.c.b16 %v3875, %v3867
    %v4724 = vpack.c.b16 %v3876, %v3868
    %v4725 = vpack.c.b16 %v3877, %v3869
    %v4726 = vpack.c.b16 %v3878, %v3870
    %v4727 = vpack.c.b16 %v3879, %v3871
    %v4728 = vpack.c.b16 %v3880, %v3872
    %v4729 = vpack.c.b16 %v3881, %v3873
    %v4730 = vpack.c.b16 %v3890, %v3882
    %v4731 = vpack.c.b16 %v3891, %v3883
    %v4732 = vpack.c.b16 %v3892, %v3884
    %v4733 = vpack.c.b16 %v3893, %v3885
    %v4734 = vpack.c.b16 %v3894, %v3886
    %v4735 = vpack.c.b16 %v3895, %v3887
    %v4736 = vpack.c.b16 %v3896, %v3888
    %v4737 = vpack.c.b16 %v3897, %v3889
    %v4738 = vpack.c.b16 %v3906, %v3898
    %v4739 = vpack.c.b16 %v3907, %v3899
    %v4740 = vpack.c.b16 %v3908, %v3900
    %v4741 = vpack.c.b16 %v3909, %v3901
    %v4742 = vpack.c.b16 %v3910, %v3902
    %v4743 = vpack.c.b16 %v3911, %v3903
    %v4744 = vpack.c.b16 %v3912, %v3904
    %v4745 = vpack.c.b16 %v3913, %v3905
    %v4746 = vpack.c.b16 %v3922, %v3914
    %v4747 = vpack.c.b16 %v3923, %v3915
    %v4748 = vpack.c.b16 %v3924, %v3916
    %v4749 = vpack.c.b16 %v3925, %v3917
    %v4750 = vpack.c.b16 %v3926, %v3918
    %v4751 = vpack.c.b16 %v3927, %v3919
    %v4752 = vpack.c.b16 %v3928, %v3920
    %v4753 = vpack.c.b16 %v3929, %v3921
    %v4754 = vpack.c.b16 %v3938, %v3930
    %v4755 = vpack.c.b16 %v3939, %v3931
    %v4756 = vpack.c.b16 %v3940, %v3932
    %v4757 = vpack.c.b16 %v3941, %v3933
    %v4758 = vpack.c.b16 %v3942, %v3934
    %v4759 = vpack.c.b16 %v3943, %v3935
    %v4760 = vpack.c.b16 %v3944, %v3936
    %v4761 = vpack.c.b16 %v3945, %v3937
    %v4762 = vpack.c.b16 %v3954, %v3946
    %v4763 = vpack.c.b16 %v3955, %v3947
    %v4764 = vpack.c.b16 %v3956, %v3948
    %v4765 = vpack.c.b16 %v3957, %v3949
    %v4766 = vpack.c.b16 %v3958, %v3950
    %v4767 = vpack.c.b16 %v3959, %v3951
    %v4768 = vpack.c.b16 %v3960, %v3952
    %v4769 = vpack.c.b16 %v3961, %v3953
    %v4770 = vpack.c.b16 %v3970, %v3962
    %v4771 = vpack.c.b16 %v3971, %v3963
    %v4772 = vpack.c.b16 %v3972, %v3964
    %v4773 = vpack.c.b16 %v3973, %v3965
    %v4774 = vpack.c.b16 %v3974, %v3966
    %v4775 = vpack.c.b16 %v3975, %v3967
    %v4776 = vpack.c.b16 %v3976, %v3968
    %v4777 = vpack.c.b16 %v3977, %v3969
    %v4778 = vpack.c.b16 %v3986, %v3978
    %v4779 = vpack.c.b16 %v3987, %v3979
    %v4780 = vpack.c.b16 %v3988, %v3980
    %v4781 = vpack.c.b16 %v3989, %v3981
    %v4782 = vpack.c.b16 %v3990, %v3982
    %v4783 = vpack.c.b16 %v3991, %v3983
    %v4784 = vpack.c.b16 %v3992, %v3984
    %v4785 = vpack.c.b16 %v3993, %v3985
    %v4786 = vpack.c.b16 %v4002, %v3994
    %v4787 = vpack.c.b16 %v4003, %v3995
    %v4788 = vpack.c.b16 %v4004, %v3996
    %v4789 = vpack.c.b16 %v4005, %v3997
    %v4790 = vpack.c.b16 %v4006, %v3998
    %v4791 = vpack.c.b16 %v4007, %v3999
    %v4792 = vpack.c.b16 %v4008, %v4000
    %v4793 = vpack.c.b16 %v4009, %v4001
    %v4794 = vpack.c.b16 %v4018, %v4010
    %v4795 = vpack.c.b16 %v4019, %v4011
    %v4796 = vpack.c.b16 %v4020, %v4012
    %v4797 = vpack.c.b16 %v4021, %v4013
    %v4798 = vpack.c.b16 %v4022, %v4014
    %v4799 = vpack.c.b16 %v4023, %v4015
    %v4800 = vpack.c.b16 %v4024, %v4016
    %v4801 = vpack.c.b16 %v4025, %v4017
    %v4802 = vpack.c.b16 %v4034, %v4026
    %v4803 = vpack.c.b16 %v4035, %v4027
    %v4804 = vpack.c.b16 %v4036, %v4028
    %v4805 = vpack.c.b16 %v4037, %v4029
    %v4806 = vpack.c.b16 %v4038, %v4030
    %v4807 = vpack.c.b16 %v4039, %v4031
    %v4808 = vpack.c.b16 %v4040, %v4032
    %v4809 = vpack.c.b16 %v4041, %v4033
    %v4810 = vpack.c.b16 %v4050, %v4042
    %v4811 = vpack.c.b16 %v4051, %v4043
    %v4812 = vpack.c.b16 %v4052, %v4044
    %v4813 = vpack.c.b16 %v4053, %v4045
    %v4814 = vpack.c.b16 %v4054, %v4046
    %v4815 = vpack.c.b16 %v4055, %v4047
    %v4816 = vpack.c.b16 %v4056, %v4048
    %v4817 = vpack.c.b16 %v4057, %v4049
    %v4818 = vpack.c.b16 %v4066, %v4058
    %v4819 = vpack.c.b16 %v4067, %v4059
    %v4820 = vpack.c.b16 %v4068, %v4060
    %v4821 = vpack.c.b16 %v4069, %v4061
    %v4822 = vpack.c.b16 %v4070, %v4062
    %v4823 = vpack.c.b16 %v4071, %v4063
    %v4824 = vpack.c.b16 %v4072, %v4064
    %v4825 = vpack.c.b16 %v4073, %v4065
    %v4826 = vpack.c.b16 %v4082, %v4074
    %v4827 = vpack.c.b16 %v4083, %v4075
    %v4828 = vpack.c.b16 %v4084, %v4076
    %v4829 = vpack.c.b16 %v4085, %v4077
    %v4830 = vpack.c.b16 %v4086, %v4078
    %v4831 = vpack.c.b16 %v4087, %v4079
    %v4832 = vpack.c.b16 %v4088, %v4080
    %v4833 = vpack.c.b16 %v4089, %v4081
    %v4834 = vpack.c.b16 %v4098, %v4090
    %v4835 = vpack.c.b16 %v4099, %v4091
    %v4836 = vpack.c.b16 %v4100, %v4092
    %v4837 = vpack.c.b16 %v4101, %v4093
    %v4838 = vpack.c.b16 %v4102, %v4094
    %v4839 = vpack.c.b16 %v4103, %v4095
    %v4840 = vpack.c.b16 %v4104, %v4096
    %v4841 = vpack.c.b16 %v4105, %v4097
    %v4842 = vpack.c.b16 %v4114, %v4106
    %v4843 = vpack.c.b16 %v4115, %v4107
    %v4844 = vpack.c.b16 %v4116, %v4108
    %v4845 = vpack.c.b16 %v4117, %v4109
    %v4846 = vpack.c.b16 %v4118, %v4110
    %v4847 = vpack.c.b16 %v4119, %v4111
    %v4848 = vpack.c.b16 %v4120, %v4112
    %v4849 = vpack.c.b16 %v4121, %v4113
    %v4850 = vpack.c.b16 %v4130, %v4122
    %v4851 = vpack.c.b16 %v4131, %v4123
    %v4852 = vpack.c.b16 %v4132, %v4124
    %v4853 = vpack.c.b16 %v4133, %v4125
    %v4854 = vpack.c.b16 %v4134, %v4126
    %v4855 = vpack.c.b16 %v4135, %v4127
    %v4856 = vpack.c.b16 %v4136, %v4128
    %v4857 = vpack.c.b16 %v4137, %v4129
    %v4858 = vpack.c.b16 %v4146, %v4138
    %v4859 = vpack.c.b16 %v4147, %v4139
    %v4860 = vpack.c.b16 %v4148, %v4140
    %v4861 = vpack.c.b16 %v4149, %v4141
    %v4862 = vpack.c.b16 %v4150, %v4142
    %v4863 = vpack.c.b16 %v4151, %v4143
    %v4864 = vpack.c.b16 %v4152, %v4144
    %v4865 = vpack.c.b16 %v4153, %v4145
    %v4866 = vpack.c.b16 %v4162, %v4154
    %v4867 = vpack.c.b16 %v4163, %v4155
    %v4868 = vpack.c.b16 %v4164, %v4156
    %v4869 = vpack.c.b16 %v4165, %v4157
    %v4870 = vpack.c.b16 %v4166, %v4158
    %v4871 = vpack.c.b16 %v4167, %v4159
    %v4872 = vpack.c.b16 %v4168, %v4160
    %v4873 = vpack.c.b16 %v4169, %v4161
    %v4874 = vpack.c.b16 %v4178, %v4170
    %v4875 = vpack.c.b16 %v4179, %v4171
    %v4876 = vpack.c.b16 %v4180, %v4172
    %v4877 = vpack.c.b16 %v4181, %v4173
    %v4878 = vpack.c.b16 %v4182, %v4174
    %v4879 = vpack.c.b16 %v4183, %v4175
    %v4880 = vpack.c.b16 %v4184, %v4176
    %v4881 = vpack.c.b16 %v4185, %v4177
    %v4882 = vpack.c.b16 %v4194, %v4186
    %v4883 = vpack.c.b16 %v4195, %v4187
    %v4884 = vpack.c.b16 %v4196, %v4188
    %v4885 = vpack.c.b16 %v4197, %v4189
    %v4886 = vpack.c.b16 %v4198, %v4190
    %v4887 = vpack.c.b16 %v4199, %v4191
    %v4888 = vpack.c.b16 %v4200, %v4192
    %v4889 = vpack.c.b16 %v4201, %v4193
    %v4890 = vpack.c.b16 %v4210, %v4202
    %v4891 = vpack.c.b16 %v4211, %v4203
    %v4892 = vpack.c.b16 %v4212, %v4204
    %v4893 = vpack.c.b16 %v4213, %v4205
    %v4894 = vpack.c.b16 %v4214, %v4206
    %v4895 = vpack.c.b16 %v4215, %v4207
    %v4896 = vpack.c.b16 %v4216, %v4208
    %v4897 = vpack.c.b16 %v4217, %v4209
    %v4898 = vpack.c.b16 %v4226, %v4218
    %v4899 = vpack.c.b16 %v4227, %v4219
    %v4900 = vpack.c.b16 %v4228, %v4220
    %v4901 = vpack.c.b16 %v4229, %v4221
    %v4902 = vpack.c.b16 %v4230, %v4222
    %v4903 = vpack.c.b16 %v4231, %v4223
    %v4904 = vpack.c.b16 %v4232, %v4224
    %v4905 = vpack.c.b16 %v4233, %v4225
    %v4906 = vpack.c.b16 %v4242, %v4234
    %v4907 = vpack.c.b16 %v4243, %v4235
    %v4908 = vpack.c.b16 %v4244, %v4236
    %v4909 = vpack.c.b16 %v4245, %v4237
    %v4910 = vpack.c.b16 %v4246, %v4238
    %v4911 = vpack.c.b16 %v4247, %v4239
    %v4912 = vpack.c.b16 %v4248, %v4240
    %v4913 = vpack.c.b16 %v4249, %v4241
    %v4914 = vpack.c.b16 %v4258, %v4250
    %v4915 = vpack.c.b16 %v4259, %v4251
    %v4916 = vpack.c.b16 %v4260, %v4252
    %v4917 = vpack.c.b16 %v4261, %v4253
    %v4918 = vpack.c.b16 %v4262, %v4254
    %v4919 = vpack.c.b16 %v4263, %v4255
    %v4920 = vpack.c.b16 %v4264, %v4256
    %v4921 = vpack.c.b16 %v4265, %v4257
    %v4922 = vpack.c.b16 %v4274, %v4266
    %v4923 = vpack.c.b16 %v4275, %v4267
    %v4924 = vpack.c.b16 %v4276, %v4268
    %v4925 = vpack.c.b16 %v4277, %v4269
    %v4926 = vpack.c.b16 %v4278, %v4270
    %v4927 = vpack.c.b16 %v4279, %v4271
    %v4928 = vpack.c.b16 %v4280, %v4272
    %v4929 = vpack.c.b16 %v4281, %v4273
    %v4930 = vpack.c.b16 %v4290, %v4282
    %v4931 = vpack.c.b16 %v4291, %v4283
    %v4932 = vpack.c.b16 %v4292, %v4284
    %v4933 = vpack.c.b16 %v4293, %v4285
    %v4934 = vpack.c.b16 %v4294, %v4286
    %v4935 = vpack.c.b16 %v4295, %v4287
    %v4936 = vpack.c.b16 %v4296, %v4288
    %v4937 = vpack.c.b16 %v4297, %v4289
    %v4938 = vpack.c.b16 %v4306, %v4298
    %v4939 = vpack.c.b16 %v4307, %v4299
    %v4940 = vpack.c.b16 %v4308, %v4300
    %v4941 = vpack.c.b16 %v4309, %v4301
    %v4942 = vpack.c.b16 %v4310, %v4302
    %v4943 = vpack.c.b16 %v4311, %v4303
    %v4944 = vpack.c.b16 %v4312, %v4304
    %v4945 = vpack.c.b16 %v4313, %v4305
    %v4946 = vpack.c.b16 %v4322, %v4314
    %v4947 = vpack.c.b16 %v4323, %v4315
    %v4948 = vpack.c.b16 %v4324, %v4316
    %v4949 = vpack.c.b16 %v4325, %v4317
    %v4950 = vpack.c.b16 %v4326, %v4318
    %v4951 = vpack.c.b16 %v4327, %v4319
    %v4952 = vpack.c.b16 %v4328, %v4320
    %v4953 = vpack.c.b16 %v4329, %v4321
    %v4954 = vpack.c.b16 %v4338, %v4330
    %v4955 = vpack.c.b16 %v4339, %v4331
    %v4956 = vpack.c.b16 %v4340, %v4332
    %v4957 = vpack.c.b16 %v4341, %v4333
    %v4958 = vpack.c.b16 %v4342, %v4334
    %v4959 = vpack.c.b16 %v4343, %v4335
    %v4960 = vpack.c.b16 %v4344, %v4336
    %v4961 = vpack.c.b16 %v4345, %v4337
    %v4962 = vpack.c.b16 %v4354, %v4346
    %v4963 = vpack.c.b16 %v4355, %v4347
    %v4964 = vpack.c.b16 %v4356, %v4348
    %v4965 = vpack.c.b16 %v4357, %v4349
    %v4966 = vpack.c.b16 %v4358, %v4350
    %v4967 = vpack.c.b16 %v4359, %v4351
    %v4968 = vpack.c.b16 %v4360, %v4352
    %v4969 = vpack.c.b16 %v4361, %v4353
    %v4970 = vpack.c.b16 %v4370, %v4362
    %v4971 = vpack.c.b16 %v4371, %v4363
    %v4972 = vpack.c.b16 %v4372, %v4364
    %v4973 = vpack.c.b16 %v4373, %v4365
    %v4974 = vpack.c.b16 %v4374, %v4366
    %v4975 = vpack.c.b16 %v4375, %v4367
    %v4976 = vpack.c.b16 %v4376, %v4368
    %v4977 = vpack.c.b16 %v4377, %v4369
    %v4978 = vpack.c.b16 %v4386, %v4378
    %v4979 = vpack.c.b16 %v4387, %v4379
    %v4980 = vpack.c.b16 %v4388, %v4380
    %v4981 = vpack.c.b16 %v4389, %v4381
    %v4982 = vpack.c.b16 %v4390, %v4382
    %v4983 = vpack.c.b16 %v4391, %v4383
    %v4984 = vpack.c.b16 %v4392, %v4384
    %v4985 = vpack.c.b16 %v4393, %v4385
    %v4986 = vpack.c.b16 %v4402, %v4394
    %v4987 = vpack.c.b16 %v4403, %v4395
    %v4988 = vpack.c.b16 %v4404, %v4396
    %v4989 = vpack.c.b16 %v4405, %v4397
    %v4990 = vpack.c.b16 %v4406, %v4398
    %v4991 = vpack.c.b16 %v4407, %v4399
    %v4992 = vpack.c.b16 %v4408, %v4400
    %v4993 = vpack.c.b16 %v4409, %v4401
    %v4994 = vpack.c.b16 %v4418, %v4410
    %v4995 = vpack.c.b16 %v4419, %v4411
    %v4996 = vpack.c.b16 %v4420, %v4412
    %v4997 = vpack.c.b16 %v4421, %v4413
    %v4998 = vpack.c.b16 %v4422, %v4414
    %v4999 = vpack.c.b16 %v4423, %v4415
    %v5000 = vpack.c.b16 %v4424, %v4416
    %v5001 = vpack.c.b16 %v4425, %v4417
    %v5002 = vpack.c.b16 %v4434, %v4426
    %v5003 = vpack.c.b16 %v4435, %v4427
    %v5004 = vpack.c.b16 %v4436, %v4428
    %v5005 = vpack.c.b16 %v4437, %v4429
    %v5006 = vpack.c.b16 %v4438, %v4430
    %v5007 = vpack.c.b16 %v4439, %v4431
    %v5008 = vpack.c.b16 %v4440, %v4432
    %v5009 = vpack.c.b16 %v4441, %v4433
    %v5010 = vpack.c.b16 %v4450, %v4442
    %v5011 = vpack.c.b16 %v4451, %v4443
    %v5012 = vpack.c.b16 %v4452, %v4444
    %v5013 = vpack.c.b16 %v4453, %v4445
    %v5014 = vpack.c.b16 %v4454, %v4446
    %v5015 = vpack.c.b16 %v4455, %v4447
    %v5016 = vpack.c.b16 %v4456, %v4448
    %v5017 = vpack.c.b16 %v4457, %v4449
    %v5018 = vpack.c.b16 %v4466, %v4458
    %v5019 = vpack.c.b16 %v4467, %v4459
    %v5020 = vpack.c.b16 %v4468, %v4460
    %v5021 = vpack.c.b16 %v4469, %v4461
    %v5022 = vpack.c.b16 %v4470, %v4462
    %v5023 = vpack.c.b16 %v4471, %v4463
    %v5024 = vpack.c.b16 %v4472, %v4464
    %v5025 = vpack.c.b16 %v4473, %v4465
    %v5026 = vpack.c.b16 %v4482, %v4474
    %v5027 = vpack.c.b16 %v4483, %v4475
    %v5028 = vpack.c.b16 %v4484, %v4476
    %v5029 = vpack.c.b16 %v4485, %v4477
    %v5030 = vpack.c.b16 %v4486, %v4478
    %v5031 = vpack.c.b16 %v4487, %v4479
    %v5032 = vpack.c.b16 %v4488, %v4480
    %v5033 = vpack.c.b16 %v4489, %v4481
    %v5034 = vpack.c.b16 %v4498, %v4490
    %v5035 = vpack.c.b16 %v4499, %v4491
    %v5036 = vpack.c.b16 %v4500, %v4492
    %v5037 = vpack.c.b16 %v4501, %v4493
    %v5038 = vpack.c.b16 %v4502, %v4494
    %v5039 = vpack.c.b16 %v4503, %v4495
    %v5040 = vpack.c.b16 %v4504, %v4496
    %v5041 = vpack.c.b16 %v4505, %v4497
    %v5042 = vpack.c.b16 %v4514, %v4506
    %v5043 = vpack.c.b16 %v4515, %v4507
    %v5044 = vpack.c.b16 %v4516, %v4508
    %v5045 = vpack.c.b16 %v4517, %v4509
    %v5046 = vpack.c.b16 %v4518, %v4510
    %v5047 = vpack.c.b16 %v4519, %v4511
    %v5048 = vpack.c.b16 %v4520, %v4512
    %v5049 = vpack.c.b16 %v4521, %v4513
    %v5050 = vpack.c.b16 %v4530, %v4522
    %v5051 = vpack.c.b16 %v4531, %v4523
    %v5052 = vpack.c.b16 %v4532, %v4524
    %v5053 = vpack.c.b16 %v4533, %v4525
    %v5054 = vpack.c.b16 %v4534, %v4526
    %v5055 = vpack.c.b16 %v4535, %v4527
    %v5056 = vpack.c.b16 %v4536, %v4528
    %v5057 = vpack.c.b16 %v4537, %v4529
    %v5058 = vpack.c.b16 %v4546, %v4538
    %v5059 = vpack.c.b16 %v4547, %v4539
    %v5060 = vpack.c.b16 %v4548, %v4540
    %v5061 = vpack.c.b16 %v4549, %v4541
    %v5062 = vpack.c.b16 %v4550, %v4542
    %v5063 = vpack.c.b16 %v4551, %v4543
    %v5064 = vpack.c.b16 %v4552, %v4544
    %v5065 = vpack.c.b16 %v4553, %v4545
    %5578 = vmatprep.subr.bf16.mxu0 %v4555
    %5579 = vmatpush1.bf16.msra.mxu0 %v4554
    %5580 = vmatprep.subr.bf16.mxu0 %v4563
    %5581 = vmatpush1.bf16.msra.mxu0 %v4562
    %5582 = vmatprep.subr.bf16.mxu0 %v4571
    %5583 = vmatpush1.bf16.msra.mxu0 %v4570
    %5584 = vmatprep.subr.bf16.mxu0 %v4579
    %5585 = vmatpush1.bf16.msra.mxu0 %v4578
    %5586 = vmatprep.subr.bf16.mxu0 %v4587
    %5587 = vmatpush1.bf16.msra.mxu0 %v4586
    %5588 = vmatprep.subr.bf16.mxu0 %v4595
    %5589 = vmatpush1.bf16.msra.mxu0 %v4594
    %5590 = vmatprep.subr.bf16.mxu0 %v4603
    %5591 = vmatpush1.bf16.msra.mxu0 %v4602
    %5592 = vmatprep.subr.bf16.mxu0 %v4611
    %5593 = vmatpush1.bf16.msra.mxu0 %v4610
    %5594 = vmatprep.subr.bf16.mxu0 %v4619
    %5595 = vmatpush1.bf16.msra.mxu0 %v4618
    %5596 = vmatprep.subr.bf16.mxu0 %v4627
    %5597 = vmatpush1.bf16.msra.mxu0 %v4626
    %5598 = vmatprep.subr.bf16.mxu0 %v4635
    %5599 = vmatpush1.bf16.msra.mxu0 %v4634
    %5600 = vmatprep.subr.bf16.mxu0 %v4643
    %5601 = vmatpush1.bf16.msra.mxu0 %v4642
    %5602 = vmatprep.subr.bf16.mxu0 %v4651
    %5603 = vmatpush1.bf16.msra.mxu0 %v4650
    %5604 = vmatprep.subr.bf16.mxu0 %v4659
    %5605 = vmatpush1.bf16.msra.mxu0 %v4658
    %5606 = vmatprep.subr.bf16.mxu0 %v4667
    %5607 = vmatpush1.bf16.msra.mxu0 %v4666
    %5608 = vmatprep.subr.bf16.mxu0 %v4675
    %5609 = vmatpush1.bf16.msra.mxu0 %v4674
    %5610 = vmatprep.mubr.bf16.mxu0 %v2457
    %5611 = vmatmul.mubr.bf16.gmra.mrb[0].mxu0 %v2456
    %v5612 = vpop.f32.mrb[0].mxu0
    %v5613 = vadd.f32 %v2981, %v5612
    %v5614 = vpop.f32.mrb[0].mxu0
    %v5615 = vadd.f32 %v2985, %v5614
    %v5616 = vpop.f32.mrb[0].mxu0
    %v5617 = vpop.f32.mrb[0].mxu0
    %5618 = vdwg.mxu0
    %5619 = vmatprep.subr.bf16.mxu0 %v4683
    %5620 = vmatpush1.bf16.msra.mxu0 %v4682
    %5621 = vmatprep.subr.bf16.mxu0 %v4691
    %5622 = vmatpush1.bf16.msra.mxu0 %v4690
    %5623 = vmatprep.subr.bf16.mxu0 %v4699
    %5624 = vmatpush1.bf16.msra.mxu0 %v4698
    %5625 = vmatprep.subr.bf16.mxu0 %v4707
    %5626 = vmatpush1.bf16.msra.mxu0 %v4706
    %5627 = vmatprep.subr.bf16.mxu0 %v4715
    %5628 = vmatpush1.bf16.msra.mxu0 %v4714
    %5629 = vmatprep.subr.bf16.mxu0 %v4723
    %5630 = vmatpush1.bf16.msra.mxu0 %v4722
    %5631 = vmatprep.subr.bf16.mxu0 %v4731
    %5632 = vmatpush1.bf16.msra.mxu0 %v4730
    %5633 = vmatprep.subr.bf16.mxu0 %v4739
    %5634 = vmatpush1.bf16.msra.mxu0 %v4738
    %5635 = vmatprep.subr.bf16.mxu0 %v4747
    %5636 = vmatpush1.bf16.msra.mxu0 %v4746
    %5637 = vmatprep.subr.bf16.mxu0 %v4755
    %5638 = vmatpush1.bf16.msra.mxu0 %v4754
    %5639 = vmatprep.subr.bf16.mxu0 %v4763
    %5640 = vmatpush1.bf16.msra.mxu0 %v4762
    %5641 = vmatprep.subr.bf16.mxu0 %v4771
    %5642 = vmatpush1.bf16.msra.mxu0 %v4770
    %5643 = vmatprep.subr.bf16.mxu0 %v4779
    %5644 = vmatpush1.bf16.msra.mxu0 %v4778
    %5645 = vmatprep.subr.bf16.mxu0 %v4787
    %5646 = vmatpush1.bf16.msra.mxu0 %v4786
    %5647 = vmatprep.subr.bf16.mxu0 %v4795
    %5648 = vmatpush1.bf16.msra.mxu0 %v4794
    %5649 = vmatprep.subr.bf16.mxu0 %v4803
    %5650 = vmatpush1.bf16.msra.mxu0 %v4802
    %5651 = vmatprep.mubr.bf16.mxu0 %v2459
    %5652 = vmatmul.mubr.bf16.gmra.mrb[0].mxu0 %v2458
    %v5653 = vpop.f32.mrb[0].mxu0
    %v5654 = vadd.f32 %v5613, %v5653
    %v5655 = vpop.f32.mrb[0].mxu0
    %v5656 = vadd.f32 %v5615, %v5655
    %v5657 = vpop.f32.mrb[0].mxu0
    %v5658 = vpop.f32.mrb[0].mxu0
    %5659 = vdwg.mxu0
    %5660 = vmatprep.subr.bf16.mxu0 %v4811
    %5661 = vmatpush1.bf16.msra.mxu0 %v4810
    %5662 = vmatprep.subr.bf16.mxu0 %v4819
    %5663 = vmatpush1.bf16.msra.mxu0 %v4818
    %5664 = vmatprep.subr.bf16.mxu0 %v4827
    %5665 = vmatpush1.bf16.msra.mxu0 %v4826
    %5666 = vmatprep.subr.bf16.mxu0 %v4835
    %5667 = vmatpush1.bf16.msra.mxu0 %v4834
    %5668 = vmatprep.subr.bf16.mxu0 %v4843
    %5669 = vmatpush1.bf16.msra.mxu0 %v4842
    %5670 = vmatprep.subr.bf16.mxu0 %v4851
    %5671 = vmatpush1.bf16.msra.mxu0 %v4850
    %5672 = vmatprep.subr.bf16.mxu0 %v4859
    %5673 = vmatpush1.bf16.msra.mxu0 %v4858
    %5674 = vmatprep.subr.bf16.mxu0 %v4867
    %5675 = vmatpush1.bf16.msra.mxu0 %v4866
    %5676 = vmatprep.subr.bf16.mxu0 %v4875
    %5677 = vmatpush1.bf16.msra.mxu0 %v4874
    %5678 = vmatprep.subr.bf16.mxu0 %v4883
    %5679 = vmatpush1.bf16.msra.mxu0 %v4882
    %5680 = vmatprep.subr.bf16.mxu0 %v4891
    %5681 = vmatpush1.bf16.msra.mxu0 %v4890
    %5682 = vmatprep.subr.bf16.mxu0 %v4899
    %5683 = vmatpush1.bf16.msra.mxu0 %v4898
    %5684 = vmatprep.subr.bf16.mxu0 %v4907
    %5685 = vmatpush1.bf16.msra.mxu0 %v4906
    %5686 = vmatprep.subr.bf16.mxu0 %v4915
    %5687 = vmatpush1.bf16.msra.mxu0 %v4914
    %5688 = vmatprep.subr.bf16.mxu0 %v4923
    %5689 = vmatpush1.bf16.msra.mxu0 %v4922
    %5690 = vmatprep.subr.bf16.mxu0 %v4931
    %5691 = vmatpush1.bf16.msra.mxu0 %v4930
    %5692 = vmatprep.mubr.bf16.mxu0 %v2461
    %5693 = vmatmul.mubr.bf16.gmra.mrb[0].mxu0 %v2460
    %v5694 = vpop.f32.mrb[0].mxu0
    %v5695 = vadd.f32 %v5654, %v5694
    %v5696 = vpop.f32.mrb[0].mxu0
    %v5697 = vadd.f32 %v5656, %v5696
    %v5698 = vpop.f32.mrb[0].mxu0
    %v5699 = vpop.f32.mrb[0].mxu0
    %5700 = vdwg.mxu0
    %5701 = vmatprep.subr.bf16.mxu0 %v4939
    %5702 = vmatpush1.bf16.msra.mxu0 %v4938
    %5703 = vmatprep.subr.bf16.mxu0 %v4947
    %5704 = vmatpush1.bf16.msra.mxu0 %v4946
    %5705 = vmatprep.subr.bf16.mxu0 %v4955
    %5706 = vmatpush1.bf16.msra.mxu0 %v4954
    %5707 = vmatprep.subr.bf16.mxu0 %v4963
    %5708 = vmatpush1.bf16.msra.mxu0 %v4962
    %5709 = vmatprep.subr.bf16.mxu0 %v4971
    %5710 = vmatpush1.bf16.msra.mxu0 %v4970
    %5711 = vmatprep.subr.bf16.mxu0 %v4979
    %5712 = vmatpush1.bf16.msra.mxu0 %v4978
    %5713 = vmatprep.subr.bf16.mxu0 %v4987
    %5714 = vmatpush1.bf16.msra.mxu0 %v4986
    %5715 = vmatprep.subr.bf16.mxu0 %v4995
    %5716 = vmatpush1.bf16.msra.mxu0 %v4994
    %5717 = vmatprep.subr.bf16.mxu0 %v5003
    %5718 = vmatpush1.bf16.msra.mxu0 %v5002
    %5719 = vmatprep.subr.bf16.mxu0 %v5011
    %5720 = vmatpush1.bf16.msra.mxu0 %v5010
    %5721 = vmatprep.subr.bf16.mxu0 %v5019
    %5722 = vmatpush1.bf16.msra.mxu0 %v5018
    %5723 = vmatprep.subr.bf16.mxu0 %v5027
    %5724 = vmatpush1.bf16.msra.mxu0 %v5026
    %5725 = vmatprep.subr.bf16.mxu0 %v5035
    %5726 = vmatpush1.bf16.msra.mxu0 %v5034
    %5727 = vmatprep.subr.bf16.mxu0 %v5043
    %5728 = vmatpush1.bf16.msra.mxu0 %v5042
    %5729 = vmatprep.subr.bf16.mxu0 %v5051
    %5730 = vmatpush1.bf16.msra.mxu0 %v5050
    %5731 = vmatprep.subr.bf16.mxu0 %v5059
    %5732 = vmatpush1.bf16.msra.mxu0 %v5058
    %5733 = vmatprep.mubr.bf16.mxu0 %v2463
    %5734 = vmatmul.mubr.bf16.gmra.mrb[0].mxu0 %v2462
    %v5735 = vpop.f32.mrb[0].mxu0
    %v5736 = vadd.f32 %v5695, %v5735
    %v5737 = vpop.f32.mrb[0].mxu0
    %v5738 = vadd.f32 %v5697, %v5737
    %v5739 = vpop.f32.mrb[0].mxu0
    %v5740 = vpop.f32.mrb[0].mxu0
    %5741 = vdwg.mxu0
    %5742 = vmatprep.subr.bf16.mxu0 %v4557
    %5743 = vmatpush1.bf16.msra.mxu0 %v4556
    %5744 = vmatprep.subr.bf16.mxu0 %v4565
    %5745 = vmatpush1.bf16.msra.mxu0 %v4564
    %5746 = vmatprep.subr.bf16.mxu0 %v4573
    %5747 = vmatpush1.bf16.msra.mxu0 %v4572
    %5748 = vmatprep.subr.bf16.mxu0 %v4581
    %5749 = vmatpush1.bf16.msra.mxu0 %v4580
    %5750 = vmatprep.subr.bf16.mxu0 %v4589
    %5751 = vmatpush1.bf16.msra.mxu0 %v4588
    %5752 = vmatprep.subr.bf16.mxu0 %v4597
    %5753 = vmatpush1.bf16.msra.mxu0 %v4596
    %5754 = vmatprep.subr.bf16.mxu0 %v4605
    %5755 = vmatpush1.bf16.msra.mxu0 %v4604
    %5756 = vmatprep.subr.bf16.mxu0 %v4613
    %5757 = vmatpush1.bf16.msra.mxu0 %v4612
    %5758 = vmatprep.subr.bf16.mxu0 %v4621
    %5759 = vmatpush1.bf16.msra.mxu0 %v4620
    %5760 = vmatprep.subr.bf16.mxu0 %v4629
    %5761 = vmatpush1.bf16.msra.mxu0 %v4628
    %5762 = vmatprep.subr.bf16.mxu0 %v4637
    %5763 = vmatpush1.bf16.msra.mxu0 %v4636
    %5764 = vmatprep.subr.bf16.mxu0 %v4645
    %5765 = vmatpush1.bf16.msra.mxu0 %v4644
    %5766 = vmatprep.subr.bf16.mxu0 %v4653
    %5767 = vmatpush1.bf16.msra.mxu0 %v4652
    %5768 = vmatprep.subr.bf16.mxu0 %v4661
    %5769 = vmatpush1.bf16.msra.mxu0 %v4660
    %5770 = vmatprep.subr.bf16.mxu0 %v4669
    %5771 = vmatpush1.bf16.msra.mxu0 %v4668
    %5772 = vmatprep.subr.bf16.mxu0 %v4677
    %5773 = vmatpush1.bf16.msra.mxu0 %v4676
    %5774 = vmatprep.mubr.bf16.mxu0 %v2457
    %5775 = vmatmul.mubr.bf16.gmra.mrb[0].mxu0 %v2456
    %v5776 = vpop.f32.mrb[0].mxu0
    %v5777 = vadd.f32 %v2989, %v5776
    %v5778 = vpop.f32.mrb[0].mxu0
    %v5779 = vadd.f32 %v2993, %v5778
    %v5780 = vpop.f32.mrb[0].mxu0
    %v5781 = vpop.f32.mrb[0].mxu0
    %5782 = vdwg.mxu0
    %5783 = vmatprep.subr.bf16.mxu0 %v4685
    %5784 = vmatpush1.bf16.msra.mxu0 %v4684
    %5785 = vmatprep.subr.bf16.mxu0 %v4693
    %5786 = vmatpush1.bf16.msra.mxu0 %v4692
    %5787 = vmatprep.subr.bf16.mxu0 %v4701
    %5788 = vmatpush1.bf16.msra.mxu0 %v4700
    %5789 = vmatprep.subr.bf16.mxu0 %v4709
    %5790 = vmatpush1.bf16.msra.mxu0 %v4708
    %5791 = vmatprep.subr.bf16.mxu0 %v4717
    %5792 = vmatpush1.bf16.msra.mxu0 %v4716
    %5793 = vmatprep.subr.bf16.mxu0 %v4725
    %5794 = vmatpush1.bf16.msra.mxu0 %v4724
    %5795 = vmatprep.subr.bf16.mxu0 %v4733
    %5796 = vmatpush1.bf16.msra.mxu0 %v4732
    %5797 = vmatprep.subr.bf16.mxu0 %v4741
    %5798 = vmatpush1.bf16.msra.mxu0 %v4740
    %5799 = vmatprep.subr.bf16.mxu0 %v4749
    %5800 = vmatpush1.bf16.msra.mxu0 %v4748
    %5801 = vmatprep.subr.bf16.mxu0 %v4757
    %5802 = vmatpush1.bf16.msra.mxu0 %v4756
    %5803 = vmatprep.subr.bf16.mxu0 %v4765
    %5804 = vmatpush1.bf16.msra.mxu0 %v4764
    %5805 = vmatprep.subr.bf16.mxu0 %v4773
    %5806 = vmatpush1.bf16.msra.mxu0 %v4772
    %5807 = vmatprep.subr.bf16.mxu0 %v4781
    %5808 = vmatpush1.bf16.msra.mxu0 %v4780
    %5809 = vmatprep.subr.bf16.mxu0 %v4789
    %5810 = vmatpush1.bf16.msra.mxu0 %v4788
    %5811 = vmatprep.subr.bf16.mxu0 %v4797
    %5812 = vmatpush1.bf16.msra.mxu0 %v4796
    %5813 = vmatprep.subr.bf16.mxu0 %v4805
    %5814 = vmatpush1.bf16.msra.mxu0 %v4804
    %5815 = vmatprep.mubr.bf16.mxu0 %v2459
    %5816 = vmatmul.mubr.bf16.gmra.mrb[0].mxu0 %v2458
    %v5817 = vpop.f32.mrb[0].mxu0
    %v5818 = vadd.f32 %v5777, %v5817
    %v5819 = vpop.f32.mrb[0].mxu0
    %v5820 = vadd.f32 %v5779, %v5819
    %v5821 = vpop.f32.mrb[0].mxu0
    %v5822 = vpop.f32.mrb[0].mxu0
    %5823 = vdwg.mxu0
    %5824 = vmatprep.subr.bf16.mxu0 %v4813
    %5825 = vmatpush1.bf16.msra.mxu0 %v4812
    %5826 = vmatprep.subr.bf16.mxu0 %v4821
    %5827 = vmatpush1.bf16.msra.mxu0 %v4820
    %5828 = vmatprep.subr.bf16.mxu0 %v4829
    %5829 = vmatpush1.bf16.msra.mxu0 %v4828
    %5830 = vmatprep.subr.bf16.mxu0 %v4837
    %5831 = vmatpush1.bf16.msra.mxu0 %v4836
    %5832 = vmatprep.subr.bf16.mxu0 %v4845
    %5833 = vmatpush1.bf16.msra.mxu0 %v4844
    %5834 = vmatprep.subr.bf16.mxu0 %v4853
    %5835 = vmatpush1.bf16.msra.mxu0 %v4852
    %5836 = vmatprep.subr.bf16.mxu0 %v4861
    %5837 = vmatpush1.bf16.msra.mxu0 %v4860
    %5838 = vmatprep.subr.bf16.mxu0 %v4869
    %5839 = vmatpush1.bf16.msra.mxu0 %v4868
    %5840 = vmatprep.subr.bf16.mxu0 %v4877
    %5841 = vmatpush1.bf16.msra.mxu0 %v4876
    %5842 = vmatprep.subr.bf16.mxu0 %v4885
    %5843 = vmatpush1.bf16.msra.mxu0 %v4884
    %5844 = vmatprep.subr.bf16.mxu0 %v4893
    %5845 = vmatpush1.bf16.msra.mxu0 %v4892
    %5846 = vmatprep.subr.bf16.mxu0 %v4901
    %5847 = vmatpush1.bf16.msra.mxu0 %v4900
    %5848 = vmatprep.subr.bf16.mxu0 %v4909
    %5849 = vmatpush1.bf16.msra.mxu0 %v4908
    %5850 = vmatprep.subr.bf16.mxu0 %v4917
    %5851 = vmatpush1.bf16.msra.mxu0 %v4916
    %5852 = vmatprep.subr.bf16.mxu0 %v4925
    %5853 = vmatpush1.bf16.msra.mxu0 %v4924
    %5854 = vmatprep.subr.bf16.mxu0 %v4933
    %5855 = vmatpush1.bf16.msra.mxu0 %v4932
    %5856 = vmatprep.mubr.bf16.mxu0 %v2461
    %5857 = vmatmul.mubr.bf16.gmra.mrb[0].mxu0 %v2460
    %v5858 = vpop.f32.mrb[0].mxu0
    %v5859 = vadd.f32 %v5818, %v5858
    %v5860 = vpop.f32.mrb[0].mxu0
    %v5861 = vadd.f32 %v5820, %v5860
    %v5862 = vpop.f32.mrb[0].mxu0
    %v5863 = vpop.f32.mrb[0].mxu0
    %5864 = vdwg.mxu0
    %5865 = vmatprep.subr.bf16.mxu0 %v4941
    %5866 = vmatpush1.bf16.msra.mxu0 %v4940
    %5867 = vmatprep.subr.bf16.mxu0 %v4949
    %5868 = vmatpush1.bf16.msra.mxu0 %v4948
    %5869 = vmatprep.subr.bf16.mxu0 %v4957
    %5870 = vmatpush1.bf16.msra.mxu0 %v4956
    %5871 = vmatprep.subr.bf16.mxu0 %v4965
    %5872 = vmatpush1.bf16.msra.mxu0 %v4964
    %5873 = vmatprep.subr.bf16.mxu0 %v4973
    %5874 = vmatpush1.bf16.msra.mxu0 %v4972
    %5875 = vmatprep.subr.bf16.mxu0 %v4981
    %5876 = vmatpush1.bf16.msra.mxu0 %v4980
    %5877 = vmatprep.subr.bf16.mxu0 %v4989
    %5878 = vmatpush1.bf16.msra.mxu0 %v4988
    %5879 = vmatprep.subr.bf16.mxu0 %v4997
    %5880 = vmatpush1.bf16.msra.mxu0 %v4996
    %5881 = vmatprep.subr.bf16.mxu0 %v5005
    %5882 = vmatpush1.bf16.msra.mxu0 %v5004
    %5883 = vmatprep.subr.bf16.mxu0 %v5013
    %5884 = vmatpush1.bf16.msra.mxu0 %v5012
    %5885 = vmatprep.subr.bf16.mxu0 %v5021
    %5886 = vmatpush1.bf16.msra.mxu0 %v5020
    %5887 = vmatprep.subr.bf16.mxu0 %v5029
    %5888 = vmatpush1.bf16.msra.mxu0 %v5028
    %5889 = vmatprep.subr.bf16.mxu0 %v5037
    %5890 = vmatpush1.bf16.msra.mxu0 %v5036
    %5891 = vmatprep.subr.bf16.mxu0 %v5045
    %5892 = vmatpush1.bf16.msra.mxu0 %v5044
    %5893 = vmatprep.subr.bf16.mxu0 %v5053
    %5894 = vmatpush1.bf16.msra.mxu0 %v5052
    %5895 = vmatprep.subr.bf16.mxu0 %v5061
    %5896 = vmatpush1.bf16.msra.mxu0 %v5060
    %5897 = vmatprep.mubr.bf16.mxu0 %v2463
    %5898 = vmatmul.mubr.bf16.gmra.mrb[0].mxu0 %v2462
    %v5899 = vpop.f32.mrb[0].mxu0
    %v5900 = vadd.f32 %v5859, %v5899
    %v5901 = vpop.f32.mrb[0].mxu0
    %v5902 = vadd.f32 %v5861, %v5901
    %v5903 = vpop.f32.mrb[0].mxu0
    %v5904 = vpop.f32.mrb[0].mxu0
    %5905 = vdwg.mxu0
    %5906 = vmatprep.subr.bf16.mxu0 %v4559
    %5907 = vmatpush1.bf16.msra.mxu0 %v4558
    %5908 = vmatprep.subr.bf16.mxu0 %v4567
    %5909 = vmatpush1.bf16.msra.mxu0 %v4566
    %5910 = vmatprep.subr.bf16.mxu0 %v4575
    %5911 = vmatpush1.bf16.msra.mxu0 %v4574
    %5912 = vmatprep.subr.bf16.mxu0 %v4583
    %5913 = vmatpush1.bf16.msra.mxu0 %v4582
    %5914 = vmatprep.subr.bf16.mxu0 %v4591
    %5915 = vmatpush1.bf16.msra.mxu0 %v4590
    %5916 = vmatprep.subr.bf16.mxu0 %v4599
    %5917 = vmatpush1.bf16.msra.mxu0 %v4598
    %5918 = vmatprep.subr.bf16.mxu0 %v4607
    %5919 = vmatpush1.bf16.msra.mxu0 %v4606
    %5920 = vmatprep.subr.bf16.mxu0 %v4615
    %5921 = vmatpush1.bf16.msra.mxu0 %v4614
    %5922 = vmatprep.subr.bf16.mxu0 %v4623
    %5923 = vmatpush1.bf16.msra.mxu0 %v4622
    %5924 = vmatprep.subr.bf16.mxu0 %v4631
    %5925 = vmatpush1.bf16.msra.mxu0 %v4630
    %5926 = vmatprep.subr.bf16.mxu0 %v4639
    %5927 = vmatpush1.bf16.msra.mxu0 %v4638
    %5928 = vmatprep.subr.bf16.mxu0 %v4647
    %5929 = vmatpush1.bf16.msra.mxu0 %v4646
    %5930 = vmatprep.subr.bf16.mxu0 %v4655
    %5931 = vmatpush1.bf16.msra.mxu0 %v4654
    %5932 = vmatprep.subr.bf16.mxu0 %v4663
    %5933 = vmatpush1.bf16.msra.mxu0 %v4662
    %5934 = vmatprep.subr.bf16.mxu0 %v4671
    %5935 = vmatpush1.bf16.msra.mxu0 %v4670
    %5936 = vmatprep.subr.bf16.mxu0 %v4679
    %5937 = vmatpush1.bf16.msra.mxu0 %v4678
    %5938 = vmatprep.mubr.bf16.mxu0 %v2457
    %5939 = vmatmul.mubr.bf16.gmra.mrb[0].mxu0 %v2456
    %v5940 = vpop.f32.mrb[0].mxu0
    %v5941 = vadd.f32 %v2997, %v5940
    %v5942 = vpop.f32.mrb[0].mxu0
    %v5943 = vadd.f32 %v3001, %v5942
    %v5944 = vpop.f32.mrb[0].mxu0
    %v5945 = vpop.f32.mrb[0].mxu0
    %5946 = vdwg.mxu0
    %5947 = vmatprep.subr.bf16.mxu0 %v4687
    %5948 = vmatpush1.bf16.msra.mxu0 %v4686
    %5949 = vmatprep.subr.bf16.mxu0 %v4695
    %5950 = vmatpush1.bf16.msra.mxu0 %v4694
    %5951 = vmatprep.subr.bf16.mxu0 %v4703
    %5952 = vmatpush1.bf16.msra.mxu0 %v4702
    %5953 = vmatprep.subr.bf16.mxu0 %v4711
    %5954 = vmatpush1.bf16.msra.mxu0 %v4710
    %5955 = vmatprep.subr.bf16.mxu0 %v4719
    %5956 = vmatpush1.bf16.msra.mxu0 %v4718
    %5957 = vmatprep.subr.bf16.mxu0 %v4727
    %5958 = vmatpush1.bf16.msra.mxu0 %v4726
    %5959 = vmatprep.subr.bf16.mxu0 %v4735
    %5960 = vmatpush1.bf16.msra.mxu0 %v4734
    %5961 = vmatprep.subr.bf16.mxu0 %v4743
    %5962 = vmatpush1.bf16.msra.mxu0 %v4742
    %5963 = vmatprep.subr.bf16.mxu0 %v4751
    %5964 = vmatpush1.bf16.msra.mxu0 %v4750
    %5965 = vmatprep.subr.bf16.mxu0 %v4759
    %5966 = vmatpush1.bf16.msra.mxu0 %v4758
    %5967 = vmatprep.subr.bf16.mxu0 %v4767
    %5968 = vmatpush1.bf16.msra.mxu0 %v4766
    %5969 = vmatprep.subr.bf16.mxu0 %v4775
    %5970 = vmatpush1.bf16.msra.mxu0 %v4774
    %5971 = vmatprep.subr.bf16.mxu0 %v4783
    %5972 = vmatpush1.bf16.msra.mxu0 %v4782
    %5973 = vmatprep.subr.bf16.mxu0 %v4791
    %5974 = vmatpush1.bf16.msra.mxu0 %v4790
    %5975 = vmatprep.subr.bf16.mxu0 %v4799
    %5976 = vmatpush1.bf16.msra.mxu0 %v4798
    %5977 = vmatprep.subr.bf16.mxu0 %v4807
    %5978 = vmatpush1.bf16.msra.mxu0 %v4806
    %5979 = vmatprep.mubr.bf16.mxu0 %v2459
    %5980 = vmatmul.mubr.bf16.gmra.mrb[0].mxu0 %v2458
    %v5981 = vpop.f32.mrb[0].mxu0
    %v5982 = vadd.f32 %v5941, %v5981
    %v5983 = vpop.f32.mrb[0].mxu0
    %v5984 = vadd.f32 %v5943, %v5983
    %v5985 = vpop.f32.mrb[0].mxu0
    %v5986 = vpop.f32.mrb[0].mxu0
    %5987 = vdwg.mxu0
    %5988 = vmatprep.subr.bf16.mxu0 %v4815
    %5989 = vmatpush1.bf16.msra.mxu0 %v4814
    %5990 = vmatprep.subr.bf16.mxu0 %v4823
    %5991 = vmatpush1.bf16.msra.mxu0 %v4822
    %5992 = vmatprep.subr.bf16.mxu0 %v4831
    %5993 = vmatpush1.bf16.msra.mxu0 %v4830
    %5994 = vmatprep.subr.bf16.mxu0 %v4839
    %5995 = vmatpush1.bf16.msra.mxu0 %v4838
    %5996 = vmatprep.subr.bf16.mxu0 %v4847
    %5997 = vmatpush1.bf16.msra.mxu0 %v4846
    %5998 = vmatprep.subr.bf16.mxu0 %v4855
    %5999 = vmatpush1.bf16.msra.mxu0 %v4854
    %6000 = vmatprep.subr.bf16.mxu0 %v4863
    %6001 = vmatpush1.bf16.msra.mxu0 %v4862
    %6002 = vmatprep.subr.bf16.mxu0 %v4871
    %6003 = vmatpush1.bf16.msra.mxu0 %v4870
    %6004 = vmatprep.subr.bf16.mxu0 %v4879
    %6005 = vmatpush1.bf16.msra.mxu0 %v4878
    %6006 = vmatprep.subr.bf16.mxu0 %v4887
    %6007 = vmatpush1.bf16.msra.mxu0 %v4886
    %6008 = vmatprep.subr.bf16.mxu0 %v4895
    %6009 = vmatpush1.bf16.msra.mxu0 %v4894
    %6010 = vmatprep.subr.bf16.mxu0 %v4903
    %6011 = vmatpush1.bf16.msra.mxu0 %v4902
    %6012 = vmatprep.subr.bf16.mxu0 %v4911
    %6013 = vmatpush1.bf16.msra.mxu0 %v4910
    %6014 = vmatprep.subr.bf16.mxu0 %v4919
    %6015 = vmatpush1.bf16.msra.mxu0 %v4918
    %6016 = vmatprep.subr.bf16.mxu0 %v4927
    %6017 = vmatpush1.bf16.msra.mxu0 %v4926
    %6018 = vmatprep.subr.bf16.mxu0 %v4935
    %6019 = vmatpush1.bf16.msra.mxu0 %v4934
    %6020 = vmatprep.mubr.bf16.mxu0 %v2461
    %6021 = vmatmul.mubr.bf16.gmra.mrb[0].mxu0 %v2460
    %v6022 = vpop.f32.mrb[0].mxu0
    %v6023 = vadd.f32 %v5982, %v6022
    %v6024 = vpop.f32.mrb[0].mxu0
    %v6025 = vadd.f32 %v5984, %v6024
    %v6026 = vpop.f32.mrb[0].mxu0
    %v6027 = vpop.f32.mrb[0].mxu0
    %6028 = vdwg.mxu0
    %6029 = vmatprep.subr.bf16.mxu0 %v4943
    %6030 = vmatpush1.bf16.msra.mxu0 %v4942
    %6031 = vmatprep.subr.bf16.mxu0 %v4951
    %6032 = vmatpush1.bf16.msra.mxu0 %v4950
    %6033 = vmatprep.subr.bf16.mxu0 %v4959
    %6034 = vmatpush1.bf16.msra.mxu0 %v4958
    %6035 = vmatprep.subr.bf16.mxu0 %v4967
    %6036 = vmatpush1.bf16.msra.mxu0 %v4966
    %6037 = vmatprep.subr.bf16.mxu0 %v4975
    %6038 = vmatpush1.bf16.msra.mxu0 %v4974
    %6039 = vmatprep.subr.bf16.mxu0 %v4983
    %6040 = vmatpush1.bf16.msra.mxu0 %v4982
    %6041 = vmatprep.subr.bf16.mxu0 %v4991
    %6042 = vmatpush1.bf16.msra.mxu0 %v4990
    %6043 = vmatprep.subr.bf16.mxu0 %v4999
    %6044 = vmatpush1.bf16.msra.mxu0 %v4998
    %6045 = vmatprep.subr.bf16.mxu0 %v5007
    %6046 = vmatpush1.bf16.msra.mxu0 %v5006
    %6047 = vmatprep.subr.bf16.mxu0 %v5015
    %6048 = vmatpush1.bf16.msra.mxu0 %v5014
    %6049 = vmatprep.subr.bf16.mxu0 %v5023
    %6050 = vmatpush1.bf16.msra.mxu0 %v5022
    %6051 = vmatprep.subr.bf16.mxu0 %v5031
    %6052 = vmatpush1.bf16.msra.mxu0 %v5030
    %6053 = vmatprep.subr.bf16.mxu0 %v5039
    %6054 = vmatpush1.bf16.msra.mxu0 %v5038
    %6055 = vmatprep.subr.bf16.mxu0 %v5047
    %6056 = vmatpush1.bf16.msra.mxu0 %v5046
    %6057 = vmatprep.subr.bf16.mxu0 %v5055
    %6058 = vmatpush1.bf16.msra.mxu0 %v5054
    %6059 = vmatprep.subr.bf16.mxu0 %v5063
    %6060 = vmatpush1.bf16.msra.mxu0 %v5062
    %6061 = vmatprep.mubr.bf16.mxu0 %v2463
    %6062 = vmatmul.mubr.bf16.gmra.mrb[0].mxu0 %v2462
    %v6063 = vpop.f32.mrb[0].mxu0
    %v6064 = vadd.f32 %v6023, %v6063
    %v6065 = vpop.f32.mrb[0].mxu0
    %v6066 = vadd.f32 %v6025, %v6065
    %v6067 = vpop.f32.mrb[0].mxu0
    %v6068 = vpop.f32.mrb[0].mxu0
    %6069 = vdwg.mxu0
    %6070 = vmatprep.subr.bf16.mxu0 %v4561
    %6071 = vmatpush1.bf16.msra.mxu0 %v4560
    %6072 = vmatprep.subr.bf16.mxu0 %v4569
    %6073 = vmatpush1.bf16.msra.mxu0 %v4568
    %6074 = vmatprep.subr.bf16.mxu0 %v4577
    %6075 = vmatpush1.bf16.msra.mxu0 %v4576
    %6076 = vmatprep.subr.bf16.mxu0 %v4585
    %6077 = vmatpush1.bf16.msra.mxu0 %v4584
    %6078 = vmatprep.subr.bf16.mxu0 %v4593
    %6079 = vmatpush1.bf16.msra.mxu0 %v4592
    %6080 = vmatprep.subr.bf16.mxu0 %v4601
    %6081 = vmatpush1.bf16.msra.mxu0 %v4600
    %6082 = vmatprep.subr.bf16.mxu0 %v4609
    %6083 = vmatpush1.bf16.msra.mxu0 %v4608
    %6084 = vmatprep.subr.bf16.mxu0 %v4617
    %6085 = vmatpush1.bf16.msra.mxu0 %v4616
    %6086 = vmatprep.subr.bf16.mxu0 %v4625
    %6087 = vmatpush1.bf16.msra.mxu0 %v4624
    %6088 = vmatprep.subr.bf16.mxu0 %v4633
    %6089 = vmatpush1.bf16.msra.mxu0 %v4632
    %6090 = vmatprep.subr.bf16.mxu0 %v4641
    %6091 = vmatpush1.bf16.msra.mxu0 %v4640
    %6092 = vmatprep.subr.bf16.mxu0 %v4649
    %6093 = vmatpush1.bf16.msra.mxu0 %v4648
    %6094 = vmatprep.subr.bf16.mxu0 %v4657
    %6095 = vmatpush1.bf16.msra.mxu0 %v4656
    %6096 = vmatprep.subr.bf16.mxu0 %v4665
    %6097 = vmatpush1.bf16.msra.mxu0 %v4664
    %6098 = vmatprep.subr.bf16.mxu0 %v4673
    %6099 = vmatpush1.bf16.msra.mxu0 %v4672
    %6100 = vmatprep.subr.bf16.mxu0 %v4681
    %6101 = vmatpush1.bf16.msra.mxu0 %v4680
    %6102 = vmatprep.mubr.bf16.mxu0 %v2457
    %6103 = vmatmul.mubr.bf16.gmra.mrb[0].mxu0 %v2456
    %v6104 = vpop.f32.mrb[0].mxu0
    %v6105 = vadd.f32 %v3005, %v6104
    %v6106 = vpop.f32.mrb[0].mxu0
    %v6107 = vadd.f32 %v3009, %v6106
    %v6108 = vpop.f32.mrb[0].mxu0
    %v6109 = vpop.f32.mrb[0].mxu0
    %6110 = vdwg.mxu0
    %6111 = vmatprep.subr.bf16.mxu0 %v4689
    %6112 = vmatpush1.bf16.msra.mxu0 %v4688
    %6113 = vmatprep.subr.bf16.mxu0 %v4697
    %6114 = vmatpush1.bf16.msra.mxu0 %v4696
    %6115 = vmatprep.subr.bf16.mxu0 %v4705
    %6116 = vmatpush1.bf16.msra.mxu0 %v4704
    %6117 = vmatprep.subr.bf16.mxu0 %v4713
    %6118 = vmatpush1.bf16.msra.mxu0 %v4712
    %6119 = vmatprep.subr.bf16.mxu0 %v4721
    %6120 = vmatpush1.bf16.msra.mxu0 %v4720
    %6121 = vmatprep.subr.bf16.mxu0 %v4729
    %6122 = vmatpush1.bf16.msra.mxu0 %v4728
    %6123 = vmatprep.subr.bf16.mxu0 %v4737
    %6124 = vmatpush1.bf16.msra.mxu0 %v4736
    %6125 = vmatprep.subr.bf16.mxu0 %v4745
    %6126 = vmatpush1.bf16.msra.mxu0 %v4744
    %6127 = vmatprep.subr.bf16.mxu0 %v4753
    %6128 = vmatpush1.bf16.msra.mxu0 %v4752
    %6129 = vmatprep.subr.bf16.mxu0 %v4761
    %6130 = vmatpush1.bf16.msra.mxu0 %v4760
    %6131 = vmatprep.subr.bf16.mxu0 %v4769
    %6132 = vmatpush1.bf16.msra.mxu0 %v4768
    %6133 = vmatprep.subr.bf16.mxu0 %v4777
    %6134 = vmatpush1.bf16.msra.mxu0 %v4776
    %6135 = vmatprep.subr.bf16.mxu0 %v4785
    %6136 = vmatpush1.bf16.msra.mxu0 %v4784
    %6137 = vmatprep.subr.bf16.mxu0 %v4793
    %6138 = vmatpush1.bf16.msra.mxu0 %v4792
    %6139 = vmatprep.subr.bf16.mxu0 %v4801
    %6140 = vmatpush1.bf16.msra.mxu0 %v4800
    %6141 = vmatprep.subr.bf16.mxu0 %v4809
    %6142 = vmatpush1.bf16.msra.mxu0 %v4808
    %6143 = vmatprep.mubr.bf16.mxu0 %v2459
    %6144 = vmatmul.mubr.bf16.gmra.mrb[0].mxu0 %v2458
    %v6145 = vpop.f32.mrb[0].mxu0
    %v6146 = vadd.f32 %v6105, %v6145
    %v6147 = vpop.f32.mrb[0].mxu0
    %v6148 = vadd.f32 %v6107, %v6147
    %v6149 = vpop.f32.mrb[0].mxu0
    %v6150 = vpop.f32.mrb[0].mxu0
    %6151 = vdwg.mxu0
    %6152 = vmatprep.subr.bf16.mxu0 %v4817
    %6153 = vmatpush1.bf16.msra.mxu0 %v4816
    %6154 = vmatprep.subr.bf16.mxu0 %v4825
    %6155 = vmatpush1.bf16.msra.mxu0 %v4824
    %6156 = vmatprep.subr.bf16.mxu0 %v4833
    %6157 = vmatpush1.bf16.msra.mxu0 %v4832
    %6158 = vmatprep.subr.bf16.mxu0 %v4841
    %6159 = vmatpush1.bf16.msra.mxu0 %v4840
    %6160 = vmatprep.subr.bf16.mxu0 %v4849
    %6161 = vmatpush1.bf16.msra.mxu0 %v4848
    %6162 = vmatprep.subr.bf16.mxu0 %v4857
    %6163 = vmatpush1.bf16.msra.mxu0 %v4856
    %6164 = vmatprep.subr.bf16.mxu0 %v4865
    %6165 = vmatpush1.bf16.msra.mxu0 %v4864
    %6166 = vmatprep.subr.bf16.mxu0 %v4873
    %6167 = vmatpush1.bf16.msra.mxu0 %v4872
    %6168 = vmatprep.subr.bf16.mxu0 %v4881
    %6169 = vmatpush1.bf16.msra.mxu0 %v4880
    %6170 = vmatprep.subr.bf16.mxu0 %v4889
    %6171 = vmatpush1.bf16.msra.mxu0 %v4888
    %6172 = vmatprep.subr.bf16.mxu0 %v4897
    %6173 = vmatpush1.bf16.msra.mxu0 %v4896
    %6174 = vmatprep.subr.bf16.mxu0 %v4905
    %6175 = vmatpush1.bf16.msra.mxu0 %v4904
    %6176 = vmatprep.subr.bf16.mxu0 %v4913
    %6177 = vmatpush1.bf16.msra.mxu0 %v4912
    %6178 = vmatprep.subr.bf16.mxu0 %v4921
    %6179 = vmatpush1.bf16.msra.mxu0 %v4920
    %6180 = vmatprep.subr.bf16.mxu0 %v4929
    %6181 = vmatpush1.bf16.msra.mxu0 %v4928
    %6182 = vmatprep.subr.bf16.mxu0 %v4937
    %6183 = vmatpush1.bf16.msra.mxu0 %v4936
    %6184 = vmatprep.mubr.bf16.mxu0 %v2461
    %6185 = vmatmul.mubr.bf16.gmra.mrb[0].mxu0 %v2460
    %v6186 = vpop.f32.mrb[0].mxu0
    %v6187 = vadd.f32 %v6146, %v6186
    %v6188 = vpop.f32.mrb[0].mxu0
    %v6189 = vadd.f32 %v6148, %v6188
    %v6190 = vpop.f32.mrb[0].mxu0
    %v6191 = vpop.f32.mrb[0].mxu0
    %6192 = vdwg.mxu0
    %6193 = vmatprep.subr.bf16.mxu0 %v4945
    %6194 = vmatpush1.bf16.msra.mxu0 %v4944
    %6195 = vmatprep.subr.bf16.mxu0 %v4953
    %6196 = vmatpush1.bf16.msra.mxu0 %v4952
    %6197 = vmatprep.subr.bf16.mxu0 %v4961
    %6198 = vmatpush1.bf16.msra.mxu0 %v4960
    %6199 = vmatprep.subr.bf16.mxu0 %v4969
    %6200 = vmatpush1.bf16.msra.mxu0 %v4968
    %6201 = vmatprep.subr.bf16.mxu0 %v4977
    %6202 = vmatpush1.bf16.msra.mxu0 %v4976
    %6203 = vmatprep.subr.bf16.mxu0 %v4985
    %6204 = vmatpush1.bf16.msra.mxu0 %v4984
    %6205 = vmatprep.subr.bf16.mxu0 %v4993
    %6206 = vmatpush1.bf16.msra.mxu0 %v4992
    %6207 = vmatprep.subr.bf16.mxu0 %v5001
    %6208 = vmatpush1.bf16.msra.mxu0 %v5000
    %6209 = vmatprep.subr.bf16.mxu0 %v5009
    %6210 = vmatpush1.bf16.msra.mxu0 %v5008
    %6211 = vmatprep.subr.bf16.mxu0 %v5017
    %6212 = vmatpush1.bf16.msra.mxu0 %v5016
    %6213 = vmatprep.subr.bf16.mxu0 %v5025
    %6214 = vmatpush1.bf16.msra.mxu0 %v5024
    %6215 = vmatprep.subr.bf16.mxu0 %v5033
    %6216 = vmatpush1.bf16.msra.mxu0 %v5032
    %6217 = vmatprep.subr.bf16.mxu0 %v5041
    %6218 = vmatpush1.bf16.msra.mxu0 %v5040
    %6219 = vmatprep.subr.bf16.mxu0 %v5049
    %6220 = vmatpush1.bf16.msra.mxu0 %v5048
    %6221 = vmatprep.subr.bf16.mxu0 %v5057
    %6222 = vmatpush1.bf16.msra.mxu0 %v5056
    %6223 = vmatprep.subr.bf16.mxu0 %v5065
    %6224 = vmatpush1.bf16.msra.mxu0 %v5064
    %6225 = vmatprep.mubr.bf16.mxu0 %v2463
    %6226 = vmatmul.mubr.bf16.gmra.mrb[0].mxu0 %v2462
    %v6227 = vpop.f32.mrb[0].mxu0
    %v6228 = vadd.f32 %v6187, %v6227
    %v6229 = vpop.f32.mrb[0].mxu0
    %v6230 = vadd.f32 %v6189, %v6229
    %v6231 = vpop.f32.mrb[0].mxu0
    %v6232 = vpop.f32.mrb[0].mxu0
    %6233 = vdwg.mxu0
    %v6234 = vmax.f32 %v5736, 0.0
    %v6235 = vmax.f32 %v5738, 0.0
    %v6236 = vmax.f32 %v5900, 0.0
    %v6237 = vmax.f32 %v5902, 0.0
    %v6238 = vmax.f32 %v6064, 0.0
    %v6239 = vmax.f32 %v6066, 0.0
    %v6240 = vmax.f32 %v6228, 0.0
    %v6241 = vmax.f32 %v6230, 0.0
    %v6242 = vpack.c.bf16 %v6234, %v6234
    %v6243 = vpack.c.bf16 %v6235, %v6235
    %v6244 = vpack.c.bf16 %v6236, %v6236
    %v6245 = vpack.c.bf16 %v6237, %v6237
    %v6246 = vpack.c.bf16 %v6238, %v6238
    %v6247 = vpack.c.bf16 %v6239, %v6239
    %v6248 = vpack.c.bf16 %v6240, %v6240
    %v6249 = vpack.c.bf16 %v6241, %v6241
    %v6250 = vld [vmem:[#allocation33] sm:$0xff]
    %v6251 = vld [vmem:[#allocation33 + $0x8] sm:$0xff]
    %v6252 = vld [vmem:[#allocation33 + $0x10] sm:$0xff]
    %v6253 = vld [vmem:[#allocation33 + $0x18] sm:$0xff]
    %v6254 = vld [vmem:[#allocation33 + $0x20] sm:$0xff]
    %v6255 = vld [vmem:[#allocation33 + $0x28] sm:$0xff]
    %v6256 = vld [vmem:[#allocation33 + $0x30] sm:$0xff]
    %v6257 = vld [vmem:[#allocation33 + $0x38] sm:$0xff]
    %v6258 = vld [vmem:[#allocation33 + $0x40] sm:$0xff]
    %v6259 = vld [vmem:[#allocation33 + $0x48] sm:$0xff]
    %v6260 = vld [vmem:[#allocation33 + $0x50] sm:$0xff]
    %v6261 = vld [vmem:[#allocation33 + $0x58] sm:$0xff]
    %v6262 = vld [vmem:[#allocation33 + $0x60] sm:$0xff]
    %v6263 = vld [vmem:[#allocation33 + $0x68] sm:$0xff]
    %v6264 = vld [vmem:[#allocation33 + $0x70] sm:$0xff]
    %v6265 = vld [vmem:[#allocation33 + $0x78] sm:$0xff]
    %v6266 = vld [vmem:[#allocation33 + $0x80] sm:$0xff]
    %v6267 = vld [vmem:[#allocation33 + $0x88] sm:$0xff]
    %v6268 = vld [vmem:[#allocation33 + $0x90] sm:$0xff]
    %v6269 = vld [vmem:[#allocation33 + $0x98] sm:$0xff]
    %v6270 = vld [vmem:[#allocation33 + $0xa0] sm:$0xff]
    %v6271 = vld [vmem:[#allocation33 + $0xa8] sm:$0xff]
    %v6272 = vld [vmem:[#allocation33 + $0xb0] sm:$0xff]
    %v6273 = vld [vmem:[#allocation33 + $0xb8] sm:$0xff]
    %v6274 = vld [vmem:[#allocation33 + $0xc0] sm:$0xff]
    %v6275 = vld [vmem:[#allocation33 + $0xc8] sm:$0xff]
    %v6276 = vld [vmem:[#allocation33 + $0xd0] sm:$0xff]
    %v6277 = vld [vmem:[#allocation33 + $0xd8] sm:$0xff]
    %v6278 = vld [vmem:[#allocation33 + $0xe0] sm:$0xff]
    %v6279 = vld [vmem:[#allocation33 + $0xe8] sm:$0xff]
    %v6280 = vld [vmem:[#allocation33 + $0xf0] sm:$0xff]
    %v6281 = vld [vmem:[#allocation33 + $0xf8] sm:$0xff]
    %v6282 = vld [vmem:[#allocation33 + $0x100] sm:$0xff]
    %v6283 = vld [vmem:[#allocation33 + $0x108] sm:$0xff]
    %v6284 = vld [vmem:[#allocation33 + $0x110] sm:$0xff]
    %v6285 = vld [vmem:[#allocation33 + $0x118] sm:$0xff]
    %v6286 = vld [vmem:[#allocation33 + $0x120] sm:$0xff]
    %v6287 = vld [vmem:[#allocation33 + $0x128] sm:$0xff]
    %v6288 = vld [vmem:[#allocation33 + $0x130] sm:$0xff]
    %v6289 = vld [vmem:[#allocation33 + $0x138] sm:$0xff]
    %v6290 = vld [vmem:[#allocation33 + $0x140] sm:$0xff]
    %v6291 = vld [vmem:[#allocation33 + $0x148] sm:$0xff]
    %v6292 = vld [vmem:[#allocation33 + $0x150] sm:$0xff]
    %v6293 = vld [vmem:[#allocation33 + $0x158] sm:$0xff]
    %v6294 = vld [vmem:[#allocation33 + $0x160] sm:$0xff]
    %v6295 = vld [vmem:[#allocation33 + $0x168] sm:$0xff]
    %v6296 = vld [vmem:[#allocation33 + $0x170] sm:$0xff]
    %v6297 = vld [vmem:[#allocation33 + $0x178] sm:$0xff]
    %v6298 = vld [vmem:[#allocation33 + $0x180] sm:$0xff]
    %v6299 = vld [vmem:[#allocation33 + $0x188] sm:$0xff]
    %v6300 = vld [vmem:[#allocation33 + $0x190] sm:$0xff]
    %v6301 = vld [vmem:[#allocation33 + $0x198] sm:$0xff]
    %v6302 = vld [vmem:[#allocation33 + $0x1a0] sm:$0xff]
    %v6303 = vld [vmem:[#allocation33 + $0x1a8] sm:$0xff]
    %v6304 = vld [vmem:[#allocation33 + $0x1b0] sm:$0xff]
    %v6305 = vld [vmem:[#allocation33 + $0x1b8] sm:$0xff]
    %v6306 = vld [vmem:[#allocation33 + $0x1c0] sm:$0xff]
    %v6307 = vld [vmem:[#allocation33 + $0x1c8] sm:$0xff]
    %v6308 = vld [vmem:[#allocation33 + $0x1d0] sm:$0xff]
    %v6309 = vld [vmem:[#allocation33 + $0x1d8] sm:$0xff]
    %v6310 = vld [vmem:[#allocation33 + $0x1e0] sm:$0xff]
    %v6311 = vld [vmem:[#allocation33 + $0x1e8] sm:$0xff]
    %v6312 = vld [vmem:[#allocation33 + $0x1f0] sm:$0xff]
    %v6313 = vld [vmem:[#allocation33 + $0x1f8] sm:$0xff]
    %v6314 = vld [vmem:[#allocation33 + $0x200] sm:$0xff]
    %v6315 = vld [vmem:[#allocation33 + $0x208] sm:$0xff]
    %v6316 = vld [vmem:[#allocation33 + $0x210] sm:$0xff]
    %v6317 = vld [vmem:[#allocation33 + $0x218] sm:$0xff]
    %v6318 = vld [vmem:[#allocation33 + $0x220] sm:$0xff]
    %v6319 = vld [vmem:[#allocation33 + $0x228] sm:$0xff]
    %v6320 = vld [vmem:[#allocation33 + $0x230] sm:$0xff]
    %v6321 = vld [vmem:[#allocation33 + $0x238] sm:$0xff]
    %v6322 = vld [vmem:[#allocation33 + $0x240] sm:$0xff]
    %v6323 = vld [vmem:[#allocation33 + $0x248] sm:$0xff]
    %v6324 = vld [vmem:[#allocation33 + $0x250] sm:$0xff]
    %v6325 = vld [vmem:[#allocation33 + $0x258] sm:$0xff]
    %v6326 = vld [vmem:[#allocation33 + $0x260] sm:$0xff]
    %v6327 = vld [vmem:[#allocation33 + $0x268] sm:$0xff]
    %v6328 = vld [vmem:[#allocation33 + $0x270] sm:$0xff]
    %v6329 = vld [vmem:[#allocation33 + $0x278] sm:$0xff]
    %v6330 = vld [vmem:[#allocation33 + $0x280] sm:$0xff]
    %v6331 = vld [vmem:[#allocation33 + $0x288] sm:$0xff]
    %v6332 = vld [vmem:[#allocation33 + $0x290] sm:$0xff]
    %v6333 = vld [vmem:[#allocation33 + $0x298] sm:$0xff]
    %v6334 = vld [vmem:[#allocation33 + $0x2a0] sm:$0xff]
    %v6335 = vld [vmem:[#allocation33 + $0x2a8] sm:$0xff]
    %v6336 = vld [vmem:[#allocation33 + $0x2b0] sm:$0xff]
    %v6337 = vld [vmem:[#allocation33 + $0x2b8] sm:$0xff]
    %v6338 = vld [vmem:[#allocation33 + $0x2c0] sm:$0xff]
    %v6339 = vld [vmem:[#allocation33 + $0x2c8] sm:$0xff]
    %v6340 = vld [vmem:[#allocation33 + $0x2d0] sm:$0xff]
    %v6341 = vld [vmem:[#allocation33 + $0x2d8] sm:$0xff]
    %v6342 = vld [vmem:[#allocation33 + $0x2e0] sm:$0xff]
    %v6343 = vld [vmem:[#allocation33 + $0x2e8] sm:$0xff]
    %v6344 = vld [vmem:[#allocation33 + $0x2f0] sm:$0xff]
    %v6345 = vld [vmem:[#allocation33 + $0x2f8] sm:$0xff]
    %v6346 = vld [vmem:[#allocation33 + $0x300] sm:$0xff]
    %v6347 = vld [vmem:[#allocation33 + $0x308] sm:$0xff]
    %v6348 = vld [vmem:[#allocation33 + $0x310] sm:$0xff]
    %v6349 = vld [vmem:[#allocation33 + $0x318] sm:$0xff]
    %v6350 = vld [vmem:[#allocation33 + $0x320] sm:$0xff]
    %v6351 = vld [vmem:[#allocation33 + $0x328] sm:$0xff]
    %v6352 = vld [vmem:[#allocation33 + $0x330] sm:$0xff]
    %v6353 = vld [vmem:[#allocation33 + $0x338] sm:$0xff]
    %v6354 = vld [vmem:[#allocation33 + $0x340] sm:$0xff]
    %v6355 = vld [vmem:[#allocation33 + $0x348] sm:$0xff]
    %v6356 = vld [vmem:[#allocation33 + $0x350] sm:$0xff]
    %v6357 = vld [vmem:[#allocation33 + $0x358] sm:$0xff]
    %v6358 = vld [vmem:[#allocation33 + $0x360] sm:$0xff]
    %v6359 = vld [vmem:[#allocation33 + $0x368] sm:$0xff]
    %v6360 = vld [vmem:[#allocation33 + $0x370] sm:$0xff]
    %v6361 = vld [vmem:[#allocation33 + $0x378] sm:$0xff]
    %v6362 = vld [vmem:[#allocation33 + $0x380] sm:$0xff]
    %v6363 = vld [vmem:[#allocation33 + $0x388] sm:$0xff]
    %v6364 = vld [vmem:[#allocation33 + $0x390] sm:$0xff]
    %v6365 = vld [vmem:[#allocation33 + $0x398] sm:$0xff]
    %v6366 = vld [vmem:[#allocation33 + $0x3a0] sm:$0xff]
    %v6367 = vld [vmem:[#allocation33 + $0x3a8] sm:$0xff]
    %v6368 = vld [vmem:[#allocation33 + $0x3b0] sm:$0xff]
    %v6369 = vld [vmem:[#allocation33 + $0x3b8] sm:$0xff]
    %v6370 = vld [vmem:[#allocation33 + $0x3c0] sm:$0xff]
    %v6371 = vld [vmem:[#allocation33 + $0x3c8] sm:$0xff]
    %v6372 = vld [vmem:[#allocation33 + $0x3d0] sm:$0xff]
    %v6373 = vld [vmem:[#allocation33 + $0x3d8] sm:$0xff]
    %v6374 = vld [vmem:[#allocation33 + $0x3e0] sm:$0xff]
    %v6375 = vld [vmem:[#allocation33 + $0x3e8] sm:$0xff]
    %v6376 = vld [vmem:[#allocation33 + $0x3f0] sm:$0xff]
    %v6377 = vld [vmem:[#allocation33 + $0x3f8] sm:$0xff]
    %v6378 = vld [vmem:[#allocation34] sm:$0x3]
    %v6380 = vlaneseq
    %v6381 = vshrl.u32 %v6380, 7
    %v6382 = vsub.s32 0, %v6381
    %v6383 = vrot.slane %v6378, %v6382
    %v6384 = vlaneseq
    %v6385 = vshrl.u32 %v6384, 7
    %v6386 = vsub.s32 1, %v6385
    %v6387 = vrot.slane %v6378, %v6386
    %v6518 = vunpack.c.l.b16 %v6250
    %v6519 = vunpack.c.h.b16 %v6250
    %v6520 = vunpack.c.l.b16 %v6251
    %v6521 = vunpack.c.h.b16 %v6251
    %v6522 = vunpack.c.l.b16 %v6252
    %v6523 = vunpack.c.h.b16 %v6252
    %v6524 = vunpack.c.l.b16 %v6253
    %v6525 = vunpack.c.h.b16 %v6253
    %v6526 = vunpack.c.l.b16 %v6254
    %v6527 = vunpack.c.h.b16 %v6254
    %v6528 = vunpack.c.l.b16 %v6255
    %v6529 = vunpack.c.h.b16 %v6255
    %v6530 = vunpack.c.l.b16 %v6256
    %v6531 = vunpack.c.h.b16 %v6256
    %v6532 = vunpack.c.l.b16 %v6257
    %v6533 = vunpack.c.h.b16 %v6257
    %v6534 = vunpack.c.l.b16 %v6258
    %v6535 = vunpack.c.h.b16 %v6258
    %v6536 = vunpack.c.l.b16 %v6259
    %v6537 = vunpack.c.h.b16 %v6259
    %v6538 = vunpack.c.l.b16 %v6260
    %v6539 = vunpack.c.h.b16 %v6260
    %v6540 = vunpack.c.l.b16 %v6261
    %v6541 = vunpack.c.h.b16 %v6261
    %v6542 = vunpack.c.l.b16 %v6262
    %v6543 = vunpack.c.h.b16 %v6262
    %v6544 = vunpack.c.l.b16 %v6263
    %v6545 = vunpack.c.h.b16 %v6263
    %v6546 = vunpack.c.l.b16 %v6264
    %v6547 = vunpack.c.h.b16 %v6264
    %v6548 = vunpack.c.l.b16 %v6265
    %v6549 = vunpack.c.h.b16 %v6265
    %v6550 = vunpack.c.l.b16 %v6266
    %v6551 = vunpack.c.h.b16 %v6266
    %v6552 = vunpack.c.l.b16 %v6267
    %v6553 = vunpack.c.h.b16 %v6267
    %v6554 = vunpack.c.l.b16 %v6268
    %v6555 = vunpack.c.h.b16 %v6268
    %v6556 = vunpack.c.l.b16 %v6269
    %v6557 = vunpack.c.h.b16 %v6269
    %v6558 = vunpack.c.l.b16 %v6270
    %v6559 = vunpack.c.h.b16 %v6270
    %v6560 = vunpack.c.l.b16 %v6271
    %v6561 = vunpack.c.h.b16 %v6271
    %v6562 = vunpack.c.l.b16 %v6272
    %v6563 = vunpack.c.h.b16 %v6272
    %v6564 = vunpack.c.l.b16 %v6273
    %v6565 = vunpack.c.h.b16 %v6273
    %v6566 = vunpack.c.l.b16 %v6274
    %v6567 = vunpack.c.h.b16 %v6274
    %v6568 = vunpack.c.l.b16 %v6275
    %v6569 = vunpack.c.h.b16 %v6275
    %v6570 = vunpack.c.l.b16 %v6276
    %v6571 = vunpack.c.h.b16 %v6276
    %v6572 = vunpack.c.l.b16 %v6277
    %v6573 = vunpack.c.h.b16 %v6277
    %v6574 = vunpack.c.l.b16 %v6278
    %v6575 = vunpack.c.h.b16 %v6278
    %v6576 = vunpack.c.l.b16 %v6279
    %v6577 = vunpack.c.h.b16 %v6279
    %v6578 = vunpack.c.l.b16 %v6280
    %v6579 = vunpack.c.h.b16 %v6280
    %v6580 = vunpack.c.l.b16 %v6281
    %v6581 = vunpack.c.h.b16 %v6281
    %v6582 = vunpack.c.l.b16 %v6282
    %v6583 = vunpack.c.h.b16 %v6282
    %v6584 = vunpack.c.l.b16 %v6283
    %v6585 = vunpack.c.h.b16 %v6283
    %v6586 = vunpack.c.l.b16 %v6284
    %v6587 = vunpack.c.h.b16 %v6284
    %v6588 = vunpack.c.l.b16 %v6285
    %v6589 = vunpack.c.h.b16 %v6285
    %v6590 = vunpack.c.l.b16 %v6286
    %v6591 = vunpack.c.h.b16 %v6286
    %v6592 = vunpack.c.l.b16 %v6287
    %v6593 = vunpack.c.h.b16 %v6287
    %v6594 = vunpack.c.l.b16 %v6288
    %v6595 = vunpack.c.h.b16 %v6288
    %v6596 = vunpack.c.l.b16 %v6289
    %v6597 = vunpack.c.h.b16 %v6289
    %v6598 = vunpack.c.l.b16 %v6290
    %v6599 = vunpack.c.h.b16 %v6290
    %v6600 = vunpack.c.l.b16 %v6291
    %v6601 = vunpack.c.h.b16 %v6291
    %v6602 = vunpack.c.l.b16 %v6292
    %v6603 = vunpack.c.h.b16 %v6292
    %v6604 = vunpack.c.l.b16 %v6293
    %v6605 = vunpack.c.h.b16 %v6293
    %v6606 = vunpack.c.l.b16 %v6294
    %v6607 = vunpack.c.h.b16 %v6294
    %v6608 = vunpack.c.l.b16 %v6295
    %v6609 = vunpack.c.h.b16 %v6295
    %v6610 = vunpack.c.l.b16 %v6296
    %v6611 = vunpack.c.h.b16 %v6296
    %v6612 = vunpack.c.l.b16 %v6297
    %v6613 = vunpack.c.h.b16 %v6297
    %v6614 = vunpack.c.l.b16 %v6298
    %v6615 = vunpack.c.h.b16 %v6298
    %v6616 = vunpack.c.l.b16 %v6299
    %v6617 = vunpack.c.h.b16 %v6299
    %v6618 = vunpack.c.l.b16 %v6300
    %v6619 = vunpack.c.h.b16 %v6300
    %v6620 = vunpack.c.l.b16 %v6301
    %v6621 = vunpack.c.h.b16 %v6301
    %v6622 = vunpack.c.l.b16 %v6302
    %v6623 = vunpack.c.h.b16 %v6302
    %v6624 = vunpack.c.l.b16 %v6303
    %v6625 = vunpack.c.h.b16 %v6303
    %v6626 = vunpack.c.l.b16 %v6304
    %v6627 = vunpack.c.h.b16 %v6304
    %v6628 = vunpack.c.l.b16 %v6305
    %v6629 = vunpack.c.h.b16 %v6305
    %v6630 = vunpack.c.l.b16 %v6306
    %v6631 = vunpack.c.h.b16 %v6306
    %v6632 = vunpack.c.l.b16 %v6307
    %v6633 = vunpack.c.h.b16 %v6307
    %v6634 = vunpack.c.l.b16 %v6308
    %v6635 = vunpack.c.h.b16 %v6308
    %v6636 = vunpack.c.l.b16 %v6309
    %v6637 = vunpack.c.h.b16 %v6309
    %v6638 = vunpack.c.l.b16 %v6310
    %v6639 = vunpack.c.h.b16 %v6310
    %v6640 = vunpack.c.l.b16 %v6311
    %v6641 = vunpack.c.h.b16 %v6311
    %v6642 = vunpack.c.l.b16 %v6312
    %v6643 = vunpack.c.h.b16 %v6312
    %v6644 = vunpack.c.l.b16 %v6313
    %v6645 = vunpack.c.h.b16 %v6313
    %v6646 = vunpack.c.l.b16 %v6314
    %v6647 = vunpack.c.h.b16 %v6314
    %v6648 = vunpack.c.l.b16 %v6315
    %v6649 = vunpack.c.h.b16 %v6315
    %v6650 = vunpack.c.l.b16 %v6316
    %v6651 = vunpack.c.h.b16 %v6316
    %v6652 = vunpack.c.l.b16 %v6317
    %v6653 = vunpack.c.h.b16 %v6317
    %v6654 = vunpack.c.l.b16 %v6318
    %v6655 = vunpack.c.h.b16 %v6318
    %v6656 = vunpack.c.l.b16 %v6319
    %v6657 = vunpack.c.h.b16 %v6319
    %v6658 = vunpack.c.l.b16 %v6320
    %v6659 = vunpack.c.h.b16 %v6320
    %v6660 = vunpack.c.l.b16 %v6321
    %v6661 = vunpack.c.h.b16 %v6321
    %v6662 = vunpack.c.l.b16 %v6322
    %v6663 = vunpack.c.h.b16 %v6322
    %v6664 = vunpack.c.l.b16 %v6323
    %v6665 = vunpack.c.h.b16 %v6323
    %v6666 = vunpack.c.l.b16 %v6324
    %v6667 = vunpack.c.h.b16 %v6324
    %v6668 = vunpack.c.l.b16 %v6325
    %v6669 = vunpack.c.h.b16 %v6325
    %v6670 = vunpack.c.l.b16 %v6326
    %v6671 = vunpack.c.h.b16 %v6326
    %v6672 = vunpack.c.l.b16 %v6327
    %v6673 = vunpack.c.h.b16 %v6327
    %v6674 = vunpack.c.l.b16 %v6328
    %v6675 = vunpack.c.h.b16 %v6328
    %v6676 = vunpack.c.l.b16 %v6329
    %v6677 = vunpack.c.h.b16 %v6329
    %v6678 = vunpack.c.l.b16 %v6330
    %v6679 = vunpack.c.h.b16 %v6330
    %v6680 = vunpack.c.l.b16 %v6331
    %v6681 = vunpack.c.h.b16 %v6331
    %v6682 = vunpack.c.l.b16 %v6332
    %v6683 = vunpack.c.h.b16 %v6332
    %v6684 = vunpack.c.l.b16 %v6333
    %v6685 = vunpack.c.h.b16 %v6333
    %v6686 = vunpack.c.l.b16 %v6334
    %v6687 = vunpack.c.h.b16 %v6334
    %v6688 = vunpack.c.l.b16 %v6335
    %v6689 = vunpack.c.h.b16 %v6335
    %v6690 = vunpack.c.l.b16 %v6336
    %v6691 = vunpack.c.h.b16 %v6336
    %v6692 = vunpack.c.l.b16 %v6337
    %v6693 = vunpack.c.h.b16 %v6337
    %v6694 = vunpack.c.l.b16 %v6338
    %v6695 = vunpack.c.h.b16 %v6338
    %v6696 = vunpack.c.l.b16 %v6339
    %v6697 = vunpack.c.h.b16 %v6339
    %v6698 = vunpack.c.l.b16 %v6340
    %v6699 = vunpack.c.h.b16 %v6340
    %v6700 = vunpack.c.l.b16 %v6341
    %v6701 = vunpack.c.h.b16 %v6341
    %v6702 = vunpack.c.l.b16 %v6342
    %v6703 = vunpack.c.h.b16 %v6342
    %v6704 = vunpack.c.l.b16 %v6343
    %v6705 = vunpack.c.h.b16 %v6343
    %v6706 = vunpack.c.l.b16 %v6344
    %v6707 = vunpack.c.h.b16 %v6344
    %v6708 = vunpack.c.l.b16 %v6345
    %v6709 = vunpack.c.h.b16 %v6345
    %v6710 = vunpack.c.l.b16 %v6346
    %v6711 = vunpack.c.h.b16 %v6346
    %v6712 = vunpack.c.l.b16 %v6347
    %v6713 = vunpack.c.h.b16 %v6347
    %v6714 = vunpack.c.l.b16 %v6348
    %v6715 = vunpack.c.h.b16 %v6348
    %v6716 = vunpack.c.l.b16 %v6349
    %v6717 = vunpack.c.h.b16 %v6349
    %v6718 = vunpack.c.l.b16 %v6350
    %v6719 = vunpack.c.h.b16 %v6350
    %v6720 = vunpack.c.l.b16 %v6351
    %v6721 = vunpack.c.h.b16 %v6351
    %v6722 = vunpack.c.l.b16 %v6352
    %v6723 = vunpack.c.h.b16 %v6352
    %v6724 = vunpack.c.l.b16 %v6353
    %v6725 = vunpack.c.h.b16 %v6353
    %v6726 = vunpack.c.l.b16 %v6354
    %v6727 = vunpack.c.h.b16 %v6354
    %v6728 = vunpack.c.l.b16 %v6355
    %v6729 = vunpack.c.h.b16 %v6355
    %v6730 = vunpack.c.l.b16 %v6356
    %v6731 = vunpack.c.h.b16 %v6356
    %v6732 = vunpack.c.l.b16 %v6357
    %v6733 = vunpack.c.h.b16 %v6357
    %v6734 = vunpack.c.l.b16 %v6358
    %v6735 = vunpack.c.h.b16 %v6358
    %v6736 = vunpack.c.l.b16 %v6359
    %v6737 = vunpack.c.h.b16 %v6359
    %v6738 = vunpack.c.l.b16 %v6360
    %v6739 = vunpack.c.h.b16 %v6360
    %v6740 = vunpack.c.l.b16 %v6361
    %v6741 = vunpack.c.h.b16 %v6361
    %v6742 = vunpack.c.l.b16 %v6362
    %v6743 = vunpack.c.h.b16 %v6362
    %v6744 = vunpack.c.l.b16 %v6363
    %v6745 = vunpack.c.h.b16 %v6363
    %v6746 = vunpack.c.l.b16 %v6364
    %v6747 = vunpack.c.h.b16 %v6364
    %v6748 = vunpack.c.l.b16 %v6365
    %v6749 = vunpack.c.h.b16 %v6365
    %v6750 = vunpack.c.l.b16 %v6366
    %v6751 = vunpack.c.h.b16 %v6366
    %v6752 = vunpack.c.l.b16 %v6367
    %v6753 = vunpack.c.h.b16 %v6367
    %v6754 = vunpack.c.l.b16 %v6368
    %v6755 = vunpack.c.h.b16 %v6368
    %v6756 = vunpack.c.l.b16 %v6369
    %v6757 = vunpack.c.h.b16 %v6369
    %v6758 = vunpack.c.l.b16 %v6370
    %v6759 = vunpack.c.h.b16 %v6370
    %v6760 = vunpack.c.l.b16 %v6371
    %v6761 = vunpack.c.h.b16 %v6371
    %v6762 = vunpack.c.l.b16 %v6372
    %v6763 = vunpack.c.h.b16 %v6372
    %v6764 = vunpack.c.l.b16 %v6373
    %v6765 = vunpack.c.h.b16 %v6373
    %v6766 = vunpack.c.l.b16 %v6374
    %v6767 = vunpack.c.h.b16 %v6374
    %v6768 = vunpack.c.l.b16 %v6375
    %v6769 = vunpack.c.h.b16 %v6375
    %v6770 = vunpack.c.l.b16 %v6376
    %v6771 = vunpack.c.h.b16 %v6376
    %v6772 = vunpack.c.l.b16 %v6377
    %v6773 = vunpack.c.h.b16 %v6377
    %v6774 = vpack.c.b16 %v6520, %v6518
    %v6775 = vpack.c.b16 %v6521, %v6519
    %v6776 = vpack.c.b16 %v6524, %v6522
    %v6777 = vpack.c.b16 %v6525, %v6523
    %v6778 = vpack.c.b16 %v6528, %v6526
    %v6779 = vpack.c.b16 %v6529, %v6527
    %v6780 = vpack.c.b16 %v6532, %v6530
    %v6781 = vpack.c.b16 %v6533, %v6531
    %v6782 = vpack.c.b16 %v6536, %v6534
    %v6783 = vpack.c.b16 %v6537, %v6535
    %v6784 = vpack.c.b16 %v6540, %v6538
    %v6785 = vpack.c.b16 %v6541, %v6539
    %v6786 = vpack.c.b16 %v6544, %v6542
    %v6787 = vpack.c.b16 %v6545, %v6543
    %v6788 = vpack.c.b16 %v6548, %v6546
    %v6789 = vpack.c.b16 %v6549, %v6547
    %v6790 = vpack.c.b16 %v6552, %v6550
    %v6791 = vpack.c.b16 %v6553, %v6551
    %v6792 = vpack.c.b16 %v6556, %v6554
    %v6793 = vpack.c.b16 %v6557, %v6555
    %v6794 = vpack.c.b16 %v6560, %v6558
    %v6795 = vpack.c.b16 %v6561, %v6559
    %v6796 = vpack.c.b16 %v6564, %v6562
    %v6797 = vpack.c.b16 %v6565, %v6563
    %v6798 = vpack.c.b16 %v6568, %v6566
    %v6799 = vpack.c.b16 %v6569, %v6567
    %v6800 = vpack.c.b16 %v6572, %v6570
    %v6801 = vpack.c.b16 %v6573, %v6571
    %v6802 = vpack.c.b16 %v6576, %v6574
    %v6803 = vpack.c.b16 %v6577, %v6575
    %v6804 = vpack.c.b16 %v6580, %v6578
    %v6805 = vpack.c.b16 %v6581, %v6579
    %v6806 = vpack.c.b16 %v6584, %v6582
    %v6807 = vpack.c.b16 %v6585, %v6583
    %v6808 = vpack.c.b16 %v6588, %v6586
    %v6809 = vpack.c.b16 %v6589, %v6587
    %v6810 = vpack.c.b16 %v6592, %v6590
    %v6811 = vpack.c.b16 %v6593, %v6591
    %v6812 = vpack.c.b16 %v6596, %v6594
    %v6813 = vpack.c.b16 %v6597, %v6595
    %v6814 = vpack.c.b16 %v6600, %v6598
    %v6815 = vpack.c.b16 %v6601, %v6599
    %v6816 = vpack.c.b16 %v6604, %v6602
    %v6817 = vpack.c.b16 %v6605, %v6603
    %v6818 = vpack.c.b16 %v6608, %v6606
    %v6819 = vpack.c.b16 %v6609, %v6607
    %v6820 = vpack.c.b16 %v6612, %v6610
    %v6821 = vpack.c.b16 %v6613, %v6611
    %v6822 = vpack.c.b16 %v6616, %v6614
    %v6823 = vpack.c.b16 %v6617, %v6615
    %v6824 = vpack.c.b16 %v6620, %v6618
    %v6825 = vpack.c.b16 %v6621, %v6619
    %v6826 = vpack.c.b16 %v6624, %v6622
    %v6827 = vpack.c.b16 %v6625, %v6623
    %v6828 = vpack.c.b16 %v6628, %v6626
    %v6829 = vpack.c.b16 %v6629, %v6627
    %v6830 = vpack.c.b16 %v6632, %v6630
    %v6831 = vpack.c.b16 %v6633, %v6631
    %v6832 = vpack.c.b16 %v6636, %v6634
    %v6833 = vpack.c.b16 %v6637, %v6635
    %v6834 = vpack.c.b16 %v6640, %v6638
    %v6835 = vpack.c.b16 %v6641, %v6639
    %v6836 = vpack.c.b16 %v6644, %v6642
    %v6837 = vpack.c.b16 %v6645, %v6643
    %v6838 = vpack.c.b16 %v6648, %v6646
    %v6839 = vpack.c.b16 %v6649, %v6647
    %v6840 = vpack.c.b16 %v6652, %v6650
    %v6841 = vpack.c.b16 %v6653, %v6651
    %v6842 = vpack.c.b16 %v6656, %v6654
    %v6843 = vpack.c.b16 %v6657, %v6655
    %v6844 = vpack.c.b16 %v6660, %v6658
    %v6845 = vpack.c.b16 %v6661, %v6659
    %v6846 = vpack.c.b16 %v6664, %v6662
    %v6847 = vpack.c.b16 %v6665, %v6663
    %v6848 = vpack.c.b16 %v6668, %v6666
    %v6849 = vpack.c.b16 %v6669, %v6667
    %v6850 = vpack.c.b16 %v6672, %v6670
    %v6851 = vpack.c.b16 %v6673, %v6671
    %v6852 = vpack.c.b16 %v6676, %v6674
    %v6853 = vpack.c.b16 %v6677, %v6675
    %v6854 = vpack.c.b16 %v6680, %v6678
    %v6855 = vpack.c.b16 %v6681, %v6679
    %v6856 = vpack.c.b16 %v6684, %v6682
    %v6857 = vpack.c.b16 %v6685, %v6683
    %v6858 = vpack.c.b16 %v6688, %v6686
    %v6859 = vpack.c.b16 %v6689, %v6687
    %v6860 = vpack.c.b16 %v6692, %v6690
    %v6861 = vpack.c.b16 %v6693, %v6691
    %v6862 = vpack.c.b16 %v6696, %v6694
    %v6863 = vpack.c.b16 %v6697, %v6695
    %v6864 = vpack.c.b16 %v6700, %v6698
    %v6865 = vpack.c.b16 %v6701, %v6699
    %v6866 = vpack.c.b16 %v6704, %v6702
    %v6867 = vpack.c.b16 %v6705, %v6703
    %v6868 = vpack.c.b16 %v6708, %v6706
    %v6869 = vpack.c.b16 %v6709, %v6707
    %v6870 = vpack.c.b16 %v6712, %v6710
    %v6871 = vpack.c.b16 %v6713, %v6711
    %v6872 = vpack.c.b16 %v6716, %v6714
    %v6873 = vpack.c.b16 %v6717, %v6715
    %v6874 = vpack.c.b16 %v6720, %v6718
    %v6875 = vpack.c.b16 %v6721, %v6719
    %v6876 = vpack.c.b16 %v6724, %v6722
    %v6877 = vpack.c.b16 %v6725, %v6723
    %v6878 = vpack.c.b16 %v6728, %v6726
    %v6879 = vpack.c.b16 %v6729, %v6727
    %v6880 = vpack.c.b16 %v6732, %v6730
    %v6881 = vpack.c.b16 %v6733, %v6731
    %v6882 = vpack.c.b16 %v6736, %v6734
    %v6883 = vpack.c.b16 %v6737, %v6735
    %v6884 = vpack.c.b16 %v6740, %v6738
    %v6885 = vpack.c.b16 %v6741, %v6739
    %v6886 = vpack.c.b16 %v6744, %v6742
    %v6887 = vpack.c.b16 %v6745, %v6743
    %v6888 = vpack.c.b16 %v6748, %v6746
    %v6889 = vpack.c.b16 %v6749, %v6747
    %v6890 = vpack.c.b16 %v6752, %v6750
    %v6891 = vpack.c.b16 %v6753, %v6751
    %v6892 = vpack.c.b16 %v6756, %v6754
    %v6893 = vpack.c.b16 %v6757, %v6755
    %v6894 = vpack.c.b16 %v6760, %v6758
    %v6895 = vpack.c.b16 %v6761, %v6759
    %v6896 = vpack.c.b16 %v6764, %v6762
    %v6897 = vpack.c.b16 %v6765, %v6763
    %v6898 = vpack.c.b16 %v6768, %v6766
    %v6899 = vpack.c.b16 %v6769, %v6767
    %v6900 = vpack.c.b16 %v6772, %v6770
    %v6901 = vpack.c.b16 %v6773, %v6771
    %7030 = vmatprep.subr.bf16.mxu0 %v6775
    %7031 = vmatpush1.bf16.msra.mxu0 %v6774
    %7032 = vmatprep.subr.bf16.mxu0 %v6777
    %7033 = vmatpush1.bf16.msra.mxu0 %v6776
    %7034 = vmatprep.subr.bf16.mxu0 %v6779
    %7035 = vmatpush1.bf16.msra.mxu0 %v6778
    %7036 = vmatprep.subr.bf16.mxu0 %v6781
    %7037 = vmatpush1.bf16.msra.mxu0 %v6780
    %7038 = vmatprep.subr.bf16.mxu0 %v6783
    %7039 = vmatpush1.bf16.msra.mxu0 %v6782
    %7040 = vmatprep.subr.bf16.mxu0 %v6785
    %7041 = vmatpush1.bf16.msra.mxu0 %v6784
    %7042 = vmatprep.subr.bf16.mxu0 %v6787
    %7043 = vmatpush1.bf16.msra.mxu0 %v6786
    %7044 = vmatprep.subr.bf16.mxu0 %v6789
    %7045 = vmatpush1.bf16.msra.mxu0 %v6788
    %7046 = vmatprep.subr.bf16.mxu0 %v6791
    %7047 = vmatpush1.bf16.msra.mxu0 %v6790
    %7048 = vmatprep.subr.bf16.mxu0 %v6793
    %7049 = vmatpush1.bf16.msra.mxu0 %v6792
    %7050 = vmatprep.subr.bf16.mxu0 %v6795
    %7051 = vmatpush1.bf16.msra.mxu0 %v6794
    %7052 = vmatprep.subr.bf16.mxu0 %v6797
    %7053 = vmatpush1.bf16.msra.mxu0 %v6796
    %7054 = vmatprep.subr.bf16.mxu0 %v6799
    %7055 = vmatpush1.bf16.msra.mxu0 %v6798
    %7056 = vmatprep.subr.bf16.mxu0 %v6801
    %7057 = vmatpush1.bf16.msra.mxu0 %v6800
    %7058 = vmatprep.subr.bf16.mxu0 %v6803
    %7059 = vmatpush1.bf16.msra.mxu0 %v6802
    %7060 = vmatprep.subr.bf16.mxu0 %v6805
    %7061 = vmatpush1.bf16.msra.mxu0 %v6804
    %7062 = vmatprep.mubr.bf16.mxu0 %v6243
    %7063 = vmatmul.mubr.bf16.gmra.mrb[0].mxu0 %v6242
    %v7064 = vpop.f32.mrb[0].mxu0
    %v7065 = vadd.f32 %v6383, %v7064
    %v7066 = vpop.f32.mrb[0].mxu0
    %v7067 = vadd.f32 %v6387, %v7066
    %v7068 = vpop.f32.mrb[0].mxu0
    %v7069 = vpop.f32.mrb[0].mxu0
    %7070 = vdwg.mxu0
    %7071 = vmatprep.subr.bf16.mxu0 %v6807
    %7072 = vmatpush1.bf16.msra.mxu0 %v6806
    %7073 = vmatprep.subr.bf16.mxu0 %v6809
    %7074 = vmatpush1.bf16.msra.mxu0 %v6808
    %7075 = vmatprep.subr.bf16.mxu0 %v6811
    %7076 = vmatpush1.bf16.msra.mxu0 %v6810
    %7077 = vmatprep.subr.bf16.mxu0 %v6813
    %7078 = vmatpush1.bf16.msra.mxu0 %v6812
    %7079 = vmatprep.subr.bf16.mxu0 %v6815
    %7080 = vmatpush1.bf16.msra.mxu0 %v6814
    %7081 = vmatprep.subr.bf16.mxu0 %v6817
    %7082 = vmatpush1.bf16.msra.mxu0 %v6816
    %7083 = vmatprep.subr.bf16.mxu0 %v6819
    %7084 = vmatpush1.bf16.msra.mxu0 %v6818
    %7085 = vmatprep.subr.bf16.mxu0 %v6821
    %7086 = vmatpush1.bf16.msra.mxu0 %v6820
    %7087 = vmatprep.subr.bf16.mxu0 %v6823
    %7088 = vmatpush1.bf16.msra.mxu0 %v6822
    %7089 = vmatprep.subr.bf16.mxu0 %v6825
    %7090 = vmatpush1.bf16.msra.mxu0 %v6824
    %7091 = vmatprep.subr.bf16.mxu0 %v6827
    %7092 = vmatpush1.bf16.msra.mxu0 %v6826
    %7093 = vmatprep.subr.bf16.mxu0 %v6829
    %7094 = vmatpush1.bf16.msra.mxu0 %v6828
    %7095 = vmatprep.subr.bf16.mxu0 %v6831
    %7096 = vmatpush1.bf16.msra.mxu0 %v6830
    %7097 = vmatprep.subr.bf16.mxu0 %v6833
    %7098 = vmatpush1.bf16.msra.mxu0 %v6832
    %7099 = vmatprep.subr.bf16.mxu0 %v6835
    %7100 = vmatpush1.bf16.msra.mxu0 %v6834
    %7101 = vmatprep.subr.bf16.mxu0 %v6837
    %7102 = vmatpush1.bf16.msra.mxu0 %v6836
    %7103 = vmatprep.mubr.bf16.mxu0 %v6245
    %7104 = vmatmul.mubr.bf16.gmra.mrb[0].mxu0 %v6244
    %v7105 = vpop.f32.mrb[0].mxu0
    %v7106 = vadd.f32 %v7065, %v7105
    %v7107 = vpop.f32.mrb[0].mxu0
    %v7108 = vadd.f32 %v7067, %v7107
    %v7109 = vpop.f32.mrb[0].mxu0
    %v7110 = vpop.f32.mrb[0].mxu0
    %7111 = vdwg.mxu0
    %7112 = vmatprep.subr.bf16.mxu0 %v6839
    %7113 = vmatpush1.bf16.msra.mxu0 %v6838
    %7114 = vmatprep.subr.bf16.mxu0 %v6841
    %7115 = vmatpush1.bf16.msra.mxu0 %v6840
    %7116 = vmatprep.subr.bf16.mxu0 %v6843
    %7117 = vmatpush1.bf16.msra.mxu0 %v6842
    %7118 = vmatprep.subr.bf16.mxu0 %v6845
    %7119 = vmatpush1.bf16.msra.mxu0 %v6844
    %7120 = vmatprep.subr.bf16.mxu0 %v6847
    %7121 = vmatpush1.bf16.msra.mxu0 %v6846
    %7122 = vmatprep.subr.bf16.mxu0 %v6849
    %7123 = vmatpush1.bf16.msra.mxu0 %v6848
    %7124 = vmatprep.subr.bf16.mxu0 %v6851
    %7125 = vmatpush1.bf16.msra.mxu0 %v6850
    %7126 = vmatprep.subr.bf16.mxu0 %v6853
    %7127 = vmatpush1.bf16.msra.mxu0 %v6852
    %7128 = vmatprep.subr.bf16.mxu0 %v6855
    %7129 = vmatpush1.bf16.msra.mxu0 %v6854
    %7130 = vmatprep.subr.bf16.mxu0 %v6857
    %7131 = vmatpush1.bf16.msra.mxu0 %v6856
    %7132 = vmatprep.subr.bf16.mxu0 %v6859
    %7133 = vmatpush1.bf16.msra.mxu0 %v6858
    %7134 = vmatprep.subr.bf16.mxu0 %v6861
    %7135 = vmatpush1.bf16.msra.mxu0 %v6860
    %7136 = vmatprep.subr.bf16.mxu0 %v6863
    %7137 = vmatpush1.bf16.msra.mxu0 %v6862
    %7138 = vmatprep.subr.bf16.mxu0 %v6865
    %7139 = vmatpush1.bf16.msra.mxu0 %v6864
    %7140 = vmatprep.subr.bf16.mxu0 %v6867
    %7141 = vmatpush1.bf16.msra.mxu0 %v6866
    %7142 = vmatprep.subr.bf16.mxu0 %v6869
    %7143 = vmatpush1.bf16.msra.mxu0 %v6868
    %7144 = vmatprep.mubr.bf16.mxu0 %v6247
    %7145 = vmatmul.mubr.bf16.gmra.mrb[0].mxu0 %v6246
    %v7146 = vpop.f32.mrb[0].mxu0
    %v7147 = vadd.f32 %v7106, %v7146
    %v7148 = vpop.f32.mrb[0].mxu0
    %v7149 = vadd.f32 %v7108, %v7148
    %v7150 = vpop.f32.mrb[0].mxu0
    %v7151 = vpop.f32.mrb[0].mxu0
    %7152 = vdwg.mxu0
    %7153 = vmatprep.subr.bf16.mxu0 %v6871
    %7154 = vmatpush1.bf16.msra.mxu0 %v6870
    %7155 = vmatprep.subr.bf16.mxu0 %v6873
    %7156 = vmatpush1.bf16.msra.mxu0 %v6872
    %7157 = vmatprep.subr.bf16.mxu0 %v6875
    %7158 = vmatpush1.bf16.msra.mxu0 %v6874
    %7159 = vmatprep.subr.bf16.mxu0 %v6877
    %7160 = vmatpush1.bf16.msra.mxu0 %v6876
    %7161 = vmatprep.subr.bf16.mxu0 %v6879
    %7162 = vmatpush1.bf16.msra.mxu0 %v6878
    %7163 = vmatprep.subr.bf16.mxu0 %v6881
    %7164 = vmatpush1.bf16.msra.mxu0 %v6880
    %7165 = vmatprep.subr.bf16.mxu0 %v6883
    %7166 = vmatpush1.bf16.msra.mxu0 %v6882
    %7167 = vmatprep.subr.bf16.mxu0 %v6885
    %7168 = vmatpush1.bf16.msra.mxu0 %v6884
    %7169 = vmatprep.subr.bf16.mxu0 %v6887
    %7170 = vmatpush1.bf16.msra.mxu0 %v6886
    %7171 = vmatprep.subr.bf16.mxu0 %v6889
    %7172 = vmatpush1.bf16.msra.mxu0 %v6888
    %7173 = vmatprep.subr.bf16.mxu0 %v6891
    %7174 = vmatpush1.bf16.msra.mxu0 %v6890
    %7175 = vmatprep.subr.bf16.mxu0 %v6893
    %7176 = vmatpush1.bf16.msra.mxu0 %v6892
    %7177 = vmatprep.subr.bf16.mxu0 %v6895
    %7178 = vmatpush1.bf16.msra.mxu0 %v6894
    %7179 = vmatprep.subr.bf16.mxu0 %v6897
    %7180 = vmatpush1.bf16.msra.mxu0 %v6896
    %7181 = vmatprep.subr.bf16.mxu0 %v6899
    %7182 = vmatpush1.bf16.msra.mxu0 %v6898
    %7183 = vmatprep.subr.bf16.mxu0 %v6901
    %7184 = vmatpush1.bf16.msra.mxu0 %v6900
    %7185 = vmatprep.mubr.bf16.mxu0 %v6249
    %7186 = vmatmul.mubr.bf16.gmra.mrb[0].mxu0 %v6248
    %v7187 = vpop.f32.mrb[0].mxu0
    %v7188 = vadd.f32 %v7147, %v7187
    %v7189 = vpop.f32.mrb[0].mxu0
    %v7190 = vadd.f32 %v7149, %v7189
    %v7191 = vpop.f32.mrb[0].mxu0
    %v7192 = vpop.f32.mrb[0].mxu0
    %7193 = vdwg.mxu0
    %v7194 = vmax.f32 %v7188, 0.0
    %v7195 = vmax.f32 %v7190, 0.0
    %v7196 = vpack.c.bf16 %v7194, %v7194
    %v7197 = vpack.c.bf16 %v7195, %v7195
    %v7198 = vld [vmem:[#allocation36] sm:$0xf]
    %v7199 = vld [vmem:[#allocation36 + $0x4] sm:$0xf]
    %v7200 = vld [vmem:[#allocation36 + $0x8] sm:$0xf]
    %v7201 = vld [vmem:[#allocation36 + $0xc] sm:$0xf]
    %v7202 = vld [vmem:[#allocation36 + $0x10] sm:$0xf]
    %v7203 = vld [vmem:[#allocation36 + $0x14] sm:$0xf]
    %v7204 = vld [vmem:[#allocation36 + $0x18] sm:$0xf]
    %v7205 = vld [vmem:[#allocation36 + $0x1c] sm:$0xf]
    %v7206 = vld [vmem:[#allocation36 + $0x20] sm:$0xf]
    %v7207 = vld [vmem:[#allocation36 + $0x24] sm:$0xf]
    %v7208 = vld [vmem:[#allocation36 + $0x28] sm:$0xf]
    %v7209 = vld [vmem:[#allocation36 + $0x2c] sm:$0xf]
    %v7210 = vld [vmem:[#allocation36 + $0x30] sm:$0xf]
    %v7211 = vld [vmem:[#allocation36 + $0x34] sm:$0xf]
    %v7212 = vld [vmem:[#allocation36 + $0x38] sm:$0xf]
    %v7213 = vld [vmem:[#allocation36 + $0x3c] sm:$0xf]
    %v7214 = vld [vmem:[#allocation36 + $0x40] sm:$0xf]
    %v7215 = vld [vmem:[#allocation36 + $0x44] sm:$0xf]
    %v7216 = vld [vmem:[#allocation36 + $0x48] sm:$0xf]
    %v7217 = vld [vmem:[#allocation36 + $0x4c] sm:$0xf]
    %v7218 = vld [vmem:[#allocation36 + $0x50] sm:$0xf]
    %v7219 = vld [vmem:[#allocation36 + $0x54] sm:$0xf]
    %v7220 = vld [vmem:[#allocation36 + $0x58] sm:$0xf]
    %v7221 = vld [vmem:[#allocation36 + $0x5c] sm:$0xf]
    %v7222 = vld [vmem:[#allocation36 + $0x60] sm:$0xf]
    %v7223 = vld [vmem:[#allocation36 + $0x64] sm:$0xf]
    %v7224 = vld [vmem:[#allocation36 + $0x68] sm:$0xf]
    %v7225 = vld [vmem:[#allocation36 + $0x6c] sm:$0xf]
    %v7226 = vld [vmem:[#allocation36 + $0x70] sm:$0xf]
    %v7227 = vld [vmem:[#allocation36 + $0x74] sm:$0xf]
    %v7228 = vld [vmem:[#allocation36 + $0x78] sm:$0xf]
    %v7229 = vld [vmem:[#allocation36 + $0x7c] sm:$0xf]
    %v7230 = vld [vmem:[#allocation37] sm:$0x1]
    %v7232 = vlaneseq
    %v7233 = vshrl.u32 %v7232, 7
    %v7234 = vsub.s32 0, %v7233
    %v7235 = vrot.slane %v7230, %v7234
    %v7269 = vunpack.c.l.b16 %v7198
    %v7270 = vunpack.c.l.b16 %v7199
    %v7271 = vunpack.c.l.b16 %v7200
    %v7272 = vunpack.c.l.b16 %v7201
    %v7273 = vunpack.c.l.b16 %v7202
    %v7274 = vunpack.c.l.b16 %v7203
    %v7275 = vunpack.c.l.b16 %v7204
    %v7276 = vunpack.c.l.b16 %v7205
    %v7277 = vunpack.c.l.b16 %v7206
    %v7278 = vunpack.c.l.b16 %v7207
    %v7279 = vunpack.c.l.b16 %v7208
    %v7280 = vunpack.c.l.b16 %v7209
    %v7281 = vunpack.c.l.b16 %v7210
    %v7282 = vunpack.c.l.b16 %v7211
    %v7283 = vunpack.c.l.b16 %v7212
    %v7284 = vunpack.c.l.b16 %v7213
    %v7285 = vunpack.c.l.b16 %v7214
    %v7286 = vunpack.c.l.b16 %v7215
    %v7287 = vunpack.c.l.b16 %v7216
    %v7288 = vunpack.c.l.b16 %v7217
    %v7289 = vunpack.c.l.b16 %v7218
    %v7290 = vunpack.c.l.b16 %v7219
    %v7291 = vunpack.c.l.b16 %v7220
    %v7292 = vunpack.c.l.b16 %v7221
    %v7293 = vunpack.c.l.b16 %v7222
    %v7294 = vunpack.c.l.b16 %v7223
    %v7295 = vunpack.c.l.b16 %v7224
    %v7296 = vunpack.c.l.b16 %v7225
    %v7297 = vunpack.c.l.b16 %v7226
    %v7298 = vunpack.c.l.b16 %v7227
    %v7299 = vunpack.c.l.b16 %v7228
    %v7300 = vunpack.c.l.b16 %v7229
    %v7301 = vpack.c.b16 %v7270, %v7269
    %v7302 = vpack.c.b16 %v7272, %v7271
    %v7303 = vpack.c.b16 %v7274, %v7273
    %v7304 = vpack.c.b16 %v7276, %v7275
    %v7305 = vpack.c.b16 %v7278, %v7277
    %v7306 = vpack.c.b16 %v7280, %v7279
    %v7307 = vpack.c.b16 %v7282, %v7281
    %v7308 = vpack.c.b16 %v7284, %v7283
    %v7309 = vpack.c.b16 %v7286, %v7285
    %v7310 = vpack.c.b16 %v7288, %v7287
    %v7311 = vpack.c.b16 %v7290, %v7289
    %v7312 = vpack.c.b16 %v7292, %v7291
    %v7313 = vpack.c.b16 %v7294, %v7293
    %v7314 = vpack.c.b16 %v7296, %v7295
    %v7315 = vpack.c.b16 %v7298, %v7297
    %v7316 = vpack.c.b16 %v7300, %v7299
    %7333 = vmatprep.subr.bf16.mxu0 0
    %7334 = vmatpush1.bf16.msra.mxu0 %v7301
    %7335 = vmatprep.subr.bf16.mxu0 0
    %7336 = vmatpush1.bf16.msra.mxu0 %v7302
    %7337 = vmatprep.subr.bf16.mxu0 0
    %7338 = vmatpush1.bf16.msra.mxu0 %v7303
    %7339 = vmatprep.subr.bf16.mxu0 0
    %7340 = vmatpush1.bf16.msra.mxu0 %v7304
    %7341 = vmatprep.subr.bf16.mxu0 0
    %7342 = vmatpush1.bf16.msra.mxu0 %v7305
    %7343 = vmatprep.subr.bf16.mxu0 0
    %7344 = vmatpush1.bf16.msra.mxu0 %v7306
    %7345 = vmatprep.subr.bf16.mxu0 0
    %7346 = vmatpush1.bf16.msra.mxu0 %v7307
    %7347 = vmatprep.subr.bf16.mxu0 0
    %7348 = vmatpush1.bf16.msra.mxu0 %v7308
    %7349 = vmatprep.subr.bf16.mxu0 0
    %7350 = vmatpush1.bf16.msra.mxu0 %v7309
    %7351 = vmatprep.subr.bf16.mxu0 0
    %7352 = vmatpush1.bf16.msra.mxu0 %v7310
    %7353 = vmatprep.subr.bf16.mxu0 0
    %7354 = vmatpush1.bf16.msra.mxu0 %v7311
    %7355 = vmatprep.subr.bf16.mxu0 0
    %7356 = vmatpush1.bf16.msra.mxu0 %v7312
    %7357 = vmatprep.subr.bf16.mxu0 0
    %7358 = vmatpush1.bf16.msra.mxu0 %v7313
    %7359 = vmatprep.subr.bf16.mxu0 0
    %7360 = vmatpush1.bf16.msra.mxu0 %v7314
    %7361 = vmatprep.subr.bf16.mxu0 0
    %7362 = vmatpush1.bf16.msra.mxu0 %v7315
    %7363 = vmatprep.subr.bf16.mxu0 0
    %7364 = vmatpush1.bf16.msra.mxu0 %v7316
    %7365 = vmatprep.mubr.bf16.mxu0 %v7197
    %7366 = vmatmul.mubr.bf16.gmra.mrb[0].mxu0 %v7196
    %v7367 = vpop.f32.mrb[0].mxu0
    %v7368 = vadd.f32 %v7235, %v7367
    %v7369 = vpop.f32.mrb[0].mxu0
    %v7370 = vpop.f32.mrb[0].mxu0
    %v7371 = vpop.f32.mrb[0].mxu0
    %7372 = vdwg.mxu0
    %7373 = vst [vmem:[%s28] sm:$0xff] %v7368
    // Predicated region
    $region210: #{secpro_gnn_forward.1} parent=1 // pred_check
      _
    $region211: #{secpro_gnn_forward.1} parent=1 // pred_check_branch
      %7375 = sbr.rel (0) target = $region213
    $region212: #{secpro_gnn_forward.1} parent=1 // pred_region
      _
    $region213: #{secpro_gnn_forward.1} parent=1 // pred_fallthru
      _
    // Predicated region
    $region214: #{secpro_gnn_forward.1} parent=1 // pred_check
      _
    $region215: #{secpro_gnn_forward.1} parent=1 // pred_check_branch
      %7377 = sbr.rel (0) target = $region217
    $region216: #{secpro_gnn_forward.1} parent=1 // pred_region
      _
    $region217: #{secpro_gnn_forward.1} parent=1 // pred_fallthru
      _
    %7378 = vsyncpa [#allocation3], 1
    %7379 = vsyncpa [#allocation5], 1
    %7380 = vsyncpa [#allocation8], 1
    %7381 = vsyncpa [#allocation11], 1
    %7382 = vsyncpa [#allocation14], 1
    %7383 = vsyncpa [#allocation17], 1
    %7384 = vsyncpa [#allocation20], 1
    %7385 = vsyncpa [#allocation23], 1
    %7386 = vsyncpa [#allocation26], 1
    %7387 = vsyncpa [#allocation29], 1
    %7388 = vsyncpa [#allocation32], 1
    %7389 = vsyncpa [#allocation35], 1
    %7390 = vsyncpa [#allocation38], 1

</llo_original>
